<compile_context>
chip_gen: v7x
topology: tpu7x:2x2x1
jax: 0.10.0
libtpu: 0.0.40
codegen_flags: <defaults>
</compile_context>

<pallas_src>
import functools

import jax
import jax.numpy as jnp
from jax.experimental import pallas as pl
from jax.experimental.pallas import tpu as pltpu

_EPS = 1e-5  # PyTorch BatchNorm default eps


def _vmem():
    return pl.BlockSpec(memory_space=pltpu.MemorySpace.VMEM)


def _tree_sum(terms):
    """Balanced pairwise sum of a list of arrays (short latency chain)."""
    while len(terms) > 1:
        nxt = [terms[i] + terms[i + 1] for i in range(0, len(terms) - 1, 2)]
        if len(terms) % 2:
            nxt.append(terms[-1])
        terms = nxt
    return terms[0]


# ---------------------------------------------------------------------------
# Fused kernel: Conv2d+BN2d+ReLU+Conv2d(1x1)+ReLU -> LSTM -> Conv1d+BN1d+ReLU
#               -> global avg pool -> Linear -> Softmax
# ---------------------------------------------------------------------------
def _tsem_fused_kernel(xr_ref, w1p_ref, w2blk_ref, wih_ref, whh_ref, wc_ref,
                       wfc_ref, vec_ref, o_ref, *,
                       B, T, F, Cf, H, n_class, conv_h, pad_b, pad_a):
    f32 = jnp.float32
    FC = F * Cf
    TB = T * B
    H4 = 4 * H

    # -------- stage 1: Conv2d(1->Cf,(h,1),'same') + BN2d(train) + ReLU
    #                   + Conv2d(Cf->1,1x1) + ReLU
    # Lane-dense layout: rows = (t, b), lanes = (f, c) with c minor.
    # w1p_ref row 0 = conv bias tiled; rows 1..h = taps tiled across F.
    h1 = xr_ref[0:TB, :] * w1p_ref[1:2, :] + w1p_ref[0:1, :]
    for k in range(1, conv_h):                              # static tap loop (VPU FMAs)
        h1 = h1 + xr_ref[k * B:k * B + TB, :] * w1p_ref[k + 1:k + 2, :]

    # One-pass batch stats per channel c: reduce rows, then fold F lane-groups.
    n1 = float(TB * F)
    ss = jnp.concatenate([jnp.sum(h1, axis=0, keepdims=True),
                          jnp.sum(h1 * h1, axis=0, keepdims=True)], axis=0)   # (2, FC)
    ssc = _tree_sum([ss[:, f * Cf:(f + 1) * Cf] for f in range(F)])           # (2, Cf)
    mean1 = ssc[0:1, :] / n1
    var1 = ssc[1:2, :] / n1 - mean1 * mean1                 # biased (training-mode BN)
    scale1 = vec_ref[0:1, 0:Cf] * jax.lax.rsqrt(var1 + _EPS)
    shift1 = vec_ref[1:2, 0:Cf] - mean1 * scale1
    aff = jnp.concatenate([scale1, shift1], axis=0)         # (2, Cf)
    afft = jnp.concatenate([aff] * F, axis=1)               # (2, FC) lane-tiled
    h1 = jnp.maximum(h1 * afft[0:1, :] + afft[1:2, :], 0.0)  # BN + ReLU fused

    # 1x1 conv (Cf -> 1) per (t,b,f): block-diagonal matmul keeps lanes dense.
    y2d = jnp.dot(h1, w2blk_ref[...], preferred_element_type=f32) + vec_ref[2:3, 0:F]
    y2d = jnp.maximum(y2d, 0.0)                             # (TB, F), rows = (t, b)

    # -------- stage 2: LSTM(input=F, hidden=H=T), batch_first, h0 = c0 = 0
    # Hoisted input projection (+ combined b_ih+b_hh) in one matmul.
    xw = jnp.dot(y2d, wih_ref[...], preferred_element_type=f32) + vec_ref[3:4, 0:H4]
    whh = whh_ref[...]                                      # (H, 4H)
    h_t = jnp.zeros((B, H), f32)
    c_t = jnp.zeros((B, H), f32)
    hs = []
    for t in range(T):                                      # fully unrolled (T static)
        parts = [xw[t * B:(t + 1) * B, :]]
        if t > 0:
            for j in range(H):                              # VPU broadcast-FMA, no MXU on the serial path
                parts.append(h_t[:, j:j + 1] * whh[j:j + 1, :])
        gates = _tree_sum(parts)                            # (B, 4H)
        sg = jax.nn.sigmoid(gates)                          # one EUP pass covers i, f, o
        i_g = sg[:, 0:H]
        f_g = sg[:, H:2 * H]
        o_g = sg[:, 3 * H:H4]
        g_g = jnp.tanh(gates[:, 2 * H:3 * H])
        c_t = f_g * c_t + i_g * g_g
        h_t = o_g * jnp.tanh(c_t)
        hs.append(h_t)                                      # (B, H)

    # -------- stage 3: Conv1d(T->Cf, h, 'same') over hidden axis + BN1d + ReLU
    #                   + avg pool over length + Linear + Softmax
    hs_stack = jnp.stack(hs, axis=0)                        # (T, B, H)
    zim_rows = []
    for b in range(B):
        zb = hs_stack[:, b, :].T                            # (H, T): rows = length l, lanes = LSTM time t
        pieces = []
        if pad_b > 0:
            pieces.append(jnp.zeros((pad_b, T), f32))
        pieces.append(zb)
        if pad_a > 0:
            pieces.append(jnp.zeros((pad_a, T), f32))
        zp = jnp.concatenate(pieces, axis=0) if len(pieces) > 1 else zb   # (H+h-1, T)
        zim_rows.append(
            jnp.concatenate([zp[k:k + H, :] for k in range(conv_h)], axis=1))  # (H, h*T)
    zim = jnp.concatenate(zim_rows, axis=0)                 # (B*H, h*T), rows = (b, l)

    # Whole conv = ONE matmul with wc_flat[k*T + t, c] = conv3_w[c, t, k].
    acc = jnp.dot(zim, wc_ref[...], preferred_element_type=f32) + vec_ref[4:5, 0:Cf]

    n2 = float(B * H)
    tt = jnp.concatenate([jnp.sum(acc, axis=0, keepdims=True),
                          jnp.sum(acc * acc, axis=0, keepdims=True)], axis=0)  # (2, Cf)
    mean2 = tt[0:1, :] / n2
    var2 = tt[1:2, :] / n2 - mean2 * mean2
    scale2 = vec_ref[5:6, 0:Cf] * jax.lax.rsqrt(var2 + _EPS)
    shift2 = vec_ref[6:7, 0:Cf] - mean2 * scale2
    a2 = jnp.maximum(acc * scale2 + shift2, 0.0)            # (B*H, Cf)

    pooled = jnp.concatenate(
        [jnp.mean(a2[b * H:(b + 1) * H, :], axis=0, keepdims=True)
         for b in range(B)], axis=0)                        # (B, Cf)

    logits = jnp.dot(pooled, wfc_ref[...], preferred_element_type=f32) \
        + vec_ref[7:8, 0:n_class]
    m = jnp.max(logits, axis=1, keepdims=True)
    e = jnp.exp(logits - m)
    o_ref[...] = e / jnp.sum(e, axis=1, keepdims=True)      # (B, n_class)


# ---------------------------------------------------------------------------
# Parameter init (deterministic, synthetic, PyTorch-like layouts).
# ---------------------------------------------------------------------------
def init_params(key, time_step, features, filters_num, n_class,
                window_size=0.2):
    h = int(window_size * time_step)
    ks = jax.random.split(key, 9)
    p = {}
    p["conv1_w"] = 0.1 * jax.random.normal(ks[0], (filters_num, h), jnp.float32)
    p["conv1_b"] = 0.1 * jax.random.normal(ks[1], (filters_num,), jnp.float32)
    p["bn1_g"] = jnp.ones((filters_num,), jnp.float32)
    p["bn1_b"] = jnp.zeros((filters_num,), jnp.float32)
    p["conv2_w"] = 0.1 * jax.random.normal(ks[2], (filters_num,), jnp.float32)
    p["conv2_b"] = 0.1 * jax.random.normal(ks[3], (1,), jnp.float32)
    p["lstm_wih"] = 0.1 * jax.random.normal(
        ks[4], (4 * time_step, features), jnp.float32)
    p["lstm_whh"] = 0.1 * jax.random.normal(
        ks[5], (4 * time_step, time_step), jnp.float32)
    # NOTE: represents b_ih + b_hh pre-summed (sum both when porting real weights).
    p["lstm_b"] = 0.1 * jax.random.normal(ks[6], (4 * time_step,), jnp.float32)
    p["conv3_w"] = 0.1 * jax.random.normal(
        ks[7], (filters_num, time_step, h), jnp.float32)
    p["conv3_b"] = jnp.zeros((filters_num,), jnp.float32)
    p["bn2_g"] = jnp.ones((filters_num,), jnp.float32)
    p["bn2_b"] = jnp.zeros((filters_num,), jnp.float32)
    p["fc_w"] = 0.1 * jax.random.normal(
        ks[8], (n_class, filters_num), jnp.float32)
    p["fc_b"] = jnp.zeros((n_class,), jnp.float32)
    return p


# ---------------------------------------------------------------------------
# Forward wrapper: layout plumbing in XLA + one pallas_call (8 operands).
# ---------------------------------------------------------------------------
def tsem_seq_forward(x, params, *, time_step, features, filters_num, n_class,
                     window_size=0.2):
    B = x.shape[0]
    T, F, Cf = time_step, features, filters_num
    H = T                                     # LSTM hidden size == time_step
    conv_h = int(window_size * T)
    pad_b = (conv_h - 1) // 2                 # PyTorch 'same': left = total // 2
    pad_a = (conv_h - 1) - pad_b
    Tp = T + conv_h - 1
    FC = F * Cf
    f32 = jnp.float32

    # Stage-1 input: time-major, time-padded, channel-replicated, lane-dense.
    #   x_rep[(t, b), f*Cf + c] = x_pad[t, b, f]
    x_tbf = jnp.transpose(x[:, 0, :, :], (1, 0, 2)).astype(f32)         # (T, B, F)
    x_pad = jnp.pad(x_tbf, ((pad_b, pad_a), (0, 0), (0, 0)))            # (Tp, B, F)
    x_rep = jnp.broadcast_to(x_pad[..., None],
                             (Tp, B, F, Cf)).reshape(Tp * B, FC)

    # Stage-1 weights: row 0 = conv bias tiled across F; rows 1..h = taps tiled.
    w1_taps = params["conv1_w"].T                                        # (h, Cf)
    w1pack = jnp.concatenate(
        [jnp.tile(params["conv1_b"][None, :], (1, F)),
         jnp.tile(w1_taps, (1, F))], axis=0)                             # (h+1, FC)

    # 1x1 conv (Cf -> 1) as a block-diagonal (FC, F) matrix: one MXU dispatch.
    w2blk = (jnp.eye(F, dtype=f32)[:, None, :] *
             params["conv2_w"][None, :, None]).reshape(FC, F)

    # LSTM weights (all f32; recurrence runs on the VPU in-kernel).
    wih = params["lstm_wih"].T                                           # (F, 4H)
    whh = params["lstm_whh"].T                                           # (H, 4H)

    # Stage-3 conv as one matmul: wc_flat[k*T + t, c] = conv3_w[c, t, k].
    wc_flat = jnp.transpose(params["conv3_w"], (2, 1, 0)).reshape(conv_h * H, Cf)

    wfc = params["fc_w"].T                                               # (Cf, n_class)

    # All small per-channel / bias vectors packed into one padded (8, WV) array.
    WV = max(4 * H, Cf, n_class, F)

    def _row(v):
        v = v.reshape(1, -1).astype(f32)
        return jnp.pad(v, ((0, 0), (0, WV - v.shape[1])))

    vecpack = jnp.concatenate([
        _row(params["bn1_g"]),                                           # 0: BN2d gamma (Cf)
        _row(params["bn1_b"]),                                           # 1: BN2d beta  (Cf)
        jnp.broadcast_to(params["conv2_b"].reshape(1, 1).astype(f32),
                         (1, WV)),                                       # 2: conv2 bias
        _row(params["lstm_b"]),                                          # 3: b_ih+b_hh  (4H)
        _row(params["conv3_b"]),                                         # 4: conv3 bias (Cf)
        _row(params["bn2_g"]),                                           # 5: BN1d gamma (Cf)
        _row(params["bn2_b"]),                                           # 6: BN1d beta  (Cf)
        _row(params["fc_b"]),                                            # 7: fc bias    (n_class)
    ], axis=0)

    kernel = functools.partial(
        _tsem_fused_kernel, B=B, T=T, F=F, Cf=Cf, H=H, n_class=n_class,
        conv_h=conv_h, pad_b=pad_b, pad_a=pad_a)
    return pl.pallas_call(
        kernel,
        out_shape=jax.ShapeDtypeStruct((B, n_class), f32),
        in_specs=[_vmem()] * 8,
        out_specs=_vmem(),
    )(x_rep, w1pack, w2blk, wih, whh, wc_flat, wfc, vecpack)


if __name__ == "__main__":
    B, T, F = 2, 16, 16          # batch, time_step, features_size
    Cf, n_class = 32, 8          # filters_num, n_class
    key = jax.random.PRNGKey(0)
    k_x, k_p = jax.random.split(key)
    x = jax.random.normal(k_x, (B, 1, T, F), jnp.float32)        # NCHW, C=1
    params = init_params(k_p, T, F, Cf, n_class)

    fwd = jax.jit(functools.partial(tsem_seq_forward, time_step=T, features=F,
                                    filters_num=Cf, n_class=n_class))
    out = jax.block_until_ready(fwd(x, params))

    assert out.shape == (B, n_class)
    assert bool(jnp.all(jnp.isfinite(out)))
    # softmax rows must sum to 1
    assert bool(jnp.allclose(jnp.sum(out, axis=1), 1.0, atol=1e-4))
    print("KERNEL_OK")
</pallas_src>

<mosaic_0001>
module attributes {stable_mosaic.version = 11 : i64} {
  func.func @_tsem_fused_kernel(%arg0: memref<36x512xf32, #tpu.memory_space<vmem>>, %arg1: memref<4x512xf32, #tpu.memory_space<vmem>>, %arg2: memref<512x16xf32, #tpu.memory_space<vmem>>, %arg3: memref<16x64xf32, #tpu.memory_space<vmem>>, %arg4: memref<16x64xf32, #tpu.memory_space<vmem>>, %arg5: memref<48x32xf32, #tpu.memory_space<vmem>>, %arg6: memref<32x8xf32, #tpu.memory_space<vmem>>, %arg7: memref<8x64xf32, #tpu.memory_space<vmem>>, %arg8: memref<2x8xf32, #tpu.memory_space<vmem>>) attributes {dimension_semantics = [], scalar_prefetch = 0 : i64, scratch_operands = 0 : i64, tpu.core_type = #tpu.core_type<tc>} {
    %c0 = arith.constant 0 : index
    %c0_0 = arith.constant 0 : index
    %0 = vector.load %arg0[%c0, %c0_0] : memref<36x512xf32, #tpu.memory_space<vmem>>, vector<32x512xf32>
    %c1 = arith.constant 1 : index
    %c0_1 = arith.constant 0 : index
    %1 = vector.load %arg1[%c1, %c0_1] : memref<4x512xf32, #tpu.memory_space<vmem>>, vector<1x512xf32>
    %2 = vector.broadcast %1 : vector<1x512xf32> to vector<32x512xf32>
    %3 = arith.mulf %0, %2 : vector<32x512xf32>
    %c0_2 = arith.constant 0 : index
    %c0_3 = arith.constant 0 : index
    %4 = vector.load %arg1[%c0_2, %c0_3] : memref<4x512xf32, #tpu.memory_space<vmem>>, vector<1x512xf32>
    %5 = vector.broadcast %4 : vector<1x512xf32> to vector<32x512xf32>
    %6 = arith.addf %3, %5 : vector<32x512xf32>
    %c2 = arith.constant 2 : index
    %c0_4 = arith.constant 0 : index
    %7 = vector.load %arg0[%c2, %c0_4] : memref<36x512xf32, #tpu.memory_space<vmem>>, vector<32x512xf32>
    %c2_5 = arith.constant 2 : index
    %c0_6 = arith.constant 0 : index
    %8 = vector.load %arg1[%c2_5, %c0_6] : memref<4x512xf32, #tpu.memory_space<vmem>>, vector<1x512xf32>
    %9 = vector.broadcast %8 : vector<1x512xf32> to vector<32x512xf32>
    %10 = arith.mulf %7, %9 : vector<32x512xf32>
    %11 = arith.addf %6, %10 : vector<32x512xf32>
    %c4 = arith.constant 4 : index
    %c0_7 = arith.constant 0 : index
    %12 = vector.load %arg0[%c4, %c0_7] : memref<36x512xf32, #tpu.memory_space<vmem>>, vector<32x512xf32>
    %c3 = arith.constant 3 : index
    %c0_8 = arith.constant 0 : index
    %13 = vector.load %arg1[%c3, %c0_8] : memref<4x512xf32, #tpu.memory_space<vmem>>, vector<1x512xf32>
    %14 = vector.broadcast %13 : vector<1x512xf32> to vector<32x512xf32>
    %15 = arith.mulf %12, %14 : vector<32x512xf32>
    %16 = arith.addf %11, %15 : vector<32x512xf32>
    %cst = arith.constant dense<0.000000e+00> : vector<512xf32>
    %17 = vector.multi_reduction <add>, %16, %cst [0] : vector<32x512xf32> to vector<512xf32>
    %18 = vector.shape_cast %17 : vector<512xf32> to vector<1x512xf32>
    %19 = arith.mulf %16, %16 : vector<32x512xf32>
    %cst_9 = arith.constant dense<0.000000e+00> : vector<512xf32>
    %20 = vector.multi_reduction <add>, %19, %cst_9 [0] : vector<32x512xf32> to vector<512xf32>
    %21 = vector.shape_cast %20 : vector<512xf32> to vector<1x512xf32>
    %22 = tpu.concatenate %18, %21 in 0 : vector<1x512xf32>, vector<1x512xf32> -> vector<2x512xf32>
    %23 = vector.extract_strided_slice %22 {offsets = [0, 0], sizes = [2, 32], strides = [1, 1]} : vector<2x512xf32> to vector<2x32xf32>
    %24 = vector.extract_strided_slice %22 {offsets = [0, 32], sizes = [2, 32], strides = [1, 1]} : vector<2x512xf32> to vector<2x32xf32>
    %25 = vector.extract_strided_slice %22 {offsets = [0, 64], sizes = [2, 32], strides = [1, 1]} : vector<2x512xf32> to vector<2x32xf32>
    %26 = vector.extract_strided_slice %22 {offsets = [0, 96], sizes = [2, 32], strides = [1, 1]} : vector<2x512xf32> to vector<2x32xf32>
    %27 = vector.extract_strided_slice %22 {offsets = [0, 128], sizes = [2, 32], strides = [1, 1]} : vector<2x512xf32> to vector<2x32xf32>
    %28 = vector.extract_strided_slice %22 {offsets = [0, 160], sizes = [2, 32], strides = [1, 1]} : vector<2x512xf32> to vector<2x32xf32>
    %29 = vector.extract_strided_slice %22 {offsets = [0, 192], sizes = [2, 32], strides = [1, 1]} : vector<2x512xf32> to vector<2x32xf32>
    %30 = vector.extract_strided_slice %22 {offsets = [0, 224], sizes = [2, 32], strides = [1, 1]} : vector<2x512xf32> to vector<2x32xf32>
    %31 = vector.extract_strided_slice %22 {offsets = [0, 256], sizes = [2, 32], strides = [1, 1]} : vector<2x512xf32> to vector<2x32xf32>
    %32 = vector.extract_strided_slice %22 {offsets = [0, 288], sizes = [2, 32], strides = [1, 1]} : vector<2x512xf32> to vector<2x32xf32>
    %33 = vector.extract_strided_slice %22 {offsets = [0, 320], sizes = [2, 32], strides = [1, 1]} : vector<2x512xf32> to vector<2x32xf32>
    %34 = vector.extract_strided_slice %22 {offsets = [0, 352], sizes = [2, 32], strides = [1, 1]} : vector<2x512xf32> to vector<2x32xf32>
    %35 = vector.extract_strided_slice %22 {offsets = [0, 384], sizes = [2, 32], strides = [1, 1]} : vector<2x512xf32> to vector<2x32xf32>
    %36 = vector.extract_strided_slice %22 {offsets = [0, 416], sizes = [2, 32], strides = [1, 1]} : vector<2x512xf32> to vector<2x32xf32>
    %37 = vector.extract_strided_slice %22 {offsets = [0, 448], sizes = [2, 32], strides = [1, 1]} : vector<2x512xf32> to vector<2x32xf32>
    %38 = vector.extract_strided_slice %22 {offsets = [0, 480], sizes = [2, 32], strides = [1, 1]} : vector<2x512xf32> to vector<2x32xf32>
    %39 = arith.addf %23, %24 : vector<2x32xf32>
    %40 = arith.addf %25, %26 : vector<2x32xf32>
    %41 = arith.addf %27, %28 : vector<2x32xf32>
    %42 = arith.addf %29, %30 : vector<2x32xf32>
    %43 = arith.addf %31, %32 : vector<2x32xf32>
    %44 = arith.addf %33, %34 : vector<2x32xf32>
    %45 = arith.addf %35, %36 : vector<2x32xf32>
    %46 = arith.addf %37, %38 : vector<2x32xf32>
    %47 = arith.addf %39, %40 : vector<2x32xf32>
    %48 = arith.addf %41, %42 : vector<2x32xf32>
    %49 = arith.addf %43, %44 : vector<2x32xf32>
    %50 = arith.addf %45, %46 : vector<2x32xf32>
    %51 = arith.addf %47, %48 : vector<2x32xf32>
    %52 = arith.addf %49, %50 : vector<2x32xf32>
    %53 = arith.addf %51, %52 : vector<2x32xf32>
    %54 = vector.extract_strided_slice %53 {offsets = [0, 0], sizes = [1, 32], strides = [1, 1]} : vector<2x32xf32> to vector<1x32xf32>
    %cst_10 = arith.constant 5.120000e+02 : f32
    %55 = vector.broadcast %cst_10 : f32 to vector<1x32xf32>
    %56 = arith.divf %54, %55 : vector<1x32xf32>
    %57 = vector.extract_strided_slice %53 {offsets = [1, 0], sizes = [1, 32], strides = [1, 1]} : vector<2x32xf32> to vector<1x32xf32>
    %cst_11 = arith.constant 5.120000e+02 : f32
    %58 = vector.broadcast %cst_11 : f32 to vector<1x32xf32>
    %59 = arith.divf %57, %58 : vector<1x32xf32>
    %60 = arith.mulf %56, %56 : vector<1x32xf32>
    %61 = arith.subf %59, %60 : vector<1x32xf32>
    %c0_12 = arith.constant 0 : index
    %c0_13 = arith.constant 0 : index
    %62 = vector.load %arg7[%c0_12, %c0_13] : memref<8x64xf32, #tpu.memory_space<vmem>>, vector<1x32xf32>
    %cst_14 = arith.constant 9.99999974E-6 : f32
    %63 = vector.broadcast %cst_14 : f32 to vector<1x32xf32>
    %64 = arith.addf %61, %63 : vector<1x32xf32>
    %65 = math.rsqrt %64 : vector<1x32xf32>
    %66 = arith.mulf %62, %65 : vector<1x32xf32>
    %c1_15 = arith.constant 1 : index
    %c0_16 = arith.constant 0 : index
    %67 = vector.load %arg7[%c1_15, %c0_16] : memref<8x64xf32, #tpu.memory_space<vmem>>, vector<1x32xf32>
    %68 = arith.mulf %56, %66 : vector<1x32xf32>
    %69 = arith.subf %67, %68 : vector<1x32xf32>
    %70 = tpu.concatenate %66, %69 in 0 : vector<1x32xf32>, vector<1x32xf32> -> vector<2x32xf32>
    %71 = tpu.concatenate %70, %70, %70, %70, %70, %70, %70, %70, %70, %70, %70, %70, %70, %70, %70, %70 in 1 : vector<2x32xf32>, vector<2x32xf32>, vector<2x32xf32>, vector<2x32xf32>, vector<2x32xf32>, vector<2x32xf32>, vector<2x32xf32>, vector<2x32xf32>, vector<2x32xf32>, vector<2x32xf32>, vector<2x32xf32>, vector<2x32xf32>, vector<2x32xf32>, vector<2x32xf32>, vector<2x32xf32>, vector<2x32xf32> -> vector<2x512xf32>
    %72 = vector.extract_strided_slice %71 {offsets = [0, 0], sizes = [1, 512], strides = [1, 1]} : vector<2x512xf32> to vector<1x512xf32>
    %73 = vector.broadcast %72 : vector<1x512xf32> to vector<32x512xf32>
    %74 = arith.mulf %16, %73 : vector<32x512xf32>
    %75 = vector.extract_strided_slice %71 {offsets = [1, 0], sizes = [1, 512], strides = [1, 1]} : vector<2x512xf32> to vector<1x512xf32>
    %76 = vector.broadcast %75 : vector<1x512xf32> to vector<32x512xf32>
    %77 = arith.addf %74, %76 : vector<32x512xf32>
    %cst_17 = arith.constant 0.000000e+00 : f32
    %78 = vector.broadcast %cst_17 : f32 to vector<32x512xf32>
    %79 = arith.maximumf %77, %78 : vector<32x512xf32>
    %c0_18 = arith.constant 0 : index
    %c0_19 = arith.constant 0 : index
    %80 = vector.load %arg2[%c0_18, %c0_19] : memref<512x16xf32, #tpu.memory_space<vmem>>, vector<512x16xf32>
    %cst_20 = arith.constant dense<0.000000e+00> : vector<32x16xf32>
    %81 = tpu.matmul %79, %80, %cst_20 {dimension_numbers = #tpu.dot_dimension_numbers<[1], [0], [0], [1], [0, 0, 1, 1], [], []>} : vector<32x512xf32>, vector<512x16xf32>, vector<32x16xf32> -> vector<32x16xf32>
    %c2_21 = arith.constant 2 : index
    %c0_22 = arith.constant 0 : index
    %82 = vector.load %arg7[%c2_21, %c0_22] : memref<8x64xf32, #tpu.memory_space<vmem>>, vector<1x16xf32>
    %83 = vector.broadcast %82 : vector<1x16xf32> to vector<32x16xf32>
    %84 = arith.addf %81, %83 : vector<32x16xf32>
    %cst_23 = arith.constant 0.000000e+00 : f32
    %85 = vector.broadcast %cst_23 : f32 to vector<32x16xf32>
    %86 = arith.maximumf %84, %85 : vector<32x16xf32>
    %c0_24 = arith.constant 0 : index
    %c0_25 = arith.constant 0 : index
    %87 = vector.load %arg3[%c0_24, %c0_25] : memref<16x64xf32, #tpu.memory_space<vmem>>, vector<16x64xf32>
    %cst_26 = arith.constant dense<0.000000e+00> : vector<32x64xf32>
    %88 = tpu.matmul %86, %87, %cst_26 {dimension_numbers = #tpu.dot_dimension_numbers<[1], [0], [0], [1], [0, 0, 1, 1], [], []>} : vector<32x16xf32>, vector<16x64xf32>, vector<32x64xf32> -> vector<32x64xf32>
    %c3_27 = arith.constant 3 : index
    %c0_28 = arith.constant 0 : index
    %89 = vector.load %arg7[%c3_27, %c0_28] : memref<8x64xf32, #tpu.memory_space<vmem>>, vector<1x64xf32>
    %90 = vector.broadcast %89 : vector<1x64xf32> to vector<32x64xf32>
    %91 = arith.addf %88, %90 : vector<32x64xf32>
    %c0_29 = arith.constant 0 : index
    %c0_30 = arith.constant 0 : index
    %92 = vector.load %arg4[%c0_29, %c0_30] : memref<16x64xf32, #tpu.memory_space<vmem>>, vector<16x64xf32>
    %cst_31 = arith.constant 0.000000e+00 : f32
    %93 = vector.broadcast %cst_31 : f32 to vector<2x16xf32>
    %94 = vector.extract_strided_slice %91 {offsets = [0, 0], sizes = [2, 64], strides = [1, 1]} : vector<32x64xf32> to vector<2x64xf32>
    %95 = arith.negf %94 : vector<2x64xf32>
    %96 = math.exp %95 : vector<2x64xf32>
    %cst_32 = arith.constant 1.000000e+00 : f32
    %97 = vector.broadcast %cst_32 : f32 to vector<2x64xf32>
    %98 = arith.addf %97, %96 : vector<2x64xf32>
    %99 = arith.divf %97, %98 : vector<2x64xf32>
    %100 = vector.extract_strided_slice %99 {offsets = [0, 0], sizes = [2, 16], strides = [1, 1]} : vector<2x64xf32> to vector<2x16xf32>
    %101 = vector.extract_strided_slice %99 {offsets = [0, 16], sizes = [2, 16], strides = [1, 1]} : vector<2x64xf32> to vector<2x16xf32>
    %102 = vector.extract_strided_slice %99 {offsets = [0, 48], sizes = [2, 16], strides = [1, 1]} : vector<2x64xf32> to vector<2x16xf32>
    %103 = vector.extract_strided_slice %94 {offsets = [0, 32], sizes = [2, 16], strides = [1, 1]} : vector<2x64xf32> to vector<2x16xf32>
    %104 = math.tanh %103 : vector<2x16xf32>
    %105 = arith.mulf %101, %93 : vector<2x16xf32>
    %106 = arith.mulf %100, %104 : vector<2x16xf32>
    %107 = arith.addf %105, %106 : vector<2x16xf32>
    %108 = math.tanh %107 : vector<2x16xf32>
    %109 = arith.mulf %102, %108 : vector<2x16xf32>
    %110 = vector.extract_strided_slice %91 {offsets = [2, 0], sizes = [2, 64], strides = [1, 1]} : vector<32x64xf32> to vector<2x64xf32>
    %111 = vector.extract_strided_slice %109 {offsets = [0, 0], sizes = [2, 1], strides = [1, 1]} : vector<2x16xf32> to vector<2x1xf32>
    %112 = vector.extract_strided_slice %92 {offsets = [0, 0], sizes = [1, 64], strides = [1, 1]} : vector<16x64xf32> to vector<1x64xf32>
    %113 = vector.broadcast %111 : vector<2x1xf32> to vector<2x64xf32>
    %114 = vector.broadcast %112 : vector<1x64xf32> to vector<2x64xf32>
    %115 = arith.mulf %113, %114 : vector<2x64xf32>
    %116 = vector.extract_strided_slice %109 {offsets = [0, 1], sizes = [2, 1], strides = [1, 1]} : vector<2x16xf32> to vector<2x1xf32>
    %117 = vector.extract_strided_slice %92 {offsets = [1, 0], sizes = [1, 64], strides = [1, 1]} : vector<16x64xf32> to vector<1x64xf32>
    %118 = vector.broadcast %116 : vector<2x1xf32> to vector<2x64xf32>
    %119 = vector.broadcast %117 : vector<1x64xf32> to vector<2x64xf32>
    %120 = arith.mulf %118, %119 : vector<2x64xf32>
    %121 = vector.extract_strided_slice %109 {offsets = [0, 2], sizes = [2, 1], strides = [1, 1]} : vector<2x16xf32> to vector<2x1xf32>
    %122 = vector.extract_strided_slice %92 {offsets = [2, 0], sizes = [1, 64], strides = [1, 1]} : vector<16x64xf32> to vector<1x64xf32>
    %123 = vector.broadcast %121 : vector<2x1xf32> to vector<2x64xf32>
    %124 = vector.broadcast %122 : vector<1x64xf32> to vector<2x64xf32>
    %125 = arith.mulf %123, %124 : vector<2x64xf32>
    %126 = vector.extract_strided_slice %109 {offsets = [0, 3], sizes = [2, 1], strides = [1, 1]} : vector<2x16xf32> to vector<2x1xf32>
    %127 = vector.extract_strided_slice %92 {offsets = [3, 0], sizes = [1, 64], strides = [1, 1]} : vector<16x64xf32> to vector<1x64xf32>
    %128 = vector.broadcast %126 : vector<2x1xf32> to vector<2x64xf32>
    %129 = vector.broadcast %127 : vector<1x64xf32> to vector<2x64xf32>
    %130 = arith.mulf %128, %129 : vector<2x64xf32>
    %131 = vector.extract_strided_slice %109 {offsets = [0, 4], sizes = [2, 1], strides = [1, 1]} : vector<2x16xf32> to vector<2x1xf32>
    %132 = vector.extract_strided_slice %92 {offsets = [4, 0], sizes = [1, 64], strides = [1, 1]} : vector<16x64xf32> to vector<1x64xf32>
    %133 = vector.broadcast %131 : vector<2x1xf32> to vector<2x64xf32>
    %134 = vector.broadcast %132 : vector<1x64xf32> to vector<2x64xf32>
    %135 = arith.mulf %133, %134 : vector<2x64xf32>
    %136 = vector.extract_strided_slice %109 {offsets = [0, 5], sizes = [2, 1], strides = [1, 1]} : vector<2x16xf32> to vector<2x1xf32>
    %137 = vector.extract_strided_slice %92 {offsets = [5, 0], sizes = [1, 64], strides = [1, 1]} : vector<16x64xf32> to vector<1x64xf32>
    %138 = vector.broadcast %136 : vector<2x1xf32> to vector<2x64xf32>
    %139 = vector.broadcast %137 : vector<1x64xf32> to vector<2x64xf32>
    %140 = arith.mulf %138, %139 : vector<2x64xf32>
    %141 = vector.extract_strided_slice %109 {offsets = [0, 6], sizes = [2, 1], strides = [1, 1]} : vector<2x16xf32> to vector<2x1xf32>
    %142 = vector.extract_strided_slice %92 {offsets = [6, 0], sizes = [1, 64], strides = [1, 1]} : vector<16x64xf32> to vector<1x64xf32>
    %143 = vector.broadcast %141 : vector<2x1xf32> to vector<2x64xf32>
    %144 = vector.broadcast %142 : vector<1x64xf32> to vector<2x64xf32>
    %145 = arith.mulf %143, %144 : vector<2x64xf32>
    %146 = vector.extract_strided_slice %109 {offsets = [0, 7], sizes = [2, 1], strides = [1, 1]} : vector<2x16xf32> to vector<2x1xf32>
    %147 = vector.extract_strided_slice %92 {offsets = [7, 0], sizes = [1, 64], strides = [1, 1]} : vector<16x64xf32> to vector<1x64xf32>
    %148 = vector.broadcast %146 : vector<2x1xf32> to vector<2x64xf32>
    %149 = vector.broadcast %147 : vector<1x64xf32> to vector<2x64xf32>
    %150 = arith.mulf %148, %149 : vector<2x64xf32>
    %151 = vector.extract_strided_slice %109 {offsets = [0, 8], sizes = [2, 1], strides = [1, 1]} : vector<2x16xf32> to vector<2x1xf32>
    %152 = vector.extract_strided_slice %92 {offsets = [8, 0], sizes = [1, 64], strides = [1, 1]} : vector<16x64xf32> to vector<1x64xf32>
    %153 = vector.broadcast %151 : vector<2x1xf32> to vector<2x64xf32>
    %154 = vector.broadcast %152 : vector<1x64xf32> to vector<2x64xf32>
    %155 = arith.mulf %153, %154 : vector<2x64xf32>
    %156 = vector.extract_strided_slice %109 {offsets = [0, 9], sizes = [2, 1], strides = [1, 1]} : vector<2x16xf32> to vector<2x1xf32>
    %157 = vector.extract_strided_slice %92 {offsets = [9, 0], sizes = [1, 64], strides = [1, 1]} : vector<16x64xf32> to vector<1x64xf32>
    %158 = vector.broadcast %156 : vector<2x1xf32> to vector<2x64xf32>
    %159 = vector.broadcast %157 : vector<1x64xf32> to vector<2x64xf32>
    %160 = arith.mulf %158, %159 : vector<2x64xf32>
    %161 = vector.extract_strided_slice %109 {offsets = [0, 10], sizes = [2, 1], strides = [1, 1]} : vector<2x16xf32> to vector<2x1xf32>
    %162 = vector.extract_strided_slice %92 {offsets = [10, 0], sizes = [1, 64], strides = [1, 1]} : vector<16x64xf32> to vector<1x64xf32>
    %163 = vector.broadcast %161 : vector<2x1xf32> to vector<2x64xf32>
    %164 = vector.broadcast %162 : vector<1x64xf32> to vector<2x64xf32>
    %165 = arith.mulf %163, %164 : vector<2x64xf32>
    %166 = vector.extract_strided_slice %109 {offsets = [0, 11], sizes = [2, 1], strides = [1, 1]} : vector<2x16xf32> to vector<2x1xf32>
    %167 = vector.extract_strided_slice %92 {offsets = [11, 0], sizes = [1, 64], strides = [1, 1]} : vector<16x64xf32> to vector<1x64xf32>
    %168 = vector.broadcast %166 : vector<2x1xf32> to vector<2x64xf32>
    %169 = vector.broadcast %167 : vector<1x64xf32> to vector<2x64xf32>
    %170 = arith.mulf %168, %169 : vector<2x64xf32>
    %171 = vector.extract_strided_slice %109 {offsets = [0, 12], sizes = [2, 1], strides = [1, 1]} : vector<2x16xf32> to vector<2x1xf32>
    %172 = vector.extract_strided_slice %92 {offsets = [12, 0], sizes = [1, 64], strides = [1, 1]} : vector<16x64xf32> to vector<1x64xf32>
    %173 = vector.broadcast %171 : vector<2x1xf32> to vector<2x64xf32>
    %174 = vector.broadcast %172 : vector<1x64xf32> to vector<2x64xf32>
    %175 = arith.mulf %173, %174 : vector<2x64xf32>
    %176 = vector.extract_strided_slice %109 {offsets = [0, 13], sizes = [2, 1], strides = [1, 1]} : vector<2x16xf32> to vector<2x1xf32>
    %177 = vector.extract_strided_slice %92 {offsets = [13, 0], sizes = [1, 64], strides = [1, 1]} : vector<16x64xf32> to vector<1x64xf32>
    %178 = vector.broadcast %176 : vector<2x1xf32> to vector<2x64xf32>
    %179 = vector.broadcast %177 : vector<1x64xf32> to vector<2x64xf32>
    %180 = arith.mulf %178, %179 : vector<2x64xf32>
    %181 = vector.extract_strided_slice %109 {offsets = [0, 14], sizes = [2, 1], strides = [1, 1]} : vector<2x16xf32> to vector<2x1xf32>
    %182 = vector.extract_strided_slice %92 {offsets = [14, 0], sizes = [1, 64], strides = [1, 1]} : vector<16x64xf32> to vector<1x64xf32>
    %183 = vector.broadcast %181 : vector<2x1xf32> to vector<2x64xf32>
    %184 = vector.broadcast %182 : vector<1x64xf32> to vector<2x64xf32>
    %185 = arith.mulf %183, %184 : vector<2x64xf32>
    %186 = vector.extract_strided_slice %109 {offsets = [0, 15], sizes = [2, 1], strides = [1, 1]} : vector<2x16xf32> to vector<2x1xf32>
    %187 = vector.extract_strided_slice %92 {offsets = [15, 0], sizes = [1, 64], strides = [1, 1]} : vector<16x64xf32> to vector<1x64xf32>
    %188 = vector.broadcast %186 : vector<2x1xf32> to vector<2x64xf32>
    %189 = vector.broadcast %187 : vector<1x64xf32> to vector<2x64xf32>
    %190 = arith.mulf %188, %189 : vector<2x64xf32>
    %191 = arith.addf %110, %115 : vector<2x64xf32>
    %192 = arith.addf %120, %125 : vector<2x64xf32>
    %193 = arith.addf %130, %135 : vector<2x64xf32>
    %194 = arith.addf %140, %145 : vector<2x64xf32>
    %195 = arith.addf %150, %155 : vector<2x64xf32>
    %196 = arith.addf %160, %165 : vector<2x64xf32>
    %197 = arith.addf %170, %175 : vector<2x64xf32>
    %198 = arith.addf %180, %185 : vector<2x64xf32>
    %199 = arith.addf %191, %192 : vector<2x64xf32>
    %200 = arith.addf %193, %194 : vector<2x64xf32>
    %201 = arith.addf %195, %196 : vector<2x64xf32>
    %202 = arith.addf %197, %198 : vector<2x64xf32>
    %203 = arith.addf %199, %200 : vector<2x64xf32>
    %204 = arith.addf %201, %202 : vector<2x64xf32>
    %205 = arith.addf %203, %204 : vector<2x64xf32>
    %206 = arith.addf %205, %190 : vector<2x64xf32>
    %207 = arith.negf %206 : vector<2x64xf32>
    %208 = math.exp %207 : vector<2x64xf32>
    %cst_33 = arith.constant 1.000000e+00 : f32
    %209 = vector.broadcast %cst_33 : f32 to vector<2x64xf32>
    %210 = arith.addf %209, %208 : vector<2x64xf32>
    %211 = arith.divf %209, %210 : vector<2x64xf32>
    %212 = vector.extract_strided_slice %211 {offsets = [0, 0], sizes = [2, 16], strides = [1, 1]} : vector<2x64xf32> to vector<2x16xf32>
    %213 = vector.extract_strided_slice %211 {offsets = [0, 16], sizes = [2, 16], strides = [1, 1]} : vector<2x64xf32> to vector<2x16xf32>
    %214 = vector.extract_strided_slice %211 {offsets = [0, 48], sizes = [2, 16], strides = [1, 1]} : vector<2x64xf32> to vector<2x16xf32>
    %215 = vector.extract_strided_slice %206 {offsets = [0, 32], sizes = [2, 16], strides = [1, 1]} : vector<2x64xf32> to vector<2x16xf32>
    %216 = math.tanh %215 : vector<2x16xf32>
    %217 = arith.mulf %213, %107 : vector<2x16xf32>
    %218 = arith.mulf %212, %216 : vector<2x16xf32>
    %219 = arith.addf %217, %218 : vector<2x16xf32>
    %220 = math.tanh %219 : vector<2x16xf32>
    %221 = arith.mulf %214, %220 : vector<2x16xf32>
    %222 = vector.extract_strided_slice %91 {offsets = [4, 0], sizes = [2, 64], strides = [1, 1]} : vector<32x64xf32> to vector<2x64xf32>
    %223 = vector.extract_strided_slice %221 {offsets = [0, 0], sizes = [2, 1], strides = [1, 1]} : vector<2x16xf32> to vector<2x1xf32>
    %224 = vector.extract_strided_slice %92 {offsets = [0, 0], sizes = [1, 64], strides = [1, 1]} : vector<16x64xf32> to vector<1x64xf32>
    %225 = vector.broadcast %223 : vector<2x1xf32> to vector<2x64xf32>
    %226 = vector.broadcast %224 : vector<1x64xf32> to vector<2x64xf32>
    %227 = arith.mulf %225, %226 : vector<2x64xf32>
    %228 = vector.extract_strided_slice %221 {offsets = [0, 1], sizes = [2, 1], strides = [1, 1]} : vector<2x16xf32> to vector<2x1xf32>
    %229 = vector.extract_strided_slice %92 {offsets = [1, 0], sizes = [1, 64], strides = [1, 1]} : vector<16x64xf32> to vector<1x64xf32>
    %230 = vector.broadcast %228 : vector<2x1xf32> to vector<2x64xf32>
    %231 = vector.broadcast %229 : vector<1x64xf32> to vector<2x64xf32>
    %232 = arith.mulf %230, %231 : vector<2x64xf32>
    %233 = vector.extract_strided_slice %221 {offsets = [0, 2], sizes = [2, 1], strides = [1, 1]} : vector<2x16xf32> to vector<2x1xf32>
    %234 = vector.extract_strided_slice %92 {offsets = [2, 0], sizes = [1, 64], strides = [1, 1]} : vector<16x64xf32> to vector<1x64xf32>
    %235 = vector.broadcast %233 : vector<2x1xf32> to vector<2x64xf32>
    %236 = vector.broadcast %234 : vector<1x64xf32> to vector<2x64xf32>
    %237 = arith.mulf %235, %236 : vector<2x64xf32>
    %238 = vector.extract_strided_slice %221 {offsets = [0, 3], sizes = [2, 1], strides = [1, 1]} : vector<2x16xf32> to vector<2x1xf32>
    %239 = vector.extract_strided_slice %92 {offsets = [3, 0], sizes = [1, 64], strides = [1, 1]} : vector<16x64xf32> to vector<1x64xf32>
    %240 = vector.broadcast %238 : vector<2x1xf32> to vector<2x64xf32>
    %241 = vector.broadcast %239 : vector<1x64xf32> to vector<2x64xf32>
    %242 = arith.mulf %240, %241 : vector<2x64xf32>
    %243 = vector.extract_strided_slice %221 {offsets = [0, 4], sizes = [2, 1], strides = [1, 1]} : vector<2x16xf32> to vector<2x1xf32>
    %244 = vector.extract_strided_slice %92 {offsets = [4, 0], sizes = [1, 64], strides = [1, 1]} : vector<16x64xf32> to vector<1x64xf32>
    %245 = vector.broadcast %243 : vector<2x1xf32> to vector<2x64xf32>
    %246 = vector.broadcast %244 : vector<1x64xf32> to vector<2x64xf32>
    %247 = arith.mulf %245, %246 : vector<2x64xf32>
    %248 = vector.extract_strided_slice %221 {offsets = [0, 5], sizes = [2, 1], strides = [1, 1]} : vector<2x16xf32> to vector<2x1xf32>
    %249 = vector.extract_strided_slice %92 {offsets = [5, 0], sizes = [1, 64], strides = [1, 1]} : vector<16x64xf32> to vector<1x64xf32>
    %250 = vector.broadcast %248 : vector<2x1xf32> to vector<2x64xf32>
    %251 = vector.broadcast %249 : vector<1x64xf32> to vector<2x64xf32>
    %252 = arith.mulf %250, %251 : vector<2x64xf32>
    %253 = vector.extract_strided_slice %221 {offsets = [0, 6], sizes = [2, 1], strides = [1, 1]} : vector<2x16xf32> to vector<2x1xf32>
    %254 = vector.extract_strided_slice %92 {offsets = [6, 0], sizes = [1, 64], strides = [1, 1]} : vector<16x64xf32> to vector<1x64xf32>
    %255 = vector.broadcast %253 : vector<2x1xf32> to vector<2x64xf32>
    %256 = vector.broadcast %254 : vector<1x64xf32> to vector<2x64xf32>
    %257 = arith.mulf %255, %256 : vector<2x64xf32>
    %258 = vector.extract_strided_slice %221 {offsets = [0, 7], sizes = [2, 1], strides = [1, 1]} : vector<2x16xf32> to vector<2x1xf32>
    %259 = vector.extract_strided_slice %92 {offsets = [7, 0], sizes = [1, 64], strides = [1, 1]} : vector<16x64xf32> to vector<1x64xf32>
    %260 = vector.broadcast %258 : vector<2x1xf32> to vector<2x64xf32>
    %261 = vector.broadcast %259 : vector<1x64xf32> to vector<2x64xf32>
    %262 = arith.mulf %260, %261 : vector<2x64xf32>
    %263 = vector.extract_strided_slice %221 {offsets = [0, 8], sizes = [2, 1], strides = [1, 1]} : vector<2x16xf32> to vector<2x1xf32>
    %264 = vector.extract_strided_slice %92 {offsets = [8, 0], sizes = [1, 64], strides = [1, 1]} : vector<16x64xf32> to vector<1x64xf32>
    %265 = vector.broadcast %263 : vector<2x1xf32> to vector<2x64xf32>
    %266 = vector.broadcast %264 : vector<1x64xf32> to vector<2x64xf32>
    %267 = arith.mulf %265, %266 : vector<2x64xf32>
    %268 = vector.extract_strided_slice %221 {offsets = [0, 9], sizes = [2, 1], strides = [1, 1]} : vector<2x16xf32> to vector<2x1xf32>
    %269 = vector.extract_strided_slice %92 {offsets = [9, 0], sizes = [1, 64], strides = [1, 1]} : vector<16x64xf32> to vector<1x64xf32>
    %270 = vector.broadcast %268 : vector<2x1xf32> to vector<2x64xf32>
    %271 = vector.broadcast %269 : vector<1x64xf32> to vector<2x64xf32>
    %272 = arith.mulf %270, %271 : vector<2x64xf32>
    %273 = vector.extract_strided_slice %221 {offsets = [0, 10], sizes = [2, 1], strides = [1, 1]} : vector<2x16xf32> to vector<2x1xf32>
    %274 = vector.extract_strided_slice %92 {offsets = [10, 0], sizes = [1, 64], strides = [1, 1]} : vector<16x64xf32> to vector<1x64xf32>
    %275 = vector.broadcast %273 : vector<2x1xf32> to vector<2x64xf32>
    %276 = vector.broadcast %274 : vector<1x64xf32> to vector<2x64xf32>
    %277 = arith.mulf %275, %276 : vector<2x64xf32>
    %278 = vector.extract_strided_slice %221 {offsets = [0, 11], sizes = [2, 1], strides = [1, 1]} : vector<2x16xf32> to vector<2x1xf32>
    %279 = vector.extract_strided_slice %92 {offsets = [11, 0], sizes = [1, 64], strides = [1, 1]} : vector<16x64xf32> to vector<1x64xf32>
    %280 = vector.broadcast %278 : vector<2x1xf32> to vector<2x64xf32>
    %281 = vector.broadcast %279 : vector<1x64xf32> to vector<2x64xf32>
    %282 = arith.mulf %280, %281 : vector<2x64xf32>
    %283 = vector.extract_strided_slice %221 {offsets = [0, 12], sizes = [2, 1], strides = [1, 1]} : vector<2x16xf32> to vector<2x1xf32>
    %284 = vector.extract_strided_slice %92 {offsets = [12, 0], sizes = [1, 64], strides = [1, 1]} : vector<16x64xf32> to vector<1x64xf32>
    %285 = vector.broadcast %283 : vector<2x1xf32> to vector<2x64xf32>
    %286 = vector.broadcast %284 : vector<1x64xf32> to vector<2x64xf32>
    %287 = arith.mulf %285, %286 : vector<2x64xf32>
    %288 = vector.extract_strided_slice %221 {offsets = [0, 13], sizes = [2, 1], strides = [1, 1]} : vector<2x16xf32> to vector<2x1xf32>
    %289 = vector.extract_strided_slice %92 {offsets = [13, 0], sizes = [1, 64], strides = [1, 1]} : vector<16x64xf32> to vector<1x64xf32>
    %290 = vector.broadcast %288 : vector<2x1xf32> to vector<2x64xf32>
    %291 = vector.broadcast %289 : vector<1x64xf32> to vector<2x64xf32>
    %292 = arith.mulf %290, %291 : vector<2x64xf32>
    %293 = vector.extract_strided_slice %221 {offsets = [0, 14], sizes = [2, 1], strides = [1, 1]} : vector<2x16xf32> to vector<2x1xf32>
    %294 = vector.extract_strided_slice %92 {offsets = [14, 0], sizes = [1, 64], strides = [1, 1]} : vector<16x64xf32> to vector<1x64xf32>
    %295 = vector.broadcast %293 : vector<2x1xf32> to vector<2x64xf32>
    %296 = vector.broadcast %294 : vector<1x64xf32> to vector<2x64xf32>
    %297 = arith.mulf %295, %296 : vector<2x64xf32>
    %298 = vector.extract_strided_slice %221 {offsets = [0, 15], sizes = [2, 1], strides = [1, 1]} : vector<2x16xf32> to vector<2x1xf32>
    %299 = vector.extract_strided_slice %92 {offsets = [15, 0], sizes = [1, 64], strides = [1, 1]} : vector<16x64xf32> to vector<1x64xf32>
    %300 = vector.broadcast %298 : vector<2x1xf32> to vector<2x64xf32>
    %301 = vector.broadcast %299 : vector<1x64xf32> to vector<2x64xf32>
    %302 = arith.mulf %300, %301 : vector<2x64xf32>
    %303 = arith.addf %222, %227 : vector<2x64xf32>
    %304 = arith.addf %232, %237 : vector<2x64xf32>
    %305 = arith.addf %242, %247 : vector<2x64xf32>
    %306 = arith.addf %252, %257 : vector<2x64xf32>
    %307 = arith.addf %262, %267 : vector<2x64xf32>
    %308 = arith.addf %272, %277 : vector<2x64xf32>
    %309 = arith.addf %282, %287 : vector<2x64xf32>
    %310 = arith.addf %292, %297 : vector<2x64xf32>
    %311 = arith.addf %303, %304 : vector<2x64xf32>
    %312 = arith.addf %305, %306 : vector<2x64xf32>
    %313 = arith.addf %307, %308 : vector<2x64xf32>
    %314 = arith.addf %309, %310 : vector<2x64xf32>
    %315 = arith.addf %311, %312 : vector<2x64xf32>
    %316 = arith.addf %313, %314 : vector<2x64xf32>
    %317 = arith.addf %315, %316 : vector<2x64xf32>
    %318 = arith.addf %317, %302 : vector<2x64xf32>
    %319 = arith.negf %318 : vector<2x64xf32>
    %320 = math.exp %319 : vector<2x64xf32>
    %cst_34 = arith.constant 1.000000e+00 : f32
    %321 = vector.broadcast %cst_34 : f32 to vector<2x64xf32>
    %322 = arith.addf %321, %320 : vector<2x64xf32>
    %323 = arith.divf %321, %322 : vector<2x64xf32>
    %324 = vector.extract_strided_slice %323 {offsets = [0, 0], sizes = [2, 16], strides = [1, 1]} : vector<2x64xf32> to vector<2x16xf32>
    %325 = vector.extract_strided_slice %323 {offsets = [0, 16], sizes = [2, 16], strides = [1, 1]} : vector<2x64xf32> to vector<2x16xf32>
    %326 = vector.extract_strided_slice %323 {offsets = [0, 48], sizes = [2, 16], strides = [1, 1]} : vector<2x64xf32> to vector<2x16xf32>
    %327 = vector.extract_strided_slice %318 {offsets = [0, 32], sizes = [2, 16], strides = [1, 1]} : vector<2x64xf32> to vector<2x16xf32>
    %328 = math.tanh %327 : vector<2x16xf32>
    %329 = arith.mulf %325, %219 : vector<2x16xf32>
    %330 = arith.mulf %324, %328 : vector<2x16xf32>
    %331 = arith.addf %329, %330 : vector<2x16xf32>
    %332 = math.tanh %331 : vector<2x16xf32>
    %333 = arith.mulf %326, %332 : vector<2x16xf32>
    %334 = vector.extract_strided_slice %91 {offsets = [6, 0], sizes = [2, 64], strides = [1, 1]} : vector<32x64xf32> to vector<2x64xf32>
    %335 = vector.extract_strided_slice %333 {offsets = [0, 0], sizes = [2, 1], strides = [1, 1]} : vector<2x16xf32> to vector<2x1xf32>
    %336 = vector.extract_strided_slice %92 {offsets = [0, 0], sizes = [1, 64], strides = [1, 1]} : vector<16x64xf32> to vector<1x64xf32>
    %337 = vector.broadcast %335 : vector<2x1xf32> to vector<2x64xf32>
    %338 = vector.broadcast %336 : vector<1x64xf32> to vector<2x64xf32>
    %339 = arith.mulf %337, %338 : vector<2x64xf32>
    %340 = vector.extract_strided_slice %333 {offsets = [0, 1], sizes = [2, 1], strides = [1, 1]} : vector<2x16xf32> to vector<2x1xf32>
    %341 = vector.extract_strided_slice %92 {offsets = [1, 0], sizes = [1, 64], strides = [1, 1]} : vector<16x64xf32> to vector<1x64xf32>
    %342 = vector.broadcast %340 : vector<2x1xf32> to vector<2x64xf32>
    %343 = vector.broadcast %341 : vector<1x64xf32> to vector<2x64xf32>
    %344 = arith.mulf %342, %343 : vector<2x64xf32>
    %345 = vector.extract_strided_slice %333 {offsets = [0, 2], sizes = [2, 1], strides = [1, 1]} : vector<2x16xf32> to vector<2x1xf32>
    %346 = vector.extract_strided_slice %92 {offsets = [2, 0], sizes = [1, 64], strides = [1, 1]} : vector<16x64xf32> to vector<1x64xf32>
    %347 = vector.broadcast %345 : vector<2x1xf32> to vector<2x64xf32>
    %348 = vector.broadcast %346 : vector<1x64xf32> to vector<2x64xf32>
    %349 = arith.mulf %347, %348 : vector<2x64xf32>
    %350 = vector.extract_strided_slice %333 {offsets = [0, 3], sizes = [2, 1], strides = [1, 1]} : vector<2x16xf32> to vector<2x1xf32>
    %351 = vector.extract_strided_slice %92 {offsets = [3, 0], sizes = [1, 64], strides = [1, 1]} : vector<16x64xf32> to vector<1x64xf32>
    %352 = vector.broadcast %350 : vector<2x1xf32> to vector<2x64xf32>
    %353 = vector.broadcast %351 : vector<1x64xf32> to vector<2x64xf32>
    %354 = arith.mulf %352, %353 : vector<2x64xf32>
    %355 = vector.extract_strided_slice %333 {offsets = [0, 4], sizes = [2, 1], strides = [1, 1]} : vector<2x16xf32> to vector<2x1xf32>
    %356 = vector.extract_strided_slice %92 {offsets = [4, 0], sizes = [1, 64], strides = [1, 1]} : vector<16x64xf32> to vector<1x64xf32>
    %357 = vector.broadcast %355 : vector<2x1xf32> to vector<2x64xf32>
    %358 = vector.broadcast %356 : vector<1x64xf32> to vector<2x64xf32>
    %359 = arith.mulf %357, %358 : vector<2x64xf32>
    %360 = vector.extract_strided_slice %333 {offsets = [0, 5], sizes = [2, 1], strides = [1, 1]} : vector<2x16xf32> to vector<2x1xf32>
    %361 = vector.extract_strided_slice %92 {offsets = [5, 0], sizes = [1, 64], strides = [1, 1]} : vector<16x64xf32> to vector<1x64xf32>
    %362 = vector.broadcast %360 : vector<2x1xf32> to vector<2x64xf32>
    %363 = vector.broadcast %361 : vector<1x64xf32> to vector<2x64xf32>
    %364 = arith.mulf %362, %363 : vector<2x64xf32>
    %365 = vector.extract_strided_slice %333 {offsets = [0, 6], sizes = [2, 1], strides = [1, 1]} : vector<2x16xf32> to vector<2x1xf32>
    %366 = vector.extract_strided_slice %92 {offsets = [6, 0], sizes = [1, 64], strides = [1, 1]} : vector<16x64xf32> to vector<1x64xf32>
    %367 = vector.broadcast %365 : vector<2x1xf32> to vector<2x64xf32>
    %368 = vector.broadcast %366 : vector<1x64xf32> to vector<2x64xf32>
    %369 = arith.mulf %367, %368 : vector<2x64xf32>
    %370 = vector.extract_strided_slice %333 {offsets = [0, 7], sizes = [2, 1], strides = [1, 1]} : vector<2x16xf32> to vector<2x1xf32>
    %371 = vector.extract_strided_slice %92 {offsets = [7, 0], sizes = [1, 64], strides = [1, 1]} : vector<16x64xf32> to vector<1x64xf32>
    %372 = vector.broadcast %370 : vector<2x1xf32> to vector<2x64xf32>
    %373 = vector.broadcast %371 : vector<1x64xf32> to vector<2x64xf32>
    %374 = arith.mulf %372, %373 : vector<2x64xf32>
    %375 = vector.extract_strided_slice %333 {offsets = [0, 8], sizes = [2, 1], strides = [1, 1]} : vector<2x16xf32> to vector<2x1xf32>
    %376 = vector.extract_strided_slice %92 {offsets = [8, 0], sizes = [1, 64], strides = [1, 1]} : vector<16x64xf32> to vector<1x64xf32>
    %377 = vector.broadcast %375 : vector<2x1xf32> to vector<2x64xf32>
    %378 = vector.broadcast %376 : vector<1x64xf32> to vector<2x64xf32>
    %379 = arith.mulf %377, %378 : vector<2x64xf32>
    %380 = vector.extract_strided_slice %333 {offsets = [0, 9], sizes = [2, 1], strides = [1, 1]} : vector<2x16xf32> to vector<2x1xf32>
    %381 = vector.extract_strided_slice %92 {offsets = [9, 0], sizes = [1, 64], strides = [1, 1]} : vector<16x64xf32> to vector<1x64xf32>
    %382 = vector.broadcast %380 : vector<2x1xf32> to vector<2x64xf32>
    %383 = vector.broadcast %381 : vector<1x64xf32> to vector<2x64xf32>
    %384 = arith.mulf %382, %383 : vector<2x64xf32>
    %385 = vector.extract_strided_slice %333 {offsets = [0, 10], sizes = [2, 1], strides = [1, 1]} : vector<2x16xf32> to vector<2x1xf32>
    %386 = vector.extract_strided_slice %92 {offsets = [10, 0], sizes = [1, 64], strides = [1, 1]} : vector<16x64xf32> to vector<1x64xf32>
    %387 = vector.broadcast %385 : vector<2x1xf32> to vector<2x64xf32>
    %388 = vector.broadcast %386 : vector<1x64xf32> to vector<2x64xf32>
    %389 = arith.mulf %387, %388 : vector<2x64xf32>
    %390 = vector.extract_strided_slice %333 {offsets = [0, 11], sizes = [2, 1], strides = [1, 1]} : vector<2x16xf32> to vector<2x1xf32>
    %391 = vector.extract_strided_slice %92 {offsets = [11, 0], sizes = [1, 64], strides = [1, 1]} : vector<16x64xf32> to vector<1x64xf32>
    %392 = vector.broadcast %390 : vector<2x1xf32> to vector<2x64xf32>
    %393 = vector.broadcast %391 : vector<1x64xf32> to vector<2x64xf32>
    %394 = arith.mulf %392, %393 : vector<2x64xf32>
    %395 = vector.extract_strided_slice %333 {offsets = [0, 12], sizes = [2, 1], strides = [1, 1]} : vector<2x16xf32> to vector<2x1xf32>
    %396 = vector.extract_strided_slice %92 {offsets = [12, 0], sizes = [1, 64], strides = [1, 1]} : vector<16x64xf32> to vector<1x64xf32>
    %397 = vector.broadcast %395 : vector<2x1xf32> to vector<2x64xf32>
    %398 = vector.broadcast %396 : vector<1x64xf32> to vector<2x64xf32>
    %399 = arith.mulf %397, %398 : vector<2x64xf32>
    %400 = vector.extract_strided_slice %333 {offsets = [0, 13], sizes = [2, 1], strides = [1, 1]} : vector<2x16xf32> to vector<2x1xf32>
    %401 = vector.extract_strided_slice %92 {offsets = [13, 0], sizes = [1, 64], strides = [1, 1]} : vector<16x64xf32> to vector<1x64xf32>
    %402 = vector.broadcast %400 : vector<2x1xf32> to vector<2x64xf32>
    %403 = vector.broadcast %401 : vector<1x64xf32> to vector<2x64xf32>
    %404 = arith.mulf %402, %403 : vector<2x64xf32>
    %405 = vector.extract_strided_slice %333 {offsets = [0, 14], sizes = [2, 1], strides = [1, 1]} : vector<2x16xf32> to vector<2x1xf32>
    %406 = vector.extract_strided_slice %92 {offsets = [14, 0], sizes = [1, 64], strides = [1, 1]} : vector<16x64xf32> to vector<1x64xf32>
    %407 = vector.broadcast %405 : vector<2x1xf32> to vector<2x64xf32>
    %408 = vector.broadcast %406 : vector<1x64xf32> to vector<2x64xf32>
    %409 = arith.mulf %407, %408 : vector<2x64xf32>
    %410 = vector.extract_strided_slice %333 {offsets = [0, 15], sizes = [2, 1], strides = [1, 1]} : vector<2x16xf32> to vector<2x1xf32>
    %411 = vector.extract_strided_slice %92 {offsets = [15, 0], sizes = [1, 64], strides = [1, 1]} : vector<16x64xf32> to vector<1x64xf32>
    %412 = vector.broadcast %410 : vector<2x1xf32> to vector<2x64xf32>
    %413 = vector.broadcast %411 : vector<1x64xf32> to vector<2x64xf32>
    %414 = arith.mulf %412, %413 : vector<2x64xf32>
    %415 = arith.addf %334, %339 : vector<2x64xf32>
    %416 = arith.addf %344, %349 : vector<2x64xf32>
    %417 = arith.addf %354, %359 : vector<2x64xf32>
    %418 = arith.addf %364, %369 : vector<2x64xf32>
    %419 = arith.addf %374, %379 : vector<2x64xf32>
    %420 = arith.addf %384, %389 : vector<2x64xf32>
    %421 = arith.addf %394, %399 : vector<2x64xf32>
    %422 = arith.addf %404, %409 : vector<2x64xf32>
    %423 = arith.addf %415, %416 : vector<2x64xf32>
    %424 = arith.addf %417, %418 : vector<2x64xf32>
    %425 = arith.addf %419, %420 : vector<2x64xf32>
    %426 = arith.addf %421, %422 : vector<2x64xf32>
    %427 = arith.addf %423, %424 : vector<2x64xf32>
    %428 = arith.addf %425, %426 : vector<2x64xf32>
    %429 = arith.addf %427, %428 : vector<2x64xf32>
    %430 = arith.addf %429, %414 : vector<2x64xf32>
    %431 = arith.negf %430 : vector<2x64xf32>
    %432 = math.exp %431 : vector<2x64xf32>
    %cst_35 = arith.constant 1.000000e+00 : f32
    %433 = vector.broadcast %cst_35 : f32 to vector<2x64xf32>
    %434 = arith.addf %433, %432 : vector<2x64xf32>
    %435 = arith.divf %433, %434 : vector<2x64xf32>
    %436 = vector.extract_strided_slice %435 {offsets = [0, 0], sizes = [2, 16], strides = [1, 1]} : vector<2x64xf32> to vector<2x16xf32>
    %437 = vector.extract_strided_slice %435 {offsets = [0, 16], sizes = [2, 16], strides = [1, 1]} : vector<2x64xf32> to vector<2x16xf32>
    %438 = vector.extract_strided_slice %435 {offsets = [0, 48], sizes = [2, 16], strides = [1, 1]} : vector<2x64xf32> to vector<2x16xf32>
    %439 = vector.extract_strided_slice %430 {offsets = [0, 32], sizes = [2, 16], strides = [1, 1]} : vector<2x64xf32> to vector<2x16xf32>
    %440 = math.tanh %439 : vector<2x16xf32>
    %441 = arith.mulf %437, %331 : vector<2x16xf32>
    %442 = arith.mulf %436, %440 : vector<2x16xf32>
    %443 = arith.addf %441, %442 : vector<2x16xf32>
    %444 = math.tanh %443 : vector<2x16xf32>
    %445 = arith.mulf %438, %444 : vector<2x16xf32>
    %446 = vector.extract_strided_slice %91 {offsets = [8, 0], sizes = [2, 64], strides = [1, 1]} : vector<32x64xf32> to vector<2x64xf32>
    %447 = vector.extract_strided_slice %445 {offsets = [0, 0], sizes = [2, 1], strides = [1, 1]} : vector<2x16xf32> to vector<2x1xf32>
    %448 = vector.extract_strided_slice %92 {offsets = [0, 0], sizes = [1, 64], strides = [1, 1]} : vector<16x64xf32> to vector<1x64xf32>
    %449 = vector.broadcast %447 : vector<2x1xf32> to vector<2x64xf32>
    %450 = vector.broadcast %448 : vector<1x64xf32> to vector<2x64xf32>
    %451 = arith.mulf %449, %450 : vector<2x64xf32>
    %452 = vector.extract_strided_slice %445 {offsets = [0, 1], sizes = [2, 1], strides = [1, 1]} : vector<2x16xf32> to vector<2x1xf32>
    %453 = vector.extract_strided_slice %92 {offsets = [1, 0], sizes = [1, 64], strides = [1, 1]} : vector<16x64xf32> to vector<1x64xf32>
    %454 = vector.broadcast %452 : vector<2x1xf32> to vector<2x64xf32>
    %455 = vector.broadcast %453 : vector<1x64xf32> to vector<2x64xf32>
    %456 = arith.mulf %454, %455 : vector<2x64xf32>
    %457 = vector.extract_strided_slice %445 {offsets = [0, 2], sizes = [2, 1], strides = [1, 1]} : vector<2x16xf32> to vector<2x1xf32>
    %458 = vector.extract_strided_slice %92 {offsets = [2, 0], sizes = [1, 64], strides = [1, 1]} : vector<16x64xf32> to vector<1x64xf32>
    %459 = vector.broadcast %457 : vector<2x1xf32> to vector<2x64xf32>
    %460 = vector.broadcast %458 : vector<1x64xf32> to vector<2x64xf32>
    %461 = arith.mulf %459, %460 : vector<2x64xf32>
    %462 = vector.extract_strided_slice %445 {offsets = [0, 3], sizes = [2, 1], strides = [1, 1]} : vector<2x16xf32> to vector<2x1xf32>
    %463 = vector.extract_strided_slice %92 {offsets = [3, 0], sizes = [1, 64], strides = [1, 1]} : vector<16x64xf32> to vector<1x64xf32>
    %464 = vector.broadcast %462 : vector<2x1xf32> to vector<2x64xf32>
    %465 = vector.broadcast %463 : vector<1x64xf32> to vector<2x64xf32>
    %466 = arith.mulf %464, %465 : vector<2x64xf32>
    %467 = vector.extract_strided_slice %445 {offsets = [0, 4], sizes = [2, 1], strides = [1, 1]} : vector<2x16xf32> to vector<2x1xf32>
    %468 = vector.extract_strided_slice %92 {offsets = [4, 0], sizes = [1, 64], strides = [1, 1]} : vector<16x64xf32> to vector<1x64xf32>
    %469 = vector.broadcast %467 : vector<2x1xf32> to vector<2x64xf32>
    %470 = vector.broadcast %468 : vector<1x64xf32> to vector<2x64xf32>
    %471 = arith.mulf %469, %470 : vector<2x64xf32>
    %472 = vector.extract_strided_slice %445 {offsets = [0, 5], sizes = [2, 1], strides = [1, 1]} : vector<2x16xf32> to vector<2x1xf32>
    %473 = vector.extract_strided_slice %92 {offsets = [5, 0], sizes = [1, 64], strides = [1, 1]} : vector<16x64xf32> to vector<1x64xf32>
    %474 = vector.broadcast %472 : vector<2x1xf32> to vector<2x64xf32>
    %475 = vector.broadcast %473 : vector<1x64xf32> to vector<2x64xf32>
    %476 = arith.mulf %474, %475 : vector<2x64xf32>
    %477 = vector.extract_strided_slice %445 {offsets = [0, 6], sizes = [2, 1], strides = [1, 1]} : vector<2x16xf32> to vector<2x1xf32>
    %478 = vector.extract_strided_slice %92 {offsets = [6, 0], sizes = [1, 64], strides = [1, 1]} : vector<16x64xf32> to vector<1x64xf32>
    %479 = vector.broadcast %477 : vector<2x1xf32> to vector<2x64xf32>
    %480 = vector.broadcast %478 : vector<1x64xf32> to vector<2x64xf32>
    %481 = arith.mulf %479, %480 : vector<2x64xf32>
    %482 = vector.extract_strided_slice %445 {offsets = [0, 7], sizes = [2, 1], strides = [1, 1]} : vector<2x16xf32> to vector<2x1xf32>
    %483 = vector.extract_strided_slice %92 {offsets = [7, 0], sizes = [1, 64], strides = [1, 1]} : vector<16x64xf32> to vector<1x64xf32>
    %484 = vector.broadcast %482 : vector<2x1xf32> to vector<2x64xf32>
    %485 = vector.broadcast %483 : vector<1x64xf32> to vector<2x64xf32>
    %486 = arith.mulf %484, %485 : vector<2x64xf32>
    %487 = vector.extract_strided_slice %445 {offsets = [0, 8], sizes = [2, 1], strides = [1, 1]} : vector<2x16xf32> to vector<2x1xf32>
    %488 = vector.extract_strided_slice %92 {offsets = [8, 0], sizes = [1, 64], strides = [1, 1]} : vector<16x64xf32> to vector<1x64xf32>
    %489 = vector.broadcast %487 : vector<2x1xf32> to vector<2x64xf32>
    %490 = vector.broadcast %488 : vector<1x64xf32> to vector<2x64xf32>
    %491 = arith.mulf %489, %490 : vector<2x64xf32>
    %492 = vector.extract_strided_slice %445 {offsets = [0, 9], sizes = [2, 1], strides = [1, 1]} : vector<2x16xf32> to vector<2x1xf32>
    %493 = vector.extract_strided_slice %92 {offsets = [9, 0], sizes = [1, 64], strides = [1, 1]} : vector<16x64xf32> to vector<1x64xf32>
    %494 = vector.broadcast %492 : vector<2x1xf32> to vector<2x64xf32>
    %495 = vector.broadcast %493 : vector<1x64xf32> to vector<2x64xf32>
    %496 = arith.mulf %494, %495 : vector<2x64xf32>
    %497 = vector.extract_strided_slice %445 {offsets = [0, 10], sizes = [2, 1], strides = [1, 1]} : vector<2x16xf32> to vector<2x1xf32>
    %498 = vector.extract_strided_slice %92 {offsets = [10, 0], sizes = [1, 64], strides = [1, 1]} : vector<16x64xf32> to vector<1x64xf32>
    %499 = vector.broadcast %497 : vector<2x1xf32> to vector<2x64xf32>
    %500 = vector.broadcast %498 : vector<1x64xf32> to vector<2x64xf32>
    %501 = arith.mulf %499, %500 : vector<2x64xf32>
    %502 = vector.extract_strided_slice %445 {offsets = [0, 11], sizes = [2, 1], strides = [1, 1]} : vector<2x16xf32> to vector<2x1xf32>
    %503 = vector.extract_strided_slice %92 {offsets = [11, 0], sizes = [1, 64], strides = [1, 1]} : vector<16x64xf32> to vector<1x64xf32>
    %504 = vector.broadcast %502 : vector<2x1xf32> to vector<2x64xf32>
    %505 = vector.broadcast %503 : vector<1x64xf32> to vector<2x64xf32>
    %506 = arith.mulf %504, %505 : vector<2x64xf32>
    %507 = vector.extract_strided_slice %445 {offsets = [0, 12], sizes = [2, 1], strides = [1, 1]} : vector<2x16xf32> to vector<2x1xf32>
    %508 = vector.extract_strided_slice %92 {offsets = [12, 0], sizes = [1, 64], strides = [1, 1]} : vector<16x64xf32> to vector<1x64xf32>
    %509 = vector.broadcast %507 : vector<2x1xf32> to vector<2x64xf32>
    %510 = vector.broadcast %508 : vector<1x64xf32> to vector<2x64xf32>
    %511 = arith.mulf %509, %510 : vector<2x64xf32>
    %512 = vector.extract_strided_slice %445 {offsets = [0, 13], sizes = [2, 1], strides = [1, 1]} : vector<2x16xf32> to vector<2x1xf32>
    %513 = vector.extract_strided_slice %92 {offsets = [13, 0], sizes = [1, 64], strides = [1, 1]} : vector<16x64xf32> to vector<1x64xf32>
    %514 = vector.broadcast %512 : vector<2x1xf32> to vector<2x64xf32>
    %515 = vector.broadcast %513 : vector<1x64xf32> to vector<2x64xf32>
    %516 = arith.mulf %514, %515 : vector<2x64xf32>
    %517 = vector.extract_strided_slice %445 {offsets = [0, 14], sizes = [2, 1], strides = [1, 1]} : vector<2x16xf32> to vector<2x1xf32>
    %518 = vector.extract_strided_slice %92 {offsets = [14, 0], sizes = [1, 64], strides = [1, 1]} : vector<16x64xf32> to vector<1x64xf32>
    %519 = vector.broadcast %517 : vector<2x1xf32> to vector<2x64xf32>
    %520 = vector.broadcast %518 : vector<1x64xf32> to vector<2x64xf32>
    %521 = arith.mulf %519, %520 : vector<2x64xf32>
    %522 = vector.extract_strided_slice %445 {offsets = [0, 15], sizes = [2, 1], strides = [1, 1]} : vector<2x16xf32> to vector<2x1xf32>
    %523 = vector.extract_strided_slice %92 {offsets = [15, 0], sizes = [1, 64], strides = [1, 1]} : vector<16x64xf32> to vector<1x64xf32>
    %524 = vector.broadcast %522 : vector<2x1xf32> to vector<2x64xf32>
    %525 = vector.broadcast %523 : vector<1x64xf32> to vector<2x64xf32>
    %526 = arith.mulf %524, %525 : vector<2x64xf32>
    %527 = arith.addf %446, %451 : vector<2x64xf32>
    %528 = arith.addf %456, %461 : vector<2x64xf32>
    %529 = arith.addf %466, %471 : vector<2x64xf32>
    %530 = arith.addf %476, %481 : vector<2x64xf32>
    %531 = arith.addf %486, %491 : vector<2x64xf32>
    %532 = arith.addf %496, %501 : vector<2x64xf32>
    %533 = arith.addf %506, %511 : vector<2x64xf32>
    %534 = arith.addf %516, %521 : vector<2x64xf32>
    %535 = arith.addf %527, %528 : vector<2x64xf32>
    %536 = arith.addf %529, %530 : vector<2x64xf32>
    %537 = arith.addf %531, %532 : vector<2x64xf32>
    %538 = arith.addf %533, %534 : vector<2x64xf32>
    %539 = arith.addf %535, %536 : vector<2x64xf32>
    %540 = arith.addf %537, %538 : vector<2x64xf32>
    %541 = arith.addf %539, %540 : vector<2x64xf32>
    %542 = arith.addf %541, %526 : vector<2x64xf32>
    %543 = arith.negf %542 : vector<2x64xf32>
    %544 = math.exp %543 : vector<2x64xf32>
    %cst_36 = arith.constant 1.000000e+00 : f32
    %545 = vector.broadcast %cst_36 : f32 to vector<2x64xf32>
    %546 = arith.addf %545, %544 : vector<2x64xf32>
    %547 = arith.divf %545, %546 : vector<2x64xf32>
    %548 = vector.extract_strided_slice %547 {offsets = [0, 0], sizes = [2, 16], strides = [1, 1]} : vector<2x64xf32> to vector<2x16xf32>
    %549 = vector.extract_strided_slice %547 {offsets = [0, 16], sizes = [2, 16], strides = [1, 1]} : vector<2x64xf32> to vector<2x16xf32>
    %550 = vector.extract_strided_slice %547 {offsets = [0, 48], sizes = [2, 16], strides = [1, 1]} : vector<2x64xf32> to vector<2x16xf32>
    %551 = vector.extract_strided_slice %542 {offsets = [0, 32], sizes = [2, 16], strides = [1, 1]} : vector<2x64xf32> to vector<2x16xf32>
    %552 = math.tanh %551 : vector<2x16xf32>
    %553 = arith.mulf %549, %443 : vector<2x16xf32>
    %554 = arith.mulf %548, %552 : vector<2x16xf32>
    %555 = arith.addf %553, %554 : vector<2x16xf32>
    %556 = math.tanh %555 : vector<2x16xf32>
    %557 = arith.mulf %550, %556 : vector<2x16xf32>
    %558 = vector.extract_strided_slice %91 {offsets = [10, 0], sizes = [2, 64], strides = [1, 1]} : vector<32x64xf32> to vector<2x64xf32>
    %559 = vector.extract_strided_slice %557 {offsets = [0, 0], sizes = [2, 1], strides = [1, 1]} : vector<2x16xf32> to vector<2x1xf32>
    %560 = vector.extract_strided_slice %92 {offsets = [0, 0], sizes = [1, 64], strides = [1, 1]} : vector<16x64xf32> to vector<1x64xf32>
    %561 = vector.broadcast %559 : vector<2x1xf32> to vector<2x64xf32>
    %562 = vector.broadcast %560 : vector<1x64xf32> to vector<2x64xf32>
    %563 = arith.mulf %561, %562 : vector<2x64xf32>
    %564 = vector.extract_strided_slice %557 {offsets = [0, 1], sizes = [2, 1], strides = [1, 1]} : vector<2x16xf32> to vector<2x1xf32>
    %565 = vector.extract_strided_slice %92 {offsets = [1, 0], sizes = [1, 64], strides = [1, 1]} : vector<16x64xf32> to vector<1x64xf32>
    %566 = vector.broadcast %564 : vector<2x1xf32> to vector<2x64xf32>
    %567 = vector.broadcast %565 : vector<1x64xf32> to vector<2x64xf32>
    %568 = arith.mulf %566, %567 : vector<2x64xf32>
    %569 = vector.extract_strided_slice %557 {offsets = [0, 2], sizes = [2, 1], strides = [1, 1]} : vector<2x16xf32> to vector<2x1xf32>
    %570 = vector.extract_strided_slice %92 {offsets = [2, 0], sizes = [1, 64], strides = [1, 1]} : vector<16x64xf32> to vector<1x64xf32>
    %571 = vector.broadcast %569 : vector<2x1xf32> to vector<2x64xf32>
    %572 = vector.broadcast %570 : vector<1x64xf32> to vector<2x64xf32>
    %573 = arith.mulf %571, %572 : vector<2x64xf32>
    %574 = vector.extract_strided_slice %557 {offsets = [0, 3], sizes = [2, 1], strides = [1, 1]} : vector<2x16xf32> to vector<2x1xf32>
    %575 = vector.extract_strided_slice %92 {offsets = [3, 0], sizes = [1, 64], strides = [1, 1]} : vector<16x64xf32> to vector<1x64xf32>
    %576 = vector.broadcast %574 : vector<2x1xf32> to vector<2x64xf32>
    %577 = vector.broadcast %575 : vector<1x64xf32> to vector<2x64xf32>
    %578 = arith.mulf %576, %577 : vector<2x64xf32>
    %579 = vector.extract_strided_slice %557 {offsets = [0, 4], sizes = [2, 1], strides = [1, 1]} : vector<2x16xf32> to vector<2x1xf32>
    %580 = vector.extract_strided_slice %92 {offsets = [4, 0], sizes = [1, 64], strides = [1, 1]} : vector<16x64xf32> to vector<1x64xf32>
    %581 = vector.broadcast %579 : vector<2x1xf32> to vector<2x64xf32>
    %582 = vector.broadcast %580 : vector<1x64xf32> to vector<2x64xf32>
    %583 = arith.mulf %581, %582 : vector<2x64xf32>
    %584 = vector.extract_strided_slice %557 {offsets = [0, 5], sizes = [2, 1], strides = [1, 1]} : vector<2x16xf32> to vector<2x1xf32>
    %585 = vector.extract_strided_slice %92 {offsets = [5, 0], sizes = [1, 64], strides = [1, 1]} : vector<16x64xf32> to vector<1x64xf32>
    %586 = vector.broadcast %584 : vector<2x1xf32> to vector<2x64xf32>
    %587 = vector.broadcast %585 : vector<1x64xf32> to vector<2x64xf32>
    %588 = arith.mulf %586, %587 : vector<2x64xf32>
    %589 = vector.extract_strided_slice %557 {offsets = [0, 6], sizes = [2, 1], strides = [1, 1]} : vector<2x16xf32> to vector<2x1xf32>
    %590 = vector.extract_strided_slice %92 {offsets = [6, 0], sizes = [1, 64], strides = [1, 1]} : vector<16x64xf32> to vector<1x64xf32>
    %591 = vector.broadcast %589 : vector<2x1xf32> to vector<2x64xf32>
    %592 = vector.broadcast %590 : vector<1x64xf32> to vector<2x64xf32>
    %593 = arith.mulf %591, %592 : vector<2x64xf32>
    %594 = vector.extract_strided_slice %557 {offsets = [0, 7], sizes = [2, 1], strides = [1, 1]} : vector<2x16xf32> to vector<2x1xf32>
    %595 = vector.extract_strided_slice %92 {offsets = [7, 0], sizes = [1, 64], strides = [1, 1]} : vector<16x64xf32> to vector<1x64xf32>
    %596 = vector.broadcast %594 : vector<2x1xf32> to vector<2x64xf32>
    %597 = vector.broadcast %595 : vector<1x64xf32> to vector<2x64xf32>
    %598 = arith.mulf %596, %597 : vector<2x64xf32>
    %599 = vector.extract_strided_slice %557 {offsets = [0, 8], sizes = [2, 1], strides = [1, 1]} : vector<2x16xf32> to vector<2x1xf32>
    %600 = vector.extract_strided_slice %92 {offsets = [8, 0], sizes = [1, 64], strides = [1, 1]} : vector<16x64xf32> to vector<1x64xf32>
    %601 = vector.broadcast %599 : vector<2x1xf32> to vector<2x64xf32>
    %602 = vector.broadcast %600 : vector<1x64xf32> to vector<2x64xf32>
    %603 = arith.mulf %601, %602 : vector<2x64xf32>
    %604 = vector.extract_strided_slice %557 {offsets = [0, 9], sizes = [2, 1], strides = [1, 1]} : vector<2x16xf32> to vector<2x1xf32>
    %605 = vector.extract_strided_slice %92 {offsets = [9, 0], sizes = [1, 64], strides = [1, 1]} : vector<16x64xf32> to vector<1x64xf32>
    %606 = vector.broadcast %604 : vector<2x1xf32> to vector<2x64xf32>
    %607 = vector.broadcast %605 : vector<1x64xf32> to vector<2x64xf32>
    %608 = arith.mulf %606, %607 : vector<2x64xf32>
    %609 = vector.extract_strided_slice %557 {offsets = [0, 10], sizes = [2, 1], strides = [1, 1]} : vector<2x16xf32> to vector<2x1xf32>
    %610 = vector.extract_strided_slice %92 {offsets = [10, 0], sizes = [1, 64], strides = [1, 1]} : vector<16x64xf32> to vector<1x64xf32>
    %611 = vector.broadcast %609 : vector<2x1xf32> to vector<2x64xf32>
    %612 = vector.broadcast %610 : vector<1x64xf32> to vector<2x64xf32>
    %613 = arith.mulf %611, %612 : vector<2x64xf32>
    %614 = vector.extract_strided_slice %557 {offsets = [0, 11], sizes = [2, 1], strides = [1, 1]} : vector<2x16xf32> to vector<2x1xf32>
    %615 = vector.extract_strided_slice %92 {offsets = [11, 0], sizes = [1, 64], strides = [1, 1]} : vector<16x64xf32> to vector<1x64xf32>
    %616 = vector.broadcast %614 : vector<2x1xf32> to vector<2x64xf32>
    %617 = vector.broadcast %615 : vector<1x64xf32> to vector<2x64xf32>
    %618 = arith.mulf %616, %617 : vector<2x64xf32>
    %619 = vector.extract_strided_slice %557 {offsets = [0, 12], sizes = [2, 1], strides = [1, 1]} : vector<2x16xf32> to vector<2x1xf32>
    %620 = vector.extract_strided_slice %92 {offsets = [12, 0], sizes = [1, 64], strides = [1, 1]} : vector<16x64xf32> to vector<1x64xf32>
    %621 = vector.broadcast %619 : vector<2x1xf32> to vector<2x64xf32>
    %622 = vector.broadcast %620 : vector<1x64xf32> to vector<2x64xf32>
    %623 = arith.mulf %621, %622 : vector<2x64xf32>
    %624 = vector.extract_strided_slice %557 {offsets = [0, 13], sizes = [2, 1], strides = [1, 1]} : vector<2x16xf32> to vector<2x1xf32>
    %625 = vector.extract_strided_slice %92 {offsets = [13, 0], sizes = [1, 64], strides = [1, 1]} : vector<16x64xf32> to vector<1x64xf32>
    %626 = vector.broadcast %624 : vector<2x1xf32> to vector<2x64xf32>
    %627 = vector.broadcast %625 : vector<1x64xf32> to vector<2x64xf32>
    %628 = arith.mulf %626, %627 : vector<2x64xf32>
    %629 = vector.extract_strided_slice %557 {offsets = [0, 14], sizes = [2, 1], strides = [1, 1]} : vector<2x16xf32> to vector<2x1xf32>
    %630 = vector.extract_strided_slice %92 {offsets = [14, 0], sizes = [1, 64], strides = [1, 1]} : vector<16x64xf32> to vector<1x64xf32>
    %631 = vector.broadcast %629 : vector<2x1xf32> to vector<2x64xf32>
    %632 = vector.broadcast %630 : vector<1x64xf32> to vector<2x64xf32>
    %633 = arith.mulf %631, %632 : vector<2x64xf32>
    %634 = vector.extract_strided_slice %557 {offsets = [0, 15], sizes = [2, 1], strides = [1, 1]} : vector<2x16xf32> to vector<2x1xf32>
    %635 = vector.extract_strided_slice %92 {offsets = [15, 0], sizes = [1, 64], strides = [1, 1]} : vector<16x64xf32> to vector<1x64xf32>
    %636 = vector.broadcast %634 : vector<2x1xf32> to vector<2x64xf32>
    %637 = vector.broadcast %635 : vector<1x64xf32> to vector<2x64xf32>
    %638 = arith.mulf %636, %637 : vector<2x64xf32>
    %639 = arith.addf %558, %563 : vector<2x64xf32>
    %640 = arith.addf %568, %573 : vector<2x64xf32>
    %641 = arith.addf %578, %583 : vector<2x64xf32>
    %642 = arith.addf %588, %593 : vector<2x64xf32>
    %643 = arith.addf %598, %603 : vector<2x64xf32>
    %644 = arith.addf %608, %613 : vector<2x64xf32>
    %645 = arith.addf %618, %623 : vector<2x64xf32>
    %646 = arith.addf %628, %633 : vector<2x64xf32>
    %647 = arith.addf %639, %640 : vector<2x64xf32>
    %648 = arith.addf %641, %642 : vector<2x64xf32>
    %649 = arith.addf %643, %644 : vector<2x64xf32>
    %650 = arith.addf %645, %646 : vector<2x64xf32>
    %651 = arith.addf %647, %648 : vector<2x64xf32>
    %652 = arith.addf %649, %650 : vector<2x64xf32>
    %653 = arith.addf %651, %652 : vector<2x64xf32>
    %654 = arith.addf %653, %638 : vector<2x64xf32>
    %655 = arith.negf %654 : vector<2x64xf32>
    %656 = math.exp %655 : vector<2x64xf32>
    %cst_37 = arith.constant 1.000000e+00 : f32
    %657 = vector.broadcast %cst_37 : f32 to vector<2x64xf32>
    %658 = arith.addf %657, %656 : vector<2x64xf32>
    %659 = arith.divf %657, %658 : vector<2x64xf32>
    %660 = vector.extract_strided_slice %659 {offsets = [0, 0], sizes = [2, 16], strides = [1, 1]} : vector<2x64xf32> to vector<2x16xf32>
    %661 = vector.extract_strided_slice %659 {offsets = [0, 16], sizes = [2, 16], strides = [1, 1]} : vector<2x64xf32> to vector<2x16xf32>
    %662 = vector.extract_strided_slice %659 {offsets = [0, 48], sizes = [2, 16], strides = [1, 1]} : vector<2x64xf32> to vector<2x16xf32>
    %663 = vector.extract_strided_slice %654 {offsets = [0, 32], sizes = [2, 16], strides = [1, 1]} : vector<2x64xf32> to vector<2x16xf32>
    %664 = math.tanh %663 : vector<2x16xf32>
    %665 = arith.mulf %661, %555 : vector<2x16xf32>
    %666 = arith.mulf %660, %664 : vector<2x16xf32>
    %667 = arith.addf %665, %666 : vector<2x16xf32>
    %668 = math.tanh %667 : vector<2x16xf32>
    %669 = arith.mulf %662, %668 : vector<2x16xf32>
    %670 = vector.extract_strided_slice %91 {offsets = [12, 0], sizes = [2, 64], strides = [1, 1]} : vector<32x64xf32> to vector<2x64xf32>
    %671 = vector.extract_strided_slice %669 {offsets = [0, 0], sizes = [2, 1], strides = [1, 1]} : vector<2x16xf32> to vector<2x1xf32>
    %672 = vector.extract_strided_slice %92 {offsets = [0, 0], sizes = [1, 64], strides = [1, 1]} : vector<16x64xf32> to vector<1x64xf32>
    %673 = vector.broadcast %671 : vector<2x1xf32> to vector<2x64xf32>
    %674 = vector.broadcast %672 : vector<1x64xf32> to vector<2x64xf32>
    %675 = arith.mulf %673, %674 : vector<2x64xf32>
    %676 = vector.extract_strided_slice %669 {offsets = [0, 1], sizes = [2, 1], strides = [1, 1]} : vector<2x16xf32> to vector<2x1xf32>
    %677 = vector.extract_strided_slice %92 {offsets = [1, 0], sizes = [1, 64], strides = [1, 1]} : vector<16x64xf32> to vector<1x64xf32>
    %678 = vector.broadcast %676 : vector<2x1xf32> to vector<2x64xf32>
    %679 = vector.broadcast %677 : vector<1x64xf32> to vector<2x64xf32>
    %680 = arith.mulf %678, %679 : vector<2x64xf32>
    %681 = vector.extract_strided_slice %669 {offsets = [0, 2], sizes = [2, 1], strides = [1, 1]} : vector<2x16xf32> to vector<2x1xf32>
    %682 = vector.extract_strided_slice %92 {offsets = [2, 0], sizes = [1, 64], strides = [1, 1]} : vector<16x64xf32> to vector<1x64xf32>
    %683 = vector.broadcast %681 : vector<2x1xf32> to vector<2x64xf32>
    %684 = vector.broadcast %682 : vector<1x64xf32> to vector<2x64xf32>
    %685 = arith.mulf %683, %684 : vector<2x64xf32>
    %686 = vector.extract_strided_slice %669 {offsets = [0, 3], sizes = [2, 1], strides = [1, 1]} : vector<2x16xf32> to vector<2x1xf32>
    %687 = vector.extract_strided_slice %92 {offsets = [3, 0], sizes = [1, 64], strides = [1, 1]} : vector<16x64xf32> to vector<1x64xf32>
    %688 = vector.broadcast %686 : vector<2x1xf32> to vector<2x64xf32>
    %689 = vector.broadcast %687 : vector<1x64xf32> to vector<2x64xf32>
    %690 = arith.mulf %688, %689 : vector<2x64xf32>
    %691 = vector.extract_strided_slice %669 {offsets = [0, 4], sizes = [2, 1], strides = [1, 1]} : vector<2x16xf32> to vector<2x1xf32>
    %692 = vector.extract_strided_slice %92 {offsets = [4, 0], sizes = [1, 64], strides = [1, 1]} : vector<16x64xf32> to vector<1x64xf32>
    %693 = vector.broadcast %691 : vector<2x1xf32> to vector<2x64xf32>
    %694 = vector.broadcast %692 : vector<1x64xf32> to vector<2x64xf32>
    %695 = arith.mulf %693, %694 : vector<2x64xf32>
    %696 = vector.extract_strided_slice %669 {offsets = [0, 5], sizes = [2, 1], strides = [1, 1]} : vector<2x16xf32> to vector<2x1xf32>
    %697 = vector.extract_strided_slice %92 {offsets = [5, 0], sizes = [1, 64], strides = [1, 1]} : vector<16x64xf32> to vector<1x64xf32>
    %698 = vector.broadcast %696 : vector<2x1xf32> to vector<2x64xf32>
    %699 = vector.broadcast %697 : vector<1x64xf32> to vector<2x64xf32>
    %700 = arith.mulf %698, %699 : vector<2x64xf32>
    %701 = vector.extract_strided_slice %669 {offsets = [0, 6], sizes = [2, 1], strides = [1, 1]} : vector<2x16xf32> to vector<2x1xf32>
    %702 = vector.extract_strided_slice %92 {offsets = [6, 0], sizes = [1, 64], strides = [1, 1]} : vector<16x64xf32> to vector<1x64xf32>
    %703 = vector.broadcast %701 : vector<2x1xf32> to vector<2x64xf32>
    %704 = vector.broadcast %702 : vector<1x64xf32> to vector<2x64xf32>
    %705 = arith.mulf %703, %704 : vector<2x64xf32>
    %706 = vector.extract_strided_slice %669 {offsets = [0, 7], sizes = [2, 1], strides = [1, 1]} : vector<2x16xf32> to vector<2x1xf32>
    %707 = vector.extract_strided_slice %92 {offsets = [7, 0], sizes = [1, 64], strides = [1, 1]} : vector<16x64xf32> to vector<1x64xf32>
    %708 = vector.broadcast %706 : vector<2x1xf32> to vector<2x64xf32>
    %709 = vector.broadcast %707 : vector<1x64xf32> to vector<2x64xf32>
    %710 = arith.mulf %708, %709 : vector<2x64xf32>
    %711 = vector.extract_strided_slice %669 {offsets = [0, 8], sizes = [2, 1], strides = [1, 1]} : vector<2x16xf32> to vector<2x1xf32>
    %712 = vector.extract_strided_slice %92 {offsets = [8, 0], sizes = [1, 64], strides = [1, 1]} : vector<16x64xf32> to vector<1x64xf32>
    %713 = vector.broadcast %711 : vector<2x1xf32> to vector<2x64xf32>
    %714 = vector.broadcast %712 : vector<1x64xf32> to vector<2x64xf32>
    %715 = arith.mulf %713, %714 : vector<2x64xf32>
    %716 = vector.extract_strided_slice %669 {offsets = [0, 9], sizes = [2, 1], strides = [1, 1]} : vector<2x16xf32> to vector<2x1xf32>
    %717 = vector.extract_strided_slice %92 {offsets = [9, 0], sizes = [1, 64], strides = [1, 1]} : vector<16x64xf32> to vector<1x64xf32>
    %718 = vector.broadcast %716 : vector<2x1xf32> to vector<2x64xf32>
    %719 = vector.broadcast %717 : vector<1x64xf32> to vector<2x64xf32>
    %720 = arith.mulf %718, %719 : vector<2x64xf32>
    %721 = vector.extract_strided_slice %669 {offsets = [0, 10], sizes = [2, 1], strides = [1, 1]} : vector<2x16xf32> to vector<2x1xf32>
    %722 = vector.extract_strided_slice %92 {offsets = [10, 0], sizes = [1, 64], strides = [1, 1]} : vector<16x64xf32> to vector<1x64xf32>
    %723 = vector.broadcast %721 : vector<2x1xf32> to vector<2x64xf32>
    %724 = vector.broadcast %722 : vector<1x64xf32> to vector<2x64xf32>
    %725 = arith.mulf %723, %724 : vector<2x64xf32>
    %726 = vector.extract_strided_slice %669 {offsets = [0, 11], sizes = [2, 1], strides = [1, 1]} : vector<2x16xf32> to vector<2x1xf32>
    %727 = vector.extract_strided_slice %92 {offsets = [11, 0], sizes = [1, 64], strides = [1, 1]} : vector<16x64xf32> to vector<1x64xf32>
    %728 = vector.broadcast %726 : vector<2x1xf32> to vector<2x64xf32>
    %729 = vector.broadcast %727 : vector<1x64xf32> to vector<2x64xf32>
    %730 = arith.mulf %728, %729 : vector<2x64xf32>
    %731 = vector.extract_strided_slice %669 {offsets = [0, 12], sizes = [2, 1], strides = [1, 1]} : vector<2x16xf32> to vector<2x1xf32>
    %732 = vector.extract_strided_slice %92 {offsets = [12, 0], sizes = [1, 64], strides = [1, 1]} : vector<16x64xf32> to vector<1x64xf32>
    %733 = vector.broadcast %731 : vector<2x1xf32> to vector<2x64xf32>
    %734 = vector.broadcast %732 : vector<1x64xf32> to vector<2x64xf32>
    %735 = arith.mulf %733, %734 : vector<2x64xf32>
    %736 = vector.extract_strided_slice %669 {offsets = [0, 13], sizes = [2, 1], strides = [1, 1]} : vector<2x16xf32> to vector<2x1xf32>
    %737 = vector.extract_strided_slice %92 {offsets = [13, 0], sizes = [1, 64], strides = [1, 1]} : vector<16x64xf32> to vector<1x64xf32>
    %738 = vector.broadcast %736 : vector<2x1xf32> to vector<2x64xf32>
    %739 = vector.broadcast %737 : vector<1x64xf32> to vector<2x64xf32>
    %740 = arith.mulf %738, %739 : vector<2x64xf32>
    %741 = vector.extract_strided_slice %669 {offsets = [0, 14], sizes = [2, 1], strides = [1, 1]} : vector<2x16xf32> to vector<2x1xf32>
    %742 = vector.extract_strided_slice %92 {offsets = [14, 0], sizes = [1, 64], strides = [1, 1]} : vector<16x64xf32> to vector<1x64xf32>
    %743 = vector.broadcast %741 : vector<2x1xf32> to vector<2x64xf32>
    %744 = vector.broadcast %742 : vector<1x64xf32> to vector<2x64xf32>
    %745 = arith.mulf %743, %744 : vector<2x64xf32>
    %746 = vector.extract_strided_slice %669 {offsets = [0, 15], sizes = [2, 1], strides = [1, 1]} : vector<2x16xf32> to vector<2x1xf32>
    %747 = vector.extract_strided_slice %92 {offsets = [15, 0], sizes = [1, 64], strides = [1, 1]} : vector<16x64xf32> to vector<1x64xf32>
    %748 = vector.broadcast %746 : vector<2x1xf32> to vector<2x64xf32>
    %749 = vector.broadcast %747 : vector<1x64xf32> to vector<2x64xf32>
    %750 = arith.mulf %748, %749 : vector<2x64xf32>
    %751 = arith.addf %670, %675 : vector<2x64xf32>
    %752 = arith.addf %680, %685 : vector<2x64xf32>
    %753 = arith.addf %690, %695 : vector<2x64xf32>
    %754 = arith.addf %700, %705 : vector<2x64xf32>
    %755 = arith.addf %710, %715 : vector<2x64xf32>
    %756 = arith.addf %720, %725 : vector<2x64xf32>
    %757 = arith.addf %730, %735 : vector<2x64xf32>
    %758 = arith.addf %740, %745 : vector<2x64xf32>
    %759 = arith.addf %751, %752 : vector<2x64xf32>
    %760 = arith.addf %753, %754 : vector<2x64xf32>
    %761 = arith.addf %755, %756 : vector<2x64xf32>
    %762 = arith.addf %757, %758 : vector<2x64xf32>
    %763 = arith.addf %759, %760 : vector<2x64xf32>
    %764 = arith.addf %761, %762 : vector<2x64xf32>
    %765 = arith.addf %763, %764 : vector<2x64xf32>
    %766 = arith.addf %765, %750 : vector<2x64xf32>
    %767 = arith.negf %766 : vector<2x64xf32>
    %768 = math.exp %767 : vector<2x64xf32>
    %cst_38 = arith.constant 1.000000e+00 : f32
    %769 = vector.broadcast %cst_38 : f32 to vector<2x64xf32>
    %770 = arith.addf %769, %768 : vector<2x64xf32>
    %771 = arith.divf %769, %770 : vector<2x64xf32>
    %772 = vector.extract_strided_slice %771 {offsets = [0, 0], sizes = [2, 16], strides = [1, 1]} : vector<2x64xf32> to vector<2x16xf32>
    %773 = vector.extract_strided_slice %771 {offsets = [0, 16], sizes = [2, 16], strides = [1, 1]} : vector<2x64xf32> to vector<2x16xf32>
    %774 = vector.extract_strided_slice %771 {offsets = [0, 48], sizes = [2, 16], strides = [1, 1]} : vector<2x64xf32> to vector<2x16xf32>
    %775 = vector.extract_strided_slice %766 {offsets = [0, 32], sizes = [2, 16], strides = [1, 1]} : vector<2x64xf32> to vector<2x16xf32>
    %776 = math.tanh %775 : vector<2x16xf32>
    %777 = arith.mulf %773, %667 : vector<2x16xf32>
    %778 = arith.mulf %772, %776 : vector<2x16xf32>
    %779 = arith.addf %777, %778 : vector<2x16xf32>
    %780 = math.tanh %779 : vector<2x16xf32>
    %781 = arith.mulf %774, %780 : vector<2x16xf32>
    %782 = vector.extract_strided_slice %91 {offsets = [14, 0], sizes = [2, 64], strides = [1, 1]} : vector<32x64xf32> to vector<2x64xf32>
    %783 = vector.extract_strided_slice %781 {offsets = [0, 0], sizes = [2, 1], strides = [1, 1]} : vector<2x16xf32> to vector<2x1xf32>
    %784 = vector.extract_strided_slice %92 {offsets = [0, 0], sizes = [1, 64], strides = [1, 1]} : vector<16x64xf32> to vector<1x64xf32>
    %785 = vector.broadcast %783 : vector<2x1xf32> to vector<2x64xf32>
    %786 = vector.broadcast %784 : vector<1x64xf32> to vector<2x64xf32>
    %787 = arith.mulf %785, %786 : vector<2x64xf32>
    %788 = vector.extract_strided_slice %781 {offsets = [0, 1], sizes = [2, 1], strides = [1, 1]} : vector<2x16xf32> to vector<2x1xf32>
    %789 = vector.extract_strided_slice %92 {offsets = [1, 0], sizes = [1, 64], strides = [1, 1]} : vector<16x64xf32> to vector<1x64xf32>
    %790 = vector.broadcast %788 : vector<2x1xf32> to vector<2x64xf32>
    %791 = vector.broadcast %789 : vector<1x64xf32> to vector<2x64xf32>
    %792 = arith.mulf %790, %791 : vector<2x64xf32>
    %793 = vector.extract_strided_slice %781 {offsets = [0, 2], sizes = [2, 1], strides = [1, 1]} : vector<2x16xf32> to vector<2x1xf32>
    %794 = vector.extract_strided_slice %92 {offsets = [2, 0], sizes = [1, 64], strides = [1, 1]} : vector<16x64xf32> to vector<1x64xf32>
    %795 = vector.broadcast %793 : vector<2x1xf32> to vector<2x64xf32>
    %796 = vector.broadcast %794 : vector<1x64xf32> to vector<2x64xf32>
    %797 = arith.mulf %795, %796 : vector<2x64xf32>
    %798 = vector.extract_strided_slice %781 {offsets = [0, 3], sizes = [2, 1], strides = [1, 1]} : vector<2x16xf32> to vector<2x1xf32>
    %799 = vector.extract_strided_slice %92 {offsets = [3, 0], sizes = [1, 64], strides = [1, 1]} : vector<16x64xf32> to vector<1x64xf32>
    %800 = vector.broadcast %798 : vector<2x1xf32> to vector<2x64xf32>
    %801 = vector.broadcast %799 : vector<1x64xf32> to vector<2x64xf32>
    %802 = arith.mulf %800, %801 : vector<2x64xf32>
    %803 = vector.extract_strided_slice %781 {offsets = [0, 4], sizes = [2, 1], strides = [1, 1]} : vector<2x16xf32> to vector<2x1xf32>
    %804 = vector.extract_strided_slice %92 {offsets = [4, 0], sizes = [1, 64], strides = [1, 1]} : vector<16x64xf32> to vector<1x64xf32>
    %805 = vector.broadcast %803 : vector<2x1xf32> to vector<2x64xf32>
    %806 = vector.broadcast %804 : vector<1x64xf32> to vector<2x64xf32>
    %807 = arith.mulf %805, %806 : vector<2x64xf32>
    %808 = vector.extract_strided_slice %781 {offsets = [0, 5], sizes = [2, 1], strides = [1, 1]} : vector<2x16xf32> to vector<2x1xf32>
    %809 = vector.extract_strided_slice %92 {offsets = [5, 0], sizes = [1, 64], strides = [1, 1]} : vector<16x64xf32> to vector<1x64xf32>
    %810 = vector.broadcast %808 : vector<2x1xf32> to vector<2x64xf32>
    %811 = vector.broadcast %809 : vector<1x64xf32> to vector<2x64xf32>
    %812 = arith.mulf %810, %811 : vector<2x64xf32>
    %813 = vector.extract_strided_slice %781 {offsets = [0, 6], sizes = [2, 1], strides = [1, 1]} : vector<2x16xf32> to vector<2x1xf32>
    %814 = vector.extract_strided_slice %92 {offsets = [6, 0], sizes = [1, 64], strides = [1, 1]} : vector<16x64xf32> to vector<1x64xf32>
    %815 = vector.broadcast %813 : vector<2x1xf32> to vector<2x64xf32>
    %816 = vector.broadcast %814 : vector<1x64xf32> to vector<2x64xf32>
    %817 = arith.mulf %815, %816 : vector<2x64xf32>
    %818 = vector.extract_strided_slice %781 {offsets = [0, 7], sizes = [2, 1], strides = [1, 1]} : vector<2x16xf32> to vector<2x1xf32>
    %819 = vector.extract_strided_slice %92 {offsets = [7, 0], sizes = [1, 64], strides = [1, 1]} : vector<16x64xf32> to vector<1x64xf32>
    %820 = vector.broadcast %818 : vector<2x1xf32> to vector<2x64xf32>
    %821 = vector.broadcast %819 : vector<1x64xf32> to vector<2x64xf32>
    %822 = arith.mulf %820, %821 : vector<2x64xf32>
    %823 = vector.extract_strided_slice %781 {offsets = [0, 8], sizes = [2, 1], strides = [1, 1]} : vector<2x16xf32> to vector<2x1xf32>
    %824 = vector.extract_strided_slice %92 {offsets = [8, 0], sizes = [1, 64], strides = [1, 1]} : vector<16x64xf32> to vector<1x64xf32>
    %825 = vector.broadcast %823 : vector<2x1xf32> to vector<2x64xf32>
    %826 = vector.broadcast %824 : vector<1x64xf32> to vector<2x64xf32>
    %827 = arith.mulf %825, %826 : vector<2x64xf32>
    %828 = vector.extract_strided_slice %781 {offsets = [0, 9], sizes = [2, 1], strides = [1, 1]} : vector<2x16xf32> to vector<2x1xf32>
    %829 = vector.extract_strided_slice %92 {offsets = [9, 0], sizes = [1, 64], strides = [1, 1]} : vector<16x64xf32> to vector<1x64xf32>
    %830 = vector.broadcast %828 : vector<2x1xf32> to vector<2x64xf32>
    %831 = vector.broadcast %829 : vector<1x64xf32> to vector<2x64xf32>
    %832 = arith.mulf %830, %831 : vector<2x64xf32>
    %833 = vector.extract_strided_slice %781 {offsets = [0, 10], sizes = [2, 1], strides = [1, 1]} : vector<2x16xf32> to vector<2x1xf32>
    %834 = vector.extract_strided_slice %92 {offsets = [10, 0], sizes = [1, 64], strides = [1, 1]} : vector<16x64xf32> to vector<1x64xf32>
    %835 = vector.broadcast %833 : vector<2x1xf32> to vector<2x64xf32>
    %836 = vector.broadcast %834 : vector<1x64xf32> to vector<2x64xf32>
    %837 = arith.mulf %835, %836 : vector<2x64xf32>
    %838 = vector.extract_strided_slice %781 {offsets = [0, 11], sizes = [2, 1], strides = [1, 1]} : vector<2x16xf32> to vector<2x1xf32>
    %839 = vector.extract_strided_slice %92 {offsets = [11, 0], sizes = [1, 64], strides = [1, 1]} : vector<16x64xf32> to vector<1x64xf32>
    %840 = vector.broadcast %838 : vector<2x1xf32> to vector<2x64xf32>
    %841 = vector.broadcast %839 : vector<1x64xf32> to vector<2x64xf32>
    %842 = arith.mulf %840, %841 : vector<2x64xf32>
    %843 = vector.extract_strided_slice %781 {offsets = [0, 12], sizes = [2, 1], strides = [1, 1]} : vector<2x16xf32> to vector<2x1xf32>
    %844 = vector.extract_strided_slice %92 {offsets = [12, 0], sizes = [1, 64], strides = [1, 1]} : vector<16x64xf32> to vector<1x64xf32>
    %845 = vector.broadcast %843 : vector<2x1xf32> to vector<2x64xf32>
    %846 = vector.broadcast %844 : vector<1x64xf32> to vector<2x64xf32>
    %847 = arith.mulf %845, %846 : vector<2x64xf32>
    %848 = vector.extract_strided_slice %781 {offsets = [0, 13], sizes = [2, 1], strides = [1, 1]} : vector<2x16xf32> to vector<2x1xf32>
    %849 = vector.extract_strided_slice %92 {offsets = [13, 0], sizes = [1, 64], strides = [1, 1]} : vector<16x64xf32> to vector<1x64xf32>
    %850 = vector.broadcast %848 : vector<2x1xf32> to vector<2x64xf32>
    %851 = vector.broadcast %849 : vector<1x64xf32> to vector<2x64xf32>
    %852 = arith.mulf %850, %851 : vector<2x64xf32>
    %853 = vector.extract_strided_slice %781 {offsets = [0, 14], sizes = [2, 1], strides = [1, 1]} : vector<2x16xf32> to vector<2x1xf32>
    %854 = vector.extract_strided_slice %92 {offsets = [14, 0], sizes = [1, 64], strides = [1, 1]} : vector<16x64xf32> to vector<1x64xf32>
    %855 = vector.broadcast %853 : vector<2x1xf32> to vector<2x64xf32>
    %856 = vector.broadcast %854 : vector<1x64xf32> to vector<2x64xf32>
    %857 = arith.mulf %855, %856 : vector<2x64xf32>
    %858 = vector.extract_strided_slice %781 {offsets = [0, 15], sizes = [2, 1], strides = [1, 1]} : vector<2x16xf32> to vector<2x1xf32>
    %859 = vector.extract_strided_slice %92 {offsets = [15, 0], sizes = [1, 64], strides = [1, 1]} : vector<16x64xf32> to vector<1x64xf32>
    %860 = vector.broadcast %858 : vector<2x1xf32> to vector<2x64xf32>
    %861 = vector.broadcast %859 : vector<1x64xf32> to vector<2x64xf32>
    %862 = arith.mulf %860, %861 : vector<2x64xf32>
    %863 = arith.addf %782, %787 : vector<2x64xf32>
    %864 = arith.addf %792, %797 : vector<2x64xf32>
    %865 = arith.addf %802, %807 : vector<2x64xf32>
    %866 = arith.addf %812, %817 : vector<2x64xf32>
    %867 = arith.addf %822, %827 : vector<2x64xf32>
    %868 = arith.addf %832, %837 : vector<2x64xf32>
    %869 = arith.addf %842, %847 : vector<2x64xf32>
    %870 = arith.addf %852, %857 : vector<2x64xf32>
    %871 = arith.addf %863, %864 : vector<2x64xf32>
    %872 = arith.addf %865, %866 : vector<2x64xf32>
    %873 = arith.addf %867, %868 : vector<2x64xf32>
    %874 = arith.addf %869, %870 : vector<2x64xf32>
    %875 = arith.addf %871, %872 : vector<2x64xf32>
    %876 = arith.addf %873, %874 : vector<2x64xf32>
    %877 = arith.addf %875, %876 : vector<2x64xf32>
    %878 = arith.addf %877, %862 : vector<2x64xf32>
    %879 = arith.negf %878 : vector<2x64xf32>
    %880 = math.exp %879 : vector<2x64xf32>
    %cst_39 = arith.constant 1.000000e+00 : f32
    %881 = vector.broadcast %cst_39 : f32 to vector<2x64xf32>
    %882 = arith.addf %881, %880 : vector<2x64xf32>
    %883 = arith.divf %881, %882 : vector<2x64xf32>
    %884 = vector.extract_strided_slice %883 {offsets = [0, 0], sizes = [2, 16], strides = [1, 1]} : vector<2x64xf32> to vector<2x16xf32>
    %885 = vector.extract_strided_slice %883 {offsets = [0, 16], sizes = [2, 16], strides = [1, 1]} : vector<2x64xf32> to vector<2x16xf32>
    %886 = vector.extract_strided_slice %883 {offsets = [0, 48], sizes = [2, 16], strides = [1, 1]} : vector<2x64xf32> to vector<2x16xf32>
    %887 = vector.extract_strided_slice %878 {offsets = [0, 32], sizes = [2, 16], strides = [1, 1]} : vector<2x64xf32> to vector<2x16xf32>
    %888 = math.tanh %887 : vector<2x16xf32>
    %889 = arith.mulf %885, %779 : vector<2x16xf32>
    %890 = arith.mulf %884, %888 : vector<2x16xf32>
    %891 = arith.addf %889, %890 : vector<2x16xf32>
    %892 = math.tanh %891 : vector<2x16xf32>
    %893 = arith.mulf %886, %892 : vector<2x16xf32>
    %894 = vector.extract_strided_slice %91 {offsets = [16, 0], sizes = [2, 64], strides = [1, 1]} : vector<32x64xf32> to vector<2x64xf32>
    %895 = vector.extract_strided_slice %893 {offsets = [0, 0], sizes = [2, 1], strides = [1, 1]} : vector<2x16xf32> to vector<2x1xf32>
    %896 = vector.extract_strided_slice %92 {offsets = [0, 0], sizes = [1, 64], strides = [1, 1]} : vector<16x64xf32> to vector<1x64xf32>
    %897 = vector.broadcast %895 : vector<2x1xf32> to vector<2x64xf32>
    %898 = vector.broadcast %896 : vector<1x64xf32> to vector<2x64xf32>
    %899 = arith.mulf %897, %898 : vector<2x64xf32>
    %900 = vector.extract_strided_slice %893 {offsets = [0, 1], sizes = [2, 1], strides = [1, 1]} : vector<2x16xf32> to vector<2x1xf32>
    %901 = vector.extract_strided_slice %92 {offsets = [1, 0], sizes = [1, 64], strides = [1, 1]} : vector<16x64xf32> to vector<1x64xf32>
    %902 = vector.broadcast %900 : vector<2x1xf32> to vector<2x64xf32>
    %903 = vector.broadcast %901 : vector<1x64xf32> to vector<2x64xf32>
    %904 = arith.mulf %902, %903 : vector<2x64xf32>
    %905 = vector.extract_strided_slice %893 {offsets = [0, 2], sizes = [2, 1], strides = [1, 1]} : vector<2x16xf32> to vector<2x1xf32>
    %906 = vector.extract_strided_slice %92 {offsets = [2, 0], sizes = [1, 64], strides = [1, 1]} : vector<16x64xf32> to vector<1x64xf32>
    %907 = vector.broadcast %905 : vector<2x1xf32> to vector<2x64xf32>
    %908 = vector.broadcast %906 : vector<1x64xf32> to vector<2x64xf32>
    %909 = arith.mulf %907, %908 : vector<2x64xf32>
    %910 = vector.extract_strided_slice %893 {offsets = [0, 3], sizes = [2, 1], strides = [1, 1]} : vector<2x16xf32> to vector<2x1xf32>
    %911 = vector.extract_strided_slice %92 {offsets = [3, 0], sizes = [1, 64], strides = [1, 1]} : vector<16x64xf32> to vector<1x64xf32>
    %912 = vector.broadcast %910 : vector<2x1xf32> to vector<2x64xf32>
    %913 = vector.broadcast %911 : vector<1x64xf32> to vector<2x64xf32>
    %914 = arith.mulf %912, %913 : vector<2x64xf32>
    %915 = vector.extract_strided_slice %893 {offsets = [0, 4], sizes = [2, 1], strides = [1, 1]} : vector<2x16xf32> to vector<2x1xf32>
    %916 = vector.extract_strided_slice %92 {offsets = [4, 0], sizes = [1, 64], strides = [1, 1]} : vector<16x64xf32> to vector<1x64xf32>
    %917 = vector.broadcast %915 : vector<2x1xf32> to vector<2x64xf32>
    %918 = vector.broadcast %916 : vector<1x64xf32> to vector<2x64xf32>
    %919 = arith.mulf %917, %918 : vector<2x64xf32>
    %920 = vector.extract_strided_slice %893 {offsets = [0, 5], sizes = [2, 1], strides = [1, 1]} : vector<2x16xf32> to vector<2x1xf32>
    %921 = vector.extract_strided_slice %92 {offsets = [5, 0], sizes = [1, 64], strides = [1, 1]} : vector<16x64xf32> to vector<1x64xf32>
    %922 = vector.broadcast %920 : vector<2x1xf32> to vector<2x64xf32>
    %923 = vector.broadcast %921 : vector<1x64xf32> to vector<2x64xf32>
    %924 = arith.mulf %922, %923 : vector<2x64xf32>
    %925 = vector.extract_strided_slice %893 {offsets = [0, 6], sizes = [2, 1], strides = [1, 1]} : vector<2x16xf32> to vector<2x1xf32>
    %926 = vector.extract_strided_slice %92 {offsets = [6, 0], sizes = [1, 64], strides = [1, 1]} : vector<16x64xf32> to vector<1x64xf32>
    %927 = vector.broadcast %925 : vector<2x1xf32> to vector<2x64xf32>
    %928 = vector.broadcast %926 : vector<1x64xf32> to vector<2x64xf32>
    %929 = arith.mulf %927, %928 : vector<2x64xf32>
    %930 = vector.extract_strided_slice %893 {offsets = [0, 7], sizes = [2, 1], strides = [1, 1]} : vector<2x16xf32> to vector<2x1xf32>
    %931 = vector.extract_strided_slice %92 {offsets = [7, 0], sizes = [1, 64], strides = [1, 1]} : vector<16x64xf32> to vector<1x64xf32>
    %932 = vector.broadcast %930 : vector<2x1xf32> to vector<2x64xf32>
    %933 = vector.broadcast %931 : vector<1x64xf32> to vector<2x64xf32>
    %934 = arith.mulf %932, %933 : vector<2x64xf32>
    %935 = vector.extract_strided_slice %893 {offsets = [0, 8], sizes = [2, 1], strides = [1, 1]} : vector<2x16xf32> to vector<2x1xf32>
    %936 = vector.extract_strided_slice %92 {offsets = [8, 0], sizes = [1, 64], strides = [1, 1]} : vector<16x64xf32> to vector<1x64xf32>
    %937 = vector.broadcast %935 : vector<2x1xf32> to vector<2x64xf32>
    %938 = vector.broadcast %936 : vector<1x64xf32> to vector<2x64xf32>
    %939 = arith.mulf %937, %938 : vector<2x64xf32>
    %940 = vector.extract_strided_slice %893 {offsets = [0, 9], sizes = [2, 1], strides = [1, 1]} : vector<2x16xf32> to vector<2x1xf32>
    %941 = vector.extract_strided_slice %92 {offsets = [9, 0], sizes = [1, 64], strides = [1, 1]} : vector<16x64xf32> to vector<1x64xf32>
    %942 = vector.broadcast %940 : vector<2x1xf32> to vector<2x64xf32>
    %943 = vector.broadcast %941 : vector<1x64xf32> to vector<2x64xf32>
    %944 = arith.mulf %942, %943 : vector<2x64xf32>
    %945 = vector.extract_strided_slice %893 {offsets = [0, 10], sizes = [2, 1], strides = [1, 1]} : vector<2x16xf32> to vector<2x1xf32>
    %946 = vector.extract_strided_slice %92 {offsets = [10, 0], sizes = [1, 64], strides = [1, 1]} : vector<16x64xf32> to vector<1x64xf32>
    %947 = vector.broadcast %945 : vector<2x1xf32> to vector<2x64xf32>
    %948 = vector.broadcast %946 : vector<1x64xf32> to vector<2x64xf32>
    %949 = arith.mulf %947, %948 : vector<2x64xf32>
    %950 = vector.extract_strided_slice %893 {offsets = [0, 11], sizes = [2, 1], strides = [1, 1]} : vector<2x16xf32> to vector<2x1xf32>
    %951 = vector.extract_strided_slice %92 {offsets = [11, 0], sizes = [1, 64], strides = [1, 1]} : vector<16x64xf32> to vector<1x64xf32>
    %952 = vector.broadcast %950 : vector<2x1xf32> to vector<2x64xf32>
    %953 = vector.broadcast %951 : vector<1x64xf32> to vector<2x64xf32>
    %954 = arith.mulf %952, %953 : vector<2x64xf32>
    %955 = vector.extract_strided_slice %893 {offsets = [0, 12], sizes = [2, 1], strides = [1, 1]} : vector<2x16xf32> to vector<2x1xf32>
    %956 = vector.extract_strided_slice %92 {offsets = [12, 0], sizes = [1, 64], strides = [1, 1]} : vector<16x64xf32> to vector<1x64xf32>
    %957 = vector.broadcast %955 : vector<2x1xf32> to vector<2x64xf32>
    %958 = vector.broadcast %956 : vector<1x64xf32> to vector<2x64xf32>
    %959 = arith.mulf %957, %958 : vector<2x64xf32>
    %960 = vector.extract_strided_slice %893 {offsets = [0, 13], sizes = [2, 1], strides = [1, 1]} : vector<2x16xf32> to vector<2x1xf32>
    %961 = vector.extract_strided_slice %92 {offsets = [13, 0], sizes = [1, 64], strides = [1, 1]} : vector<16x64xf32> to vector<1x64xf32>
    %962 = vector.broadcast %960 : vector<2x1xf32> to vector<2x64xf32>
    %963 = vector.broadcast %961 : vector<1x64xf32> to vector<2x64xf32>
    %964 = arith.mulf %962, %963 : vector<2x64xf32>
    %965 = vector.extract_strided_slice %893 {offsets = [0, 14], sizes = [2, 1], strides = [1, 1]} : vector<2x16xf32> to vector<2x1xf32>
    %966 = vector.extract_strided_slice %92 {offsets = [14, 0], sizes = [1, 64], strides = [1, 1]} : vector<16x64xf32> to vector<1x64xf32>
    %967 = vector.broadcast %965 : vector<2x1xf32> to vector<2x64xf32>
    %968 = vector.broadcast %966 : vector<1x64xf32> to vector<2x64xf32>
    %969 = arith.mulf %967, %968 : vector<2x64xf32>
    %970 = vector.extract_strided_slice %893 {offsets = [0, 15], sizes = [2, 1], strides = [1, 1]} : vector<2x16xf32> to vector<2x1xf32>
    %971 = vector.extract_strided_slice %92 {offsets = [15, 0], sizes = [1, 64], strides = [1, 1]} : vector<16x64xf32> to vector<1x64xf32>
    %972 = vector.broadcast %970 : vector<2x1xf32> to vector<2x64xf32>
    %973 = vector.broadcast %971 : vector<1x64xf32> to vector<2x64xf32>
    %974 = arith.mulf %972, %973 : vector<2x64xf32>
    %975 = arith.addf %894, %899 : vector<2x64xf32>
    %976 = arith.addf %904, %909 : vector<2x64xf32>
    %977 = arith.addf %914, %919 : vector<2x64xf32>
    %978 = arith.addf %924, %929 : vector<2x64xf32>
    %979 = arith.addf %934, %939 : vector<2x64xf32>
    %980 = arith.addf %944, %949 : vector<2x64xf32>
    %981 = arith.addf %954, %959 : vector<2x64xf32>
    %982 = arith.addf %964, %969 : vector<2x64xf32>
    %983 = arith.addf %975, %976 : vector<2x64xf32>
    %984 = arith.addf %977, %978 : vector<2x64xf32>
    %985 = arith.addf %979, %980 : vector<2x64xf32>
    %986 = arith.addf %981, %982 : vector<2x64xf32>
    %987 = arith.addf %983, %984 : vector<2x64xf32>
    %988 = arith.addf %985, %986 : vector<2x64xf32>
    %989 = arith.addf %987, %988 : vector<2x64xf32>
    %990 = arith.addf %989, %974 : vector<2x64xf32>
    %991 = arith.negf %990 : vector<2x64xf32>
    %992 = math.exp %991 : vector<2x64xf32>
    %cst_40 = arith.constant 1.000000e+00 : f32
    %993 = vector.broadcast %cst_40 : f32 to vector<2x64xf32>
    %994 = arith.addf %993, %992 : vector<2x64xf32>
    %995 = arith.divf %993, %994 : vector<2x64xf32>
    %996 = vector.extract_strided_slice %995 {offsets = [0, 0], sizes = [2, 16], strides = [1, 1]} : vector<2x64xf32> to vector<2x16xf32>
    %997 = vector.extract_strided_slice %995 {offsets = [0, 16], sizes = [2, 16], strides = [1, 1]} : vector<2x64xf32> to vector<2x16xf32>
    %998 = vector.extract_strided_slice %995 {offsets = [0, 48], sizes = [2, 16], strides = [1, 1]} : vector<2x64xf32> to vector<2x16xf32>
    %999 = vector.extract_strided_slice %990 {offsets = [0, 32], sizes = [2, 16], strides = [1, 1]} : vector<2x64xf32> to vector<2x16xf32>
    %1000 = math.tanh %999 : vector<2x16xf32>
    %1001 = arith.mulf %997, %891 : vector<2x16xf32>
    %1002 = arith.mulf %996, %1000 : vector<2x16xf32>
    %1003 = arith.addf %1001, %1002 : vector<2x16xf32>
    %1004 = math.tanh %1003 : vector<2x16xf32>
    %1005 = arith.mulf %998, %1004 : vector<2x16xf32>
    %1006 = vector.extract_strided_slice %91 {offsets = [18, 0], sizes = [2, 64], strides = [1, 1]} : vector<32x64xf32> to vector<2x64xf32>
    %1007 = vector.extract_strided_slice %1005 {offsets = [0, 0], sizes = [2, 1], strides = [1, 1]} : vector<2x16xf32> to vector<2x1xf32>
    %1008 = vector.extract_strided_slice %92 {offsets = [0, 0], sizes = [1, 64], strides = [1, 1]} : vector<16x64xf32> to vector<1x64xf32>
    %1009 = vector.broadcast %1007 : vector<2x1xf32> to vector<2x64xf32>
    %1010 = vector.broadcast %1008 : vector<1x64xf32> to vector<2x64xf32>
    %1011 = arith.mulf %1009, %1010 : vector<2x64xf32>
    %1012 = vector.extract_strided_slice %1005 {offsets = [0, 1], sizes = [2, 1], strides = [1, 1]} : vector<2x16xf32> to vector<2x1xf32>
    %1013 = vector.extract_strided_slice %92 {offsets = [1, 0], sizes = [1, 64], strides = [1, 1]} : vector<16x64xf32> to vector<1x64xf32>
    %1014 = vector.broadcast %1012 : vector<2x1xf32> to vector<2x64xf32>
    %1015 = vector.broadcast %1013 : vector<1x64xf32> to vector<2x64xf32>
    %1016 = arith.mulf %1014, %1015 : vector<2x64xf32>
    %1017 = vector.extract_strided_slice %1005 {offsets = [0, 2], sizes = [2, 1], strides = [1, 1]} : vector<2x16xf32> to vector<2x1xf32>
    %1018 = vector.extract_strided_slice %92 {offsets = [2, 0], sizes = [1, 64], strides = [1, 1]} : vector<16x64xf32> to vector<1x64xf32>
    %1019 = vector.broadcast %1017 : vector<2x1xf32> to vector<2x64xf32>
    %1020 = vector.broadcast %1018 : vector<1x64xf32> to vector<2x64xf32>
    %1021 = arith.mulf %1019, %1020 : vector<2x64xf32>
    %1022 = vector.extract_strided_slice %1005 {offsets = [0, 3], sizes = [2, 1], strides = [1, 1]} : vector<2x16xf32> to vector<2x1xf32>
    %1023 = vector.extract_strided_slice %92 {offsets = [3, 0], sizes = [1, 64], strides = [1, 1]} : vector<16x64xf32> to vector<1x64xf32>
    %1024 = vector.broadcast %1022 : vector<2x1xf32> to vector<2x64xf32>
    %1025 = vector.broadcast %1023 : vector<1x64xf32> to vector<2x64xf32>
    %1026 = arith.mulf %1024, %1025 : vector<2x64xf32>
    %1027 = vector.extract_strided_slice %1005 {offsets = [0, 4], sizes = [2, 1], strides = [1, 1]} : vector<2x16xf32> to vector<2x1xf32>
    %1028 = vector.extract_strided_slice %92 {offsets = [4, 0], sizes = [1, 64], strides = [1, 1]} : vector<16x64xf32> to vector<1x64xf32>
    %1029 = vector.broadcast %1027 : vector<2x1xf32> to vector<2x64xf32>
    %1030 = vector.broadcast %1028 : vector<1x64xf32> to vector<2x64xf32>
    %1031 = arith.mulf %1029, %1030 : vector<2x64xf32>
    %1032 = vector.extract_strided_slice %1005 {offsets = [0, 5], sizes = [2, 1], strides = [1, 1]} : vector<2x16xf32> to vector<2x1xf32>
    %1033 = vector.extract_strided_slice %92 {offsets = [5, 0], sizes = [1, 64], strides = [1, 1]} : vector<16x64xf32> to vector<1x64xf32>
    %1034 = vector.broadcast %1032 : vector<2x1xf32> to vector<2x64xf32>
    %1035 = vector.broadcast %1033 : vector<1x64xf32> to vector<2x64xf32>
    %1036 = arith.mulf %1034, %1035 : vector<2x64xf32>
    %1037 = vector.extract_strided_slice %1005 {offsets = [0, 6], sizes = [2, 1], strides = [1, 1]} : vector<2x16xf32> to vector<2x1xf32>
    %1038 = vector.extract_strided_slice %92 {offsets = [6, 0], sizes = [1, 64], strides = [1, 1]} : vector<16x64xf32> to vector<1x64xf32>
    %1039 = vector.broadcast %1037 : vector<2x1xf32> to vector<2x64xf32>
    %1040 = vector.broadcast %1038 : vector<1x64xf32> to vector<2x64xf32>
    %1041 = arith.mulf %1039, %1040 : vector<2x64xf32>
    %1042 = vector.extract_strided_slice %1005 {offsets = [0, 7], sizes = [2, 1], strides = [1, 1]} : vector<2x16xf32> to vector<2x1xf32>
    %1043 = vector.extract_strided_slice %92 {offsets = [7, 0], sizes = [1, 64], strides = [1, 1]} : vector<16x64xf32> to vector<1x64xf32>
    %1044 = vector.broadcast %1042 : vector<2x1xf32> to vector<2x64xf32>
    %1045 = vector.broadcast %1043 : vector<1x64xf32> to vector<2x64xf32>
    %1046 = arith.mulf %1044, %1045 : vector<2x64xf32>
    %1047 = vector.extract_strided_slice %1005 {offsets = [0, 8], sizes = [2, 1], strides = [1, 1]} : vector<2x16xf32> to vector<2x1xf32>
    %1048 = vector.extract_strided_slice %92 {offsets = [8, 0], sizes = [1, 64], strides = [1, 1]} : vector<16x64xf32> to vector<1x64xf32>
    %1049 = vector.broadcast %1047 : vector<2x1xf32> to vector<2x64xf32>
    %1050 = vector.broadcast %1048 : vector<1x64xf32> to vector<2x64xf32>
    %1051 = arith.mulf %1049, %1050 : vector<2x64xf32>
    %1052 = vector.extract_strided_slice %1005 {offsets = [0, 9], sizes = [2, 1], strides = [1, 1]} : vector<2x16xf32> to vector<2x1xf32>
    %1053 = vector.extract_strided_slice %92 {offsets = [9, 0], sizes = [1, 64], strides = [1, 1]} : vector<16x64xf32> to vector<1x64xf32>
    %1054 = vector.broadcast %1052 : vector<2x1xf32> to vector<2x64xf32>
    %1055 = vector.broadcast %1053 : vector<1x64xf32> to vector<2x64xf32>
    %1056 = arith.mulf %1054, %1055 : vector<2x64xf32>
    %1057 = vector.extract_strided_slice %1005 {offsets = [0, 10], sizes = [2, 1], strides = [1, 1]} : vector<2x16xf32> to vector<2x1xf32>
    %1058 = vector.extract_strided_slice %92 {offsets = [10, 0], sizes = [1, 64], strides = [1, 1]} : vector<16x64xf32> to vector<1x64xf32>
    %1059 = vector.broadcast %1057 : vector<2x1xf32> to vector<2x64xf32>
    %1060 = vector.broadcast %1058 : vector<1x64xf32> to vector<2x64xf32>
    %1061 = arith.mulf %1059, %1060 : vector<2x64xf32>
    %1062 = vector.extract_strided_slice %1005 {offsets = [0, 11], sizes = [2, 1], strides = [1, 1]} : vector<2x16xf32> to vector<2x1xf32>
    %1063 = vector.extract_strided_slice %92 {offsets = [11, 0], sizes = [1, 64], strides = [1, 1]} : vector<16x64xf32> to vector<1x64xf32>
    %1064 = vector.broadcast %1062 : vector<2x1xf32> to vector<2x64xf32>
    %1065 = vector.broadcast %1063 : vector<1x64xf32> to vector<2x64xf32>
    %1066 = arith.mulf %1064, %1065 : vector<2x64xf32>
    %1067 = vector.extract_strided_slice %1005 {offsets = [0, 12], sizes = [2, 1], strides = [1, 1]} : vector<2x16xf32> to vector<2x1xf32>
    %1068 = vector.extract_strided_slice %92 {offsets = [12, 0], sizes = [1, 64], strides = [1, 1]} : vector<16x64xf32> to vector<1x64xf32>
    %1069 = vector.broadcast %1067 : vector<2x1xf32> to vector<2x64xf32>
    %1070 = vector.broadcast %1068 : vector<1x64xf32> to vector<2x64xf32>
    %1071 = arith.mulf %1069, %1070 : vector<2x64xf32>
    %1072 = vector.extract_strided_slice %1005 {offsets = [0, 13], sizes = [2, 1], strides = [1, 1]} : vector<2x16xf32> to vector<2x1xf32>
    %1073 = vector.extract_strided_slice %92 {offsets = [13, 0], sizes = [1, 64], strides = [1, 1]} : vector<16x64xf32> to vector<1x64xf32>
    %1074 = vector.broadcast %1072 : vector<2x1xf32> to vector<2x64xf32>
    %1075 = vector.broadcast %1073 : vector<1x64xf32> to vector<2x64xf32>
    %1076 = arith.mulf %1074, %1075 : vector<2x64xf32>
    %1077 = vector.extract_strided_slice %1005 {offsets = [0, 14], sizes = [2, 1], strides = [1, 1]} : vector<2x16xf32> to vector<2x1xf32>
    %1078 = vector.extract_strided_slice %92 {offsets = [14, 0], sizes = [1, 64], strides = [1, 1]} : vector<16x64xf32> to vector<1x64xf32>
    %1079 = vector.broadcast %1077 : vector<2x1xf32> to vector<2x64xf32>
    %1080 = vector.broadcast %1078 : vector<1x64xf32> to vector<2x64xf32>
    %1081 = arith.mulf %1079, %1080 : vector<2x64xf32>
    %1082 = vector.extract_strided_slice %1005 {offsets = [0, 15], sizes = [2, 1], strides = [1, 1]} : vector<2x16xf32> to vector<2x1xf32>
    %1083 = vector.extract_strided_slice %92 {offsets = [15, 0], sizes = [1, 64], strides = [1, 1]} : vector<16x64xf32> to vector<1x64xf32>
    %1084 = vector.broadcast %1082 : vector<2x1xf32> to vector<2x64xf32>
    %1085 = vector.broadcast %1083 : vector<1x64xf32> to vector<2x64xf32>
    %1086 = arith.mulf %1084, %1085 : vector<2x64xf32>
    %1087 = arith.addf %1006, %1011 : vector<2x64xf32>
    %1088 = arith.addf %1016, %1021 : vector<2x64xf32>
    %1089 = arith.addf %1026, %1031 : vector<2x64xf32>
    %1090 = arith.addf %1036, %1041 : vector<2x64xf32>
    %1091 = arith.addf %1046, %1051 : vector<2x64xf32>
    %1092 = arith.addf %1056, %1061 : vector<2x64xf32>
    %1093 = arith.addf %1066, %1071 : vector<2x64xf32>
    %1094 = arith.addf %1076, %1081 : vector<2x64xf32>
    %1095 = arith.addf %1087, %1088 : vector<2x64xf32>
    %1096 = arith.addf %1089, %1090 : vector<2x64xf32>
    %1097 = arith.addf %1091, %1092 : vector<2x64xf32>
    %1098 = arith.addf %1093, %1094 : vector<2x64xf32>
    %1099 = arith.addf %1095, %1096 : vector<2x64xf32>
    %1100 = arith.addf %1097, %1098 : vector<2x64xf32>
    %1101 = arith.addf %1099, %1100 : vector<2x64xf32>
    %1102 = arith.addf %1101, %1086 : vector<2x64xf32>
    %1103 = arith.negf %1102 : vector<2x64xf32>
    %1104 = math.exp %1103 : vector<2x64xf32>
    %cst_41 = arith.constant 1.000000e+00 : f32
    %1105 = vector.broadcast %cst_41 : f32 to vector<2x64xf32>
    %1106 = arith.addf %1105, %1104 : vector<2x64xf32>
    %1107 = arith.divf %1105, %1106 : vector<2x64xf32>
    %1108 = vector.extract_strided_slice %1107 {offsets = [0, 0], sizes = [2, 16], strides = [1, 1]} : vector<2x64xf32> to vector<2x16xf32>
    %1109 = vector.extract_strided_slice %1107 {offsets = [0, 16], sizes = [2, 16], strides = [1, 1]} : vector<2x64xf32> to vector<2x16xf32>
    %1110 = vector.extract_strided_slice %1107 {offsets = [0, 48], sizes = [2, 16], strides = [1, 1]} : vector<2x64xf32> to vector<2x16xf32>
    %1111 = vector.extract_strided_slice %1102 {offsets = [0, 32], sizes = [2, 16], strides = [1, 1]} : vector<2x64xf32> to vector<2x16xf32>
    %1112 = math.tanh %1111 : vector<2x16xf32>
    %1113 = arith.mulf %1109, %1003 : vector<2x16xf32>
    %1114 = arith.mulf %1108, %1112 : vector<2x16xf32>
    %1115 = arith.addf %1113, %1114 : vector<2x16xf32>
    %1116 = math.tanh %1115 : vector<2x16xf32>
    %1117 = arith.mulf %1110, %1116 : vector<2x16xf32>
    %1118 = vector.extract_strided_slice %91 {offsets = [20, 0], sizes = [2, 64], strides = [1, 1]} : vector<32x64xf32> to vector<2x64xf32>
    %1119 = vector.extract_strided_slice %1117 {offsets = [0, 0], sizes = [2, 1], strides = [1, 1]} : vector<2x16xf32> to vector<2x1xf32>
    %1120 = vector.extract_strided_slice %92 {offsets = [0, 0], sizes = [1, 64], strides = [1, 1]} : vector<16x64xf32> to vector<1x64xf32>
    %1121 = vector.broadcast %1119 : vector<2x1xf32> to vector<2x64xf32>
    %1122 = vector.broadcast %1120 : vector<1x64xf32> to vector<2x64xf32>
    %1123 = arith.mulf %1121, %1122 : vector<2x64xf32>
    %1124 = vector.extract_strided_slice %1117 {offsets = [0, 1], sizes = [2, 1], strides = [1, 1]} : vector<2x16xf32> to vector<2x1xf32>
    %1125 = vector.extract_strided_slice %92 {offsets = [1, 0], sizes = [1, 64], strides = [1, 1]} : vector<16x64xf32> to vector<1x64xf32>
    %1126 = vector.broadcast %1124 : vector<2x1xf32> to vector<2x64xf32>
    %1127 = vector.broadcast %1125 : vector<1x64xf32> to vector<2x64xf32>
    %1128 = arith.mulf %1126, %1127 : vector<2x64xf32>
    %1129 = vector.extract_strided_slice %1117 {offsets = [0, 2], sizes = [2, 1], strides = [1, 1]} : vector<2x16xf32> to vector<2x1xf32>
    %1130 = vector.extract_strided_slice %92 {offsets = [2, 0], sizes = [1, 64], strides = [1, 1]} : vector<16x64xf32> to vector<1x64xf32>
    %1131 = vector.broadcast %1129 : vector<2x1xf32> to vector<2x64xf32>
    %1132 = vector.broadcast %1130 : vector<1x64xf32> to vector<2x64xf32>
    %1133 = arith.mulf %1131, %1132 : vector<2x64xf32>
    %1134 = vector.extract_strided_slice %1117 {offsets = [0, 3], sizes = [2, 1], strides = [1, 1]} : vector<2x16xf32> to vector<2x1xf32>
    %1135 = vector.extract_strided_slice %92 {offsets = [3, 0], sizes = [1, 64], strides = [1, 1]} : vector<16x64xf32> to vector<1x64xf32>
    %1136 = vector.broadcast %1134 : vector<2x1xf32> to vector<2x64xf32>
    %1137 = vector.broadcast %1135 : vector<1x64xf32> to vector<2x64xf32>
    %1138 = arith.mulf %1136, %1137 : vector<2x64xf32>
    %1139 = vector.extract_strided_slice %1117 {offsets = [0, 4], sizes = [2, 1], strides = [1, 1]} : vector<2x16xf32> to vector<2x1xf32>
    %1140 = vector.extract_strided_slice %92 {offsets = [4, 0], sizes = [1, 64], strides = [1, 1]} : vector<16x64xf32> to vector<1x64xf32>
    %1141 = vector.broadcast %1139 : vector<2x1xf32> to vector<2x64xf32>
    %1142 = vector.broadcast %1140 : vector<1x64xf32> to vector<2x64xf32>
    %1143 = arith.mulf %1141, %1142 : vector<2x64xf32>
    %1144 = vector.extract_strided_slice %1117 {offsets = [0, 5], sizes = [2, 1], strides = [1, 1]} : vector<2x16xf32> to vector<2x1xf32>
    %1145 = vector.extract_strided_slice %92 {offsets = [5, 0], sizes = [1, 64], strides = [1, 1]} : vector<16x64xf32> to vector<1x64xf32>
    %1146 = vector.broadcast %1144 : vector<2x1xf32> to vector<2x64xf32>
    %1147 = vector.broadcast %1145 : vector<1x64xf32> to vector<2x64xf32>
    %1148 = arith.mulf %1146, %1147 : vector<2x64xf32>
    %1149 = vector.extract_strided_slice %1117 {offsets = [0, 6], sizes = [2, 1], strides = [1, 1]} : vector<2x16xf32> to vector<2x1xf32>
    %1150 = vector.extract_strided_slice %92 {offsets = [6, 0], sizes = [1, 64], strides = [1, 1]} : vector<16x64xf32> to vector<1x64xf32>
    %1151 = vector.broadcast %1149 : vector<2x1xf32> to vector<2x64xf32>
    %1152 = vector.broadcast %1150 : vector<1x64xf32> to vector<2x64xf32>
    %1153 = arith.mulf %1151, %1152 : vector<2x64xf32>
    %1154 = vector.extract_strided_slice %1117 {offsets = [0, 7], sizes = [2, 1], strides = [1, 1]} : vector<2x16xf32> to vector<2x1xf32>
    %1155 = vector.extract_strided_slice %92 {offsets = [7, 0], sizes = [1, 64], strides = [1, 1]} : vector<16x64xf32> to vector<1x64xf32>
    %1156 = vector.broadcast %1154 : vector<2x1xf32> to vector<2x64xf32>
    %1157 = vector.broadcast %1155 : vector<1x64xf32> to vector<2x64xf32>
    %1158 = arith.mulf %1156, %1157 : vector<2x64xf32>
    %1159 = vector.extract_strided_slice %1117 {offsets = [0, 8], sizes = [2, 1], strides = [1, 1]} : vector<2x16xf32> to vector<2x1xf32>
    %1160 = vector.extract_strided_slice %92 {offsets = [8, 0], sizes = [1, 64], strides = [1, 1]} : vector<16x64xf32> to vector<1x64xf32>
    %1161 = vector.broadcast %1159 : vector<2x1xf32> to vector<2x64xf32>
    %1162 = vector.broadcast %1160 : vector<1x64xf32> to vector<2x64xf32>
    %1163 = arith.mulf %1161, %1162 : vector<2x64xf32>
    %1164 = vector.extract_strided_slice %1117 {offsets = [0, 9], sizes = [2, 1], strides = [1, 1]} : vector<2x16xf32> to vector<2x1xf32>
    %1165 = vector.extract_strided_slice %92 {offsets = [9, 0], sizes = [1, 64], strides = [1, 1]} : vector<16x64xf32> to vector<1x64xf32>
    %1166 = vector.broadcast %1164 : vector<2x1xf32> to vector<2x64xf32>
    %1167 = vector.broadcast %1165 : vector<1x64xf32> to vector<2x64xf32>
    %1168 = arith.mulf %1166, %1167 : vector<2x64xf32>
    %1169 = vector.extract_strided_slice %1117 {offsets = [0, 10], sizes = [2, 1], strides = [1, 1]} : vector<2x16xf32> to vector<2x1xf32>
    %1170 = vector.extract_strided_slice %92 {offsets = [10, 0], sizes = [1, 64], strides = [1, 1]} : vector<16x64xf32> to vector<1x64xf32>
    %1171 = vector.broadcast %1169 : vector<2x1xf32> to vector<2x64xf32>
    %1172 = vector.broadcast %1170 : vector<1x64xf32> to vector<2x64xf32>
    %1173 = arith.mulf %1171, %1172 : vector<2x64xf32>
    %1174 = vector.extract_strided_slice %1117 {offsets = [0, 11], sizes = [2, 1], strides = [1, 1]} : vector<2x16xf32> to vector<2x1xf32>
    %1175 = vector.extract_strided_slice %92 {offsets = [11, 0], sizes = [1, 64], strides = [1, 1]} : vector<16x64xf32> to vector<1x64xf32>
    %1176 = vector.broadcast %1174 : vector<2x1xf32> to vector<2x64xf32>
    %1177 = vector.broadcast %1175 : vector<1x64xf32> to vector<2x64xf32>
    %1178 = arith.mulf %1176, %1177 : vector<2x64xf32>
    %1179 = vector.extract_strided_slice %1117 {offsets = [0, 12], sizes = [2, 1], strides = [1, 1]} : vector<2x16xf32> to vector<2x1xf32>
    %1180 = vector.extract_strided_slice %92 {offsets = [12, 0], sizes = [1, 64], strides = [1, 1]} : vector<16x64xf32> to vector<1x64xf32>
    %1181 = vector.broadcast %1179 : vector<2x1xf32> to vector<2x64xf32>
    %1182 = vector.broadcast %1180 : vector<1x64xf32> to vector<2x64xf32>
    %1183 = arith.mulf %1181, %1182 : vector<2x64xf32>
    %1184 = vector.extract_strided_slice %1117 {offsets = [0, 13], sizes = [2, 1], strides = [1, 1]} : vector<2x16xf32> to vector<2x1xf32>
    %1185 = vector.extract_strided_slice %92 {offsets = [13, 0], sizes = [1, 64], strides = [1, 1]} : vector<16x64xf32> to vector<1x64xf32>
    %1186 = vector.broadcast %1184 : vector<2x1xf32> to vector<2x64xf32>
    %1187 = vector.broadcast %1185 : vector<1x64xf32> to vector<2x64xf32>
    %1188 = arith.mulf %1186, %1187 : vector<2x64xf32>
    %1189 = vector.extract_strided_slice %1117 {offsets = [0, 14], sizes = [2, 1], strides = [1, 1]} : vector<2x16xf32> to vector<2x1xf32>
    %1190 = vector.extract_strided_slice %92 {offsets = [14, 0], sizes = [1, 64], strides = [1, 1]} : vector<16x64xf32> to vector<1x64xf32>
    %1191 = vector.broadcast %1189 : vector<2x1xf32> to vector<2x64xf32>
    %1192 = vector.broadcast %1190 : vector<1x64xf32> to vector<2x64xf32>
    %1193 = arith.mulf %1191, %1192 : vector<2x64xf32>
    %1194 = vector.extract_strided_slice %1117 {offsets = [0, 15], sizes = [2, 1], strides = [1, 1]} : vector<2x16xf32> to vector<2x1xf32>
    %1195 = vector.extract_strided_slice %92 {offsets = [15, 0], sizes = [1, 64], strides = [1, 1]} : vector<16x64xf32> to vector<1x64xf32>
    %1196 = vector.broadcast %1194 : vector<2x1xf32> to vector<2x64xf32>
    %1197 = vector.broadcast %1195 : vector<1x64xf32> to vector<2x64xf32>
    %1198 = arith.mulf %1196, %1197 : vector<2x64xf32>
    %1199 = arith.addf %1118, %1123 : vector<2x64xf32>
    %1200 = arith.addf %1128, %1133 : vector<2x64xf32>
    %1201 = arith.addf %1138, %1143 : vector<2x64xf32>
    %1202 = arith.addf %1148, %1153 : vector<2x64xf32>
    %1203 = arith.addf %1158, %1163 : vector<2x64xf32>
    %1204 = arith.addf %1168, %1173 : vector<2x64xf32>
    %1205 = arith.addf %1178, %1183 : vector<2x64xf32>
    %1206 = arith.addf %1188, %1193 : vector<2x64xf32>
    %1207 = arith.addf %1199, %1200 : vector<2x64xf32>
    %1208 = arith.addf %1201, %1202 : vector<2x64xf32>
    %1209 = arith.addf %1203, %1204 : vector<2x64xf32>
    %1210 = arith.addf %1205, %1206 : vector<2x64xf32>
    %1211 = arith.addf %1207, %1208 : vector<2x64xf32>
    %1212 = arith.addf %1209, %1210 : vector<2x64xf32>
    %1213 = arith.addf %1211, %1212 : vector<2x64xf32>
    %1214 = arith.addf %1213, %1198 : vector<2x64xf32>
    %1215 = arith.negf %1214 : vector<2x64xf32>
    %1216 = math.exp %1215 : vector<2x64xf32>
    %cst_42 = arith.constant 1.000000e+00 : f32
    %1217 = vector.broadcast %cst_42 : f32 to vector<2x64xf32>
    %1218 = arith.addf %1217, %1216 : vector<2x64xf32>
    %1219 = arith.divf %1217, %1218 : vector<2x64xf32>
    %1220 = vector.extract_strided_slice %1219 {offsets = [0, 0], sizes = [2, 16], strides = [1, 1]} : vector<2x64xf32> to vector<2x16xf32>
    %1221 = vector.extract_strided_slice %1219 {offsets = [0, 16], sizes = [2, 16], strides = [1, 1]} : vector<2x64xf32> to vector<2x16xf32>
    %1222 = vector.extract_strided_slice %1219 {offsets = [0, 48], sizes = [2, 16], strides = [1, 1]} : vector<2x64xf32> to vector<2x16xf32>
    %1223 = vector.extract_strided_slice %1214 {offsets = [0, 32], sizes = [2, 16], strides = [1, 1]} : vector<2x64xf32> to vector<2x16xf32>
    %1224 = math.tanh %1223 : vector<2x16xf32>
    %1225 = arith.mulf %1221, %1115 : vector<2x16xf32>
    %1226 = arith.mulf %1220, %1224 : vector<2x16xf32>
    %1227 = arith.addf %1225, %1226 : vector<2x16xf32>
    %1228 = math.tanh %1227 : vector<2x16xf32>
    %1229 = arith.mulf %1222, %1228 : vector<2x16xf32>
    %1230 = vector.extract_strided_slice %91 {offsets = [22, 0], sizes = [2, 64], strides = [1, 1]} : vector<32x64xf32> to vector<2x64xf32>
    %1231 = vector.extract_strided_slice %1229 {offsets = [0, 0], sizes = [2, 1], strides = [1, 1]} : vector<2x16xf32> to vector<2x1xf32>
    %1232 = vector.extract_strided_slice %92 {offsets = [0, 0], sizes = [1, 64], strides = [1, 1]} : vector<16x64xf32> to vector<1x64xf32>
    %1233 = vector.broadcast %1231 : vector<2x1xf32> to vector<2x64xf32>
    %1234 = vector.broadcast %1232 : vector<1x64xf32> to vector<2x64xf32>
    %1235 = arith.mulf %1233, %1234 : vector<2x64xf32>
    %1236 = vector.extract_strided_slice %1229 {offsets = [0, 1], sizes = [2, 1], strides = [1, 1]} : vector<2x16xf32> to vector<2x1xf32>
    %1237 = vector.extract_strided_slice %92 {offsets = [1, 0], sizes = [1, 64], strides = [1, 1]} : vector<16x64xf32> to vector<1x64xf32>
    %1238 = vector.broadcast %1236 : vector<2x1xf32> to vector<2x64xf32>
    %1239 = vector.broadcast %1237 : vector<1x64xf32> to vector<2x64xf32>
    %1240 = arith.mulf %1238, %1239 : vector<2x64xf32>
    %1241 = vector.extract_strided_slice %1229 {offsets = [0, 2], sizes = [2, 1], strides = [1, 1]} : vector<2x16xf32> to vector<2x1xf32>
    %1242 = vector.extract_strided_slice %92 {offsets = [2, 0], sizes = [1, 64], strides = [1, 1]} : vector<16x64xf32> to vector<1x64xf32>
    %1243 = vector.broadcast %1241 : vector<2x1xf32> to vector<2x64xf32>
    %1244 = vector.broadcast %1242 : vector<1x64xf32> to vector<2x64xf32>
    %1245 = arith.mulf %1243, %1244 : vector<2x64xf32>
    %1246 = vector.extract_strided_slice %1229 {offsets = [0, 3], sizes = [2, 1], strides = [1, 1]} : vector<2x16xf32> to vector<2x1xf32>
    %1247 = vector.extract_strided_slice %92 {offsets = [3, 0], sizes = [1, 64], strides = [1, 1]} : vector<16x64xf32> to vector<1x64xf32>
    %1248 = vector.broadcast %1246 : vector<2x1xf32> to vector<2x64xf32>
    %1249 = vector.broadcast %1247 : vector<1x64xf32> to vector<2x64xf32>
    %1250 = arith.mulf %1248, %1249 : vector<2x64xf32>
    %1251 = vector.extract_strided_slice %1229 {offsets = [0, 4], sizes = [2, 1], strides = [1, 1]} : vector<2x16xf32> to vector<2x1xf32>
    %1252 = vector.extract_strided_slice %92 {offsets = [4, 0], sizes = [1, 64], strides = [1, 1]} : vector<16x64xf32> to vector<1x64xf32>
    %1253 = vector.broadcast %1251 : vector<2x1xf32> to vector<2x64xf32>
    %1254 = vector.broadcast %1252 : vector<1x64xf32> to vector<2x64xf32>
    %1255 = arith.mulf %1253, %1254 : vector<2x64xf32>
    %1256 = vector.extract_strided_slice %1229 {offsets = [0, 5], sizes = [2, 1], strides = [1, 1]} : vector<2x16xf32> to vector<2x1xf32>
    %1257 = vector.extract_strided_slice %92 {offsets = [5, 0], sizes = [1, 64], strides = [1, 1]} : vector<16x64xf32> to vector<1x64xf32>
    %1258 = vector.broadcast %1256 : vector<2x1xf32> to vector<2x64xf32>
    %1259 = vector.broadcast %1257 : vector<1x64xf32> to vector<2x64xf32>
    %1260 = arith.mulf %1258, %1259 : vector<2x64xf32>
    %1261 = vector.extract_strided_slice %1229 {offsets = [0, 6], sizes = [2, 1], strides = [1, 1]} : vector<2x16xf32> to vector<2x1xf32>
    %1262 = vector.extract_strided_slice %92 {offsets = [6, 0], sizes = [1, 64], strides = [1, 1]} : vector<16x64xf32> to vector<1x64xf32>
    %1263 = vector.broadcast %1261 : vector<2x1xf32> to vector<2x64xf32>
    %1264 = vector.broadcast %1262 : vector<1x64xf32> to vector<2x64xf32>
    %1265 = arith.mulf %1263, %1264 : vector<2x64xf32>
    %1266 = vector.extract_strided_slice %1229 {offsets = [0, 7], sizes = [2, 1], strides = [1, 1]} : vector<2x16xf32> to vector<2x1xf32>
    %1267 = vector.extract_strided_slice %92 {offsets = [7, 0], sizes = [1, 64], strides = [1, 1]} : vector<16x64xf32> to vector<1x64xf32>
    %1268 = vector.broadcast %1266 : vector<2x1xf32> to vector<2x64xf32>
    %1269 = vector.broadcast %1267 : vector<1x64xf32> to vector<2x64xf32>
    %1270 = arith.mulf %1268, %1269 : vector<2x64xf32>
    %1271 = vector.extract_strided_slice %1229 {offsets = [0, 8], sizes = [2, 1], strides = [1, 1]} : vector<2x16xf32> to vector<2x1xf32>
    %1272 = vector.extract_strided_slice %92 {offsets = [8, 0], sizes = [1, 64], strides = [1, 1]} : vector<16x64xf32> to vector<1x64xf32>
    %1273 = vector.broadcast %1271 : vector<2x1xf32> to vector<2x64xf32>
    %1274 = vector.broadcast %1272 : vector<1x64xf32> to vector<2x64xf32>
    %1275 = arith.mulf %1273, %1274 : vector<2x64xf32>
    %1276 = vector.extract_strided_slice %1229 {offsets = [0, 9], sizes = [2, 1], strides = [1, 1]} : vector<2x16xf32> to vector<2x1xf32>
    %1277 = vector.extract_strided_slice %92 {offsets = [9, 0], sizes = [1, 64], strides = [1, 1]} : vector<16x64xf32> to vector<1x64xf32>
    %1278 = vector.broadcast %1276 : vector<2x1xf32> to vector<2x64xf32>
    %1279 = vector.broadcast %1277 : vector<1x64xf32> to vector<2x64xf32>
    %1280 = arith.mulf %1278, %1279 : vector<2x64xf32>
    %1281 = vector.extract_strided_slice %1229 {offsets = [0, 10], sizes = [2, 1], strides = [1, 1]} : vector<2x16xf32> to vector<2x1xf32>
    %1282 = vector.extract_strided_slice %92 {offsets = [10, 0], sizes = [1, 64], strides = [1, 1]} : vector<16x64xf32> to vector<1x64xf32>
    %1283 = vector.broadcast %1281 : vector<2x1xf32> to vector<2x64xf32>
    %1284 = vector.broadcast %1282 : vector<1x64xf32> to vector<2x64xf32>
    %1285 = arith.mulf %1283, %1284 : vector<2x64xf32>
    %1286 = vector.extract_strided_slice %1229 {offsets = [0, 11], sizes = [2, 1], strides = [1, 1]} : vector<2x16xf32> to vector<2x1xf32>
    %1287 = vector.extract_strided_slice %92 {offsets = [11, 0], sizes = [1, 64], strides = [1, 1]} : vector<16x64xf32> to vector<1x64xf32>
    %1288 = vector.broadcast %1286 : vector<2x1xf32> to vector<2x64xf32>
    %1289 = vector.broadcast %1287 : vector<1x64xf32> to vector<2x64xf32>
    %1290 = arith.mulf %1288, %1289 : vector<2x64xf32>
    %1291 = vector.extract_strided_slice %1229 {offsets = [0, 12], sizes = [2, 1], strides = [1, 1]} : vector<2x16xf32> to vector<2x1xf32>
    %1292 = vector.extract_strided_slice %92 {offsets = [12, 0], sizes = [1, 64], strides = [1, 1]} : vector<16x64xf32> to vector<1x64xf32>
    %1293 = vector.broadcast %1291 : vector<2x1xf32> to vector<2x64xf32>
    %1294 = vector.broadcast %1292 : vector<1x64xf32> to vector<2x64xf32>
    %1295 = arith.mulf %1293, %1294 : vector<2x64xf32>
    %1296 = vector.extract_strided_slice %1229 {offsets = [0, 13], sizes = [2, 1], strides = [1, 1]} : vector<2x16xf32> to vector<2x1xf32>
    %1297 = vector.extract_strided_slice %92 {offsets = [13, 0], sizes = [1, 64], strides = [1, 1]} : vector<16x64xf32> to vector<1x64xf32>
    %1298 = vector.broadcast %1296 : vector<2x1xf32> to vector<2x64xf32>
    %1299 = vector.broadcast %1297 : vector<1x64xf32> to vector<2x64xf32>
    %1300 = arith.mulf %1298, %1299 : vector<2x64xf32>
    %1301 = vector.extract_strided_slice %1229 {offsets = [0, 14], sizes = [2, 1], strides = [1, 1]} : vector<2x16xf32> to vector<2x1xf32>
    %1302 = vector.extract_strided_slice %92 {offsets = [14, 0], sizes = [1, 64], strides = [1, 1]} : vector<16x64xf32> to vector<1x64xf32>
    %1303 = vector.broadcast %1301 : vector<2x1xf32> to vector<2x64xf32>
    %1304 = vector.broadcast %1302 : vector<1x64xf32> to vector<2x64xf32>
    %1305 = arith.mulf %1303, %1304 : vector<2x64xf32>
    %1306 = vector.extract_strided_slice %1229 {offsets = [0, 15], sizes = [2, 1], strides = [1, 1]} : vector<2x16xf32> to vector<2x1xf32>
    %1307 = vector.extract_strided_slice %92 {offsets = [15, 0], sizes = [1, 64], strides = [1, 1]} : vector<16x64xf32> to vector<1x64xf32>
    %1308 = vector.broadcast %1306 : vector<2x1xf32> to vector<2x64xf32>
    %1309 = vector.broadcast %1307 : vector<1x64xf32> to vector<2x64xf32>
    %1310 = arith.mulf %1308, %1309 : vector<2x64xf32>
    %1311 = arith.addf %1230, %1235 : vector<2x64xf32>
    %1312 = arith.addf %1240, %1245 : vector<2x64xf32>
    %1313 = arith.addf %1250, %1255 : vector<2x64xf32>
    %1314 = arith.addf %1260, %1265 : vector<2x64xf32>
    %1315 = arith.addf %1270, %1275 : vector<2x64xf32>
    %1316 = arith.addf %1280, %1285 : vector<2x64xf32>
    %1317 = arith.addf %1290, %1295 : vector<2x64xf32>
    %1318 = arith.addf %1300, %1305 : vector<2x64xf32>
    %1319 = arith.addf %1311, %1312 : vector<2x64xf32>
    %1320 = arith.addf %1313, %1314 : vector<2x64xf32>
    %1321 = arith.addf %1315, %1316 : vector<2x64xf32>
    %1322 = arith.addf %1317, %1318 : vector<2x64xf32>
    %1323 = arith.addf %1319, %1320 : vector<2x64xf32>
    %1324 = arith.addf %1321, %1322 : vector<2x64xf32>
    %1325 = arith.addf %1323, %1324 : vector<2x64xf32>
    %1326 = arith.addf %1325, %1310 : vector<2x64xf32>
    %1327 = arith.negf %1326 : vector<2x64xf32>
    %1328 = math.exp %1327 : vector<2x64xf32>
    %cst_43 = arith.constant 1.000000e+00 : f32
    %1329 = vector.broadcast %cst_43 : f32 to vector<2x64xf32>
    %1330 = arith.addf %1329, %1328 : vector<2x64xf32>
    %1331 = arith.divf %1329, %1330 : vector<2x64xf32>
    %1332 = vector.extract_strided_slice %1331 {offsets = [0, 0], sizes = [2, 16], strides = [1, 1]} : vector<2x64xf32> to vector<2x16xf32>
    %1333 = vector.extract_strided_slice %1331 {offsets = [0, 16], sizes = [2, 16], strides = [1, 1]} : vector<2x64xf32> to vector<2x16xf32>
    %1334 = vector.extract_strided_slice %1331 {offsets = [0, 48], sizes = [2, 16], strides = [1, 1]} : vector<2x64xf32> to vector<2x16xf32>
    %1335 = vector.extract_strided_slice %1326 {offsets = [0, 32], sizes = [2, 16], strides = [1, 1]} : vector<2x64xf32> to vector<2x16xf32>
    %1336 = math.tanh %1335 : vector<2x16xf32>
    %1337 = arith.mulf %1333, %1227 : vector<2x16xf32>
    %1338 = arith.mulf %1332, %1336 : vector<2x16xf32>
    %1339 = arith.addf %1337, %1338 : vector<2x16xf32>
    %1340 = math.tanh %1339 : vector<2x16xf32>
    %1341 = arith.mulf %1334, %1340 : vector<2x16xf32>
    %1342 = vector.extract_strided_slice %91 {offsets = [24, 0], sizes = [2, 64], strides = [1, 1]} : vector<32x64xf32> to vector<2x64xf32>
    %1343 = vector.extract_strided_slice %1341 {offsets = [0, 0], sizes = [2, 1], strides = [1, 1]} : vector<2x16xf32> to vector<2x1xf32>
    %1344 = vector.extract_strided_slice %92 {offsets = [0, 0], sizes = [1, 64], strides = [1, 1]} : vector<16x64xf32> to vector<1x64xf32>
    %1345 = vector.broadcast %1343 : vector<2x1xf32> to vector<2x64xf32>
    %1346 = vector.broadcast %1344 : vector<1x64xf32> to vector<2x64xf32>
    %1347 = arith.mulf %1345, %1346 : vector<2x64xf32>
    %1348 = vector.extract_strided_slice %1341 {offsets = [0, 1], sizes = [2, 1], strides = [1, 1]} : vector<2x16xf32> to vector<2x1xf32>
    %1349 = vector.extract_strided_slice %92 {offsets = [1, 0], sizes = [1, 64], strides = [1, 1]} : vector<16x64xf32> to vector<1x64xf32>
    %1350 = vector.broadcast %1348 : vector<2x1xf32> to vector<2x64xf32>
    %1351 = vector.broadcast %1349 : vector<1x64xf32> to vector<2x64xf32>
    %1352 = arith.mulf %1350, %1351 : vector<2x64xf32>
    %1353 = vector.extract_strided_slice %1341 {offsets = [0, 2], sizes = [2, 1], strides = [1, 1]} : vector<2x16xf32> to vector<2x1xf32>
    %1354 = vector.extract_strided_slice %92 {offsets = [2, 0], sizes = [1, 64], strides = [1, 1]} : vector<16x64xf32> to vector<1x64xf32>
    %1355 = vector.broadcast %1353 : vector<2x1xf32> to vector<2x64xf32>
    %1356 = vector.broadcast %1354 : vector<1x64xf32> to vector<2x64xf32>
    %1357 = arith.mulf %1355, %1356 : vector<2x64xf32>
    %1358 = vector.extract_strided_slice %1341 {offsets = [0, 3], sizes = [2, 1], strides = [1, 1]} : vector<2x16xf32> to vector<2x1xf32>
    %1359 = vector.extract_strided_slice %92 {offsets = [3, 0], sizes = [1, 64], strides = [1, 1]} : vector<16x64xf32> to vector<1x64xf32>
    %1360 = vector.broadcast %1358 : vector<2x1xf32> to vector<2x64xf32>
    %1361 = vector.broadcast %1359 : vector<1x64xf32> to vector<2x64xf32>
    %1362 = arith.mulf %1360, %1361 : vector<2x64xf32>
    %1363 = vector.extract_strided_slice %1341 {offsets = [0, 4], sizes = [2, 1], strides = [1, 1]} : vector<2x16xf32> to vector<2x1xf32>
    %1364 = vector.extract_strided_slice %92 {offsets = [4, 0], sizes = [1, 64], strides = [1, 1]} : vector<16x64xf32> to vector<1x64xf32>
    %1365 = vector.broadcast %1363 : vector<2x1xf32> to vector<2x64xf32>
    %1366 = vector.broadcast %1364 : vector<1x64xf32> to vector<2x64xf32>
    %1367 = arith.mulf %1365, %1366 : vector<2x64xf32>
    %1368 = vector.extract_strided_slice %1341 {offsets = [0, 5], sizes = [2, 1], strides = [1, 1]} : vector<2x16xf32> to vector<2x1xf32>
    %1369 = vector.extract_strided_slice %92 {offsets = [5, 0], sizes = [1, 64], strides = [1, 1]} : vector<16x64xf32> to vector<1x64xf32>
    %1370 = vector.broadcast %1368 : vector<2x1xf32> to vector<2x64xf32>
    %1371 = vector.broadcast %1369 : vector<1x64xf32> to vector<2x64xf32>
    %1372 = arith.mulf %1370, %1371 : vector<2x64xf32>
    %1373 = vector.extract_strided_slice %1341 {offsets = [0, 6], sizes = [2, 1], strides = [1, 1]} : vector<2x16xf32> to vector<2x1xf32>
    %1374 = vector.extract_strided_slice %92 {offsets = [6, 0], sizes = [1, 64], strides = [1, 1]} : vector<16x64xf32> to vector<1x64xf32>
    %1375 = vector.broadcast %1373 : vector<2x1xf32> to vector<2x64xf32>
    %1376 = vector.broadcast %1374 : vector<1x64xf32> to vector<2x64xf32>
    %1377 = arith.mulf %1375, %1376 : vector<2x64xf32>
    %1378 = vector.extract_strided_slice %1341 {offsets = [0, 7], sizes = [2, 1], strides = [1, 1]} : vector<2x16xf32> to vector<2x1xf32>
    %1379 = vector.extract_strided_slice %92 {offsets = [7, 0], sizes = [1, 64], strides = [1, 1]} : vector<16x64xf32> to vector<1x64xf32>
    %1380 = vector.broadcast %1378 : vector<2x1xf32> to vector<2x64xf32>
    %1381 = vector.broadcast %1379 : vector<1x64xf32> to vector<2x64xf32>
    %1382 = arith.mulf %1380, %1381 : vector<2x64xf32>
    %1383 = vector.extract_strided_slice %1341 {offsets = [0, 8], sizes = [2, 1], strides = [1, 1]} : vector<2x16xf32> to vector<2x1xf32>
    %1384 = vector.extract_strided_slice %92 {offsets = [8, 0], sizes = [1, 64], strides = [1, 1]} : vector<16x64xf32> to vector<1x64xf32>
    %1385 = vector.broadcast %1383 : vector<2x1xf32> to vector<2x64xf32>
    %1386 = vector.broadcast %1384 : vector<1x64xf32> to vector<2x64xf32>
    %1387 = arith.mulf %1385, %1386 : vector<2x64xf32>
    %1388 = vector.extract_strided_slice %1341 {offsets = [0, 9], sizes = [2, 1], strides = [1, 1]} : vector<2x16xf32> to vector<2x1xf32>
    %1389 = vector.extract_strided_slice %92 {offsets = [9, 0], sizes = [1, 64], strides = [1, 1]} : vector<16x64xf32> to vector<1x64xf32>
    %1390 = vector.broadcast %1388 : vector<2x1xf32> to vector<2x64xf32>
    %1391 = vector.broadcast %1389 : vector<1x64xf32> to vector<2x64xf32>
    %1392 = arith.mulf %1390, %1391 : vector<2x64xf32>
    %1393 = vector.extract_strided_slice %1341 {offsets = [0, 10], sizes = [2, 1], strides = [1, 1]} : vector<2x16xf32> to vector<2x1xf32>
    %1394 = vector.extract_strided_slice %92 {offsets = [10, 0], sizes = [1, 64], strides = [1, 1]} : vector<16x64xf32> to vector<1x64xf32>
    %1395 = vector.broadcast %1393 : vector<2x1xf32> to vector<2x64xf32>
    %1396 = vector.broadcast %1394 : vector<1x64xf32> to vector<2x64xf32>
    %1397 = arith.mulf %1395, %1396 : vector<2x64xf32>
    %1398 = vector.extract_strided_slice %1341 {offsets = [0, 11], sizes = [2, 1], strides = [1, 1]} : vector<2x16xf32> to vector<2x1xf32>
    %1399 = vector.extract_strided_slice %92 {offsets = [11, 0], sizes = [1, 64], strides = [1, 1]} : vector<16x64xf32> to vector<1x64xf32>
    %1400 = vector.broadcast %1398 : vector<2x1xf32> to vector<2x64xf32>
    %1401 = vector.broadcast %1399 : vector<1x64xf32> to vector<2x64xf32>
    %1402 = arith.mulf %1400, %1401 : vector<2x64xf32>
    %1403 = vector.extract_strided_slice %1341 {offsets = [0, 12], sizes = [2, 1], strides = [1, 1]} : vector<2x16xf32> to vector<2x1xf32>
    %1404 = vector.extract_strided_slice %92 {offsets = [12, 0], sizes = [1, 64], strides = [1, 1]} : vector<16x64xf32> to vector<1x64xf32>
    %1405 = vector.broadcast %1403 : vector<2x1xf32> to vector<2x64xf32>
    %1406 = vector.broadcast %1404 : vector<1x64xf32> to vector<2x64xf32>
    %1407 = arith.mulf %1405, %1406 : vector<2x64xf32>
    %1408 = vector.extract_strided_slice %1341 {offsets = [0, 13], sizes = [2, 1], strides = [1, 1]} : vector<2x16xf32> to vector<2x1xf32>
    %1409 = vector.extract_strided_slice %92 {offsets = [13, 0], sizes = [1, 64], strides = [1, 1]} : vector<16x64xf32> to vector<1x64xf32>
    %1410 = vector.broadcast %1408 : vector<2x1xf32> to vector<2x64xf32>
    %1411 = vector.broadcast %1409 : vector<1x64xf32> to vector<2x64xf32>
    %1412 = arith.mulf %1410, %1411 : vector<2x64xf32>
    %1413 = vector.extract_strided_slice %1341 {offsets = [0, 14], sizes = [2, 1], strides = [1, 1]} : vector<2x16xf32> to vector<2x1xf32>
    %1414 = vector.extract_strided_slice %92 {offsets = [14, 0], sizes = [1, 64], strides = [1, 1]} : vector<16x64xf32> to vector<1x64xf32>
    %1415 = vector.broadcast %1413 : vector<2x1xf32> to vector<2x64xf32>
    %1416 = vector.broadcast %1414 : vector<1x64xf32> to vector<2x64xf32>
    %1417 = arith.mulf %1415, %1416 : vector<2x64xf32>
    %1418 = vector.extract_strided_slice %1341 {offsets = [0, 15], sizes = [2, 1], strides = [1, 1]} : vector<2x16xf32> to vector<2x1xf32>
    %1419 = vector.extract_strided_slice %92 {offsets = [15, 0], sizes = [1, 64], strides = [1, 1]} : vector<16x64xf32> to vector<1x64xf32>
    %1420 = vector.broadcast %1418 : vector<2x1xf32> to vector<2x64xf32>
    %1421 = vector.broadcast %1419 : vector<1x64xf32> to vector<2x64xf32>
    %1422 = arith.mulf %1420, %1421 : vector<2x64xf32>
    %1423 = arith.addf %1342, %1347 : vector<2x64xf32>
    %1424 = arith.addf %1352, %1357 : vector<2x64xf32>
    %1425 = arith.addf %1362, %1367 : vector<2x64xf32>
    %1426 = arith.addf %1372, %1377 : vector<2x64xf32>
    %1427 = arith.addf %1382, %1387 : vector<2x64xf32>
    %1428 = arith.addf %1392, %1397 : vector<2x64xf32>
    %1429 = arith.addf %1402, %1407 : vector<2x64xf32>
    %1430 = arith.addf %1412, %1417 : vector<2x64xf32>
    %1431 = arith.addf %1423, %1424 : vector<2x64xf32>
    %1432 = arith.addf %1425, %1426 : vector<2x64xf32>
    %1433 = arith.addf %1427, %1428 : vector<2x64xf32>
    %1434 = arith.addf %1429, %1430 : vector<2x64xf32>
    %1435 = arith.addf %1431, %1432 : vector<2x64xf32>
    %1436 = arith.addf %1433, %1434 : vector<2x64xf32>
    %1437 = arith.addf %1435, %1436 : vector<2x64xf32>
    %1438 = arith.addf %1437, %1422 : vector<2x64xf32>
    %1439 = arith.negf %1438 : vector<2x64xf32>
    %1440 = math.exp %1439 : vector<2x64xf32>
    %cst_44 = arith.constant 1.000000e+00 : f32
    %1441 = vector.broadcast %cst_44 : f32 to vector<2x64xf32>
    %1442 = arith.addf %1441, %1440 : vector<2x64xf32>
    %1443 = arith.divf %1441, %1442 : vector<2x64xf32>
    %1444 = vector.extract_strided_slice %1443 {offsets = [0, 0], sizes = [2, 16], strides = [1, 1]} : vector<2x64xf32> to vector<2x16xf32>
    %1445 = vector.extract_strided_slice %1443 {offsets = [0, 16], sizes = [2, 16], strides = [1, 1]} : vector<2x64xf32> to vector<2x16xf32>
    %1446 = vector.extract_strided_slice %1443 {offsets = [0, 48], sizes = [2, 16], strides = [1, 1]} : vector<2x64xf32> to vector<2x16xf32>
    %1447 = vector.extract_strided_slice %1438 {offsets = [0, 32], sizes = [2, 16], strides = [1, 1]} : vector<2x64xf32> to vector<2x16xf32>
    %1448 = math.tanh %1447 : vector<2x16xf32>
    %1449 = arith.mulf %1445, %1339 : vector<2x16xf32>
    %1450 = arith.mulf %1444, %1448 : vector<2x16xf32>
    %1451 = arith.addf %1449, %1450 : vector<2x16xf32>
    %1452 = math.tanh %1451 : vector<2x16xf32>
    %1453 = arith.mulf %1446, %1452 : vector<2x16xf32>
    %1454 = vector.extract_strided_slice %91 {offsets = [26, 0], sizes = [2, 64], strides = [1, 1]} : vector<32x64xf32> to vector<2x64xf32>
    %1455 = vector.extract_strided_slice %1453 {offsets = [0, 0], sizes = [2, 1], strides = [1, 1]} : vector<2x16xf32> to vector<2x1xf32>
    %1456 = vector.extract_strided_slice %92 {offsets = [0, 0], sizes = [1, 64], strides = [1, 1]} : vector<16x64xf32> to vector<1x64xf32>
    %1457 = vector.broadcast %1455 : vector<2x1xf32> to vector<2x64xf32>
    %1458 = vector.broadcast %1456 : vector<1x64xf32> to vector<2x64xf32>
    %1459 = arith.mulf %1457, %1458 : vector<2x64xf32>
    %1460 = vector.extract_strided_slice %1453 {offsets = [0, 1], sizes = [2, 1], strides = [1, 1]} : vector<2x16xf32> to vector<2x1xf32>
    %1461 = vector.extract_strided_slice %92 {offsets = [1, 0], sizes = [1, 64], strides = [1, 1]} : vector<16x64xf32> to vector<1x64xf32>
    %1462 = vector.broadcast %1460 : vector<2x1xf32> to vector<2x64xf32>
    %1463 = vector.broadcast %1461 : vector<1x64xf32> to vector<2x64xf32>
    %1464 = arith.mulf %1462, %1463 : vector<2x64xf32>
    %1465 = vector.extract_strided_slice %1453 {offsets = [0, 2], sizes = [2, 1], strides = [1, 1]} : vector<2x16xf32> to vector<2x1xf32>
    %1466 = vector.extract_strided_slice %92 {offsets = [2, 0], sizes = [1, 64], strides = [1, 1]} : vector<16x64xf32> to vector<1x64xf32>
    %1467 = vector.broadcast %1465 : vector<2x1xf32> to vector<2x64xf32>
    %1468 = vector.broadcast %1466 : vector<1x64xf32> to vector<2x64xf32>
    %1469 = arith.mulf %1467, %1468 : vector<2x64xf32>
    %1470 = vector.extract_strided_slice %1453 {offsets = [0, 3], sizes = [2, 1], strides = [1, 1]} : vector<2x16xf32> to vector<2x1xf32>
    %1471 = vector.extract_strided_slice %92 {offsets = [3, 0], sizes = [1, 64], strides = [1, 1]} : vector<16x64xf32> to vector<1x64xf32>
    %1472 = vector.broadcast %1470 : vector<2x1xf32> to vector<2x64xf32>
    %1473 = vector.broadcast %1471 : vector<1x64xf32> to vector<2x64xf32>
    %1474 = arith.mulf %1472, %1473 : vector<2x64xf32>
    %1475 = vector.extract_strided_slice %1453 {offsets = [0, 4], sizes = [2, 1], strides = [1, 1]} : vector<2x16xf32> to vector<2x1xf32>
    %1476 = vector.extract_strided_slice %92 {offsets = [4, 0], sizes = [1, 64], strides = [1, 1]} : vector<16x64xf32> to vector<1x64xf32>
    %1477 = vector.broadcast %1475 : vector<2x1xf32> to vector<2x64xf32>
    %1478 = vector.broadcast %1476 : vector<1x64xf32> to vector<2x64xf32>
    %1479 = arith.mulf %1477, %1478 : vector<2x64xf32>
    %1480 = vector.extract_strided_slice %1453 {offsets = [0, 5], sizes = [2, 1], strides = [1, 1]} : vector<2x16xf32> to vector<2x1xf32>
    %1481 = vector.extract_strided_slice %92 {offsets = [5, 0], sizes = [1, 64], strides = [1, 1]} : vector<16x64xf32> to vector<1x64xf32>
    %1482 = vector.broadcast %1480 : vector<2x1xf32> to vector<2x64xf32>
    %1483 = vector.broadcast %1481 : vector<1x64xf32> to vector<2x64xf32>
    %1484 = arith.mulf %1482, %1483 : vector<2x64xf32>
    %1485 = vector.extract_strided_slice %1453 {offsets = [0, 6], sizes = [2, 1], strides = [1, 1]} : vector<2x16xf32> to vector<2x1xf32>
    %1486 = vector.extract_strided_slice %92 {offsets = [6, 0], sizes = [1, 64], strides = [1, 1]} : vector<16x64xf32> to vector<1x64xf32>
    %1487 = vector.broadcast %1485 : vector<2x1xf32> to vector<2x64xf32>
    %1488 = vector.broadcast %1486 : vector<1x64xf32> to vector<2x64xf32>
    %1489 = arith.mulf %1487, %1488 : vector<2x64xf32>
    %1490 = vector.extract_strided_slice %1453 {offsets = [0, 7], sizes = [2, 1], strides = [1, 1]} : vector<2x16xf32> to vector<2x1xf32>
    %1491 = vector.extract_strided_slice %92 {offsets = [7, 0], sizes = [1, 64], strides = [1, 1]} : vector<16x64xf32> to vector<1x64xf32>
    %1492 = vector.broadcast %1490 : vector<2x1xf32> to vector<2x64xf32>
    %1493 = vector.broadcast %1491 : vector<1x64xf32> to vector<2x64xf32>
    %1494 = arith.mulf %1492, %1493 : vector<2x64xf32>
    %1495 = vector.extract_strided_slice %1453 {offsets = [0, 8], sizes = [2, 1], strides = [1, 1]} : vector<2x16xf32> to vector<2x1xf32>
    %1496 = vector.extract_strided_slice %92 {offsets = [8, 0], sizes = [1, 64], strides = [1, 1]} : vector<16x64xf32> to vector<1x64xf32>
    %1497 = vector.broadcast %1495 : vector<2x1xf32> to vector<2x64xf32>
    %1498 = vector.broadcast %1496 : vector<1x64xf32> to vector<2x64xf32>
    %1499 = arith.mulf %1497, %1498 : vector<2x64xf32>
    %1500 = vector.extract_strided_slice %1453 {offsets = [0, 9], sizes = [2, 1], strides = [1, 1]} : vector<2x16xf32> to vector<2x1xf32>
    %1501 = vector.extract_strided_slice %92 {offsets = [9, 0], sizes = [1, 64], strides = [1, 1]} : vector<16x64xf32> to vector<1x64xf32>
    %1502 = vector.broadcast %1500 : vector<2x1xf32> to vector<2x64xf32>
    %1503 = vector.broadcast %1501 : vector<1x64xf32> to vector<2x64xf32>
    %1504 = arith.mulf %1502, %1503 : vector<2x64xf32>
    %1505 = vector.extract_strided_slice %1453 {offsets = [0, 10], sizes = [2, 1], strides = [1, 1]} : vector<2x16xf32> to vector<2x1xf32>
    %1506 = vector.extract_strided_slice %92 {offsets = [10, 0], sizes = [1, 64], strides = [1, 1]} : vector<16x64xf32> to vector<1x64xf32>
    %1507 = vector.broadcast %1505 : vector<2x1xf32> to vector<2x64xf32>
    %1508 = vector.broadcast %1506 : vector<1x64xf32> to vector<2x64xf32>
    %1509 = arith.mulf %1507, %1508 : vector<2x64xf32>
    %1510 = vector.extract_strided_slice %1453 {offsets = [0, 11], sizes = [2, 1], strides = [1, 1]} : vector<2x16xf32> to vector<2x1xf32>
    %1511 = vector.extract_strided_slice %92 {offsets = [11, 0], sizes = [1, 64], strides = [1, 1]} : vector<16x64xf32> to vector<1x64xf32>
    %1512 = vector.broadcast %1510 : vector<2x1xf32> to vector<2x64xf32>
    %1513 = vector.broadcast %1511 : vector<1x64xf32> to vector<2x64xf32>
    %1514 = arith.mulf %1512, %1513 : vector<2x64xf32>
    %1515 = vector.extract_strided_slice %1453 {offsets = [0, 12], sizes = [2, 1], strides = [1, 1]} : vector<2x16xf32> to vector<2x1xf32>
    %1516 = vector.extract_strided_slice %92 {offsets = [12, 0], sizes = [1, 64], strides = [1, 1]} : vector<16x64xf32> to vector<1x64xf32>
    %1517 = vector.broadcast %1515 : vector<2x1xf32> to vector<2x64xf32>
    %1518 = vector.broadcast %1516 : vector<1x64xf32> to vector<2x64xf32>
    %1519 = arith.mulf %1517, %1518 : vector<2x64xf32>
    %1520 = vector.extract_strided_slice %1453 {offsets = [0, 13], sizes = [2, 1], strides = [1, 1]} : vector<2x16xf32> to vector<2x1xf32>
    %1521 = vector.extract_strided_slice %92 {offsets = [13, 0], sizes = [1, 64], strides = [1, 1]} : vector<16x64xf32> to vector<1x64xf32>
    %1522 = vector.broadcast %1520 : vector<2x1xf32> to vector<2x64xf32>
    %1523 = vector.broadcast %1521 : vector<1x64xf32> to vector<2x64xf32>
    %1524 = arith.mulf %1522, %1523 : vector<2x64xf32>
    %1525 = vector.extract_strided_slice %1453 {offsets = [0, 14], sizes = [2, 1], strides = [1, 1]} : vector<2x16xf32> to vector<2x1xf32>
    %1526 = vector.extract_strided_slice %92 {offsets = [14, 0], sizes = [1, 64], strides = [1, 1]} : vector<16x64xf32> to vector<1x64xf32>
    %1527 = vector.broadcast %1525 : vector<2x1xf32> to vector<2x64xf32>
    %1528 = vector.broadcast %1526 : vector<1x64xf32> to vector<2x64xf32>
    %1529 = arith.mulf %1527, %1528 : vector<2x64xf32>
    %1530 = vector.extract_strided_slice %1453 {offsets = [0, 15], sizes = [2, 1], strides = [1, 1]} : vector<2x16xf32> to vector<2x1xf32>
    %1531 = vector.extract_strided_slice %92 {offsets = [15, 0], sizes = [1, 64], strides = [1, 1]} : vector<16x64xf32> to vector<1x64xf32>
    %1532 = vector.broadcast %1530 : vector<2x1xf32> to vector<2x64xf32>
    %1533 = vector.broadcast %1531 : vector<1x64xf32> to vector<2x64xf32>
    %1534 = arith.mulf %1532, %1533 : vector<2x64xf32>
    %1535 = arith.addf %1454, %1459 : vector<2x64xf32>
    %1536 = arith.addf %1464, %1469 : vector<2x64xf32>
    %1537 = arith.addf %1474, %1479 : vector<2x64xf32>
    %1538 = arith.addf %1484, %1489 : vector<2x64xf32>
    %1539 = arith.addf %1494, %1499 : vector<2x64xf32>
    %1540 = arith.addf %1504, %1509 : vector<2x64xf32>
    %1541 = arith.addf %1514, %1519 : vector<2x64xf32>
    %1542 = arith.addf %1524, %1529 : vector<2x64xf32>
    %1543 = arith.addf %1535, %1536 : vector<2x64xf32>
    %1544 = arith.addf %1537, %1538 : vector<2x64xf32>
    %1545 = arith.addf %1539, %1540 : vector<2x64xf32>
    %1546 = arith.addf %1541, %1542 : vector<2x64xf32>
    %1547 = arith.addf %1543, %1544 : vector<2x64xf32>
    %1548 = arith.addf %1545, %1546 : vector<2x64xf32>
    %1549 = arith.addf %1547, %1548 : vector<2x64xf32>
    %1550 = arith.addf %1549, %1534 : vector<2x64xf32>
    %1551 = arith.negf %1550 : vector<2x64xf32>
    %1552 = math.exp %1551 : vector<2x64xf32>
    %cst_45 = arith.constant 1.000000e+00 : f32
    %1553 = vector.broadcast %cst_45 : f32 to vector<2x64xf32>
    %1554 = arith.addf %1553, %1552 : vector<2x64xf32>
    %1555 = arith.divf %1553, %1554 : vector<2x64xf32>
    %1556 = vector.extract_strided_slice %1555 {offsets = [0, 0], sizes = [2, 16], strides = [1, 1]} : vector<2x64xf32> to vector<2x16xf32>
    %1557 = vector.extract_strided_slice %1555 {offsets = [0, 16], sizes = [2, 16], strides = [1, 1]} : vector<2x64xf32> to vector<2x16xf32>
    %1558 = vector.extract_strided_slice %1555 {offsets = [0, 48], sizes = [2, 16], strides = [1, 1]} : vector<2x64xf32> to vector<2x16xf32>
    %1559 = vector.extract_strided_slice %1550 {offsets = [0, 32], sizes = [2, 16], strides = [1, 1]} : vector<2x64xf32> to vector<2x16xf32>
    %1560 = math.tanh %1559 : vector<2x16xf32>
    %1561 = arith.mulf %1557, %1451 : vector<2x16xf32>
    %1562 = arith.mulf %1556, %1560 : vector<2x16xf32>
    %1563 = arith.addf %1561, %1562 : vector<2x16xf32>
    %1564 = math.tanh %1563 : vector<2x16xf32>
    %1565 = arith.mulf %1558, %1564 : vector<2x16xf32>
    %1566 = vector.extract_strided_slice %91 {offsets = [28, 0], sizes = [2, 64], strides = [1, 1]} : vector<32x64xf32> to vector<2x64xf32>
    %1567 = vector.extract_strided_slice %1565 {offsets = [0, 0], sizes = [2, 1], strides = [1, 1]} : vector<2x16xf32> to vector<2x1xf32>
    %1568 = vector.extract_strided_slice %92 {offsets = [0, 0], sizes = [1, 64], strides = [1, 1]} : vector<16x64xf32> to vector<1x64xf32>
    %1569 = vector.broadcast %1567 : vector<2x1xf32> to vector<2x64xf32>
    %1570 = vector.broadcast %1568 : vector<1x64xf32> to vector<2x64xf32>
    %1571 = arith.mulf %1569, %1570 : vector<2x64xf32>
    %1572 = vector.extract_strided_slice %1565 {offsets = [0, 1], sizes = [2, 1], strides = [1, 1]} : vector<2x16xf32> to vector<2x1xf32>
    %1573 = vector.extract_strided_slice %92 {offsets = [1, 0], sizes = [1, 64], strides = [1, 1]} : vector<16x64xf32> to vector<1x64xf32>
    %1574 = vector.broadcast %1572 : vector<2x1xf32> to vector<2x64xf32>
    %1575 = vector.broadcast %1573 : vector<1x64xf32> to vector<2x64xf32>
    %1576 = arith.mulf %1574, %1575 : vector<2x64xf32>
    %1577 = vector.extract_strided_slice %1565 {offsets = [0, 2], sizes = [2, 1], strides = [1, 1]} : vector<2x16xf32> to vector<2x1xf32>
    %1578 = vector.extract_strided_slice %92 {offsets = [2, 0], sizes = [1, 64], strides = [1, 1]} : vector<16x64xf32> to vector<1x64xf32>
    %1579 = vector.broadcast %1577 : vector<2x1xf32> to vector<2x64xf32>
    %1580 = vector.broadcast %1578 : vector<1x64xf32> to vector<2x64xf32>
    %1581 = arith.mulf %1579, %1580 : vector<2x64xf32>
    %1582 = vector.extract_strided_slice %1565 {offsets = [0, 3], sizes = [2, 1], strides = [1, 1]} : vector<2x16xf32> to vector<2x1xf32>
    %1583 = vector.extract_strided_slice %92 {offsets = [3, 0], sizes = [1, 64], strides = [1, 1]} : vector<16x64xf32> to vector<1x64xf32>
    %1584 = vector.broadcast %1582 : vector<2x1xf32> to vector<2x64xf32>
    %1585 = vector.broadcast %1583 : vector<1x64xf32> to vector<2x64xf32>
    %1586 = arith.mulf %1584, %1585 : vector<2x64xf32>
    %1587 = vector.extract_strided_slice %1565 {offsets = [0, 4], sizes = [2, 1], strides = [1, 1]} : vector<2x16xf32> to vector<2x1xf32>
    %1588 = vector.extract_strided_slice %92 {offsets = [4, 0], sizes = [1, 64], strides = [1, 1]} : vector<16x64xf32> to vector<1x64xf32>
    %1589 = vector.broadcast %1587 : vector<2x1xf32> to vector<2x64xf32>
    %1590 = vector.broadcast %1588 : vector<1x64xf32> to vector<2x64xf32>
    %1591 = arith.mulf %1589, %1590 : vector<2x64xf32>
    %1592 = vector.extract_strided_slice %1565 {offsets = [0, 5], sizes = [2, 1], strides = [1, 1]} : vector<2x16xf32> to vector<2x1xf32>
    %1593 = vector.extract_strided_slice %92 {offsets = [5, 0], sizes = [1, 64], strides = [1, 1]} : vector<16x64xf32> to vector<1x64xf32>
    %1594 = vector.broadcast %1592 : vector<2x1xf32> to vector<2x64xf32>
    %1595 = vector.broadcast %1593 : vector<1x64xf32> to vector<2x64xf32>
    %1596 = arith.mulf %1594, %1595 : vector<2x64xf32>
    %1597 = vector.extract_strided_slice %1565 {offsets = [0, 6], sizes = [2, 1], strides = [1, 1]} : vector<2x16xf32> to vector<2x1xf32>
    %1598 = vector.extract_strided_slice %92 {offsets = [6, 0], sizes = [1, 64], strides = [1, 1]} : vector<16x64xf32> to vector<1x64xf32>
    %1599 = vector.broadcast %1597 : vector<2x1xf32> to vector<2x64xf32>
    %1600 = vector.broadcast %1598 : vector<1x64xf32> to vector<2x64xf32>
    %1601 = arith.mulf %1599, %1600 : vector<2x64xf32>
    %1602 = vector.extract_strided_slice %1565 {offsets = [0, 7], sizes = [2, 1], strides = [1, 1]} : vector<2x16xf32> to vector<2x1xf32>
    %1603 = vector.extract_strided_slice %92 {offsets = [7, 0], sizes = [1, 64], strides = [1, 1]} : vector<16x64xf32> to vector<1x64xf32>
    %1604 = vector.broadcast %1602 : vector<2x1xf32> to vector<2x64xf32>
    %1605 = vector.broadcast %1603 : vector<1x64xf32> to vector<2x64xf32>
    %1606 = arith.mulf %1604, %1605 : vector<2x64xf32>
    %1607 = vector.extract_strided_slice %1565 {offsets = [0, 8], sizes = [2, 1], strides = [1, 1]} : vector<2x16xf32> to vector<2x1xf32>
    %1608 = vector.extract_strided_slice %92 {offsets = [8, 0], sizes = [1, 64], strides = [1, 1]} : vector<16x64xf32> to vector<1x64xf32>
    %1609 = vector.broadcast %1607 : vector<2x1xf32> to vector<2x64xf32>
    %1610 = vector.broadcast %1608 : vector<1x64xf32> to vector<2x64xf32>
    %1611 = arith.mulf %1609, %1610 : vector<2x64xf32>
    %1612 = vector.extract_strided_slice %1565 {offsets = [0, 9], sizes = [2, 1], strides = [1, 1]} : vector<2x16xf32> to vector<2x1xf32>
    %1613 = vector.extract_strided_slice %92 {offsets = [9, 0], sizes = [1, 64], strides = [1, 1]} : vector<16x64xf32> to vector<1x64xf32>
    %1614 = vector.broadcast %1612 : vector<2x1xf32> to vector<2x64xf32>
    %1615 = vector.broadcast %1613 : vector<1x64xf32> to vector<2x64xf32>
    %1616 = arith.mulf %1614, %1615 : vector<2x64xf32>
    %1617 = vector.extract_strided_slice %1565 {offsets = [0, 10], sizes = [2, 1], strides = [1, 1]} : vector<2x16xf32> to vector<2x1xf32>
    %1618 = vector.extract_strided_slice %92 {offsets = [10, 0], sizes = [1, 64], strides = [1, 1]} : vector<16x64xf32> to vector<1x64xf32>
    %1619 = vector.broadcast %1617 : vector<2x1xf32> to vector<2x64xf32>
    %1620 = vector.broadcast %1618 : vector<1x64xf32> to vector<2x64xf32>
    %1621 = arith.mulf %1619, %1620 : vector<2x64xf32>
    %1622 = vector.extract_strided_slice %1565 {offsets = [0, 11], sizes = [2, 1], strides = [1, 1]} : vector<2x16xf32> to vector<2x1xf32>
    %1623 = vector.extract_strided_slice %92 {offsets = [11, 0], sizes = [1, 64], strides = [1, 1]} : vector<16x64xf32> to vector<1x64xf32>
    %1624 = vector.broadcast %1622 : vector<2x1xf32> to vector<2x64xf32>
    %1625 = vector.broadcast %1623 : vector<1x64xf32> to vector<2x64xf32>
    %1626 = arith.mulf %1624, %1625 : vector<2x64xf32>
    %1627 = vector.extract_strided_slice %1565 {offsets = [0, 12], sizes = [2, 1], strides = [1, 1]} : vector<2x16xf32> to vector<2x1xf32>
    %1628 = vector.extract_strided_slice %92 {offsets = [12, 0], sizes = [1, 64], strides = [1, 1]} : vector<16x64xf32> to vector<1x64xf32>
    %1629 = vector.broadcast %1627 : vector<2x1xf32> to vector<2x64xf32>
    %1630 = vector.broadcast %1628 : vector<1x64xf32> to vector<2x64xf32>
    %1631 = arith.mulf %1629, %1630 : vector<2x64xf32>
    %1632 = vector.extract_strided_slice %1565 {offsets = [0, 13], sizes = [2, 1], strides = [1, 1]} : vector<2x16xf32> to vector<2x1xf32>
    %1633 = vector.extract_strided_slice %92 {offsets = [13, 0], sizes = [1, 64], strides = [1, 1]} : vector<16x64xf32> to vector<1x64xf32>
    %1634 = vector.broadcast %1632 : vector<2x1xf32> to vector<2x64xf32>
    %1635 = vector.broadcast %1633 : vector<1x64xf32> to vector<2x64xf32>
    %1636 = arith.mulf %1634, %1635 : vector<2x64xf32>
    %1637 = vector.extract_strided_slice %1565 {offsets = [0, 14], sizes = [2, 1], strides = [1, 1]} : vector<2x16xf32> to vector<2x1xf32>
    %1638 = vector.extract_strided_slice %92 {offsets = [14, 0], sizes = [1, 64], strides = [1, 1]} : vector<16x64xf32> to vector<1x64xf32>
    %1639 = vector.broadcast %1637 : vector<2x1xf32> to vector<2x64xf32>
    %1640 = vector.broadcast %1638 : vector<1x64xf32> to vector<2x64xf32>
    %1641 = arith.mulf %1639, %1640 : vector<2x64xf32>
    %1642 = vector.extract_strided_slice %1565 {offsets = [0, 15], sizes = [2, 1], strides = [1, 1]} : vector<2x16xf32> to vector<2x1xf32>
    %1643 = vector.extract_strided_slice %92 {offsets = [15, 0], sizes = [1, 64], strides = [1, 1]} : vector<16x64xf32> to vector<1x64xf32>
    %1644 = vector.broadcast %1642 : vector<2x1xf32> to vector<2x64xf32>
    %1645 = vector.broadcast %1643 : vector<1x64xf32> to vector<2x64xf32>
    %1646 = arith.mulf %1644, %1645 : vector<2x64xf32>
    %1647 = arith.addf %1566, %1571 : vector<2x64xf32>
    %1648 = arith.addf %1576, %1581 : vector<2x64xf32>
    %1649 = arith.addf %1586, %1591 : vector<2x64xf32>
    %1650 = arith.addf %1596, %1601 : vector<2x64xf32>
    %1651 = arith.addf %1606, %1611 : vector<2x64xf32>
    %1652 = arith.addf %1616, %1621 : vector<2x64xf32>
    %1653 = arith.addf %1626, %1631 : vector<2x64xf32>
    %1654 = arith.addf %1636, %1641 : vector<2x64xf32>
    %1655 = arith.addf %1647, %1648 : vector<2x64xf32>
    %1656 = arith.addf %1649, %1650 : vector<2x64xf32>
    %1657 = arith.addf %1651, %1652 : vector<2x64xf32>
    %1658 = arith.addf %1653, %1654 : vector<2x64xf32>
    %1659 = arith.addf %1655, %1656 : vector<2x64xf32>
    %1660 = arith.addf %1657, %1658 : vector<2x64xf32>
    %1661 = arith.addf %1659, %1660 : vector<2x64xf32>
    %1662 = arith.addf %1661, %1646 : vector<2x64xf32>
    %1663 = arith.negf %1662 : vector<2x64xf32>
    %1664 = math.exp %1663 : vector<2x64xf32>
    %cst_46 = arith.constant 1.000000e+00 : f32
    %1665 = vector.broadcast %cst_46 : f32 to vector<2x64xf32>
    %1666 = arith.addf %1665, %1664 : vector<2x64xf32>
    %1667 = arith.divf %1665, %1666 : vector<2x64xf32>
    %1668 = vector.extract_strided_slice %1667 {offsets = [0, 0], sizes = [2, 16], strides = [1, 1]} : vector<2x64xf32> to vector<2x16xf32>
    %1669 = vector.extract_strided_slice %1667 {offsets = [0, 16], sizes = [2, 16], strides = [1, 1]} : vector<2x64xf32> to vector<2x16xf32>
    %1670 = vector.extract_strided_slice %1667 {offsets = [0, 48], sizes = [2, 16], strides = [1, 1]} : vector<2x64xf32> to vector<2x16xf32>
    %1671 = vector.extract_strided_slice %1662 {offsets = [0, 32], sizes = [2, 16], strides = [1, 1]} : vector<2x64xf32> to vector<2x16xf32>
    %1672 = math.tanh %1671 : vector<2x16xf32>
    %1673 = arith.mulf %1669, %1563 : vector<2x16xf32>
    %1674 = arith.mulf %1668, %1672 : vector<2x16xf32>
    %1675 = arith.addf %1673, %1674 : vector<2x16xf32>
    %1676 = math.tanh %1675 : vector<2x16xf32>
    %1677 = arith.mulf %1670, %1676 : vector<2x16xf32>
    %1678 = vector.extract_strided_slice %91 {offsets = [30, 0], sizes = [2, 64], strides = [1, 1]} : vector<32x64xf32> to vector<2x64xf32>
    %1679 = vector.extract_strided_slice %1677 {offsets = [0, 0], sizes = [2, 1], strides = [1, 1]} : vector<2x16xf32> to vector<2x1xf32>
    %1680 = vector.extract_strided_slice %92 {offsets = [0, 0], sizes = [1, 64], strides = [1, 1]} : vector<16x64xf32> to vector<1x64xf32>
    %1681 = vector.broadcast %1679 : vector<2x1xf32> to vector<2x64xf32>
    %1682 = vector.broadcast %1680 : vector<1x64xf32> to vector<2x64xf32>
    %1683 = arith.mulf %1681, %1682 : vector<2x64xf32>
    %1684 = vector.extract_strided_slice %1677 {offsets = [0, 1], sizes = [2, 1], strides = [1, 1]} : vector<2x16xf32> to vector<2x1xf32>
    %1685 = vector.extract_strided_slice %92 {offsets = [1, 0], sizes = [1, 64], strides = [1, 1]} : vector<16x64xf32> to vector<1x64xf32>
    %1686 = vector.broadcast %1684 : vector<2x1xf32> to vector<2x64xf32>
    %1687 = vector.broadcast %1685 : vector<1x64xf32> to vector<2x64xf32>
    %1688 = arith.mulf %1686, %1687 : vector<2x64xf32>
    %1689 = vector.extract_strided_slice %1677 {offsets = [0, 2], sizes = [2, 1], strides = [1, 1]} : vector<2x16xf32> to vector<2x1xf32>
    %1690 = vector.extract_strided_slice %92 {offsets = [2, 0], sizes = [1, 64], strides = [1, 1]} : vector<16x64xf32> to vector<1x64xf32>
    %1691 = vector.broadcast %1689 : vector<2x1xf32> to vector<2x64xf32>
    %1692 = vector.broadcast %1690 : vector<1x64xf32> to vector<2x64xf32>
    %1693 = arith.mulf %1691, %1692 : vector<2x64xf32>
    %1694 = vector.extract_strided_slice %1677 {offsets = [0, 3], sizes = [2, 1], strides = [1, 1]} : vector<2x16xf32> to vector<2x1xf32>
    %1695 = vector.extract_strided_slice %92 {offsets = [3, 0], sizes = [1, 64], strides = [1, 1]} : vector<16x64xf32> to vector<1x64xf32>
    %1696 = vector.broadcast %1694 : vector<2x1xf32> to vector<2x64xf32>
    %1697 = vector.broadcast %1695 : vector<1x64xf32> to vector<2x64xf32>
    %1698 = arith.mulf %1696, %1697 : vector<2x64xf32>
    %1699 = vector.extract_strided_slice %1677 {offsets = [0, 4], sizes = [2, 1], strides = [1, 1]} : vector<2x16xf32> to vector<2x1xf32>
    %1700 = vector.extract_strided_slice %92 {offsets = [4, 0], sizes = [1, 64], strides = [1, 1]} : vector<16x64xf32> to vector<1x64xf32>
    %1701 = vector.broadcast %1699 : vector<2x1xf32> to vector<2x64xf32>
    %1702 = vector.broadcast %1700 : vector<1x64xf32> to vector<2x64xf32>
    %1703 = arith.mulf %1701, %1702 : vector<2x64xf32>
    %1704 = vector.extract_strided_slice %1677 {offsets = [0, 5], sizes = [2, 1], strides = [1, 1]} : vector<2x16xf32> to vector<2x1xf32>
    %1705 = vector.extract_strided_slice %92 {offsets = [5, 0], sizes = [1, 64], strides = [1, 1]} : vector<16x64xf32> to vector<1x64xf32>
    %1706 = vector.broadcast %1704 : vector<2x1xf32> to vector<2x64xf32>
    %1707 = vector.broadcast %1705 : vector<1x64xf32> to vector<2x64xf32>
    %1708 = arith.mulf %1706, %1707 : vector<2x64xf32>
    %1709 = vector.extract_strided_slice %1677 {offsets = [0, 6], sizes = [2, 1], strides = [1, 1]} : vector<2x16xf32> to vector<2x1xf32>
    %1710 = vector.extract_strided_slice %92 {offsets = [6, 0], sizes = [1, 64], strides = [1, 1]} : vector<16x64xf32> to vector<1x64xf32>
    %1711 = vector.broadcast %1709 : vector<2x1xf32> to vector<2x64xf32>
    %1712 = vector.broadcast %1710 : vector<1x64xf32> to vector<2x64xf32>
    %1713 = arith.mulf %1711, %1712 : vector<2x64xf32>
    %1714 = vector.extract_strided_slice %1677 {offsets = [0, 7], sizes = [2, 1], strides = [1, 1]} : vector<2x16xf32> to vector<2x1xf32>
    %1715 = vector.extract_strided_slice %92 {offsets = [7, 0], sizes = [1, 64], strides = [1, 1]} : vector<16x64xf32> to vector<1x64xf32>
    %1716 = vector.broadcast %1714 : vector<2x1xf32> to vector<2x64xf32>
    %1717 = vector.broadcast %1715 : vector<1x64xf32> to vector<2x64xf32>
    %1718 = arith.mulf %1716, %1717 : vector<2x64xf32>
    %1719 = vector.extract_strided_slice %1677 {offsets = [0, 8], sizes = [2, 1], strides = [1, 1]} : vector<2x16xf32> to vector<2x1xf32>
    %1720 = vector.extract_strided_slice %92 {offsets = [8, 0], sizes = [1, 64], strides = [1, 1]} : vector<16x64xf32> to vector<1x64xf32>
    %1721 = vector.broadcast %1719 : vector<2x1xf32> to vector<2x64xf32>
    %1722 = vector.broadcast %1720 : vector<1x64xf32> to vector<2x64xf32>
    %1723 = arith.mulf %1721, %1722 : vector<2x64xf32>
    %1724 = vector.extract_strided_slice %1677 {offsets = [0, 9], sizes = [2, 1], strides = [1, 1]} : vector<2x16xf32> to vector<2x1xf32>
    %1725 = vector.extract_strided_slice %92 {offsets = [9, 0], sizes = [1, 64], strides = [1, 1]} : vector<16x64xf32> to vector<1x64xf32>
    %1726 = vector.broadcast %1724 : vector<2x1xf32> to vector<2x64xf32>
    %1727 = vector.broadcast %1725 : vector<1x64xf32> to vector<2x64xf32>
    %1728 = arith.mulf %1726, %1727 : vector<2x64xf32>
    %1729 = vector.extract_strided_slice %1677 {offsets = [0, 10], sizes = [2, 1], strides = [1, 1]} : vector<2x16xf32> to vector<2x1xf32>
    %1730 = vector.extract_strided_slice %92 {offsets = [10, 0], sizes = [1, 64], strides = [1, 1]} : vector<16x64xf32> to vector<1x64xf32>
    %1731 = vector.broadcast %1729 : vector<2x1xf32> to vector<2x64xf32>
    %1732 = vector.broadcast %1730 : vector<1x64xf32> to vector<2x64xf32>
    %1733 = arith.mulf %1731, %1732 : vector<2x64xf32>
    %1734 = vector.extract_strided_slice %1677 {offsets = [0, 11], sizes = [2, 1], strides = [1, 1]} : vector<2x16xf32> to vector<2x1xf32>
    %1735 = vector.extract_strided_slice %92 {offsets = [11, 0], sizes = [1, 64], strides = [1, 1]} : vector<16x64xf32> to vector<1x64xf32>
    %1736 = vector.broadcast %1734 : vector<2x1xf32> to vector<2x64xf32>
    %1737 = vector.broadcast %1735 : vector<1x64xf32> to vector<2x64xf32>
    %1738 = arith.mulf %1736, %1737 : vector<2x64xf32>
    %1739 = vector.extract_strided_slice %1677 {offsets = [0, 12], sizes = [2, 1], strides = [1, 1]} : vector<2x16xf32> to vector<2x1xf32>
    %1740 = vector.extract_strided_slice %92 {offsets = [12, 0], sizes = [1, 64], strides = [1, 1]} : vector<16x64xf32> to vector<1x64xf32>
    %1741 = vector.broadcast %1739 : vector<2x1xf32> to vector<2x64xf32>
    %1742 = vector.broadcast %1740 : vector<1x64xf32> to vector<2x64xf32>
    %1743 = arith.mulf %1741, %1742 : vector<2x64xf32>
    %1744 = vector.extract_strided_slice %1677 {offsets = [0, 13], sizes = [2, 1], strides = [1, 1]} : vector<2x16xf32> to vector<2x1xf32>
    %1745 = vector.extract_strided_slice %92 {offsets = [13, 0], sizes = [1, 64], strides = [1, 1]} : vector<16x64xf32> to vector<1x64xf32>
    %1746 = vector.broadcast %1744 : vector<2x1xf32> to vector<2x64xf32>
    %1747 = vector.broadcast %1745 : vector<1x64xf32> to vector<2x64xf32>
    %1748 = arith.mulf %1746, %1747 : vector<2x64xf32>
    %1749 = vector.extract_strided_slice %1677 {offsets = [0, 14], sizes = [2, 1], strides = [1, 1]} : vector<2x16xf32> to vector<2x1xf32>
    %1750 = vector.extract_strided_slice %92 {offsets = [14, 0], sizes = [1, 64], strides = [1, 1]} : vector<16x64xf32> to vector<1x64xf32>
    %1751 = vector.broadcast %1749 : vector<2x1xf32> to vector<2x64xf32>
    %1752 = vector.broadcast %1750 : vector<1x64xf32> to vector<2x64xf32>
    %1753 = arith.mulf %1751, %1752 : vector<2x64xf32>
    %1754 = vector.extract_strided_slice %1677 {offsets = [0, 15], sizes = [2, 1], strides = [1, 1]} : vector<2x16xf32> to vector<2x1xf32>
    %1755 = vector.extract_strided_slice %92 {offsets = [15, 0], sizes = [1, 64], strides = [1, 1]} : vector<16x64xf32> to vector<1x64xf32>
    %1756 = vector.broadcast %1754 : vector<2x1xf32> to vector<2x64xf32>
    %1757 = vector.broadcast %1755 : vector<1x64xf32> to vector<2x64xf32>
    %1758 = arith.mulf %1756, %1757 : vector<2x64xf32>
    %1759 = arith.addf %1678, %1683 : vector<2x64xf32>
    %1760 = arith.addf %1688, %1693 : vector<2x64xf32>
    %1761 = arith.addf %1698, %1703 : vector<2x64xf32>
    %1762 = arith.addf %1708, %1713 : vector<2x64xf32>
    %1763 = arith.addf %1718, %1723 : vector<2x64xf32>
    %1764 = arith.addf %1728, %1733 : vector<2x64xf32>
    %1765 = arith.addf %1738, %1743 : vector<2x64xf32>
    %1766 = arith.addf %1748, %1753 : vector<2x64xf32>
    %1767 = arith.addf %1759, %1760 : vector<2x64xf32>
    %1768 = arith.addf %1761, %1762 : vector<2x64xf32>
    %1769 = arith.addf %1763, %1764 : vector<2x64xf32>
    %1770 = arith.addf %1765, %1766 : vector<2x64xf32>
    %1771 = arith.addf %1767, %1768 : vector<2x64xf32>
    %1772 = arith.addf %1769, %1770 : vector<2x64xf32>
    %1773 = arith.addf %1771, %1772 : vector<2x64xf32>
    %1774 = arith.addf %1773, %1758 : vector<2x64xf32>
    %1775 = arith.negf %1774 : vector<2x64xf32>
    %1776 = math.exp %1775 : vector<2x64xf32>
    %cst_47 = arith.constant 1.000000e+00 : f32
    %1777 = vector.broadcast %cst_47 : f32 to vector<2x64xf32>
    %1778 = arith.addf %1777, %1776 : vector<2x64xf32>
    %1779 = arith.divf %1777, %1778 : vector<2x64xf32>
    %1780 = vector.extract_strided_slice %1779 {offsets = [0, 0], sizes = [2, 16], strides = [1, 1]} : vector<2x64xf32> to vector<2x16xf32>
    %1781 = vector.extract_strided_slice %1779 {offsets = [0, 16], sizes = [2, 16], strides = [1, 1]} : vector<2x64xf32> to vector<2x16xf32>
    %1782 = vector.extract_strided_slice %1779 {offsets = [0, 48], sizes = [2, 16], strides = [1, 1]} : vector<2x64xf32> to vector<2x16xf32>
    %1783 = vector.extract_strided_slice %1774 {offsets = [0, 32], sizes = [2, 16], strides = [1, 1]} : vector<2x64xf32> to vector<2x16xf32>
    %1784 = math.tanh %1783 : vector<2x16xf32>
    %1785 = arith.mulf %1781, %1675 : vector<2x16xf32>
    %1786 = arith.mulf %1780, %1784 : vector<2x16xf32>
    %1787 = arith.addf %1785, %1786 : vector<2x16xf32>
    %1788 = math.tanh %1787 : vector<2x16xf32>
    %1789 = arith.mulf %1782, %1788 : vector<2x16xf32>
    %1790 = vector.shape_cast %109 : vector<2x16xf32> to vector<1x2x16xf32>
    %1791 = vector.shape_cast %221 : vector<2x16xf32> to vector<1x2x16xf32>
    %1792 = vector.shape_cast %333 : vector<2x16xf32> to vector<1x2x16xf32>
    %1793 = vector.shape_cast %445 : vector<2x16xf32> to vector<1x2x16xf32>
    %1794 = vector.shape_cast %557 : vector<2x16xf32> to vector<1x2x16xf32>
    %1795 = vector.shape_cast %669 : vector<2x16xf32> to vector<1x2x16xf32>
    %1796 = vector.shape_cast %781 : vector<2x16xf32> to vector<1x2x16xf32>
    %1797 = vector.shape_cast %893 : vector<2x16xf32> to vector<1x2x16xf32>
    %1798 = vector.shape_cast %1005 : vector<2x16xf32> to vector<1x2x16xf32>
    %1799 = vector.shape_cast %1117 : vector<2x16xf32> to vector<1x2x16xf32>
    %1800 = vector.shape_cast %1229 : vector<2x16xf32> to vector<1x2x16xf32>
    %1801 = vector.shape_cast %1341 : vector<2x16xf32> to vector<1x2x16xf32>
    %1802 = vector.shape_cast %1453 : vector<2x16xf32> to vector<1x2x16xf32>
    %1803 = vector.shape_cast %1565 : vector<2x16xf32> to vector<1x2x16xf32>
    %1804 = vector.shape_cast %1677 : vector<2x16xf32> to vector<1x2x16xf32>
    %1805 = vector.shape_cast %1789 : vector<2x16xf32> to vector<1x2x16xf32>
    %1806 = tpu.concatenate %1790, %1791, %1792, %1793, %1794, %1795, %1796, %1797, %1798, %1799, %1800, %1801, %1802, %1803, %1804, %1805 in 0 : vector<1x2x16xf32>, vector<1x2x16xf32>, vector<1x2x16xf32>, vector<1x2x16xf32>, vector<1x2x16xf32>, vector<1x2x16xf32>, vector<1x2x16xf32>, vector<1x2x16xf32>, vector<1x2x16xf32>, vector<1x2x16xf32>, vector<1x2x16xf32>, vector<1x2x16xf32>, vector<1x2x16xf32>, vector<1x2x16xf32>, vector<1x2x16xf32>, vector<1x2x16xf32> -> vector<16x2x16xf32>
    %1807 = vector.extract_strided_slice %1806 {offsets = [0, 0, 0], sizes = [16, 1, 16], strides = [1, 1, 1]} : vector<16x2x16xf32> to vector<16x1x16xf32>
    %1808 = vector.shape_cast %1807 : vector<16x1x16xf32> to vector<16x16xf32>
    %1809 = tpu.transpose %1808, [1, 0] : vector<16x16xf32> -> vector<16x16xf32>
    %cst_48 = arith.constant 0.000000e+00 : f32
    %1810 = vector.broadcast %cst_48 : f32 to vector<1x16xf32>
    %cst_49 = arith.constant 0.000000e+00 : f32
    %1811 = vector.broadcast %cst_49 : f32 to vector<1x16xf32>
    %1812 = tpu.concatenate %1810, %1809, %1811 in 0 : vector<1x16xf32>, vector<16x16xf32>, vector<1x16xf32> -> vector<18x16xf32>
    %1813 = vector.extract_strided_slice %1812 {offsets = [0, 0], sizes = [16, 16], strides = [1, 1]} : vector<18x16xf32> to vector<16x16xf32>
    %1814 = vector.extract_strided_slice %1812 {offsets = [1, 0], sizes = [16, 16], strides = [1, 1]} : vector<18x16xf32> to vector<16x16xf32>
    %1815 = vector.extract_strided_slice %1812 {offsets = [2, 0], sizes = [16, 16], strides = [1, 1]} : vector<18x16xf32> to vector<16x16xf32>
    %1816 = tpu.concatenate %1813, %1814, %1815 in 1 : vector<16x16xf32>, vector<16x16xf32>, vector<16x16xf32> -> vector<16x48xf32>
    %1817 = vector.extract_strided_slice %1806 {offsets = [0, 1, 0], sizes = [16, 1, 16], strides = [1, 1, 1]} : vector<16x2x16xf32> to vector<16x1x16xf32>
    %1818 = vector.shape_cast %1817 : vector<16x1x16xf32> to vector<16x16xf32>
    %1819 = tpu.transpose %1818, [1, 0] : vector<16x16xf32> -> vector<16x16xf32>
    %cst_50 = arith.constant 0.000000e+00 : f32
    %1820 = vector.broadcast %cst_50 : f32 to vector<1x16xf32>
    %cst_51 = arith.constant 0.000000e+00 : f32
    %1821 = vector.broadcast %cst_51 : f32 to vector<1x16xf32>
    %1822 = tpu.concatenate %1820, %1819, %1821 in 0 : vector<1x16xf32>, vector<16x16xf32>, vector<1x16xf32> -> vector<18x16xf32>
    %1823 = vector.extract_strided_slice %1822 {offsets = [0, 0], sizes = [16, 16], strides = [1, 1]} : vector<18x16xf32> to vector<16x16xf32>
    %1824 = vector.extract_strided_slice %1822 {offsets = [1, 0], sizes = [16, 16], strides = [1, 1]} : vector<18x16xf32> to vector<16x16xf32>
    %1825 = vector.extract_strided_slice %1822 {offsets = [2, 0], sizes = [16, 16], strides = [1, 1]} : vector<18x16xf32> to vector<16x16xf32>
    %1826 = tpu.concatenate %1823, %1824, %1825 in 1 : vector<16x16xf32>, vector<16x16xf32>, vector<16x16xf32> -> vector<16x48xf32>
    %1827 = tpu.concatenate %1816, %1826 in 0 : vector<16x48xf32>, vector<16x48xf32> -> vector<32x48xf32>
    %c0_52 = arith.constant 0 : index
    %c0_53 = arith.constant 0 : index
    %1828 = vector.load %arg5[%c0_52, %c0_53] : memref<48x32xf32, #tpu.memory_space<vmem>>, vector<48x32xf32>
    %cst_54 = arith.constant dense<0.000000e+00> : vector<32x32xf32>
    %1829 = tpu.matmul %1827, %1828, %cst_54 {dimension_numbers = #tpu.dot_dimension_numbers<[1], [0], [0], [1], [0, 0, 1, 1], [], []>} : vector<32x48xf32>, vector<48x32xf32>, vector<32x32xf32> -> vector<32x32xf32>
    %c4_55 = arith.constant 4 : index
    %c0_56 = arith.constant 0 : index
    %1830 = vector.load %arg7[%c4_55, %c0_56] : memref<8x64xf32, #tpu.memory_space<vmem>>, vector<1x32xf32>
    %1831 = vector.broadcast %1830 : vector<1x32xf32> to vector<32x32xf32>
    %1832 = arith.addf %1829, %1831 : vector<32x32xf32>
    %cst_57 = arith.constant dense<0.000000e+00> : vector<32xf32>
    %1833 = vector.multi_reduction <add>, %1832, %cst_57 [0] : vector<32x32xf32> to vector<32xf32>
    %1834 = vector.shape_cast %1833 : vector<32xf32> to vector<1x32xf32>
    %1835 = arith.mulf %1832, %1832 : vector<32x32xf32>
    %cst_58 = arith.constant dense<0.000000e+00> : vector<32xf32>
    %1836 = vector.multi_reduction <add>, %1835, %cst_58 [0] : vector<32x32xf32> to vector<32xf32>
    %1837 = vector.shape_cast %1836 : vector<32xf32> to vector<1x32xf32>
    %1838 = tpu.concatenate %1834, %1837 in 0 : vector<1x32xf32>, vector<1x32xf32> -> vector<2x32xf32>
    %1839 = vector.extract_strided_slice %1838 {offsets = [0, 0], sizes = [1, 32], strides = [1, 1]} : vector<2x32xf32> to vector<1x32xf32>
    %cst_59 = arith.constant 3.200000e+01 : f32
    %1840 = vector.broadcast %cst_59 : f32 to vector<1x32xf32>
    %1841 = arith.divf %1839, %1840 : vector<1x32xf32>
    %1842 = vector.extract_strided_slice %1838 {offsets = [1, 0], sizes = [1, 32], strides = [1, 1]} : vector<2x32xf32> to vector<1x32xf32>
    %cst_60 = arith.constant 3.200000e+01 : f32
    %1843 = vector.broadcast %cst_60 : f32 to vector<1x32xf32>
    %1844 = arith.divf %1842, %1843 : vector<1x32xf32>
    %1845 = arith.mulf %1841, %1841 : vector<1x32xf32>
    %1846 = arith.subf %1844, %1845 : vector<1x32xf32>
    %c5 = arith.constant 5 : index
    %c0_61 = arith.constant 0 : index
    %1847 = vector.load %arg7[%c5, %c0_61] : memref<8x64xf32, #tpu.memory_space<vmem>>, vector<1x32xf32>
    %cst_62 = arith.constant 9.99999974E-6 : f32
    %1848 = vector.broadcast %cst_62 : f32 to vector<1x32xf32>
    %1849 = arith.addf %1846, %1848 : vector<1x32xf32>
    %1850 = math.rsqrt %1849 : vector<1x32xf32>
    %1851 = arith.mulf %1847, %1850 : vector<1x32xf32>
    %c6 = arith.constant 6 : index
    %c0_63 = arith.constant 0 : index
    %1852 = vector.load %arg7[%c6, %c0_63] : memref<8x64xf32, #tpu.memory_space<vmem>>, vector<1x32xf32>
    %1853 = arith.mulf %1841, %1851 : vector<1x32xf32>
    %1854 = arith.subf %1852, %1853 : vector<1x32xf32>
    %1855 = vector.broadcast %1851 : vector<1x32xf32> to vector<32x32xf32>
    %1856 = arith.mulf %1832, %1855 : vector<32x32xf32>
    %1857 = vector.broadcast %1854 : vector<1x32xf32> to vector<32x32xf32>
    %1858 = arith.addf %1856, %1857 : vector<32x32xf32>
    %cst_64 = arith.constant 0.000000e+00 : f32
    %1859 = vector.broadcast %cst_64 : f32 to vector<32x32xf32>
    %1860 = arith.maximumf %1858, %1859 : vector<32x32xf32>
    %1861 = vector.extract_strided_slice %1860 {offsets = [0, 0], sizes = [16, 32], strides = [1, 1]} : vector<32x32xf32> to vector<16x32xf32>
    %cst_65 = arith.constant dense<0.000000e+00> : vector<32xf32>
    %1862 = vector.multi_reduction <add>, %1861, %cst_65 [0] : vector<16x32xf32> to vector<32xf32>
    %1863 = vector.shape_cast %1862 : vector<32xf32> to vector<1x32xf32>
    %cst_66 = arith.constant 1.600000e+01 : f32
    %1864 = vector.broadcast %cst_66 : f32 to vector<1x32xf32>
    %1865 = arith.divf %1863, %1864 : vector<1x32xf32>
    %1866 = vector.extract_strided_slice %1860 {offsets = [16, 0], sizes = [16, 32], strides = [1, 1]} : vector<32x32xf32> to vector<16x32xf32>
    %cst_67 = arith.constant dense<0.000000e+00> : vector<32xf32>
    %1867 = vector.multi_reduction <add>, %1866, %cst_67 [0] : vector<16x32xf32> to vector<32xf32>
    %1868 = vector.shape_cast %1867 : vector<32xf32> to vector<1x32xf32>
    %cst_68 = arith.constant 1.600000e+01 : f32
    %1869 = vector.broadcast %cst_68 : f32 to vector<1x32xf32>
    %1870 = arith.divf %1868, %1869 : vector<1x32xf32>
    %1871 = tpu.concatenate %1865, %1870 in 0 : vector<1x32xf32>, vector<1x32xf32> -> vector<2x32xf32>
    %c0_69 = arith.constant 0 : index
    %c0_70 = arith.constant 0 : index
    %1872 = vector.load %arg6[%c0_69, %c0_70] : memref<32x8xf32, #tpu.memory_space<vmem>>, vector<32x8xf32>
    %cst_71 = arith.constant dense<0.000000e+00> : vector<2x8xf32>
    %1873 = tpu.matmul %1871, %1872, %cst_71 {dimension_numbers = #tpu.dot_dimension_numbers<[1], [0], [0], [1], [0, 0, 1, 1], [], []>} : vector<2x32xf32>, vector<32x8xf32>, vector<2x8xf32> -> vector<2x8xf32>
    %c7 = arith.constant 7 : index
    %c0_72 = arith.constant 0 : index
    %1874 = vector.load %arg7[%c7, %c0_72] : memref<8x64xf32, #tpu.memory_space<vmem>>, vector<1x8xf32>
    %1875 = vector.broadcast %1874 : vector<1x8xf32> to vector<2x8xf32>
    %1876 = arith.addf %1873, %1875 : vector<2x8xf32>
    %cst_73 = arith.constant dense<0xFF800000> : vector<2xf32>
    %1877 = vector.multi_reduction <maximumf>, %1876, %cst_73 [1] : vector<2x8xf32> to vector<2xf32>
    %1878 = vector.shape_cast %1877 : vector<2xf32> to vector<2x1xf32>
    %1879 = vector.broadcast %1878 : vector<2x1xf32> to vector<2x8xf32>
    %1880 = arith.subf %1876, %1879 : vector<2x8xf32>
    %1881 = math.exp %1880 : vector<2x8xf32>
    %cst_74 = arith.constant dense<0.000000e+00> : vector<2xf32>
    %1882 = vector.multi_reduction <add>, %1881, %cst_74 [1] : vector<2x8xf32> to vector<2xf32>
    %1883 = vector.shape_cast %1882 : vector<2xf32> to vector<2x1xf32>
    %1884 = vector.broadcast %1883 : vector<2x1xf32> to vector<2x8xf32>
    %1885 = arith.divf %1881, %1884 : vector<2x8xf32>
    %c0_75 = arith.constant 0 : index
    %c0_76 = arith.constant 0 : index
    %1886 = vector.load %arg8[%c0_75, %c0_76] : memref<2x8xf32, #tpu.memory_space<vmem>>, vector<2x8xf32>
    tpu.vector_store %arg8[%c0_75, %c0_76], %1885 {strides = array<i32>} : memref<2x8xf32, #tpu.memory_space<vmem>>, vector<2x8xf32>,
    return
  }
}

</mosaic_0001>

<llo_original>
// kernel: tile.17
$region0: #{tile.17}
  %s0 = inlined_call_operand.vmem [shape: f32[3,16,32], index: 0, kind: input, shape index: {}]
  %s1 = inlined_call_operand.vmem [shape: f32[3,512], index: 1, kind: output, shape index: {}]
  $region1: #{tile.17} parent=0
    #allocation0 [shape = 'u8[16384]{0}', space=vmem, size = 0x4000, scoped, tag = 'scoped mem for output reshape']
    %v2 = vld [vmem:[%s0] ss:$4 sm:$0xff]
    %vm3 = vcmask 261120
    %4 = vst.msk [vmem:[#allocation0] ss:$8 sm:$0xf] %vm3, %v2
    %s5 = scalar_lea.vmem [#allocation0], 4294967265
    %6 = vst.msk [vmem:[%s5] ss:$8 sm:$0xf0] %vm3, %v2
    %s7 = scalar_lea.vmem %s0, 32
    %v8 = vld [vmem:[%s7] ss:$4 sm:$0xf]
    %vm9 = vcmask 261120
    %s10 = scalar_lea.vmem [#allocation0], 2
    %11 = vst.msk [vmem:[%s10] ss:$8 sm:$0xf] %vm9, %v8
    %s12 = scalar_lea.vmem %s0, 3
    %s13 = smov 3
    %v14 = vld [vmem:[%s12] ss:$16 sm:%s13]
    %s15 = scalar_lea.vmem %s0, 91
    %s16 = smov 12
    %v17 = vld [vmem:[%s15] ss:$-28 sm:%s16]
    %vm18 = vcmask 1043458
    %v19 = vsel %vm18, %v17, %v14
    %s20 = scalar_lea.vmem %s0, 4294967255
    %s21 = smov 48
    %v22 = vld [vmem:[%s20] ss:$16 sm:%s21]
    %vm23 = vcmask 1045508
    %v24 = vsel %vm23, %v22, %v19
    %s25 = scalar_lea.vmem %s0, 4294967211
    %s26 = smov 192
    %v27 = vld [vmem:[%s25] ss:$16 sm:%s26]
    %vm28 = vcmask 1047558
    %v29 = vsel %vm28, %v27, %v24
    %30 = vrot.lane.b32.xlu0 %v29, 96
    %v31 = vpop.permute.xlu0 %30
    %vm32 = vcmask 1048320
    %33 = vst.msk [vmem:[#allocation0] sm:$0x7] %vm32, %v31
    %s34 = scalar_lea.vmem [#allocation0], 5
    %35 = vst.msk [vmem:[%s34] sm:$0x38] %vm32, %v31
    %s36 = scalar_lea.vmem [#allocation0], 10
    %37 = vst.msk [vmem:[%s36] sm:$0xc0] %vm32, %v31
    %s38 = scalar_lea.vmem %s0, 43
    %s39 = smov 3
    %v40 = vld [vmem:[%s38] ss:$-28 sm:%s39]
    %s41 = scalar_lea.vmem %s0, 4294967295
    %s42 = smov 12
    %v43 = vld [vmem:[%s41] ss:$16 sm:%s42]
    %vm44 = vcmask 1043458
    %v45 = vsel %vm44, %v43, %v40
    %46 = vrot.lane.b32.xlu0 %v45, 96
    %v47 = vpop.permute.xlu0 %46
    %vm48 = vcmask 1048320
    %s49 = scalar_lea.vmem [#allocation0], 18
    %50 = vst.msk [vmem:[%s49] ss:$6 sm:$0x3] %vm48, %v47
    %s51 = scalar_lea.vmem [#allocation0], 23
    %52 = vst.msk [vmem:[%s51] sm:$0xc] %vm48, %v47
    %s53 = scalar_lea.vmem %s0, 2
    %s54 = smov 3
    %v55 = vld [vmem:[%s53] ss:$16 sm:%s54]
    %s56 = scalar_lea.vmem %s0, 90
    %s57 = smov 12
    %v58 = vld [vmem:[%s56] ss:$-28 sm:%s57]
    %vm59 = vcmask 1043458
    %v60 = vsel %vm59, %v58, %v55
    %s61 = scalar_lea.vmem %s0, 4294967254
    %s62 = smov 48
    %v63 = vld [vmem:[%s61] ss:$16 sm:%s62]
    %vm64 = vcmask 1045508
    %v65 = vsel %vm64, %v63, %v60
    %s66 = scalar_lea.vmem %s0, 4294967210
    %s67 = smov 192
    %v68 = vld [vmem:[%s66] ss:$16 sm:%s67]
    %vm69 = vcmask 1047558
    %v70 = vsel %vm69, %v68, %v65
    %71 = vrot.lane.b32.xlu0 %v70, 64
    %v72 = vpop.permute.xlu0 %71
    %vm73 = vcmask 785920
    %74 = vst.msk [vmem:[#allocation0] sm:$0x7] %vm73, %v72
    %s75 = scalar_lea.vmem [#allocation0], 5
    %76 = vst.msk [vmem:[%s75] sm:$0x38] %vm73, %v72
    %s77 = scalar_lea.vmem [#allocation0], 10
    %78 = vst.msk [vmem:[%s77] sm:$0xc0] %vm73, %v72
    %s79 = scalar_lea.vmem %s0, 42
    %s80 = smov 3
    %v81 = vld [vmem:[%s79] ss:$-28 sm:%s80]
    %s82 = scalar_lea.vmem %s0, 4294967294
    %s83 = smov 12
    %v84 = vld [vmem:[%s82] ss:$16 sm:%s83]
    %vm85 = vcmask 1043458
    %v86 = vsel %vm85, %v84, %v81
    %87 = vrot.lane.b32.xlu0 %v86, 64
    %v88 = vpop.permute.xlu0 %87
    %vm89 = vcmask 785920
    %s90 = scalar_lea.vmem [#allocation0], 18
    %91 = vst.msk [vmem:[%s90] ss:$6 sm:$0x3] %vm89, %v88
    %s92 = scalar_lea.vmem [#allocation0], 23
    %93 = vst.msk [vmem:[%s92] sm:$0xc] %vm89, %v88
    %s94 = scalar_lea.vmem %s0, 1
    %s95 = smov 3
    %v96 = vld [vmem:[%s94] ss:$16 sm:%s95]
    %s97 = scalar_lea.vmem %s0, 89
    %s98 = smov 12
    %v99 = vld [vmem:[%s97] ss:$-28 sm:%s98]
    %vm100 = vcmask 1043458
    %v101 = vsel %vm100, %v99, %v96
    %s102 = scalar_lea.vmem %s0, 4294967253
    %s103 = smov 48
    %v104 = vld [vmem:[%s102] ss:$16 sm:%s103]
    %vm105 = vcmask 1045508
    %v106 = vsel %vm105, %v104, %v101
    %s107 = scalar_lea.vmem %s0, 4294967209
    %s108 = smov 192
    %v109 = vld [vmem:[%s107] ss:$16 sm:%s108]
    %vm110 = vcmask 1047558
    %v111 = vsel %vm110, %v109, %v106
    %112 = vrot.lane.b32.xlu0 %v111, 32
    %v113 = vpop.permute.xlu0 %112
    %vm114 = vcmask 523520
    %115 = vst.msk [vmem:[#allocation0] sm:$0x7] %vm114, %v113
    %s116 = scalar_lea.vmem [#allocation0], 5
    %117 = vst.msk [vmem:[%s116] sm:$0x38] %vm114, %v113
    %s118 = scalar_lea.vmem [#allocation0], 10
    %119 = vst.msk [vmem:[%s118] sm:$0xc0] %vm114, %v113
    %s120 = scalar_lea.vmem %s0, 41
    %s121 = smov 3
    %v122 = vld [vmem:[%s120] ss:$-28 sm:%s121]
    %s123 = scalar_lea.vmem %s0, 4294967293
    %s124 = smov 12
    %v125 = vld [vmem:[%s123] ss:$16 sm:%s124]
    %vm126 = vcmask 1043458
    %v127 = vsel %vm126, %v125, %v122
    %128 = vrot.lane.b32.xlu0 %v127, 32
    %v129 = vpop.permute.xlu0 %128
    %vm130 = vcmask 523520
    %s131 = scalar_lea.vmem [#allocation0], 18
    %132 = vst.msk [vmem:[%s131] ss:$6 sm:$0x3] %vm130, %v129
    %s133 = scalar_lea.vmem [#allocation0], 23
    %134 = vst.msk [vmem:[%s133] sm:$0xc] %vm130, %v129
    %s136 = sshllo.u32 0, 4
    %v138 = vld [vmem:[#allocation0] sm:%s136]
    %s139 = sshllo.u32 0, 4
    %140 = vst [vmem:[%s1] sm:%s139] %v138
    %s141 = scalar_lea.vmem [#allocation0], 8
    %v142 = vld [vmem:[%s141] sm:%s136]
    %s143 = sshllo.u32 0, 4
    %s144 = scalar_lea.vmem %s1, 4
    %145 = vst [vmem:[%s144] sm:%s143] %v142
    %s146 = scalar_lea.vmem [#allocation0], 16
    %v147 = vld [vmem:[%s146] sm:%s136]
    %s148 = sshllo.u32 0, 4
    %s149 = smul.addr 4, 2
    %s150 = scalar_lea.vmem %s1, %s149
    %151 = vst [vmem:[%s150] sm:%s148] %v147
    %s152 = scalar_lea.vmem [#allocation0], 24
    %v153 = vld [vmem:[%s152] sm:%s136]
    %s154 = sshllo.u32 0, 4
    %s155 = smul.addr 4, 3
    %s156 = scalar_lea.vmem %s1, %s155
    %157 = vst [vmem:[%s156] sm:%s154] %v153

// kernel: tsem_seq_forward.1
$region0: #{tsem_seq_forward.1}
  #allocation0 [shape = 'u32[]', space=smem, size = 0x4, offset = 0x4, fixed_abs, tag = 'smem constant byte address 0x4 - core index']
  #allocation1 [shape = 'u32[144,128]{1,0:T(1,128)}', space=vmem, size = 0x12000, scoped, tag = 'internal scratch']
  %s0 = inlined_call_operand.vmem [shape: f32[36,512], index: 0, kind: input, shape index: {}]
  %s1 = inlined_call_operand.vmem [shape: f32[4,512], index: 1, kind: input, shape index: {}]
  %s2 = inlined_call_operand.vmem [shape: f32[512,16], index: 2, kind: input, shape index: {}]
  %s3 = inlined_call_operand.vmem [shape: f32[16,64], index: 3, kind: input, shape index: {}]
  %s4 = inlined_call_operand.vmem [shape: f32[16,64], index: 4, kind: input, shape index: {}]
  %s5 = inlined_call_operand.vmem [shape: f32[48,32], index: 5, kind: input, shape index: {}]
  %s6 = inlined_call_operand.vmem [shape: f32[32,8], index: 6, kind: input, shape index: {}]
  %s7 = inlined_call_operand.vmem [shape: f32[8,64], index: 7, kind: input, shape index: {}]
  %s8 = inlined_call_operand.hbm [shape: f32[2,8], index: 8, kind: output, shape index: {}]
  %s9 = sld [smem:[#allocation0]]
  $region42: #{tsem_seq_forward.1} parent=0
    _
  %s11 = ssub.s32 1, %s9
  %s12 = scalar_select 0, %s11, %s9
  $region1: #{tsem_seq_forward.1} parent=0
    #allocation2 [shape = 'u8[1024]{0}', space=vmem, size = 0x400, scoped, tag = 'output window, operand 0, single buffered']
    #allocation3 [shape = 's32[1]{0}', space=sflag, size = 0x4, scoped, tag = 'scoped memory for tsem_seq_forward.1']
    %13 = vsyncpa [#allocation3], 0
    // Predicated region
    $region2: #{tsem_seq_forward.1} parent=1 // pred_check
      _
    $region3: #{tsem_seq_forward.1} parent=1 // pred_check_branch
      %15 = sbr.rel (0) target = $region5
    $region4: #{tsem_seq_forward.1} parent=1 // pred_region
      _
    $region5: #{tsem_seq_forward.1} parent=1 // pred_fallthru
      _
    // Predicated region
    $region6: #{tsem_seq_forward.1} parent=1 // pred_check
      _
    $region7: #{tsem_seq_forward.1} parent=1 // pred_check_branch
      %17 = sbr.rel (0) target = $region9
    $region8: #{tsem_seq_forward.1} parent=1 // pred_region
      _
    $region9: #{tsem_seq_forward.1} parent=1 // pred_fallthru
      _
    // Predicated region
    $region10: #{tsem_seq_forward.1} parent=1 // pred_check
      _
    $region11: #{tsem_seq_forward.1} parent=1 // pred_check_branch
      %19 = sbr.rel (0) target = $region13
    $region12: #{tsem_seq_forward.1} parent=1 // pred_region
      _
    $region13: #{tsem_seq_forward.1} parent=1 // pred_fallthru
      _
    // Predicated region
    $region14: #{tsem_seq_forward.1} parent=1 // pred_check
      _
    $region15: #{tsem_seq_forward.1} parent=1 // pred_check_branch
      %21 = sbr.rel (0) target = $region17
    $region16: #{tsem_seq_forward.1} parent=1 // pred_region
      _
    $region17: #{tsem_seq_forward.1} parent=1 // pred_fallthru
      _
    // Predicated region
    $region18: #{tsem_seq_forward.1} parent=1 // pred_check
      _
    $region19: #{tsem_seq_forward.1} parent=1 // pred_check_branch
      %23 = sbr.rel (0) target = $region21
    $region20: #{tsem_seq_forward.1} parent=1 // pred_region
      _
    $region21: #{tsem_seq_forward.1} parent=1 // pred_fallthru
      _
    // Predicated region
    $region22: #{tsem_seq_forward.1} parent=1 // pred_check
      _
    $region23: #{tsem_seq_forward.1} parent=1 // pred_check_branch
      %25 = sbr.rel (0) target = $region25
    $region24: #{tsem_seq_forward.1} parent=1 // pred_region
      _
    $region25: #{tsem_seq_forward.1} parent=1 // pred_fallthru
      _
    // Predicated region
    $region26: #{tsem_seq_forward.1} parent=1 // pred_check
      _
    $region27: #{tsem_seq_forward.1} parent=1 // pred_check_branch
      %27 = sbr.rel (0) target = $region29
    $region28: #{tsem_seq_forward.1} parent=1 // pred_region
      _
    $region29: #{tsem_seq_forward.1} parent=1 // pred_fallthru
      _
    // Predicated region
    $region30: #{tsem_seq_forward.1} parent=1 // pred_check
      _
    $region31: #{tsem_seq_forward.1} parent=1 // pred_check_branch
      %29 = sbr.rel (0) target = $region33
    $region32: #{tsem_seq_forward.1} parent=1 // pred_region
      _
    $region33: #{tsem_seq_forward.1} parent=1 // pred_fallthru
      _
    %v30 = vld [vmem:[%s0] sm:$0xff]
    %v31 = vld [vmem:[%s0 + $0x8] sm:$0xff]
    %v32 = vld [vmem:[%s0 + $0x10] sm:$0xff]
    %v33 = vld [vmem:[%s0 + $0x18] sm:$0xff]
    %v34 = vld [vmem:[%s0 + $0x20] sm:$0xff]
    %v35 = vld [vmem:[%s0 + $0x28] sm:$0xff]
    %v36 = vld [vmem:[%s0 + $0x30] sm:$0xff]
    %v37 = vld [vmem:[%s0 + $0x38] sm:$0xff]
    %v38 = vld [vmem:[%s0 + $0x40] sm:$0xff]
    %v39 = vld [vmem:[%s0 + $0x48] sm:$0xff]
    %v40 = vld [vmem:[%s0 + $0x50] sm:$0xff]
    %v41 = vld [vmem:[%s0 + $0x58] sm:$0xff]
    %v42 = vld [vmem:[%s0 + $0x60] sm:$0xff]
    %v43 = vld [vmem:[%s0 + $0x68] sm:$0xff]
    %v44 = vld [vmem:[%s0 + $0x70] sm:$0xff]
    %v45 = vld [vmem:[%s0 + $0x78] sm:$0xff]
    %s46 = scalar_lea.vmem %s1, 1
    %v47 = vld [vmem:[%s46] ss:$4 sm:$0xf]
    %v49 = vlaneseq
    %v50 = vshrl.u32 %v49, 7
    %v51 = vsub.s32 0, %v50
    %v52 = vrot.slane %v47, %v51
    %v53 = vlaneseq
    %v54 = vshrl.u32 %v53, 7
    %v55 = vsub.s32 1, %v54
    %v56 = vrot.slane %v47, %v55
    %v57 = vlaneseq
    %v58 = vshrl.u32 %v57, 7
    %v59 = vsub.s32 2, %v58
    %v60 = vrot.slane %v47, %v59
    %v61 = vlaneseq
    %v62 = vshrl.u32 %v61, 7
    %v63 = vsub.s32 3, %v62
    %v64 = vrot.slane %v47, %v63
    %v69 = vmul.f32 %v30, %v52
    %v70 = vmul.f32 %v31, %v56
    %v71 = vmul.f32 %v32, %v60
    %v72 = vmul.f32 %v33, %v64
    %v73 = vmul.f32 %v34, %v52
    %v74 = vmul.f32 %v35, %v56
    %v75 = vmul.f32 %v36, %v60
    %v76 = vmul.f32 %v37, %v64
    %v77 = vmul.f32 %v38, %v52
    %v78 = vmul.f32 %v39, %v56
    %v79 = vmul.f32 %v40, %v60
    %v80 = vmul.f32 %v41, %v64
    %v81 = vmul.f32 %v42, %v52
    %v82 = vmul.f32 %v43, %v56
    %v83 = vmul.f32 %v44, %v60
    %v84 = vmul.f32 %v45, %v64
    %v85 = vld [vmem:[%s1] ss:$4 sm:$0xf]
    %v87 = vlaneseq
    %v88 = vshrl.u32 %v87, 7
    %v89 = vsub.s32 0, %v88
    %v90 = vrot.slane %v85, %v89
    %v91 = vlaneseq
    %v92 = vshrl.u32 %v91, 7
    %v93 = vsub.s32 1, %v92
    %v94 = vrot.slane %v85, %v93
    %v95 = vlaneseq
    %v96 = vshrl.u32 %v95, 7
    %v97 = vsub.s32 2, %v96
    %v98 = vrot.slane %v85, %v97
    %v99 = vlaneseq
    %v100 = vshrl.u32 %v99, 7
    %v101 = vsub.s32 3, %v100
    %v102 = vrot.slane %v85, %v101
    %v107 = vadd.f32 %v69, %v90
    %v108 = vadd.f32 %v70, %v94
    %v109 = vadd.f32 %v71, %v98
    %v110 = vadd.f32 %v72, %v102
    %v111 = vadd.f32 %v73, %v90
    %v112 = vadd.f32 %v74, %v94
    %v113 = vadd.f32 %v75, %v98
    %v114 = vadd.f32 %v76, %v102
    %v115 = vadd.f32 %v77, %v90
    %v116 = vadd.f32 %v78, %v94
    %v117 = vadd.f32 %v79, %v98
    %v118 = vadd.f32 %v80, %v102
    %v119 = vadd.f32 %v81, %v90
    %v120 = vadd.f32 %v82, %v94
    %v121 = vadd.f32 %v83, %v98
    %v122 = vadd.f32 %v84, %v102
    %v123 = vld [vmem:[%s0] sm:$0xfc]
    %v124 = vld [vmem:[%s0 + $0x8] sm:$0xfc]
    %v125 = vld [vmem:[%s0 + $0x10] sm:$0xfc]
    %v126 = vld [vmem:[%s0 + $0x18] sm:$0xfc]
    %v127 = vld [vmem:[%s0 + $0x80] sm:$0x3]
    %v128 = vld [vmem:[%s0 + $0x88] sm:$0x3]
    %v129 = vld [vmem:[%s0 + $0x90] sm:$0x3]
    %v130 = vld [vmem:[%s0 + $0x98] sm:$0x3]
    %s131 = scalar_lea.vmem %s1, 2
    %v132 = vld [vmem:[%s131] ss:$4 sm:$0xf]
    %v134 = vlaneseq
    %v135 = vshrl.u32 %v134, 7
    %v136 = vsub.s32 0, %v135
    %v137 = vrot.slane %v132, %v136
    %v138 = vlaneseq
    %v139 = vshrl.u32 %v138, 7
    %v140 = vsub.s32 1, %v139
    %v141 = vrot.slane %v132, %v140
    %v142 = vlaneseq
    %v143 = vshrl.u32 %v142, 7
    %v144 = vsub.s32 2, %v143
    %v145 = vrot.slane %v132, %v144
    %v146 = vlaneseq
    %v147 = vshrl.u32 %v146, 7
    %v148 = vsub.s32 3, %v147
    %v149 = vrot.slane %v132, %v148
    %v154 = vmul.f32 %v123, %v137
    %v155 = vmul.f32 %v124, %v141
    %v156 = vmul.f32 %v125, %v145
    %v157 = vmul.f32 %v126, %v149
    %v158 = vmul.f32 %v34, %v137
    %v159 = vmul.f32 %v35, %v141
    %v160 = vmul.f32 %v36, %v145
    %v161 = vmul.f32 %v37, %v149
    %v162 = vmul.f32 %v38, %v137
    %v163 = vmul.f32 %v39, %v141
    %v164 = vmul.f32 %v40, %v145
    %v165 = vmul.f32 %v41, %v149
    %v166 = vmul.f32 %v42, %v137
    %v167 = vmul.f32 %v43, %v141
    %v168 = vmul.f32 %v44, %v145
    %v169 = vmul.f32 %v45, %v149
    %v170 = vmul.f32 %v127, %v137
    %v171 = vmul.f32 %v128, %v141
    %v172 = vmul.f32 %v129, %v145
    %v173 = vmul.f32 %v130, %v149
    %vm194 = vcmask 1045504
    %v195 = vrot.slane %v154, 2
    %v196 = vrot.slane %v158, 2
    %v197 = vsel %vm194, %v195, %v196
    %v198 = vrot.slane %v155, 2
    %v199 = vrot.slane %v159, 2
    %v200 = vsel %vm194, %v198, %v199
    %v201 = vrot.slane %v156, 2
    %v202 = vrot.slane %v160, 2
    %v203 = vsel %vm194, %v201, %v202
    %v204 = vrot.slane %v157, 2
    %v205 = vrot.slane %v161, 2
    %v206 = vsel %vm194, %v204, %v205
    %v207 = vrot.slane %v162, 2
    %v208 = vsel %vm194, %v196, %v207
    %v209 = vrot.slane %v163, 2
    %v210 = vsel %vm194, %v199, %v209
    %v211 = vrot.slane %v164, 2
    %v212 = vsel %vm194, %v202, %v211
    %v213 = vrot.slane %v165, 2
    %v214 = vsel %vm194, %v205, %v213
    %v215 = vrot.slane %v166, 2
    %v216 = vsel %vm194, %v207, %v215
    %v217 = vrot.slane %v167, 2
    %v218 = vsel %vm194, %v209, %v217
    %v219 = vrot.slane %v168, 2
    %v220 = vsel %vm194, %v211, %v219
    %v221 = vrot.slane %v169, 2
    %v222 = vsel %vm194, %v213, %v221
    %v223 = vrot.slane %v170, 2
    %v224 = vsel %vm194, %v215, %v223
    %v225 = vrot.slane %v171, 2
    %v226 = vsel %vm194, %v217, %v225
    %v227 = vrot.slane %v172, 2
    %v228 = vsel %vm194, %v219, %v227
    %v229 = vrot.slane %v173, 2
    %v230 = vsel %vm194, %v221, %v229
    %v247 = vadd.f32 %v107, %v197
    %v248 = vadd.f32 %v108, %v200
    %v249 = vadd.f32 %v109, %v203
    %v250 = vadd.f32 %v110, %v206
    %v251 = vadd.f32 %v111, %v208
    %v252 = vadd.f32 %v112, %v210
    %v253 = vadd.f32 %v113, %v212
    %v254 = vadd.f32 %v114, %v214
    %v255 = vadd.f32 %v115, %v216
    %v256 = vadd.f32 %v116, %v218
    %v257 = vadd.f32 %v117, %v220
    %v258 = vadd.f32 %v118, %v222
    %v259 = vadd.f32 %v119, %v224
    %v260 = vadd.f32 %v120, %v226
    %v261 = vadd.f32 %v121, %v228
    %v262 = vadd.f32 %v122, %v230
    %v263 = vld [vmem:[%s0] sm:$0xf0]
    %v264 = vld [vmem:[%s0 + $0x8] sm:$0xf0]
    %v265 = vld [vmem:[%s0 + $0x10] sm:$0xf0]
    %v266 = vld [vmem:[%s0 + $0x18] sm:$0xf0]
    %v267 = vld [vmem:[%s0 + $0x80] sm:$0xf]
    %v268 = vld [vmem:[%s0 + $0x88] sm:$0xf]
    %v269 = vld [vmem:[%s0 + $0x90] sm:$0xf]
    %v270 = vld [vmem:[%s0 + $0x98] sm:$0xf]
    %s271 = scalar_lea.vmem %s1, 3
    %v272 = vld [vmem:[%s271] ss:$4 sm:$0xf]
    %v274 = vlaneseq
    %v275 = vshrl.u32 %v274, 7
    %v276 = vsub.s32 0, %v275
    %v277 = vrot.slane %v272, %v276
    %v278 = vlaneseq
    %v279 = vshrl.u32 %v278, 7
    %v280 = vsub.s32 1, %v279
    %v281 = vrot.slane %v272, %v280
    %v282 = vlaneseq
    %v283 = vshrl.u32 %v282, 7
    %v284 = vsub.s32 2, %v283
    %v285 = vrot.slane %v272, %v284
    %v286 = vlaneseq
    %v287 = vshrl.u32 %v286, 7
    %v288 = vsub.s32 3, %v287
    %v289 = vrot.slane %v272, %v288
    %v294 = vmul.f32 %v263, %v277
    %v295 = vmul.f32 %v264, %v281
    %v296 = vmul.f32 %v265, %v285
    %v297 = vmul.f32 %v266, %v289
    %v298 = vmul.f32 %v34, %v277
    %v299 = vmul.f32 %v35, %v281
    %v300 = vmul.f32 %v36, %v285
    %v301 = vmul.f32 %v37, %v289
    %v302 = vmul.f32 %v38, %v277
    %v303 = vmul.f32 %v39, %v281
    %v304 = vmul.f32 %v40, %v285
    %v305 = vmul.f32 %v41, %v289
    %v306 = vmul.f32 %v42, %v277
    %v307 = vmul.f32 %v43, %v281
    %v308 = vmul.f32 %v44, %v285
    %v309 = vmul.f32 %v45, %v289
    %v310 = vmul.f32 %v267, %v277
    %v311 = vmul.f32 %v268, %v281
    %v312 = vmul.f32 %v269, %v285
    %v313 = vmul.f32 %v270, %v289
    %vm334 = vcmask 1043456
    %v335 = vrot.slane %v294, 4
    %v336 = vrot.slane %v298, 4
    %v337 = vsel %vm334, %v335, %v336
    %v338 = vrot.slane %v295, 4
    %v339 = vrot.slane %v299, 4
    %v340 = vsel %vm334, %v338, %v339
    %v341 = vrot.slane %v296, 4
    %v342 = vrot.slane %v300, 4
    %v343 = vsel %vm334, %v341, %v342
    %v344 = vrot.slane %v297, 4
    %v345 = vrot.slane %v301, 4
    %v346 = vsel %vm334, %v344, %v345
    %v347 = vrot.slane %v302, 4
    %v348 = vsel %vm334, %v336, %v347
    %v349 = vrot.slane %v303, 4
    %v350 = vsel %vm334, %v339, %v349
    %v351 = vrot.slane %v304, 4
    %v352 = vsel %vm334, %v342, %v351
    %v353 = vrot.slane %v305, 4
    %v354 = vsel %vm334, %v345, %v353
    %v355 = vrot.slane %v306, 4
    %v356 = vsel %vm334, %v347, %v355
    %v357 = vrot.slane %v307, 4
    %v358 = vsel %vm334, %v349, %v357
    %v359 = vrot.slane %v308, 4
    %v360 = vsel %vm334, %v351, %v359
    %v361 = vrot.slane %v309, 4
    %v362 = vsel %vm334, %v353, %v361
    %v363 = vrot.slane %v310, 4
    %v364 = vsel %vm334, %v355, %v363
    %v365 = vrot.slane %v311, 4
    %v366 = vsel %vm334, %v357, %v365
    %v367 = vrot.slane %v312, 4
    %v368 = vsel %vm334, %v359, %v367
    %v369 = vrot.slane %v313, 4
    %v370 = vsel %vm334, %v361, %v369
    %v387 = vadd.f32 %v247, %v337
    %v388 = vadd.f32 %v248, %v340
    %v389 = vadd.f32 %v249, %v343
    %v390 = vadd.f32 %v250, %v346
    %v391 = vadd.f32 %v251, %v348
    %v392 = vadd.f32 %v252, %v350
    %v393 = vadd.f32 %v253, %v352
    %v394 = vadd.f32 %v254, %v354
    %v395 = vadd.f32 %v255, %v356
    %v396 = vadd.f32 %v256, %v358
    %v397 = vadd.f32 %v257, %v360
    %v398 = vadd.f32 %v258, %v362
    %v399 = vadd.f32 %v259, %v364
    %v400 = vadd.f32 %v260, %v366
    %v401 = vadd.f32 %v261, %v368
    %v402 = vadd.f32 %v262, %v370
    %v403 = vadd.f32 %v387, %v391
    %v404 = vadd.f32 %v403, %v395
    %v405 = vadd.f32 %v404, %v399
    %v406 = vrot.slane %v405, 4
    %v407 = vadd.f32 %v405, %v406
    %v408 = vrot.slane %v407, 2
    %v409 = vadd.f32 %v407, %v408
    %v410 = vrot.slane %v409, 1
    %v411 = vadd.f32 %v409, %v410
    %v412 = vadd.f32 %v388, %v392
    %v413 = vadd.f32 %v412, %v396
    %v414 = vadd.f32 %v413, %v400
    %v415 = vrot.slane %v414, 4
    %v416 = vadd.f32 %v414, %v415
    %v417 = vrot.slane %v416, 2
    %v418 = vadd.f32 %v416, %v417
    %v419 = vrot.slane %v418, 1
    %v420 = vadd.f32 %v418, %v419
    %v421 = vadd.f32 %v389, %v393
    %v422 = vadd.f32 %v421, %v397
    %v423 = vadd.f32 %v422, %v401
    %v424 = vrot.slane %v423, 4
    %v425 = vadd.f32 %v423, %v424
    %v426 = vrot.slane %v425, 2
    %v427 = vadd.f32 %v425, %v426
    %v428 = vrot.slane %v427, 1
    %v429 = vadd.f32 %v427, %v428
    %v430 = vadd.f32 %v390, %v394
    %v431 = vadd.f32 %v430, %v398
    %v432 = vadd.f32 %v431, %v402
    %v433 = vrot.slane %v432, 4
    %v434 = vadd.f32 %v432, %v433
    %v435 = vrot.slane %v434, 2
    %v436 = vadd.f32 %v434, %v435
    %v437 = vrot.slane %v436, 1
    %v438 = vadd.f32 %v436, %v437
    %v439 = vmul.f32 %v387, %v387
    %v440 = vmul.f32 %v388, %v388
    %v441 = vmul.f32 %v389, %v389
    %v442 = vmul.f32 %v390, %v390
    %v443 = vmul.f32 %v391, %v391
    %v444 = vmul.f32 %v392, %v392
    %v445 = vmul.f32 %v393, %v393
    %v446 = vmul.f32 %v394, %v394
    %v447 = vmul.f32 %v395, %v395
    %v448 = vmul.f32 %v396, %v396
    %v449 = vmul.f32 %v397, %v397
    %v450 = vmul.f32 %v398, %v398
    %v451 = vmul.f32 %v399, %v399
    %v452 = vmul.f32 %v400, %v400
    %v453 = vmul.f32 %v401, %v401
    %v454 = vmul.f32 %v402, %v402
    %v455 = vadd.f32 %v439, %v443
    %v456 = vadd.f32 %v455, %v447
    %v457 = vadd.f32 %v456, %v451
    %v458 = vrot.slane %v457, 4
    %v459 = vadd.f32 %v457, %v458
    %v460 = vrot.slane %v459, 2
    %v461 = vadd.f32 %v459, %v460
    %v462 = vrot.slane %v461, 1
    %v463 = vadd.f32 %v461, %v462
    %v464 = vadd.f32 %v440, %v444
    %v465 = vadd.f32 %v464, %v448
    %v466 = vadd.f32 %v465, %v452
    %v467 = vrot.slane %v466, 4
    %v468 = vadd.f32 %v466, %v467
    %v469 = vrot.slane %v468, 2
    %v470 = vadd.f32 %v468, %v469
    %v471 = vrot.slane %v470, 1
    %v472 = vadd.f32 %v470, %v471
    %v473 = vadd.f32 %v441, %v445
    %v474 = vadd.f32 %v473, %v449
    %v475 = vadd.f32 %v474, %v453
    %v476 = vrot.slane %v475, 4
    %v477 = vadd.f32 %v475, %v476
    %v478 = vrot.slane %v477, 2
    %v479 = vadd.f32 %v477, %v478
    %v480 = vrot.slane %v479, 1
    %v481 = vadd.f32 %v479, %v480
    %v482 = vadd.f32 %v442, %v446
    %v483 = vadd.f32 %v482, %v450
    %v484 = vadd.f32 %v483, %v454
    %v485 = vrot.slane %v484, 4
    %v486 = vadd.f32 %v484, %v485
    %v487 = vrot.slane %v486, 2
    %v488 = vadd.f32 %v486, %v487
    %v489 = vrot.slane %v488, 1
    %v490 = vadd.f32 %v488, %v489
    %vm491 = vcmask 1040384
    %v492 = vsel %vm491, %v411, %v463
    %v493 = vsel %vm491, %v420, %v472
    %v494 = vsel %vm491, %v429, %v481
    %v495 = vsel %vm491, %v438, %v490
    %497 = vrot.lane.b32.xlu0 %v492, 96
    %v498 = vpop.permute.xlu0 %497
    %v500 = vadd.f32 %v492, %v498
    %502 = vrot.lane.b32.xlu0 %v493, 96
    %v503 = vpop.permute.xlu0 %502
    %v505 = vadd.f32 %v493, %v503
    %507 = vrot.lane.b32.xlu0 %v494, 96
    %v508 = vpop.permute.xlu0 %507
    %v510 = vadd.f32 %v494, %v508
    %512 = vrot.lane.b32.xlu0 %v495, 96
    %v513 = vpop.permute.xlu0 %512
    %v515 = vadd.f32 %v495, %v513
    %517 = vrot.lane.b32.xlu0 %v500, 64
    %v518 = vpop.permute.xlu0 %517
    %v520 = vadd.f32 %v500, %v518
    %522 = vrot.lane.b32.xlu0 %v505, 64
    %v523 = vpop.permute.xlu0 %522
    %v525 = vadd.f32 %v505, %v523
    %527 = vrot.lane.b32.xlu0 %v510, 64
    %v528 = vpop.permute.xlu0 %527
    %v530 = vadd.f32 %v510, %v528
    %532 = vrot.lane.b32.xlu0 %v515, 64
    %v533 = vpop.permute.xlu0 %532
    %v535 = vadd.f32 %v515, %v533
    %v536 = vadd.f32 %v520, %v525
    %v537 = vadd.f32 %v530, %v535
    %v538 = vadd.f32 %v536, %v537
    %v539 = vrcp.pop 512.0
    %v540 = vmul.f32 %v538, %v539
    %v541 = vmul.f32 %v540, %v540
    %v543 = vrot.slane %v541, 7
    %v545 = vsub.f32 %v540, %v543
    %v546 = vld [vmem:[%s7] sm:$0x1]
    %v547 = vadd.f32 %v545, 1e-05
    %v548 = vrsqrt.pop %v547
    %v550 = vrot.slane %v548, 1
    %v552 = vmul.f32 %v546, %v550
    %v553 = vld [vmem:[%s7 + $0x1] sm:$0x1]
    %v554 = vmul.f32 %v540, %v552
    %v555 = vsub.f32 %v553, %v554
    %v557 = vrot.slane %v555, 7
    %v559 = vsel %vm491, %v552, %v557
    %561 = vrot.lane.b32.xlu0 %v559, 32
    %v562 = vpop.permute.xlu0 %561
    %564 = vrot.lane.b32.xlu0 %v559, 64
    %v565 = vpop.permute.xlu0 %564
    %567 = vrot.lane.b32.xlu0 %v559, 96
    %v568 = vpop.permute.xlu0 %567
    %vm570 = vcmask 261120
    %v571 = vsel %vm570, %v559, %v562
    %vm572 = vcmask 523264
    %v573 = vsel %vm572, %v571, %v565
    %vm574 = vcmask 785408
    %v575 = vsel %vm574, %v573, %v568
    %v576 = vlaneseq
    %v577 = vshrl.u32 %v576, 7
    %v578 = vsub.s32 0, %v577
    %v579 = vrot.slane %v575, %v578
    %v580 = vmul.f32 %v387, %v579
    %v581 = vmul.f32 %v388, %v579
    %v582 = vmul.f32 %v389, %v579
    %v583 = vmul.f32 %v390, %v579
    %v584 = vmul.f32 %v391, %v579
    %v585 = vmul.f32 %v392, %v579
    %v586 = vmul.f32 %v393, %v579
    %v587 = vmul.f32 %v394, %v579
    %v588 = vmul.f32 %v395, %v579
    %v589 = vmul.f32 %v396, %v579
    %v590 = vmul.f32 %v397, %v579
    %v591 = vmul.f32 %v398, %v579
    %v592 = vmul.f32 %v399, %v579
    %v593 = vmul.f32 %v400, %v579
    %v594 = vmul.f32 %v401, %v579
    %v595 = vmul.f32 %v402, %v579
    %v596 = vlaneseq
    %v597 = vshrl.u32 %v596, 7
    %v598 = vsub.s32 1, %v597
    %v599 = vrot.slane %v575, %v598
    %v600 = vadd.f32 %v580, %v599
    %v601 = vadd.f32 %v581, %v599
    %v602 = vadd.f32 %v582, %v599
    %v603 = vadd.f32 %v583, %v599
    %v604 = vadd.f32 %v584, %v599
    %v605 = vadd.f32 %v585, %v599
    %v606 = vadd.f32 %v586, %v599
    %v607 = vadd.f32 %v587, %v599
    %v608 = vadd.f32 %v588, %v599
    %v609 = vadd.f32 %v589, %v599
    %v610 = vadd.f32 %v590, %v599
    %v611 = vadd.f32 %v591, %v599
    %v612 = vadd.f32 %v592, %v599
    %v613 = vadd.f32 %v593, %v599
    %v614 = vadd.f32 %v594, %v599
    %v615 = vadd.f32 %v595, %v599
    %v616 = vmax.f32 %v600, 0.0
    %v617 = vmax.f32 %v601, 0.0
    %v618 = vmax.f32 %v602, 0.0
    %v619 = vmax.f32 %v603, 0.0
    %v620 = vmax.f32 %v604, 0.0
    %v621 = vmax.f32 %v605, 0.0
    %v622 = vmax.f32 %v606, 0.0
    %v623 = vmax.f32 %v607, 0.0
    %v624 = vmax.f32 %v608, 0.0
    %v625 = vmax.f32 %v609, 0.0
    %v626 = vmax.f32 %v610, 0.0
    %v627 = vmax.f32 %v611, 0.0
    %v628 = vmax.f32 %v612, 0.0
    %v629 = vmax.f32 %v613, 0.0
    %v630 = vmax.f32 %v614, 0.0
    %v631 = vmax.f32 %v615, 0.0
    %v632 = vld [vmem:[%s2] sm:$0xff]
    %v633 = vld [vmem:[%s2 + $0x8] sm:$0xff]
    %v634 = vld [vmem:[%s2 + $0x10] sm:$0xff]
    %v635 = vld [vmem:[%s2 + $0x18] sm:$0xff]
    %v636 = vld [vmem:[%s2 + $0x20] sm:$0xff]
    %v637 = vld [vmem:[%s2 + $0x28] sm:$0xff]
    %v638 = vld [vmem:[%s2 + $0x30] sm:$0xff]
    %v639 = vld [vmem:[%s2 + $0x38] sm:$0xff]
    %v640 = vld [vmem:[%s2 + $0x40] sm:$0xff]
    %v641 = vld [vmem:[%s2 + $0x48] sm:$0xff]
    %v642 = vld [vmem:[%s2 + $0x50] sm:$0xff]
    %v643 = vld [vmem:[%s2 + $0x58] sm:$0xff]
    %v644 = vld [vmem:[%s2 + $0x60] sm:$0xff]
    %v645 = vld [vmem:[%s2 + $0x68] sm:$0xff]
    %v646 = vld [vmem:[%s2 + $0x70] sm:$0xff]
    %v647 = vld [vmem:[%s2 + $0x78] sm:$0xff]
    %v648 = vld [vmem:[%s2 + $0x80] sm:$0xff]
    %v649 = vld [vmem:[%s2 + $0x88] sm:$0xff]
    %v650 = vld [vmem:[%s2 + $0x90] sm:$0xff]
    %v651 = vld [vmem:[%s2 + $0x98] sm:$0xff]
    %v652 = vld [vmem:[%s2 + $0xa0] sm:$0xff]
    %v653 = vld [vmem:[%s2 + $0xa8] sm:$0xff]
    %v654 = vld [vmem:[%s2 + $0xb0] sm:$0xff]
    %v655 = vld [vmem:[%s2 + $0xb8] sm:$0xff]
    %v656 = vld [vmem:[%s2 + $0xc0] sm:$0xff]
    %v657 = vld [vmem:[%s2 + $0xc8] sm:$0xff]
    %v658 = vld [vmem:[%s2 + $0xd0] sm:$0xff]
    %v659 = vld [vmem:[%s2 + $0xd8] sm:$0xff]
    %v660 = vld [vmem:[%s2 + $0xe0] sm:$0xff]
    %v661 = vld [vmem:[%s2 + $0xe8] sm:$0xff]
    %v662 = vld [vmem:[%s2 + $0xf0] sm:$0xff]
    %v663 = vld [vmem:[%s2 + $0xf8] sm:$0xff]
    %v664 = vld [vmem:[%s2 + $0x100] sm:$0xff]
    %v665 = vld [vmem:[%s2 + $0x108] sm:$0xff]
    %v666 = vld [vmem:[%s2 + $0x110] sm:$0xff]
    %v667 = vld [vmem:[%s2 + $0x118] sm:$0xff]
    %v668 = vld [vmem:[%s2 + $0x120] sm:$0xff]
    %v669 = vld [vmem:[%s2 + $0x128] sm:$0xff]
    %v670 = vld [vmem:[%s2 + $0x130] sm:$0xff]
    %v671 = vld [vmem:[%s2 + $0x138] sm:$0xff]
    %v672 = vld [vmem:[%s2 + $0x140] sm:$0xff]
    %v673 = vld [vmem:[%s2 + $0x148] sm:$0xff]
    %v674 = vld [vmem:[%s2 + $0x150] sm:$0xff]
    %v675 = vld [vmem:[%s2 + $0x158] sm:$0xff]
    %v676 = vld [vmem:[%s2 + $0x160] sm:$0xff]
    %v677 = vld [vmem:[%s2 + $0x168] sm:$0xff]
    %v678 = vld [vmem:[%s2 + $0x170] sm:$0xff]
    %v679 = vld [vmem:[%s2 + $0x178] sm:$0xff]
    %v680 = vld [vmem:[%s2 + $0x180] sm:$0xff]
    %v681 = vld [vmem:[%s2 + $0x188] sm:$0xff]
    %v682 = vld [vmem:[%s2 + $0x190] sm:$0xff]
    %v683 = vld [vmem:[%s2 + $0x198] sm:$0xff]
    %v684 = vld [vmem:[%s2 + $0x1a0] sm:$0xff]
    %v685 = vld [vmem:[%s2 + $0x1a8] sm:$0xff]
    %v686 = vld [vmem:[%s2 + $0x1b0] sm:$0xff]
    %v687 = vld [vmem:[%s2 + $0x1b8] sm:$0xff]
    %v688 = vld [vmem:[%s2 + $0x1c0] sm:$0xff]
    %v689 = vld [vmem:[%s2 + $0x1c8] sm:$0xff]
    %v690 = vld [vmem:[%s2 + $0x1d0] sm:$0xff]
    %v691 = vld [vmem:[%s2 + $0x1d8] sm:$0xff]
    %v692 = vld [vmem:[%s2 + $0x1e0] sm:$0xff]
    %v693 = vld [vmem:[%s2 + $0x1e8] sm:$0xff]
    %v694 = vld [vmem:[%s2 + $0x1f0] sm:$0xff]
    %v695 = vld [vmem:[%s2 + $0x1f8] sm:$0xff]
    %v696 = vld [vmem:[%s7 + $0x2] sm:$0x1]
    %v697 = vlaneseq
    %v698 = vshrl.u32 %v697, 7
    %v699 = vsub.s32 0, %v698
    %v700 = vrot.slane %v696, %v699
    %701 = vmatprep.subr.mxu0 0.0
    %702 = vmatpush1.msra.mxu0 %v632
    %703 = vmatprep.subr.mxu0 0.0
    %704 = vmatpush1.msra.mxu0 %v633
    %705 = vmatprep.subr.mxu0 0.0
    %706 = vmatpush1.msra.mxu0 %v634
    %707 = vmatprep.subr.mxu0 0.0
    %708 = vmatpush1.msra.mxu0 %v635
    %709 = vmatprep.subr.mxu0 0.0
    %710 = vmatpush1.msra.mxu0 %v636
    %711 = vmatprep.subr.mxu0 0.0
    %712 = vmatpush1.msra.mxu0 %v637
    %713 = vmatprep.subr.mxu0 0.0
    %714 = vmatpush1.msra.mxu0 %v638
    %715 = vmatprep.subr.mxu0 0.0
    %716 = vmatpush1.msra.mxu0 %v639
    %717 = vmatprep.subr.mxu0 0.0
    %718 = vmatpush1.msra.mxu0 %v640
    %719 = vmatprep.subr.mxu0 0.0
    %720 = vmatpush1.msra.mxu0 %v641
    %721 = vmatprep.subr.mxu0 0.0
    %722 = vmatpush1.msra.mxu0 %v642
    %723 = vmatprep.subr.mxu0 0.0
    %724 = vmatpush1.msra.mxu0 %v643
    %725 = vmatprep.subr.mxu0 0.0
    %726 = vmatpush1.msra.mxu0 %v644
    %727 = vmatprep.subr.mxu0 0.0
    %728 = vmatpush1.msra.mxu0 %v645
    %729 = vmatprep.subr.mxu0 0.0
    %730 = vmatpush1.msra.mxu0 %v646
    %731 = vmatprep.subr.mxu0 0.0
    %732 = vmatpush1.msra.mxu0 %v647
    %733 = vmatprep.subr.mxu0 0.0
    %734 = vmatpush1.msra.mxu0 %v648
    %735 = vmatprep.subr.mxu0 0.0
    %736 = vmatpush1.msra.mxu0 %v649
    %737 = vmatprep.subr.mxu0 0.0
    %738 = vmatpush1.msra.mxu0 %v650
    %739 = vmatprep.subr.mxu0 0.0
    %740 = vmatpush1.msra.mxu0 %v651
    %741 = vmatprep.subr.mxu0 0.0
    %742 = vmatpush1.msra.mxu0 %v652
    %743 = vmatprep.subr.mxu0 0.0
    %744 = vmatpush1.msra.mxu0 %v653
    %745 = vmatprep.subr.mxu0 0.0
    %746 = vmatpush1.msra.mxu0 %v654
    %747 = vmatprep.subr.mxu0 0.0
    %748 = vmatpush1.msra.mxu0 %v655
    %749 = vmatprep.subr.mxu0 0.0
    %750 = vmatpush1.msra.mxu0 %v656
    %751 = vmatprep.subr.mxu0 0.0
    %752 = vmatpush1.msra.mxu0 %v657
    %753 = vmatprep.subr.mxu0 0.0
    %754 = vmatpush1.msra.mxu0 %v658
    %755 = vmatprep.subr.mxu0 0.0
    %756 = vmatpush1.msra.mxu0 %v659
    %757 = vmatprep.subr.mxu0 0.0
    %758 = vmatpush1.msra.mxu0 %v660
    %759 = vmatprep.subr.mxu0 0.0
    %760 = vmatpush1.msra.mxu0 %v661
    %761 = vmatprep.subr.mxu0 0.0
    %762 = vmatpush1.msra.mxu0 %v662
    %763 = vmatprep.subr.mxu0 0.0
    %764 = vmatpush1.msra.mxu0 %v663
    %765 = vmatprep.mubr.f32.mxu0 %v617
    %766 = vmatmul.mubr.f32.gmra.mrb[0].mxu0 %v616
    %v767 = vpop.f32.mrb[0].mxu0
    %v768 = vadd.f32 %v700, %v767
    %v769 = vpop.f32.mrb[0].mxu0
    %770 = vmatprep.mubr.f32.mxu0 %v621
    %771 = vmatmul.mubr.f32.gmra.mrb[0].mxu0 %v620
    %v772 = vpop.f32.mrb[0].mxu0
    %v773 = vadd.f32 %v700, %v772
    %v774 = vpop.f32.mrb[0].mxu0
    %775 = vmatprep.mubr.f32.mxu0 %v625
    %776 = vmatmul.mubr.f32.gmra.mrb[0].mxu0 %v624
    %v777 = vpop.f32.mrb[0].mxu0
    %v778 = vadd.f32 %v700, %v777
    %v779 = vpop.f32.mrb[0].mxu0
    %780 = vmatprep.mubr.f32.mxu0 %v629
    %781 = vmatmul.mubr.f32.gmra.mrb[0].mxu0 %v628
    %v782 = vpop.f32.mrb[0].mxu0
    %v783 = vadd.f32 %v700, %v782
    %v784 = vpop.f32.mrb[0].mxu0
    %785 = vdwg.mxu0
    %786 = vmatprep.subr.mxu0 0.0
    %787 = vmatpush1.msra.mxu0 %v664
    %788 = vmatprep.subr.mxu0 0.0
    %789 = vmatpush1.msra.mxu0 %v665
    %790 = vmatprep.subr.mxu0 0.0
    %791 = vmatpush1.msra.mxu0 %v666
    %792 = vmatprep.subr.mxu0 0.0
    %793 = vmatpush1.msra.mxu0 %v667
    %794 = vmatprep.subr.mxu0 0.0
    %795 = vmatpush1.msra.mxu0 %v668
    %796 = vmatprep.subr.mxu0 0.0
    %797 = vmatpush1.msra.mxu0 %v669
    %798 = vmatprep.subr.mxu0 0.0
    %799 = vmatpush1.msra.mxu0 %v670
    %800 = vmatprep.subr.mxu0 0.0
    %801 = vmatpush1.msra.mxu0 %v671
    %802 = vmatprep.subr.mxu0 0.0
    %803 = vmatpush1.msra.mxu0 %v672
    %804 = vmatprep.subr.mxu0 0.0
    %805 = vmatpush1.msra.mxu0 %v673
    %806 = vmatprep.subr.mxu0 0.0
    %807 = vmatpush1.msra.mxu0 %v674
    %808 = vmatprep.subr.mxu0 0.0
    %809 = vmatpush1.msra.mxu0 %v675
    %810 = vmatprep.subr.mxu0 0.0
    %811 = vmatpush1.msra.mxu0 %v676
    %812 = vmatprep.subr.mxu0 0.0
    %813 = vmatpush1.msra.mxu0 %v677
    %814 = vmatprep.subr.mxu0 0.0
    %815 = vmatpush1.msra.mxu0 %v678
    %816 = vmatprep.subr.mxu0 0.0
    %817 = vmatpush1.msra.mxu0 %v679
    %818 = vmatprep.subr.mxu0 0.0
    %819 = vmatpush1.msra.mxu0 %v680
    %820 = vmatprep.subr.mxu0 0.0
    %821 = vmatpush1.msra.mxu0 %v681
    %822 = vmatprep.subr.mxu0 0.0
    %823 = vmatpush1.msra.mxu0 %v682
    %824 = vmatprep.subr.mxu0 0.0
    %825 = vmatpush1.msra.mxu0 %v683
    %826 = vmatprep.subr.mxu0 0.0
    %827 = vmatpush1.msra.mxu0 %v684
    %828 = vmatprep.subr.mxu0 0.0
    %829 = vmatpush1.msra.mxu0 %v685
    %830 = vmatprep.subr.mxu0 0.0
    %831 = vmatpush1.msra.mxu0 %v686
    %832 = vmatprep.subr.mxu0 0.0
    %833 = vmatpush1.msra.mxu0 %v687
    %834 = vmatprep.subr.mxu0 0.0
    %835 = vmatpush1.msra.mxu0 %v688
    %836 = vmatprep.subr.mxu0 0.0
    %837 = vmatpush1.msra.mxu0 %v689
    %838 = vmatprep.subr.mxu0 0.0
    %839 = vmatpush1.msra.mxu0 %v690
    %840 = vmatprep.subr.mxu0 0.0
    %841 = vmatpush1.msra.mxu0 %v691
    %842 = vmatprep.subr.mxu0 0.0
    %843 = vmatpush1.msra.mxu0 %v692
    %844 = vmatprep.subr.mxu0 0.0
    %845 = vmatpush1.msra.mxu0 %v693
    %846 = vmatprep.subr.mxu0 0.0
    %847 = vmatpush1.msra.mxu0 %v694
    %848 = vmatprep.subr.mxu0 0.0
    %849 = vmatpush1.msra.mxu0 %v695
    %850 = vmatprep.mubr.f32.mxu0 %v619
    %851 = vmatmul.mubr.f32.gmra.mrb[0].mxu0 %v618
    %v852 = vpop.f32.mrb[0].mxu0
    %v853 = vadd.f32 %v768, %v852
    %v854 = vpop.f32.mrb[0].mxu0
    %855 = vmatprep.mubr.f32.mxu0 %v623
    %856 = vmatmul.mubr.f32.gmra.mrb[0].mxu0 %v622
    %v857 = vpop.f32.mrb[0].mxu0
    %v858 = vadd.f32 %v773, %v857
    %v859 = vpop.f32.mrb[0].mxu0
    %860 = vmatprep.mubr.f32.mxu0 %v627
    %861 = vmatmul.mubr.f32.gmra.mrb[0].mxu0 %v626
    %v862 = vpop.f32.mrb[0].mxu0
    %v863 = vadd.f32 %v778, %v862
    %v864 = vpop.f32.mrb[0].mxu0
    %865 = vmatprep.mubr.f32.mxu0 %v631
    %866 = vmatmul.mubr.f32.gmra.mrb[0].mxu0 %v630
    %v867 = vpop.f32.mrb[0].mxu0
    %v868 = vadd.f32 %v783, %v867
    %v869 = vpop.f32.mrb[0].mxu0
    %870 = vdwg.mxu0
    %v871 = vmax.f32 %v853, 0.0
    %v872 = vmax.f32 %v858, 0.0
    %v873 = vmax.f32 %v863, 0.0
    %v874 = vmax.f32 %v868, 0.0
    %v875 = vld [vmem:[%s3] sm:$0xff]
    %v876 = vld [vmem:[%s3 + $0x8] sm:$0xff]
    %v877 = vld [vmem:[%s7 + $0x3] sm:$0x1]
    %v878 = vlaneseq
    %v879 = vshrl.u32 %v878, 7
    %v880 = vsub.s32 0, %v879
    %v881 = vrot.slane %v877, %v880
    %vm882 = vcmask 130048
    %v884 = vsel %vm882, %v871, 0
    %v887 = vsel %vm882, %v872, 0
    %v890 = vsel %vm882, %v873, 0
    %v893 = vsel %vm882, %v874, 0
    %895 = vmatprep.subr.mxu0 0.0
    %896 = vmatpush1.msra.mxu0 %v875
    %897 = vmatprep.subr.mxu0 0.0
    %898 = vmatpush1.msra.mxu0 %v876
    %899 = vmatprep.subr.mxu0 0.0
    %900 = vmatpush1.msra.mxu0 0.0
    %901 = vmatprep.subr.mxu0 0.0
    %902 = vmatpush1.msra.mxu0 0.0
    %903 = vmatprep.subr.mxu0 0.0
    %904 = vmatpush1.msra.mxu0 0.0
    %905 = vmatprep.subr.mxu0 0.0
    %906 = vmatpush1.msra.mxu0 0.0
    %907 = vmatprep.subr.mxu0 0.0
    %908 = vmatpush1.msra.mxu0 0.0
    %909 = vmatprep.subr.mxu0 0.0
    %910 = vmatpush1.msra.mxu0 0.0
    %911 = vmatprep.subr.mxu0 0.0
    %912 = vmatpush1.msra.mxu0 0.0
    %913 = vmatprep.subr.mxu0 0.0
    %914 = vmatpush1.msra.mxu0 0.0
    %915 = vmatprep.subr.mxu0 0.0
    %916 = vmatpush1.msra.mxu0 0.0
    %917 = vmatprep.subr.mxu0 0.0
    %918 = vmatpush1.msra.mxu0 0.0
    %919 = vmatprep.subr.mxu0 0.0
    %920 = vmatpush1.msra.mxu0 0.0
    %921 = vmatprep.subr.mxu0 0.0
    %922 = vmatpush1.msra.mxu0 0.0
    %923 = vmatprep.subr.mxu0 0.0
    %924 = vmatpush1.msra.mxu0 0.0
    %925 = vmatprep.subr.mxu0 0.0
    %926 = vmatpush1.msra.mxu0 0.0
    %927 = vmatprep.subr.mxu0 0.0
    %928 = vmatpush1.msra.mxu0 0.0
    %929 = vmatprep.subr.mxu0 0.0
    %930 = vmatpush1.msra.mxu0 0.0
    %931 = vmatprep.subr.mxu0 0.0
    %932 = vmatpush1.msra.mxu0 0.0
    %933 = vmatprep.subr.mxu0 0.0
    %934 = vmatpush1.msra.mxu0 0.0
    %935 = vmatprep.subr.mxu0 0.0
    %936 = vmatpush1.msra.mxu0 0.0
    %937 = vmatprep.subr.mxu0 0.0
    %938 = vmatpush1.msra.mxu0 0.0
    %939 = vmatprep.subr.mxu0 0.0
    %940 = vmatpush1.msra.mxu0 0.0
    %941 = vmatprep.subr.mxu0 0.0
    %942 = vmatpush1.msra.mxu0 0.0
    %943 = vmatprep.subr.mxu0 0.0
    %944 = vmatpush1.msra.mxu0 0.0
    %945 = vmatprep.subr.mxu0 0.0
    %946 = vmatpush1.msra.mxu0 0.0
    %947 = vmatprep.subr.mxu0 0.0
    %948 = vmatpush1.msra.mxu0 0.0
    %949 = vmatprep.subr.mxu0 0.0
    %950 = vmatpush1.msra.mxu0 0.0
    %951 = vmatprep.subr.mxu0 0.0
    %952 = vmatpush1.msra.mxu0 0.0
    %953 = vmatprep.subr.mxu0 0.0
    %954 = vmatpush1.msra.mxu0 0.0
    %955 = vmatprep.subr.mxu0 0.0
    %956 = vmatpush1.msra.mxu0 0.0
    %957 = vmatprep.subr.mxu0 0.0
    %958 = vmatpush1.msra.mxu0 0.0
    %959 = vmatprep.mubr.f32.mxu0 0.0
    %960 = vmatmul.mubr.f32.gmra.mrb[0].mxu0 %v884
    %v961 = vpop.f32.mrb[0].mxu0
    %v962 = vadd.f32 %v881, %v961
    %v963 = vpop.f32.mrb[0].mxu0
    %964 = vmatprep.mubr.f32.mxu0 0.0
    %965 = vmatmul.mubr.f32.gmra.mrb[0].mxu0 %v887
    %v966 = vpop.f32.mrb[0].mxu0
    %v967 = vadd.f32 %v881, %v966
    %v968 = vpop.f32.mrb[0].mxu0
    %969 = vmatprep.mubr.f32.mxu0 0.0
    %970 = vmatmul.mubr.f32.gmra.mrb[0].mxu0 %v890
    %v971 = vpop.f32.mrb[0].mxu0
    %v972 = vadd.f32 %v881, %v971
    %v973 = vpop.f32.mrb[0].mxu0
    %974 = vmatprep.mubr.f32.mxu0 0.0
    %975 = vmatmul.mubr.f32.gmra.mrb[0].mxu0 %v893
    %v976 = vpop.f32.mrb[0].mxu0
    %v977 = vadd.f32 %v881, %v976
    %v978 = vpop.f32.mrb[0].mxu0
    %979 = vdwg.mxu0
    %v980 = vld [vmem:[%s4] sm:$0xff]
    %v981 = vld [vmem:[%s4 + $0x8] sm:$0xff]
    %v982 = vxor.u32 %v962, 2147483648
    %v983 = vmul.f32 %v982, 1.442695
    %v984 = vpow.pop %v983
    %v985 = vadd.f32 %v984, 1.0
    %v986 = vrcp.pop %v985
    %v987 = vmul.f32 1.0, %v986
    %v988 = vtanh.pop %v962
    %v989 = vmul.f32 %v987, 0.0
    %991 = vrot.lane.b32.xlu0 %v988, 96
    %v992 = vpop.permute.xlu0 %991
    %v994 = vmul.f32 %v987, %v992
    %996 = vrot.lane.b32.xlu0 %v994, 16
    %v997 = vpop.permute.xlu0 %996
    %v999 = vadd.f32 %v989, %v997
    %v1000 = vtanh.pop %v999
    %1002 = vrot.lane.b32.xlu0 %v1000, 32
    %v1003 = vpop.permute.xlu0 %1002
    %v1005 = vmul.f32 %v987, %v1003
    %1007 = vset.pattern.permute.xlu0 48
    %1008 = vperm.xlu0 %1007, %v1005
    %v1009 = vpop.permute.xlu0 %1008
    %v1011 = vlaneseq
    %v1012 = vshrl.u32 %v1011, 7
    %v1013 = vsub.s32 0, %v1012
    %v1014 = vrot.slane %v980, %v1013
    %v1015 = vmul.f32 %v1009, %v1014
    %1016 = vset.pattern.permute.xlu0 49
    %1017 = vperm.xlu0 %1016, %v1005
    %v1018 = vpop.permute.xlu0 %1017
    %v1020 = vlaneseq
    %v1021 = vshrl.u32 %v1020, 7
    %v1022 = vsub.s32 1, %v1021
    %v1023 = vrot.slane %v980, %v1022
    %v1024 = vmul.f32 %v1018, %v1023
    %1025 = vset.pattern.permute.xlu0 50
    %1026 = vperm.xlu0 %1025, %v1005
    %v1027 = vpop.permute.xlu0 %1026
    %v1029 = vlaneseq
    %v1030 = vshrl.u32 %v1029, 7
    %v1031 = vsub.s32 2, %v1030
    %v1032 = vrot.slane %v980, %v1031
    %v1033 = vmul.f32 %v1027, %v1032
    %1034 = vset.pattern.permute.xlu0 51
    %1035 = vperm.xlu0 %1034, %v1005
    %v1036 = vpop.permute.xlu0 %1035
    %v1038 = vlaneseq
    %v1039 = vshrl.u32 %v1038, 7
    %v1040 = vsub.s32 3, %v1039
    %v1041 = vrot.slane %v980, %v1040
    %v1042 = vmul.f32 %v1036, %v1041
    %1043 = vset.pattern.permute.xlu0 52
    %1044 = vperm.xlu0 %1043, %v1005
    %v1045 = vpop.permute.xlu0 %1044
    %v1047 = vlaneseq
    %v1048 = vshrl.u32 %v1047, 7
    %v1049 = vsub.s32 4, %v1048
    %v1050 = vrot.slane %v980, %v1049
    %v1051 = vmul.f32 %v1045, %v1050
    %1052 = vset.pattern.permute.xlu0 53
    %1053 = vperm.xlu0 %1052, %v1005
    %v1054 = vpop.permute.xlu0 %1053
    %v1056 = vlaneseq
    %v1057 = vshrl.u32 %v1056, 7
    %v1058 = vsub.s32 5, %v1057
    %v1059 = vrot.slane %v980, %v1058
    %v1060 = vmul.f32 %v1054, %v1059
    %1061 = vset.pattern.permute.xlu0 54
    %1062 = vperm.xlu0 %1061, %v1005
    %v1063 = vpop.permute.xlu0 %1062
    %v1065 = vlaneseq
    %v1066 = vshrl.u32 %v1065, 7
    %v1067 = vsub.s32 6, %v1066
    %v1068 = vrot.slane %v980, %v1067
    %v1069 = vmul.f32 %v1063, %v1068
    %1070 = vset.pattern.permute.xlu0 55
    %1071 = vperm.xlu0 %1070, %v1005
    %v1072 = vpop.permute.xlu0 %1071
    %v1074 = vlaneseq
    %v1075 = vshrl.u32 %v1074, 7
    %v1076 = vsub.s32 7, %v1075
    %v1077 = vrot.slane %v980, %v1076
    %v1078 = vmul.f32 %v1072, %v1077
    %1079 = vset.pattern.permute.xlu0 56
    %1080 = vperm.xlu0 %1079, %v1005
    %v1081 = vpop.permute.xlu0 %1080
    %v1083 = vlaneseq
    %v1084 = vshrl.u32 %v1083, 7
    %v1085 = vsub.s32 0, %v1084
    %v1086 = vrot.slane %v981, %v1085
    %v1087 = vmul.f32 %v1081, %v1086
    %1088 = vset.pattern.permute.xlu0 57
    %1089 = vperm.xlu0 %1088, %v1005
    %v1090 = vpop.permute.xlu0 %1089
    %v1092 = vlaneseq
    %v1093 = vshrl.u32 %v1092, 7
    %v1094 = vsub.s32 1, %v1093
    %v1095 = vrot.slane %v981, %v1094
    %v1096 = vmul.f32 %v1090, %v1095
    %1097 = vset.pattern.permute.xlu0 58
    %1098 = vperm.xlu0 %1097, %v1005
    %v1099 = vpop.permute.xlu0 %1098
    %v1101 = vlaneseq
    %v1102 = vshrl.u32 %v1101, 7
    %v1103 = vsub.s32 2, %v1102
    %v1104 = vrot.slane %v981, %v1103
    %v1105 = vmul.f32 %v1099, %v1104
    %1106 = vset.pattern.permute.xlu0 59
    %1107 = vperm.xlu0 %1106, %v1005
    %v1108 = vpop.permute.xlu0 %1107
    %v1110 = vlaneseq
    %v1111 = vshrl.u32 %v1110, 7
    %v1112 = vsub.s32 3, %v1111
    %v1113 = vrot.slane %v981, %v1112
    %v1114 = vmul.f32 %v1108, %v1113
    %1115 = vset.pattern.permute.xlu0 60
    %1116 = vperm.xlu0 %1115, %v1005
    %v1117 = vpop.permute.xlu0 %1116
    %v1119 = vlaneseq
    %v1120 = vshrl.u32 %v1119, 7
    %v1121 = vsub.s32 4, %v1120
    %v1122 = vrot.slane %v981, %v1121
    %v1123 = vmul.f32 %v1117, %v1122
    %1124 = vset.pattern.permute.xlu0 61
    %1125 = vperm.xlu0 %1124, %v1005
    %v1126 = vpop.permute.xlu0 %1125
    %v1128 = vlaneseq
    %v1129 = vshrl.u32 %v1128, 7
    %v1130 = vsub.s32 5, %v1129
    %v1131 = vrot.slane %v981, %v1130
    %v1132 = vmul.f32 %v1126, %v1131
    %1133 = vset.pattern.permute.xlu0 62
    %1134 = vperm.xlu0 %1133, %v1005
    %v1135 = vpop.permute.xlu0 %1134
    %v1137 = vlaneseq
    %v1138 = vshrl.u32 %v1137, 7
    %v1139 = vsub.s32 6, %v1138
    %v1140 = vrot.slane %v981, %v1139
    %v1141 = vmul.f32 %v1135, %v1140
    %1142 = vset.pattern.permute.xlu0 63
    %1143 = vperm.xlu0 %1142, %v1005
    %v1144 = vpop.permute.xlu0 %1143
    %v1146 = vlaneseq
    %v1147 = vshrl.u32 %v1146, 7
    %v1148 = vsub.s32 7, %v1147
    %v1149 = vrot.slane %v981, %v1148
    %v1150 = vmul.f32 %v1144, %v1149
    %v1152 = vrot.slane %v1015, 6
    %v1154 = vadd.f32 %v962, %v1152
    %v1155 = vadd.f32 %v1024, %v1033
    %v1156 = vadd.f32 %v1042, %v1051
    %v1157 = vadd.f32 %v1060, %v1069
    %v1158 = vadd.f32 %v1078, %v1087
    %v1159 = vadd.f32 %v1096, %v1105
    %v1160 = vadd.f32 %v1114, %v1123
    %v1161 = vadd.f32 %v1132, %v1141
    %v1163 = vrot.slane %v1155, 6
    %v1165 = vadd.f32 %v1154, %v1163
    %v1166 = vadd.f32 %v1156, %v1157
    %v1167 = vadd.f32 %v1158, %v1159
    %v1168 = vadd.f32 %v1160, %v1161
    %v1170 = vrot.slane %v1166, 6
    %v1172 = vadd.f32 %v1165, %v1170
    %v1173 = vadd.f32 %v1167, %v1168
    %v1175 = vrot.slane %v1173, 6
    %v1177 = vadd.f32 %v1172, %v1175
    %v1179 = vrot.slane %v1150, 6
    %v1181 = vadd.f32 %v1177, %v1179
    %v1182 = vxor.u32 %v1181, 2147483648
    %v1183 = vmul.f32 %v1182, 1.442695
    %v1184 = vpow.pop %v1183
    %v1185 = vadd.f32 %v1184, 1.0
    %v1186 = vrcp.pop %v1185
    %v1187 = vmul.f32 1.0, %v1186
    %v1188 = vtanh.pop %v1181
    %v1190 = vrot.slane %v999, 6
    %v1192 = vmul.f32 %v1187, %v1190
    %1194 = vrot.lane.b32.xlu0 %v1188, 96
    %v1195 = vpop.permute.xlu0 %1194
    %v1197 = vmul.f32 %v1187, %v1195
    %1199 = vrot.lane.b32.xlu0 %v1197, 16
    %v1200 = vpop.permute.xlu0 %1199
    %v1202 = vadd.f32 %v1192, %v1200
    %v1203 = vtanh.pop %v1202
    %1205 = vrot.lane.b32.xlu0 %v1203, 32
    %v1206 = vpop.permute.xlu0 %1205
    %v1208 = vmul.f32 %v1187, %v1206
    %1210 = vset.pattern.permute.xlu0 48
    %1211 = vperm.xlu0 %1210, %v1208
    %v1212 = vpop.permute.xlu0 %1211
    %v1214 = vmul.f32 %v1212, %v1014
    %1215 = vset.pattern.permute.xlu0 49
    %1216 = vperm.xlu0 %1215, %v1208
    %v1217 = vpop.permute.xlu0 %1216
    %v1219 = vmul.f32 %v1217, %v1023
    %1220 = vset.pattern.permute.xlu0 50
    %1221 = vperm.xlu0 %1220, %v1208
    %v1222 = vpop.permute.xlu0 %1221
    %v1224 = vmul.f32 %v1222, %v1032
    %1225 = vset.pattern.permute.xlu0 51
    %1226 = vperm.xlu0 %1225, %v1208
    %v1227 = vpop.permute.xlu0 %1226
    %v1229 = vmul.f32 %v1227, %v1041
    %1230 = vset.pattern.permute.xlu0 52
    %1231 = vperm.xlu0 %1230, %v1208
    %v1232 = vpop.permute.xlu0 %1231
    %v1234 = vmul.f32 %v1232, %v1050
    %1235 = vset.pattern.permute.xlu0 53
    %1236 = vperm.xlu0 %1235, %v1208
    %v1237 = vpop.permute.xlu0 %1236
    %v1239 = vmul.f32 %v1237, %v1059
    %1240 = vset.pattern.permute.xlu0 54
    %1241 = vperm.xlu0 %1240, %v1208
    %v1242 = vpop.permute.xlu0 %1241
    %v1244 = vmul.f32 %v1242, %v1068
    %1245 = vset.pattern.permute.xlu0 55
    %1246 = vperm.xlu0 %1245, %v1208
    %v1247 = vpop.permute.xlu0 %1246
    %v1249 = vmul.f32 %v1247, %v1077
    %1250 = vset.pattern.permute.xlu0 56
    %1251 = vperm.xlu0 %1250, %v1208
    %v1252 = vpop.permute.xlu0 %1251
    %v1254 = vmul.f32 %v1252, %v1086
    %1255 = vset.pattern.permute.xlu0 57
    %1256 = vperm.xlu0 %1255, %v1208
    %v1257 = vpop.permute.xlu0 %1256
    %v1259 = vmul.f32 %v1257, %v1095
    %1260 = vset.pattern.permute.xlu0 58
    %1261 = vperm.xlu0 %1260, %v1208
    %v1262 = vpop.permute.xlu0 %1261
    %v1264 = vmul.f32 %v1262, %v1104
    %1265 = vset.pattern.permute.xlu0 59
    %1266 = vperm.xlu0 %1265, %v1208
    %v1267 = vpop.permute.xlu0 %1266
    %v1269 = vmul.f32 %v1267, %v1113
    %1270 = vset.pattern.permute.xlu0 60
    %1271 = vperm.xlu0 %1270, %v1208
    %v1272 = vpop.permute.xlu0 %1271
    %v1274 = vmul.f32 %v1272, %v1122
    %1275 = vset.pattern.permute.xlu0 61
    %1276 = vperm.xlu0 %1275, %v1208
    %v1277 = vpop.permute.xlu0 %1276
    %v1279 = vmul.f32 %v1277, %v1131
    %1280 = vset.pattern.permute.xlu0 62
    %1281 = vperm.xlu0 %1280, %v1208
    %v1282 = vpop.permute.xlu0 %1281
    %v1284 = vmul.f32 %v1282, %v1140
    %1285 = vset.pattern.permute.xlu0 63
    %1286 = vperm.xlu0 %1285, %v1208
    %v1287 = vpop.permute.xlu0 %1286
    %v1289 = vmul.f32 %v1287, %v1149
    %v1291 = vrot.slane %v1214, 6
    %v1293 = vadd.f32 %v962, %v1291
    %v1294 = vadd.f32 %v1219, %v1224
    %v1295 = vadd.f32 %v1229, %v1234
    %v1296 = vadd.f32 %v1239, %v1244
    %v1297 = vadd.f32 %v1249, %v1254
    %v1298 = vadd.f32 %v1259, %v1264
    %v1299 = vadd.f32 %v1269, %v1274
    %v1300 = vadd.f32 %v1279, %v1284
    %v1302 = vrot.slane %v1294, 6
    %v1304 = vadd.f32 %v1293, %v1302
    %v1305 = vadd.f32 %v1295, %v1296
    %v1306 = vadd.f32 %v1297, %v1298
    %v1307 = vadd.f32 %v1299, %v1300
    %v1309 = vrot.slane %v1305, 6
    %v1311 = vadd.f32 %v1304, %v1309
    %v1312 = vadd.f32 %v1306, %v1307
    %v1314 = vrot.slane %v1312, 6
    %v1316 = vadd.f32 %v1311, %v1314
    %v1318 = vrot.slane %v1289, 6
    %v1320 = vadd.f32 %v1316, %v1318
    %v1321 = vxor.u32 %v1320, 2147483648
    %v1322 = vmul.f32 %v1321, 1.442695
    %v1323 = vpow.pop %v1322
    %v1324 = vadd.f32 %v1323, 1.0
    %v1325 = vrcp.pop %v1324
    %v1326 = vmul.f32 1.0, %v1325
    %v1327 = vtanh.pop %v1320
    %v1329 = vrot.slane %v1202, 6
    %v1331 = vmul.f32 %v1326, %v1329
    %1333 = vrot.lane.b32.xlu0 %v1327, 96
    %v1334 = vpop.permute.xlu0 %1333
    %v1336 = vmul.f32 %v1326, %v1334
    %1338 = vrot.lane.b32.xlu0 %v1336, 16
    %v1339 = vpop.permute.xlu0 %1338
    %v1341 = vadd.f32 %v1331, %v1339
    %v1342 = vtanh.pop %v1341
    %1344 = vrot.lane.b32.xlu0 %v1342, 32
    %v1345 = vpop.permute.xlu0 %1344
    %v1347 = vmul.f32 %v1326, %v1345
    %1349 = vset.pattern.permute.xlu0 48
    %1350 = vperm.xlu0 %1349, %v1347
    %v1351 = vpop.permute.xlu0 %1350
    %v1353 = vmul.f32 %v1351, %v1014
    %1354 = vset.pattern.permute.xlu0 49
    %1355 = vperm.xlu0 %1354, %v1347
    %v1356 = vpop.permute.xlu0 %1355
    %v1358 = vmul.f32 %v1356, %v1023
    %1359 = vset.pattern.permute.xlu0 50
    %1360 = vperm.xlu0 %1359, %v1347
    %v1361 = vpop.permute.xlu0 %1360
    %v1363 = vmul.f32 %v1361, %v1032
    %1364 = vset.pattern.permute.xlu0 51
    %1365 = vperm.xlu0 %1364, %v1347
    %v1366 = vpop.permute.xlu0 %1365
    %v1368 = vmul.f32 %v1366, %v1041
    %1369 = vset.pattern.permute.xlu0 52
    %1370 = vperm.xlu0 %1369, %v1347
    %v1371 = vpop.permute.xlu0 %1370
    %v1373 = vmul.f32 %v1371, %v1050
    %1374 = vset.pattern.permute.xlu0 53
    %1375 = vperm.xlu0 %1374, %v1347
    %v1376 = vpop.permute.xlu0 %1375
    %v1378 = vmul.f32 %v1376, %v1059
    %1379 = vset.pattern.permute.xlu0 54
    %1380 = vperm.xlu0 %1379, %v1347
    %v1381 = vpop.permute.xlu0 %1380
    %v1383 = vmul.f32 %v1381, %v1068
    %1384 = vset.pattern.permute.xlu0 55
    %1385 = vperm.xlu0 %1384, %v1347
    %v1386 = vpop.permute.xlu0 %1385
    %v1388 = vmul.f32 %v1386, %v1077
    %1389 = vset.pattern.permute.xlu0 56
    %1390 = vperm.xlu0 %1389, %v1347
    %v1391 = vpop.permute.xlu0 %1390
    %v1393 = vmul.f32 %v1391, %v1086
    %1394 = vset.pattern.permute.xlu0 57
    %1395 = vperm.xlu0 %1394, %v1347
    %v1396 = vpop.permute.xlu0 %1395
    %v1398 = vmul.f32 %v1396, %v1095
    %1399 = vset.pattern.permute.xlu0 58
    %1400 = vperm.xlu0 %1399, %v1347
    %v1401 = vpop.permute.xlu0 %1400
    %v1403 = vmul.f32 %v1401, %v1104
    %1404 = vset.pattern.permute.xlu0 59
    %1405 = vperm.xlu0 %1404, %v1347
    %v1406 = vpop.permute.xlu0 %1405
    %v1408 = vmul.f32 %v1406, %v1113
    %1409 = vset.pattern.permute.xlu0 60
    %1410 = vperm.xlu0 %1409, %v1347
    %v1411 = vpop.permute.xlu0 %1410
    %v1413 = vmul.f32 %v1411, %v1122
    %1414 = vset.pattern.permute.xlu0 61
    %1415 = vperm.xlu0 %1414, %v1347
    %v1416 = vpop.permute.xlu0 %1415
    %v1418 = vmul.f32 %v1416, %v1131
    %1419 = vset.pattern.permute.xlu0 62
    %1420 = vperm.xlu0 %1419, %v1347
    %v1421 = vpop.permute.xlu0 %1420
    %v1423 = vmul.f32 %v1421, %v1140
    %1424 = vset.pattern.permute.xlu0 63
    %1425 = vperm.xlu0 %1424, %v1347
    %v1426 = vpop.permute.xlu0 %1425
    %v1428 = vmul.f32 %v1426, %v1149
    %v1430 = vrot.slane %v1353, 6
    %v1432 = vadd.f32 %v962, %v1430
    %v1433 = vadd.f32 %v1358, %v1363
    %v1434 = vadd.f32 %v1368, %v1373
    %v1435 = vadd.f32 %v1378, %v1383
    %v1436 = vadd.f32 %v1388, %v1393
    %v1437 = vadd.f32 %v1398, %v1403
    %v1438 = vadd.f32 %v1408, %v1413
    %v1439 = vadd.f32 %v1418, %v1423
    %v1441 = vrot.slane %v1433, 6
    %v1443 = vadd.f32 %v1432, %v1441
    %v1444 = vadd.f32 %v1434, %v1435
    %v1445 = vadd.f32 %v1436, %v1437
    %v1446 = vadd.f32 %v1438, %v1439
    %v1448 = vrot.slane %v1444, 6
    %v1450 = vadd.f32 %v1443, %v1448
    %v1451 = vadd.f32 %v1445, %v1446
    %v1453 = vrot.slane %v1451, 6
    %v1455 = vadd.f32 %v1450, %v1453
    %v1457 = vrot.slane %v1428, 6
    %v1459 = vadd.f32 %v1455, %v1457
    %v1460 = vxor.u32 %v1459, 2147483648
    %v1461 = vmul.f32 %v1460, 1.442695
    %v1462 = vpow.pop %v1461
    %v1463 = vadd.f32 %v1462, 1.0
    %v1464 = vrcp.pop %v1463
    %v1465 = vmul.f32 1.0, %v1464
    %v1466 = vtanh.pop %v1459
    %v1468 = vrot.slane %v1341, 6
    %v1470 = vmul.f32 %v1465, %v1468
    %1472 = vrot.lane.b32.xlu0 %v1466, 96
    %v1473 = vpop.permute.xlu0 %1472
    %v1475 = vmul.f32 %v1465, %v1473
    %1477 = vrot.lane.b32.xlu0 %v1475, 16
    %v1478 = vpop.permute.xlu0 %1477
    %v1480 = vadd.f32 %v1470, %v1478
    %v1481 = vtanh.pop %v1480
    %1483 = vrot.lane.b32.xlu0 %v1481, 32
    %v1484 = vpop.permute.xlu0 %1483
    %v1486 = vmul.f32 %v1465, %v1484
    %1488 = vset.pattern.permute.xlu0 48
    %1489 = vperm.xlu0 %1488, %v1486
    %v1490 = vpop.permute.xlu0 %1489
    %v1492 = vmul.f32 %v1490, %v1014
    %1493 = vset.pattern.permute.xlu0 49
    %1494 = vperm.xlu0 %1493, %v1486
    %v1495 = vpop.permute.xlu0 %1494
    %v1497 = vmul.f32 %v1495, %v1023
    %1498 = vset.pattern.permute.xlu0 50
    %1499 = vperm.xlu0 %1498, %v1486
    %v1500 = vpop.permute.xlu0 %1499
    %v1502 = vmul.f32 %v1500, %v1032
    %1503 = vset.pattern.permute.xlu0 51
    %1504 = vperm.xlu0 %1503, %v1486
    %v1505 = vpop.permute.xlu0 %1504
    %v1507 = vmul.f32 %v1505, %v1041
    %1508 = vset.pattern.permute.xlu0 52
    %1509 = vperm.xlu0 %1508, %v1486
    %v1510 = vpop.permute.xlu0 %1509
    %v1512 = vmul.f32 %v1510, %v1050
    %1513 = vset.pattern.permute.xlu0 53
    %1514 = vperm.xlu0 %1513, %v1486
    %v1515 = vpop.permute.xlu0 %1514
    %v1517 = vmul.f32 %v1515, %v1059
    %1518 = vset.pattern.permute.xlu0 54
    %1519 = vperm.xlu0 %1518, %v1486
    %v1520 = vpop.permute.xlu0 %1519
    %v1522 = vmul.f32 %v1520, %v1068
    %1523 = vset.pattern.permute.xlu0 55
    %1524 = vperm.xlu0 %1523, %v1486
    %v1525 = vpop.permute.xlu0 %1524
    %v1527 = vmul.f32 %v1525, %v1077
    %1528 = vset.pattern.permute.xlu0 56
    %1529 = vperm.xlu0 %1528, %v1486
    %v1530 = vpop.permute.xlu0 %1529
    %v1532 = vmul.f32 %v1530, %v1086
    %1533 = vset.pattern.permute.xlu0 57
    %1534 = vperm.xlu0 %1533, %v1486
    %v1535 = vpop.permute.xlu0 %1534
    %v1537 = vmul.f32 %v1535, %v1095
    %1538 = vset.pattern.permute.xlu0 58
    %1539 = vperm.xlu0 %1538, %v1486
    %v1540 = vpop.permute.xlu0 %1539
    %v1542 = vmul.f32 %v1540, %v1104
    %1543 = vset.pattern.permute.xlu0 59
    %1544 = vperm.xlu0 %1543, %v1486
    %v1545 = vpop.permute.xlu0 %1544
    %v1547 = vmul.f32 %v1545, %v1113
    %1548 = vset.pattern.permute.xlu0 60
    %1549 = vperm.xlu0 %1548, %v1486
    %v1550 = vpop.permute.xlu0 %1549
    %v1552 = vmul.f32 %v1550, %v1122
    %1553 = vset.pattern.permute.xlu0 61
    %1554 = vperm.xlu0 %1553, %v1486
    %v1555 = vpop.permute.xlu0 %1554
    %v1557 = vmul.f32 %v1555, %v1131
    %1558 = vset.pattern.permute.xlu0 62
    %1559 = vperm.xlu0 %1558, %v1486
    %v1560 = vpop.permute.xlu0 %1559
    %v1562 = vmul.f32 %v1560, %v1140
    %1563 = vset.pattern.permute.xlu0 63
    %1564 = vperm.xlu0 %1563, %v1486
    %v1565 = vpop.permute.xlu0 %1564
    %v1567 = vmul.f32 %v1565, %v1149
    %v1569 = vrot.slane %v1492, 6
    %v1571 = vadd.f32 %v967, %v1569
    %v1572 = vadd.f32 %v1497, %v1502
    %v1573 = vadd.f32 %v1507, %v1512
    %v1574 = vadd.f32 %v1517, %v1522
    %v1575 = vadd.f32 %v1527, %v1532
    %v1576 = vadd.f32 %v1537, %v1542
    %v1577 = vadd.f32 %v1547, %v1552
    %v1578 = vadd.f32 %v1557, %v1562
    %v1580 = vrot.slane %v1572, 6
    %v1582 = vadd.f32 %v1571, %v1580
    %v1583 = vadd.f32 %v1573, %v1574
    %v1584 = vadd.f32 %v1575, %v1576
    %v1585 = vadd.f32 %v1577, %v1578
    %v1587 = vrot.slane %v1583, 6
    %v1589 = vadd.f32 %v1582, %v1587
    %v1590 = vadd.f32 %v1584, %v1585
    %v1592 = vrot.slane %v1590, 6
    %v1594 = vadd.f32 %v1589, %v1592
    %v1596 = vrot.slane %v1567, 6
    %v1598 = vadd.f32 %v1594, %v1596
    %v1599 = vxor.u32 %v1598, 2147483648
    %v1600 = vmul.f32 %v1599, 1.442695
    %v1601 = vpow.pop %v1600
    %v1602 = vadd.f32 %v1601, 1.0
    %v1603 = vrcp.pop %v1602
    %v1604 = vmul.f32 1.0, %v1603
    %v1605 = vtanh.pop %v1598
    %v1607 = vrot.slane %v1480, 6
    %v1609 = vmul.f32 %v1604, %v1607
    %1611 = vrot.lane.b32.xlu0 %v1605, 96
    %v1612 = vpop.permute.xlu0 %1611
    %v1614 = vmul.f32 %v1604, %v1612
    %1616 = vrot.lane.b32.xlu0 %v1614, 16
    %v1617 = vpop.permute.xlu0 %1616
    %v1619 = vadd.f32 %v1609, %v1617
    %v1620 = vtanh.pop %v1619
    %1622 = vrot.lane.b32.xlu0 %v1620, 32
    %v1623 = vpop.permute.xlu0 %1622
    %v1625 = vmul.f32 %v1604, %v1623
    %1627 = vset.pattern.permute.xlu0 48
    %1628 = vperm.xlu0 %1627, %v1625
    %v1629 = vpop.permute.xlu0 %1628
    %v1631 = vmul.f32 %v1629, %v1014
    %1632 = vset.pattern.permute.xlu0 49
    %1633 = vperm.xlu0 %1632, %v1625
    %v1634 = vpop.permute.xlu0 %1633
    %v1636 = vmul.f32 %v1634, %v1023
    %1637 = vset.pattern.permute.xlu0 50
    %1638 = vperm.xlu0 %1637, %v1625
    %v1639 = vpop.permute.xlu0 %1638
    %v1641 = vmul.f32 %v1639, %v1032
    %1642 = vset.pattern.permute.xlu0 51
    %1643 = vperm.xlu0 %1642, %v1625
    %v1644 = vpop.permute.xlu0 %1643
    %v1646 = vmul.f32 %v1644, %v1041
    %1647 = vset.pattern.permute.xlu0 52
    %1648 = vperm.xlu0 %1647, %v1625
    %v1649 = vpop.permute.xlu0 %1648
    %v1651 = vmul.f32 %v1649, %v1050
    %1652 = vset.pattern.permute.xlu0 53
    %1653 = vperm.xlu0 %1652, %v1625
    %v1654 = vpop.permute.xlu0 %1653
    %v1656 = vmul.f32 %v1654, %v1059
    %1657 = vset.pattern.permute.xlu0 54
    %1658 = vperm.xlu0 %1657, %v1625
    %v1659 = vpop.permute.xlu0 %1658
    %v1661 = vmul.f32 %v1659, %v1068
    %1662 = vset.pattern.permute.xlu0 55
    %1663 = vperm.xlu0 %1662, %v1625
    %v1664 = vpop.permute.xlu0 %1663
    %v1666 = vmul.f32 %v1664, %v1077
    %1667 = vset.pattern.permute.xlu0 56
    %1668 = vperm.xlu0 %1667, %v1625
    %v1669 = vpop.permute.xlu0 %1668
    %v1671 = vmul.f32 %v1669, %v1086
    %1672 = vset.pattern.permute.xlu0 57
    %1673 = vperm.xlu0 %1672, %v1625
    %v1674 = vpop.permute.xlu0 %1673
    %v1676 = vmul.f32 %v1674, %v1095
    %1677 = vset.pattern.permute.xlu0 58
    %1678 = vperm.xlu0 %1677, %v1625
    %v1679 = vpop.permute.xlu0 %1678
    %v1681 = vmul.f32 %v1679, %v1104
    %1682 = vset.pattern.permute.xlu0 59
    %1683 = vperm.xlu0 %1682, %v1625
    %v1684 = vpop.permute.xlu0 %1683
    %v1686 = vmul.f32 %v1684, %v1113
    %1687 = vset.pattern.permute.xlu0 60
    %1688 = vperm.xlu0 %1687, %v1625
    %v1689 = vpop.permute.xlu0 %1688
    %v1691 = vmul.f32 %v1689, %v1122
    %1692 = vset.pattern.permute.xlu0 61
    %1693 = vperm.xlu0 %1692, %v1625
    %v1694 = vpop.permute.xlu0 %1693
    %v1696 = vmul.f32 %v1694, %v1131
    %1697 = vset.pattern.permute.xlu0 62
    %1698 = vperm.xlu0 %1697, %v1625
    %v1699 = vpop.permute.xlu0 %1698
    %v1701 = vmul.f32 %v1699, %v1140
    %1702 = vset.pattern.permute.xlu0 63
    %1703 = vperm.xlu0 %1702, %v1625
    %v1704 = vpop.permute.xlu0 %1703
    %v1706 = vmul.f32 %v1704, %v1149
    %v1708 = vrot.slane %v1631, 6
    %v1710 = vadd.f32 %v967, %v1708
    %v1711 = vadd.f32 %v1636, %v1641
    %v1712 = vadd.f32 %v1646, %v1651
    %v1713 = vadd.f32 %v1656, %v1661
    %v1714 = vadd.f32 %v1666, %v1671
    %v1715 = vadd.f32 %v1676, %v1681
    %v1716 = vadd.f32 %v1686, %v1691
    %v1717 = vadd.f32 %v1696, %v1701
    %v1719 = vrot.slane %v1711, 6
    %v1721 = vadd.f32 %v1710, %v1719
    %v1722 = vadd.f32 %v1712, %v1713
    %v1723 = vadd.f32 %v1714, %v1715
    %v1724 = vadd.f32 %v1716, %v1717
    %v1726 = vrot.slane %v1722, 6
    %v1728 = vadd.f32 %v1721, %v1726
    %v1729 = vadd.f32 %v1723, %v1724
    %v1731 = vrot.slane %v1729, 6
    %v1733 = vadd.f32 %v1728, %v1731
    %v1735 = vrot.slane %v1706, 6
    %v1737 = vadd.f32 %v1733, %v1735
    %v1738 = vxor.u32 %v1737, 2147483648
    %v1739 = vmul.f32 %v1738, 1.442695
    %v1740 = vpow.pop %v1739
    %v1741 = vadd.f32 %v1740, 1.0
    %v1742 = vrcp.pop %v1741
    %v1743 = vmul.f32 1.0, %v1742
    %v1744 = vtanh.pop %v1737
    %v1746 = vrot.slane %v1619, 6
    %v1748 = vmul.f32 %v1743, %v1746
    %1750 = vrot.lane.b32.xlu0 %v1744, 96
    %v1751 = vpop.permute.xlu0 %1750
    %v1753 = vmul.f32 %v1743, %v1751
    %1755 = vrot.lane.b32.xlu0 %v1753, 16
    %v1756 = vpop.permute.xlu0 %1755
    %v1758 = vadd.f32 %v1748, %v1756
    %v1759 = vtanh.pop %v1758
    %1761 = vrot.lane.b32.xlu0 %v1759, 32
    %v1762 = vpop.permute.xlu0 %1761
    %v1764 = vmul.f32 %v1743, %v1762
    %1766 = vset.pattern.permute.xlu0 48
    %1767 = vperm.xlu0 %1766, %v1764
    %v1768 = vpop.permute.xlu0 %1767
    %v1770 = vmul.f32 %v1768, %v1014
    %1771 = vset.pattern.permute.xlu0 49
    %1772 = vperm.xlu0 %1771, %v1764
    %v1773 = vpop.permute.xlu0 %1772
    %v1775 = vmul.f32 %v1773, %v1023
    %1776 = vset.pattern.permute.xlu0 50
    %1777 = vperm.xlu0 %1776, %v1764
    %v1778 = vpop.permute.xlu0 %1777
    %v1780 = vmul.f32 %v1778, %v1032
    %1781 = vset.pattern.permute.xlu0 51
    %1782 = vperm.xlu0 %1781, %v1764
    %v1783 = vpop.permute.xlu0 %1782
    %v1785 = vmul.f32 %v1783, %v1041
    %1786 = vset.pattern.permute.xlu0 52
    %1787 = vperm.xlu0 %1786, %v1764
    %v1788 = vpop.permute.xlu0 %1787
    %v1790 = vmul.f32 %v1788, %v1050
    %1791 = vset.pattern.permute.xlu0 53
    %1792 = vperm.xlu0 %1791, %v1764
    %v1793 = vpop.permute.xlu0 %1792
    %v1795 = vmul.f32 %v1793, %v1059
    %1796 = vset.pattern.permute.xlu0 54
    %1797 = vperm.xlu0 %1796, %v1764
    %v1798 = vpop.permute.xlu0 %1797
    %v1800 = vmul.f32 %v1798, %v1068
    %1801 = vset.pattern.permute.xlu0 55
    %1802 = vperm.xlu0 %1801, %v1764
    %v1803 = vpop.permute.xlu0 %1802
    %v1805 = vmul.f32 %v1803, %v1077
    %1806 = vset.pattern.permute.xlu0 56
    %1807 = vperm.xlu0 %1806, %v1764
    %v1808 = vpop.permute.xlu0 %1807
    %v1810 = vmul.f32 %v1808, %v1086
    %1811 = vset.pattern.permute.xlu0 57
    %1812 = vperm.xlu0 %1811, %v1764
    %v1813 = vpop.permute.xlu0 %1812
    %v1815 = vmul.f32 %v1813, %v1095
    %1816 = vset.pattern.permute.xlu0 58
    %1817 = vperm.xlu0 %1816, %v1764
    %v1818 = vpop.permute.xlu0 %1817
    %v1820 = vmul.f32 %v1818, %v1104
    %1821 = vset.pattern.permute.xlu0 59
    %1822 = vperm.xlu0 %1821, %v1764
    %v1823 = vpop.permute.xlu0 %1822
    %v1825 = vmul.f32 %v1823, %v1113
    %1826 = vset.pattern.permute.xlu0 60
    %1827 = vperm.xlu0 %1826, %v1764
    %v1828 = vpop.permute.xlu0 %1827
    %v1830 = vmul.f32 %v1828, %v1122
    %1831 = vset.pattern.permute.xlu0 61
    %1832 = vperm.xlu0 %1831, %v1764
    %v1833 = vpop.permute.xlu0 %1832
    %v1835 = vmul.f32 %v1833, %v1131
    %1836 = vset.pattern.permute.xlu0 62
    %1837 = vperm.xlu0 %1836, %v1764
    %v1838 = vpop.permute.xlu0 %1837
    %v1840 = vmul.f32 %v1838, %v1140
    %1841 = vset.pattern.permute.xlu0 63
    %1842 = vperm.xlu0 %1841, %v1764
    %v1843 = vpop.permute.xlu0 %1842
    %v1845 = vmul.f32 %v1843, %v1149
    %v1847 = vrot.slane %v1770, 6
    %v1849 = vadd.f32 %v967, %v1847
    %v1850 = vadd.f32 %v1775, %v1780
    %v1851 = vadd.f32 %v1785, %v1790
    %v1852 = vadd.f32 %v1795, %v1800
    %v1853 = vadd.f32 %v1805, %v1810
    %v1854 = vadd.f32 %v1815, %v1820
    %v1855 = vadd.f32 %v1825, %v1830
    %v1856 = vadd.f32 %v1835, %v1840
    %v1858 = vrot.slane %v1850, 6
    %v1860 = vadd.f32 %v1849, %v1858
    %v1861 = vadd.f32 %v1851, %v1852
    %v1862 = vadd.f32 %v1853, %v1854
    %v1863 = vadd.f32 %v1855, %v1856
    %v1865 = vrot.slane %v1861, 6
    %v1867 = vadd.f32 %v1860, %v1865
    %v1868 = vadd.f32 %v1862, %v1863
    %v1870 = vrot.slane %v1868, 6
    %v1872 = vadd.f32 %v1867, %v1870
    %v1874 = vrot.slane %v1845, 6
    %v1876 = vadd.f32 %v1872, %v1874
    %v1877 = vxor.u32 %v1876, 2147483648
    %v1878 = vmul.f32 %v1877, 1.442695
    %v1879 = vpow.pop %v1878
    %v1880 = vadd.f32 %v1879, 1.0
    %v1881 = vrcp.pop %v1880
    %v1882 = vmul.f32 1.0, %v1881
    %v1883 = vtanh.pop %v1876
    %v1885 = vrot.slane %v1758, 6
    %v1887 = vmul.f32 %v1882, %v1885
    %1889 = vrot.lane.b32.xlu0 %v1883, 96
    %v1890 = vpop.permute.xlu0 %1889
    %v1892 = vmul.f32 %v1882, %v1890
    %1894 = vrot.lane.b32.xlu0 %v1892, 16
    %v1895 = vpop.permute.xlu0 %1894
    %v1897 = vadd.f32 %v1887, %v1895
    %v1898 = vtanh.pop %v1897
    %1900 = vrot.lane.b32.xlu0 %v1898, 32
    %v1901 = vpop.permute.xlu0 %1900
    %v1903 = vmul.f32 %v1882, %v1901
    %1905 = vset.pattern.permute.xlu0 48
    %1906 = vperm.xlu0 %1905, %v1903
    %v1907 = vpop.permute.xlu0 %1906
    %v1909 = vmul.f32 %v1907, %v1014
    %1910 = vset.pattern.permute.xlu0 49
    %1911 = vperm.xlu0 %1910, %v1903
    %v1912 = vpop.permute.xlu0 %1911
    %v1914 = vmul.f32 %v1912, %v1023
    %1915 = vset.pattern.permute.xlu0 50
    %1916 = vperm.xlu0 %1915, %v1903
    %v1917 = vpop.permute.xlu0 %1916
    %v1919 = vmul.f32 %v1917, %v1032
    %1920 = vset.pattern.permute.xlu0 51
    %1921 = vperm.xlu0 %1920, %v1903
    %v1922 = vpop.permute.xlu0 %1921
    %v1924 = vmul.f32 %v1922, %v1041
    %1925 = vset.pattern.permute.xlu0 52
    %1926 = vperm.xlu0 %1925, %v1903
    %v1927 = vpop.permute.xlu0 %1926
    %v1929 = vmul.f32 %v1927, %v1050
    %1930 = vset.pattern.permute.xlu0 53
    %1931 = vperm.xlu0 %1930, %v1903
    %v1932 = vpop.permute.xlu0 %1931
    %v1934 = vmul.f32 %v1932, %v1059
    %1935 = vset.pattern.permute.xlu0 54
    %1936 = vperm.xlu0 %1935, %v1903
    %v1937 = vpop.permute.xlu0 %1936
    %v1939 = vmul.f32 %v1937, %v1068
    %1940 = vset.pattern.permute.xlu0 55
    %1941 = vperm.xlu0 %1940, %v1903
    %v1942 = vpop.permute.xlu0 %1941
    %v1944 = vmul.f32 %v1942, %v1077
    %1945 = vset.pattern.permute.xlu0 56
    %1946 = vperm.xlu0 %1945, %v1903
    %v1947 = vpop.permute.xlu0 %1946
    %v1949 = vmul.f32 %v1947, %v1086
    %1950 = vset.pattern.permute.xlu0 57
    %1951 = vperm.xlu0 %1950, %v1903
    %v1952 = vpop.permute.xlu0 %1951
    %v1954 = vmul.f32 %v1952, %v1095
    %1955 = vset.pattern.permute.xlu0 58
    %1956 = vperm.xlu0 %1955, %v1903
    %v1957 = vpop.permute.xlu0 %1956
    %v1959 = vmul.f32 %v1957, %v1104
    %1960 = vset.pattern.permute.xlu0 59
    %1961 = vperm.xlu0 %1960, %v1903
    %v1962 = vpop.permute.xlu0 %1961
    %v1964 = vmul.f32 %v1962, %v1113
    %1965 = vset.pattern.permute.xlu0 60
    %1966 = vperm.xlu0 %1965, %v1903
    %v1967 = vpop.permute.xlu0 %1966
    %v1969 = vmul.f32 %v1967, %v1122
    %1970 = vset.pattern.permute.xlu0 61
    %1971 = vperm.xlu0 %1970, %v1903
    %v1972 = vpop.permute.xlu0 %1971
    %v1974 = vmul.f32 %v1972, %v1131
    %1975 = vset.pattern.permute.xlu0 62
    %1976 = vperm.xlu0 %1975, %v1903
    %v1977 = vpop.permute.xlu0 %1976
    %v1979 = vmul.f32 %v1977, %v1140
    %1980 = vset.pattern.permute.xlu0 63
    %1981 = vperm.xlu0 %1980, %v1903
    %v1982 = vpop.permute.xlu0 %1981
    %v1984 = vmul.f32 %v1982, %v1149
    %v1986 = vrot.slane %v1909, 6
    %v1988 = vadd.f32 %v967, %v1986
    %v1989 = vadd.f32 %v1914, %v1919
    %v1990 = vadd.f32 %v1924, %v1929
    %v1991 = vadd.f32 %v1934, %v1939
    %v1992 = vadd.f32 %v1944, %v1949
    %v1993 = vadd.f32 %v1954, %v1959
    %v1994 = vadd.f32 %v1964, %v1969
    %v1995 = vadd.f32 %v1974, %v1979
    %v1997 = vrot.slane %v1989, 6
    %v1999 = vadd.f32 %v1988, %v1997
    %v2000 = vadd.f32 %v1990, %v1991
    %v2001 = vadd.f32 %v1992, %v1993
    %v2002 = vadd.f32 %v1994, %v1995
    %v2004 = vrot.slane %v2000, 6
    %v2006 = vadd.f32 %v1999, %v2004
    %v2007 = vadd.f32 %v2001, %v2002
    %v2009 = vrot.slane %v2007, 6
    %v2011 = vadd.f32 %v2006, %v2009
    %v2013 = vrot.slane %v1984, 6
    %v2015 = vadd.f32 %v2011, %v2013
    %v2016 = vxor.u32 %v2015, 2147483648
    %v2017 = vmul.f32 %v2016, 1.442695
    %v2018 = vpow.pop %v2017
    %v2019 = vadd.f32 %v2018, 1.0
    %v2020 = vrcp.pop %v2019
    %v2021 = vmul.f32 1.0, %v2020
    %v2022 = vtanh.pop %v2015
    %v2024 = vrot.slane %v1897, 6
    %v2026 = vmul.f32 %v2021, %v2024
    %2028 = vrot.lane.b32.xlu0 %v2022, 96
    %v2029 = vpop.permute.xlu0 %2028
    %v2031 = vmul.f32 %v2021, %v2029
    %2033 = vrot.lane.b32.xlu0 %v2031, 16
    %v2034 = vpop.permute.xlu0 %2033
    %v2036 = vadd.f32 %v2026, %v2034
    %v2037 = vtanh.pop %v2036
    %2039 = vrot.lane.b32.xlu0 %v2037, 32
    %v2040 = vpop.permute.xlu0 %2039
    %v2042 = vmul.f32 %v2021, %v2040
    %2044 = vset.pattern.permute.xlu0 48
    %2045 = vperm.xlu0 %2044, %v2042
    %v2046 = vpop.permute.xlu0 %2045
    %v2048 = vmul.f32 %v2046, %v1014
    %2049 = vset.pattern.permute.xlu0 49
    %2050 = vperm.xlu0 %2049, %v2042
    %v2051 = vpop.permute.xlu0 %2050
    %v2053 = vmul.f32 %v2051, %v1023
    %2054 = vset.pattern.permute.xlu0 50
    %2055 = vperm.xlu0 %2054, %v2042
    %v2056 = vpop.permute.xlu0 %2055
    %v2058 = vmul.f32 %v2056, %v1032
    %2059 = vset.pattern.permute.xlu0 51
    %2060 = vperm.xlu0 %2059, %v2042
    %v2061 = vpop.permute.xlu0 %2060
    %v2063 = vmul.f32 %v2061, %v1041
    %2064 = vset.pattern.permute.xlu0 52
    %2065 = vperm.xlu0 %2064, %v2042
    %v2066 = vpop.permute.xlu0 %2065
    %v2068 = vmul.f32 %v2066, %v1050
    %2069 = vset.pattern.permute.xlu0 53
    %2070 = vperm.xlu0 %2069, %v2042
    %v2071 = vpop.permute.xlu0 %2070
    %v2073 = vmul.f32 %v2071, %v1059
    %2074 = vset.pattern.permute.xlu0 54
    %2075 = vperm.xlu0 %2074, %v2042
    %v2076 = vpop.permute.xlu0 %2075
    %v2078 = vmul.f32 %v2076, %v1068
    %2079 = vset.pattern.permute.xlu0 55
    %2080 = vperm.xlu0 %2079, %v2042
    %v2081 = vpop.permute.xlu0 %2080
    %v2083 = vmul.f32 %v2081, %v1077
    %2084 = vset.pattern.permute.xlu0 56
    %2085 = vperm.xlu0 %2084, %v2042
    %v2086 = vpop.permute.xlu0 %2085
    %v2088 = vmul.f32 %v2086, %v1086
    %2089 = vset.pattern.permute.xlu0 57
    %2090 = vperm.xlu0 %2089, %v2042
    %v2091 = vpop.permute.xlu0 %2090
    %v2093 = vmul.f32 %v2091, %v1095
    %2094 = vset.pattern.permute.xlu0 58
    %2095 = vperm.xlu0 %2094, %v2042
    %v2096 = vpop.permute.xlu0 %2095
    %v2098 = vmul.f32 %v2096, %v1104
    %2099 = vset.pattern.permute.xlu0 59
    %2100 = vperm.xlu0 %2099, %v2042
    %v2101 = vpop.permute.xlu0 %2100
    %v2103 = vmul.f32 %v2101, %v1113
    %2104 = vset.pattern.permute.xlu0 60
    %2105 = vperm.xlu0 %2104, %v2042
    %v2106 = vpop.permute.xlu0 %2105
    %v2108 = vmul.f32 %v2106, %v1122
    %2109 = vset.pattern.permute.xlu0 61
    %2110 = vperm.xlu0 %2109, %v2042
    %v2111 = vpop.permute.xlu0 %2110
    %v2113 = vmul.f32 %v2111, %v1131
    %2114 = vset.pattern.permute.xlu0 62
    %2115 = vperm.xlu0 %2114, %v2042
    %v2116 = vpop.permute.xlu0 %2115
    %v2118 = vmul.f32 %v2116, %v1140
    %2119 = vset.pattern.permute.xlu0 63
    %2120 = vperm.xlu0 %2119, %v2042
    %v2121 = vpop.permute.xlu0 %2120
    %v2123 = vmul.f32 %v2121, %v1149
    %v2125 = vrot.slane %v2048, 6
    %v2127 = vadd.f32 %v972, %v2125
    %v2128 = vadd.f32 %v2053, %v2058
    %v2129 = vadd.f32 %v2063, %v2068
    %v2130 = vadd.f32 %v2073, %v2078
    %v2131 = vadd.f32 %v2083, %v2088
    %v2132 = vadd.f32 %v2093, %v2098
    %v2133 = vadd.f32 %v2103, %v2108
    %v2134 = vadd.f32 %v2113, %v2118
    %v2136 = vrot.slane %v2128, 6
    %v2138 = vadd.f32 %v2127, %v2136
    %v2139 = vadd.f32 %v2129, %v2130
    %v2140 = vadd.f32 %v2131, %v2132
    %v2141 = vadd.f32 %v2133, %v2134
    %v2143 = vrot.slane %v2139, 6
    %v2145 = vadd.f32 %v2138, %v2143
    %v2146 = vadd.f32 %v2140, %v2141
    %v2148 = vrot.slane %v2146, 6
    %v2150 = vadd.f32 %v2145, %v2148
    %v2152 = vrot.slane %v2123, 6
    %v2154 = vadd.f32 %v2150, %v2152
    %v2155 = vxor.u32 %v2154, 2147483648
    %v2156 = vmul.f32 %v2155, 1.442695
    %v2157 = vpow.pop %v2156
    %v2158 = vadd.f32 %v2157, 1.0
    %v2159 = vrcp.pop %v2158
    %v2160 = vmul.f32 1.0, %v2159
    %v2161 = vtanh.pop %v2154
    %v2163 = vrot.slane %v2036, 6
    %v2165 = vmul.f32 %v2160, %v2163
    %2167 = vrot.lane.b32.xlu0 %v2161, 96
    %v2168 = vpop.permute.xlu0 %2167
    %v2170 = vmul.f32 %v2160, %v2168
    %2172 = vrot.lane.b32.xlu0 %v2170, 16
    %v2173 = vpop.permute.xlu0 %2172
    %v2175 = vadd.f32 %v2165, %v2173
    %v2176 = vtanh.pop %v2175
    %2178 = vrot.lane.b32.xlu0 %v2176, 32
    %v2179 = vpop.permute.xlu0 %2178
    %v2181 = vmul.f32 %v2160, %v2179
    %2183 = vset.pattern.permute.xlu0 48
    %2184 = vperm.xlu0 %2183, %v2181
    %v2185 = vpop.permute.xlu0 %2184
    %v2187 = vmul.f32 %v2185, %v1014
    %2188 = vset.pattern.permute.xlu0 49
    %2189 = vperm.xlu0 %2188, %v2181
    %v2190 = vpop.permute.xlu0 %2189
    %v2192 = vmul.f32 %v2190, %v1023
    %2193 = vset.pattern.permute.xlu0 50
    %2194 = vperm.xlu0 %2193, %v2181
    %v2195 = vpop.permute.xlu0 %2194
    %v2197 = vmul.f32 %v2195, %v1032
    %2198 = vset.pattern.permute.xlu0 51
    %2199 = vperm.xlu0 %2198, %v2181
    %v2200 = vpop.permute.xlu0 %2199
    %v2202 = vmul.f32 %v2200, %v1041
    %2203 = vset.pattern.permute.xlu0 52
    %2204 = vperm.xlu0 %2203, %v2181
    %v2205 = vpop.permute.xlu0 %2204
    %v2207 = vmul.f32 %v2205, %v1050
    %2208 = vset.pattern.permute.xlu0 53
    %2209 = vperm.xlu0 %2208, %v2181
    %v2210 = vpop.permute.xlu0 %2209
    %v2212 = vmul.f32 %v2210, %v1059
    %2213 = vset.pattern.permute.xlu0 54
    %2214 = vperm.xlu0 %2213, %v2181
    %v2215 = vpop.permute.xlu0 %2214
    %v2217 = vmul.f32 %v2215, %v1068
    %2218 = vset.pattern.permute.xlu0 55
    %2219 = vperm.xlu0 %2218, %v2181
    %v2220 = vpop.permute.xlu0 %2219
    %v2222 = vmul.f32 %v2220, %v1077
    %2223 = vset.pattern.permute.xlu0 56
    %2224 = vperm.xlu0 %2223, %v2181
    %v2225 = vpop.permute.xlu0 %2224
    %v2227 = vmul.f32 %v2225, %v1086
    %2228 = vset.pattern.permute.xlu0 57
    %2229 = vperm.xlu0 %2228, %v2181
    %v2230 = vpop.permute.xlu0 %2229
    %v2232 = vmul.f32 %v2230, %v1095
    %2233 = vset.pattern.permute.xlu0 58
    %2234 = vperm.xlu0 %2233, %v2181
    %v2235 = vpop.permute.xlu0 %2234
    %v2237 = vmul.f32 %v2235, %v1104
    %2238 = vset.pattern.permute.xlu0 59
    %2239 = vperm.xlu0 %2238, %v2181
    %v2240 = vpop.permute.xlu0 %2239
    %v2242 = vmul.f32 %v2240, %v1113
    %2243 = vset.pattern.permute.xlu0 60
    %2244 = vperm.xlu0 %2243, %v2181
    %v2245 = vpop.permute.xlu0 %2244
    %v2247 = vmul.f32 %v2245, %v1122
    %2248 = vset.pattern.permute.xlu0 61
    %2249 = vperm.xlu0 %2248, %v2181
    %v2250 = vpop.permute.xlu0 %2249
    %v2252 = vmul.f32 %v2250, %v1131
    %2253 = vset.pattern.permute.xlu0 62
    %2254 = vperm.xlu0 %2253, %v2181
    %v2255 = vpop.permute.xlu0 %2254
    %v2257 = vmul.f32 %v2255, %v1140
    %2258 = vset.pattern.permute.xlu0 63
    %2259 = vperm.xlu0 %2258, %v2181
    %v2260 = vpop.permute.xlu0 %2259
    %v2262 = vmul.f32 %v2260, %v1149
    %v2264 = vrot.slane %v2187, 6
    %v2266 = vadd.f32 %v972, %v2264
    %v2267 = vadd.f32 %v2192, %v2197
    %v2268 = vadd.f32 %v2202, %v2207
    %v2269 = vadd.f32 %v2212, %v2217
    %v2270 = vadd.f32 %v2222, %v2227
    %v2271 = vadd.f32 %v2232, %v2237
    %v2272 = vadd.f32 %v2242, %v2247
    %v2273 = vadd.f32 %v2252, %v2257
    %v2275 = vrot.slane %v2267, 6
    %v2277 = vadd.f32 %v2266, %v2275
    %v2278 = vadd.f32 %v2268, %v2269
    %v2279 = vadd.f32 %v2270, %v2271
    %v2280 = vadd.f32 %v2272, %v2273
    %v2282 = vrot.slane %v2278, 6
    %v2284 = vadd.f32 %v2277, %v2282
    %v2285 = vadd.f32 %v2279, %v2280
    %v2287 = vrot.slane %v2285, 6
    %v2289 = vadd.f32 %v2284, %v2287
    %v2291 = vrot.slane %v2262, 6
    %v2293 = vadd.f32 %v2289, %v2291
    %v2294 = vxor.u32 %v2293, 2147483648
    %v2295 = vmul.f32 %v2294, 1.442695
    %v2296 = vpow.pop %v2295
    %v2297 = vadd.f32 %v2296, 1.0
    %v2298 = vrcp.pop %v2297
    %v2299 = vmul.f32 1.0, %v2298
    %v2300 = vtanh.pop %v2293
    %v2302 = vrot.slane %v2175, 6
    %v2304 = vmul.f32 %v2299, %v2302
    %2306 = vrot.lane.b32.xlu0 %v2300, 96
    %v2307 = vpop.permute.xlu0 %2306
    %v2309 = vmul.f32 %v2299, %v2307
    %2311 = vrot.lane.b32.xlu0 %v2309, 16
    %v2312 = vpop.permute.xlu0 %2311
    %v2314 = vadd.f32 %v2304, %v2312
    %v2315 = vtanh.pop %v2314
    %2317 = vrot.lane.b32.xlu0 %v2315, 32
    %v2318 = vpop.permute.xlu0 %2317
    %v2320 = vmul.f32 %v2299, %v2318
    %2322 = vset.pattern.permute.xlu0 48
    %2323 = vperm.xlu0 %2322, %v2320
    %v2324 = vpop.permute.xlu0 %2323
    %v2326 = vmul.f32 %v2324, %v1014
    %2327 = vset.pattern.permute.xlu0 49
    %2328 = vperm.xlu0 %2327, %v2320
    %v2329 = vpop.permute.xlu0 %2328
    %v2331 = vmul.f32 %v2329, %v1023
    %2332 = vset.pattern.permute.xlu0 50
    %2333 = vperm.xlu0 %2332, %v2320
    %v2334 = vpop.permute.xlu0 %2333
    %v2336 = vmul.f32 %v2334, %v1032
    %2337 = vset.pattern.permute.xlu0 51
    %2338 = vperm.xlu0 %2337, %v2320
    %v2339 = vpop.permute.xlu0 %2338
    %v2341 = vmul.f32 %v2339, %v1041
    %2342 = vset.pattern.permute.xlu0 52
    %2343 = vperm.xlu0 %2342, %v2320
    %v2344 = vpop.permute.xlu0 %2343
    %v2346 = vmul.f32 %v2344, %v1050
    %2347 = vset.pattern.permute.xlu0 53
    %2348 = vperm.xlu0 %2347, %v2320
    %v2349 = vpop.permute.xlu0 %2348
    %v2351 = vmul.f32 %v2349, %v1059
    %2352 = vset.pattern.permute.xlu0 54
    %2353 = vperm.xlu0 %2352, %v2320
    %v2354 = vpop.permute.xlu0 %2353
    %v2356 = vmul.f32 %v2354, %v1068
    %2357 = vset.pattern.permute.xlu0 55
    %2358 = vperm.xlu0 %2357, %v2320
    %v2359 = vpop.permute.xlu0 %2358
    %v2361 = vmul.f32 %v2359, %v1077
    %2362 = vset.pattern.permute.xlu0 56
    %2363 = vperm.xlu0 %2362, %v2320
    %v2364 = vpop.permute.xlu0 %2363
    %v2366 = vmul.f32 %v2364, %v1086
    %2367 = vset.pattern.permute.xlu0 57
    %2368 = vperm.xlu0 %2367, %v2320
    %v2369 = vpop.permute.xlu0 %2368
    %v2371 = vmul.f32 %v2369, %v1095
    %2372 = vset.pattern.permute.xlu0 58
    %2373 = vperm.xlu0 %2372, %v2320
    %v2374 = vpop.permute.xlu0 %2373
    %v2376 = vmul.f32 %v2374, %v1104
    %2377 = vset.pattern.permute.xlu0 59
    %2378 = vperm.xlu0 %2377, %v2320
    %v2379 = vpop.permute.xlu0 %2378
    %v2381 = vmul.f32 %v2379, %v1113
    %2382 = vset.pattern.permute.xlu0 60
    %2383 = vperm.xlu0 %2382, %v2320
    %v2384 = vpop.permute.xlu0 %2383
    %v2386 = vmul.f32 %v2384, %v1122
    %2387 = vset.pattern.permute.xlu0 61
    %2388 = vperm.xlu0 %2387, %v2320
    %v2389 = vpop.permute.xlu0 %2388
    %v2391 = vmul.f32 %v2389, %v1131
    %2392 = vset.pattern.permute.xlu0 62
    %2393 = vperm.xlu0 %2392, %v2320
    %v2394 = vpop.permute.xlu0 %2393
    %v2396 = vmul.f32 %v2394, %v1140
    %2397 = vset.pattern.permute.xlu0 63
    %2398 = vperm.xlu0 %2397, %v2320
    %v2399 = vpop.permute.xlu0 %2398
    %v2401 = vmul.f32 %v2399, %v1149
    %v2403 = vrot.slane %v2326, 6
    %v2405 = vadd.f32 %v972, %v2403
    %v2406 = vadd.f32 %v2331, %v2336
    %v2407 = vadd.f32 %v2341, %v2346
    %v2408 = vadd.f32 %v2351, %v2356
    %v2409 = vadd.f32 %v2361, %v2366
    %v2410 = vadd.f32 %v2371, %v2376
    %v2411 = vadd.f32 %v2381, %v2386
    %v2412 = vadd.f32 %v2391, %v2396
    %v2414 = vrot.slane %v2406, 6
    %v2416 = vadd.f32 %v2405, %v2414
    %v2417 = vadd.f32 %v2407, %v2408
    %v2418 = vadd.f32 %v2409, %v2410
    %v2419 = vadd.f32 %v2411, %v2412
    %v2421 = vrot.slane %v2417, 6
    %v2423 = vadd.f32 %v2416, %v2421
    %v2424 = vadd.f32 %v2418, %v2419
    %v2426 = vrot.slane %v2424, 6
    %v2428 = vadd.f32 %v2423, %v2426
    %v2430 = vrot.slane %v2401, 6
    %v2432 = vadd.f32 %v2428, %v2430
    %v2433 = vxor.u32 %v2432, 2147483648
    %v2434 = vmul.f32 %v2433, 1.442695
    %v2435 = vpow.pop %v2434
    %v2436 = vadd.f32 %v2435, 1.0
    %v2437 = vrcp.pop %v2436
    %v2438 = vmul.f32 1.0, %v2437
    %v2439 = vtanh.pop %v2432
    %v2441 = vrot.slane %v2314, 6
    %v2443 = vmul.f32 %v2438, %v2441
    %2445 = vrot.lane.b32.xlu0 %v2439, 96
    %v2446 = vpop.permute.xlu0 %2445
    %v2448 = vmul.f32 %v2438, %v2446
    %2450 = vrot.lane.b32.xlu0 %v2448, 16
    %v2451 = vpop.permute.xlu0 %2450
    %v2453 = vadd.f32 %v2443, %v2451
    %v2454 = vtanh.pop %v2453
    %2456 = vrot.lane.b32.xlu0 %v2454, 32
    %v2457 = vpop.permute.xlu0 %2456
    %v2459 = vmul.f32 %v2438, %v2457
    %2461 = vset.pattern.permute.xlu0 48
    %2462 = vperm.xlu0 %2461, %v2459
    %v2463 = vpop.permute.xlu0 %2462
    %v2465 = vmul.f32 %v2463, %v1014
    %2466 = vset.pattern.permute.xlu0 49
    %2467 = vperm.xlu0 %2466, %v2459
    %v2468 = vpop.permute.xlu0 %2467
    %v2470 = vmul.f32 %v2468, %v1023
    %2471 = vset.pattern.permute.xlu0 50
    %2472 = vperm.xlu0 %2471, %v2459
    %v2473 = vpop.permute.xlu0 %2472
    %v2475 = vmul.f32 %v2473, %v1032
    %2476 = vset.pattern.permute.xlu0 51
    %2477 = vperm.xlu0 %2476, %v2459
    %v2478 = vpop.permute.xlu0 %2477
    %v2480 = vmul.f32 %v2478, %v1041
    %2481 = vset.pattern.permute.xlu0 52
    %2482 = vperm.xlu0 %2481, %v2459
    %v2483 = vpop.permute.xlu0 %2482
    %v2485 = vmul.f32 %v2483, %v1050
    %2486 = vset.pattern.permute.xlu0 53
    %2487 = vperm.xlu0 %2486, %v2459
    %v2488 = vpop.permute.xlu0 %2487
    %v2490 = vmul.f32 %v2488, %v1059
    %2491 = vset.pattern.permute.xlu0 54
    %2492 = vperm.xlu0 %2491, %v2459
    %v2493 = vpop.permute.xlu0 %2492
    %v2495 = vmul.f32 %v2493, %v1068
    %2496 = vset.pattern.permute.xlu0 55
    %2497 = vperm.xlu0 %2496, %v2459
    %v2498 = vpop.permute.xlu0 %2497
    %v2500 = vmul.f32 %v2498, %v1077
    %2501 = vset.pattern.permute.xlu0 56
    %2502 = vperm.xlu0 %2501, %v2459
    %v2503 = vpop.permute.xlu0 %2502
    %v2505 = vmul.f32 %v2503, %v1086
    %2506 = vset.pattern.permute.xlu0 57
    %2507 = vperm.xlu0 %2506, %v2459
    %v2508 = vpop.permute.xlu0 %2507
    %v2510 = vmul.f32 %v2508, %v1095
    %2511 = vset.pattern.permute.xlu0 58
    %2512 = vperm.xlu0 %2511, %v2459
    %v2513 = vpop.permute.xlu0 %2512
    %v2515 = vmul.f32 %v2513, %v1104
    %2516 = vset.pattern.permute.xlu0 59
    %2517 = vperm.xlu0 %2516, %v2459
    %v2518 = vpop.permute.xlu0 %2517
    %v2520 = vmul.f32 %v2518, %v1113
    %2521 = vset.pattern.permute.xlu0 60
    %2522 = vperm.xlu0 %2521, %v2459
    %v2523 = vpop.permute.xlu0 %2522
    %v2525 = vmul.f32 %v2523, %v1122
    %2526 = vset.pattern.permute.xlu0 61
    %2527 = vperm.xlu0 %2526, %v2459
    %v2528 = vpop.permute.xlu0 %2527
    %v2530 = vmul.f32 %v2528, %v1131
    %2531 = vset.pattern.permute.xlu0 62
    %2532 = vperm.xlu0 %2531, %v2459
    %v2533 = vpop.permute.xlu0 %2532
    %v2535 = vmul.f32 %v2533, %v1140
    %2536 = vset.pattern.permute.xlu0 63
    %2537 = vperm.xlu0 %2536, %v2459
    %v2538 = vpop.permute.xlu0 %2537
    %v2540 = vmul.f32 %v2538, %v1149
    %v2542 = vrot.slane %v2465, 6
    %v2544 = vadd.f32 %v972, %v2542
    %v2545 = vadd.f32 %v2470, %v2475
    %v2546 = vadd.f32 %v2480, %v2485
    %v2547 = vadd.f32 %v2490, %v2495
    %v2548 = vadd.f32 %v2500, %v2505
    %v2549 = vadd.f32 %v2510, %v2515
    %v2550 = vadd.f32 %v2520, %v2525
    %v2551 = vadd.f32 %v2530, %v2535
    %v2553 = vrot.slane %v2545, 6
    %v2555 = vadd.f32 %v2544, %v2553
    %v2556 = vadd.f32 %v2546, %v2547
    %v2557 = vadd.f32 %v2548, %v2549
    %v2558 = vadd.f32 %v2550, %v2551
    %v2560 = vrot.slane %v2556, 6
    %v2562 = vadd.f32 %v2555, %v2560
    %v2563 = vadd.f32 %v2557, %v2558
    %v2565 = vrot.slane %v2563, 6
    %v2567 = vadd.f32 %v2562, %v2565
    %v2569 = vrot.slane %v2540, 6
    %v2571 = vadd.f32 %v2567, %v2569
    %v2572 = vxor.u32 %v2571, 2147483648
    %v2573 = vmul.f32 %v2572, 1.442695
    %v2574 = vpow.pop %v2573
    %v2575 = vadd.f32 %v2574, 1.0
    %v2576 = vrcp.pop %v2575
    %v2577 = vmul.f32 1.0, %v2576
    %v2578 = vtanh.pop %v2571
    %v2580 = vrot.slane %v2453, 6
    %v2582 = vmul.f32 %v2577, %v2580
    %2584 = vrot.lane.b32.xlu0 %v2578, 96
    %v2585 = vpop.permute.xlu0 %2584
    %v2587 = vmul.f32 %v2577, %v2585
    %2589 = vrot.lane.b32.xlu0 %v2587, 16
    %v2590 = vpop.permute.xlu0 %2589
    %v2592 = vadd.f32 %v2582, %v2590
    %v2593 = vtanh.pop %v2592
    %2595 = vrot.lane.b32.xlu0 %v2593, 32
    %v2596 = vpop.permute.xlu0 %2595
    %v2598 = vmul.f32 %v2577, %v2596
    %2600 = vset.pattern.permute.xlu0 48
    %2601 = vperm.xlu0 %2600, %v2598
    %v2602 = vpop.permute.xlu0 %2601
    %v2604 = vmul.f32 %v2602, %v1014
    %2605 = vset.pattern.permute.xlu0 49
    %2606 = vperm.xlu0 %2605, %v2598
    %v2607 = vpop.permute.xlu0 %2606
    %v2609 = vmul.f32 %v2607, %v1023
    %2610 = vset.pattern.permute.xlu0 50
    %2611 = vperm.xlu0 %2610, %v2598
    %v2612 = vpop.permute.xlu0 %2611
    %v2614 = vmul.f32 %v2612, %v1032
    %2615 = vset.pattern.permute.xlu0 51
    %2616 = vperm.xlu0 %2615, %v2598
    %v2617 = vpop.permute.xlu0 %2616
    %v2619 = vmul.f32 %v2617, %v1041
    %2620 = vset.pattern.permute.xlu0 52
    %2621 = vperm.xlu0 %2620, %v2598
    %v2622 = vpop.permute.xlu0 %2621
    %v2624 = vmul.f32 %v2622, %v1050
    %2625 = vset.pattern.permute.xlu0 53
    %2626 = vperm.xlu0 %2625, %v2598
    %v2627 = vpop.permute.xlu0 %2626
    %v2629 = vmul.f32 %v2627, %v1059
    %2630 = vset.pattern.permute.xlu0 54
    %2631 = vperm.xlu0 %2630, %v2598
    %v2632 = vpop.permute.xlu0 %2631
    %v2634 = vmul.f32 %v2632, %v1068
    %2635 = vset.pattern.permute.xlu0 55
    %2636 = vperm.xlu0 %2635, %v2598
    %v2637 = vpop.permute.xlu0 %2636
    %v2639 = vmul.f32 %v2637, %v1077
    %2640 = vset.pattern.permute.xlu0 56
    %2641 = vperm.xlu0 %2640, %v2598
    %v2642 = vpop.permute.xlu0 %2641
    %v2644 = vmul.f32 %v2642, %v1086
    %2645 = vset.pattern.permute.xlu0 57
    %2646 = vperm.xlu0 %2645, %v2598
    %v2647 = vpop.permute.xlu0 %2646
    %v2649 = vmul.f32 %v2647, %v1095
    %2650 = vset.pattern.permute.xlu0 58
    %2651 = vperm.xlu0 %2650, %v2598
    %v2652 = vpop.permute.xlu0 %2651
    %v2654 = vmul.f32 %v2652, %v1104
    %2655 = vset.pattern.permute.xlu0 59
    %2656 = vperm.xlu0 %2655, %v2598
    %v2657 = vpop.permute.xlu0 %2656
    %v2659 = vmul.f32 %v2657, %v1113
    %2660 = vset.pattern.permute.xlu0 60
    %2661 = vperm.xlu0 %2660, %v2598
    %v2662 = vpop.permute.xlu0 %2661
    %v2664 = vmul.f32 %v2662, %v1122
    %2665 = vset.pattern.permute.xlu0 61
    %2666 = vperm.xlu0 %2665, %v2598
    %v2667 = vpop.permute.xlu0 %2666
    %v2669 = vmul.f32 %v2667, %v1131
    %2670 = vset.pattern.permute.xlu0 62
    %2671 = vperm.xlu0 %2670, %v2598
    %v2672 = vpop.permute.xlu0 %2671
    %v2674 = vmul.f32 %v2672, %v1140
    %2675 = vset.pattern.permute.xlu0 63
    %2676 = vperm.xlu0 %2675, %v2598
    %v2677 = vpop.permute.xlu0 %2676
    %v2679 = vmul.f32 %v2677, %v1149
    %v2681 = vrot.slane %v2604, 6
    %v2683 = vadd.f32 %v977, %v2681
    %v2684 = vadd.f32 %v2609, %v2614
    %v2685 = vadd.f32 %v2619, %v2624
    %v2686 = vadd.f32 %v2629, %v2634
    %v2687 = vadd.f32 %v2639, %v2644
    %v2688 = vadd.f32 %v2649, %v2654
    %v2689 = vadd.f32 %v2659, %v2664
    %v2690 = vadd.f32 %v2669, %v2674
    %v2692 = vrot.slane %v2684, 6
    %v2694 = vadd.f32 %v2683, %v2692
    %v2695 = vadd.f32 %v2685, %v2686
    %v2696 = vadd.f32 %v2687, %v2688
    %v2697 = vadd.f32 %v2689, %v2690
    %v2699 = vrot.slane %v2695, 6
    %v2701 = vadd.f32 %v2694, %v2699
    %v2702 = vadd.f32 %v2696, %v2697
    %v2704 = vrot.slane %v2702, 6
    %v2706 = vadd.f32 %v2701, %v2704
    %v2708 = vrot.slane %v2679, 6
    %v2710 = vadd.f32 %v2706, %v2708
    %v2711 = vxor.u32 %v2710, 2147483648
    %v2712 = vmul.f32 %v2711, 1.442695
    %v2713 = vpow.pop %v2712
    %v2714 = vadd.f32 %v2713, 1.0
    %v2715 = vrcp.pop %v2714
    %v2716 = vmul.f32 1.0, %v2715
    %v2717 = vtanh.pop %v2710
    %v2719 = vrot.slane %v2592, 6
    %v2721 = vmul.f32 %v2716, %v2719
    %2723 = vrot.lane.b32.xlu0 %v2717, 96
    %v2724 = vpop.permute.xlu0 %2723
    %v2726 = vmul.f32 %v2716, %v2724
    %2728 = vrot.lane.b32.xlu0 %v2726, 16
    %v2729 = vpop.permute.xlu0 %2728
    %v2731 = vadd.f32 %v2721, %v2729
    %v2732 = vtanh.pop %v2731
    %2734 = vrot.lane.b32.xlu0 %v2732, 32
    %v2735 = vpop.permute.xlu0 %2734
    %v2737 = vmul.f32 %v2716, %v2735
    %2739 = vset.pattern.permute.xlu0 48
    %2740 = vperm.xlu0 %2739, %v2737
    %v2741 = vpop.permute.xlu0 %2740
    %v2743 = vmul.f32 %v2741, %v1014
    %2744 = vset.pattern.permute.xlu0 49
    %2745 = vperm.xlu0 %2744, %v2737
    %v2746 = vpop.permute.xlu0 %2745
    %v2748 = vmul.f32 %v2746, %v1023
    %2749 = vset.pattern.permute.xlu0 50
    %2750 = vperm.xlu0 %2749, %v2737
    %v2751 = vpop.permute.xlu0 %2750
    %v2753 = vmul.f32 %v2751, %v1032
    %2754 = vset.pattern.permute.xlu0 51
    %2755 = vperm.xlu0 %2754, %v2737
    %v2756 = vpop.permute.xlu0 %2755
    %v2758 = vmul.f32 %v2756, %v1041
    %2759 = vset.pattern.permute.xlu0 52
    %2760 = vperm.xlu0 %2759, %v2737
    %v2761 = vpop.permute.xlu0 %2760
    %v2763 = vmul.f32 %v2761, %v1050
    %2764 = vset.pattern.permute.xlu0 53
    %2765 = vperm.xlu0 %2764, %v2737
    %v2766 = vpop.permute.xlu0 %2765
    %v2768 = vmul.f32 %v2766, %v1059
    %2769 = vset.pattern.permute.xlu0 54
    %2770 = vperm.xlu0 %2769, %v2737
    %v2771 = vpop.permute.xlu0 %2770
    %v2773 = vmul.f32 %v2771, %v1068
    %2774 = vset.pattern.permute.xlu0 55
    %2775 = vperm.xlu0 %2774, %v2737
    %v2776 = vpop.permute.xlu0 %2775
    %v2778 = vmul.f32 %v2776, %v1077
    %2779 = vset.pattern.permute.xlu0 56
    %2780 = vperm.xlu0 %2779, %v2737
    %v2781 = vpop.permute.xlu0 %2780
    %v2783 = vmul.f32 %v2781, %v1086
    %2784 = vset.pattern.permute.xlu0 57
    %2785 = vperm.xlu0 %2784, %v2737
    %v2786 = vpop.permute.xlu0 %2785
    %v2788 = vmul.f32 %v2786, %v1095
    %2789 = vset.pattern.permute.xlu0 58
    %2790 = vperm.xlu0 %2789, %v2737
    %v2791 = vpop.permute.xlu0 %2790
    %v2793 = vmul.f32 %v2791, %v1104
    %2794 = vset.pattern.permute.xlu0 59
    %2795 = vperm.xlu0 %2794, %v2737
    %v2796 = vpop.permute.xlu0 %2795
    %v2798 = vmul.f32 %v2796, %v1113
    %2799 = vset.pattern.permute.xlu0 60
    %2800 = vperm.xlu0 %2799, %v2737
    %v2801 = vpop.permute.xlu0 %2800
    %v2803 = vmul.f32 %v2801, %v1122
    %2804 = vset.pattern.permute.xlu0 61
    %2805 = vperm.xlu0 %2804, %v2737
    %v2806 = vpop.permute.xlu0 %2805
    %v2808 = vmul.f32 %v2806, %v1131
    %2809 = vset.pattern.permute.xlu0 62
    %2810 = vperm.xlu0 %2809, %v2737
    %v2811 = vpop.permute.xlu0 %2810
    %v2813 = vmul.f32 %v2811, %v1140
    %2814 = vset.pattern.permute.xlu0 63
    %2815 = vperm.xlu0 %2814, %v2737
    %v2816 = vpop.permute.xlu0 %2815
    %v2818 = vmul.f32 %v2816, %v1149
    %v2820 = vrot.slane %v2743, 6
    %v2822 = vadd.f32 %v977, %v2820
    %v2823 = vadd.f32 %v2748, %v2753
    %v2824 = vadd.f32 %v2758, %v2763
    %v2825 = vadd.f32 %v2768, %v2773
    %v2826 = vadd.f32 %v2778, %v2783
    %v2827 = vadd.f32 %v2788, %v2793
    %v2828 = vadd.f32 %v2798, %v2803
    %v2829 = vadd.f32 %v2808, %v2813
    %v2831 = vrot.slane %v2823, 6
    %v2833 = vadd.f32 %v2822, %v2831
    %v2834 = vadd.f32 %v2824, %v2825
    %v2835 = vadd.f32 %v2826, %v2827
    %v2836 = vadd.f32 %v2828, %v2829
    %v2838 = vrot.slane %v2834, 6
    %v2840 = vadd.f32 %v2833, %v2838
    %v2841 = vadd.f32 %v2835, %v2836
    %v2843 = vrot.slane %v2841, 6
    %v2845 = vadd.f32 %v2840, %v2843
    %v2847 = vrot.slane %v2818, 6
    %v2849 = vadd.f32 %v2845, %v2847
    %v2850 = vxor.u32 %v2849, 2147483648
    %v2851 = vmul.f32 %v2850, 1.442695
    %v2852 = vpow.pop %v2851
    %v2853 = vadd.f32 %v2852, 1.0
    %v2854 = vrcp.pop %v2853
    %v2855 = vmul.f32 1.0, %v2854
    %v2856 = vtanh.pop %v2849
    %v2858 = vrot.slane %v2731, 6
    %v2860 = vmul.f32 %v2855, %v2858
    %2862 = vrot.lane.b32.xlu0 %v2856, 96
    %v2863 = vpop.permute.xlu0 %2862
    %v2865 = vmul.f32 %v2855, %v2863
    %2867 = vrot.lane.b32.xlu0 %v2865, 16
    %v2868 = vpop.permute.xlu0 %2867
    %v2870 = vadd.f32 %v2860, %v2868
    %v2871 = vtanh.pop %v2870
    %2873 = vrot.lane.b32.xlu0 %v2871, 32
    %v2874 = vpop.permute.xlu0 %2873
    %v2876 = vmul.f32 %v2855, %v2874
    %2878 = vset.pattern.permute.xlu0 48
    %2879 = vperm.xlu0 %2878, %v2876
    %v2880 = vpop.permute.xlu0 %2879
    %v2882 = vmul.f32 %v2880, %v1014
    %2883 = vset.pattern.permute.xlu0 49
    %2884 = vperm.xlu0 %2883, %v2876
    %v2885 = vpop.permute.xlu0 %2884
    %v2887 = vmul.f32 %v2885, %v1023
    %2888 = vset.pattern.permute.xlu0 50
    %2889 = vperm.xlu0 %2888, %v2876
    %v2890 = vpop.permute.xlu0 %2889
    %v2892 = vmul.f32 %v2890, %v1032
    %2893 = vset.pattern.permute.xlu0 51
    %2894 = vperm.xlu0 %2893, %v2876
    %v2895 = vpop.permute.xlu0 %2894
    %v2897 = vmul.f32 %v2895, %v1041
    %2898 = vset.pattern.permute.xlu0 52
    %2899 = vperm.xlu0 %2898, %v2876
    %v2900 = vpop.permute.xlu0 %2899
    %v2902 = vmul.f32 %v2900, %v1050
    %2903 = vset.pattern.permute.xlu0 53
    %2904 = vperm.xlu0 %2903, %v2876
    %v2905 = vpop.permute.xlu0 %2904
    %v2907 = vmul.f32 %v2905, %v1059
    %2908 = vset.pattern.permute.xlu0 54
    %2909 = vperm.xlu0 %2908, %v2876
    %v2910 = vpop.permute.xlu0 %2909
    %v2912 = vmul.f32 %v2910, %v1068
    %2913 = vset.pattern.permute.xlu0 55
    %2914 = vperm.xlu0 %2913, %v2876
    %v2915 = vpop.permute.xlu0 %2914
    %v2917 = vmul.f32 %v2915, %v1077
    %2918 = vset.pattern.permute.xlu0 56
    %2919 = vperm.xlu0 %2918, %v2876
    %v2920 = vpop.permute.xlu0 %2919
    %v2922 = vmul.f32 %v2920, %v1086
    %2923 = vset.pattern.permute.xlu0 57
    %2924 = vperm.xlu0 %2923, %v2876
    %v2925 = vpop.permute.xlu0 %2924
    %v2927 = vmul.f32 %v2925, %v1095
    %2928 = vset.pattern.permute.xlu0 58
    %2929 = vperm.xlu0 %2928, %v2876
    %v2930 = vpop.permute.xlu0 %2929
    %v2932 = vmul.f32 %v2930, %v1104
    %2933 = vset.pattern.permute.xlu0 59
    %2934 = vperm.xlu0 %2933, %v2876
    %v2935 = vpop.permute.xlu0 %2934
    %v2937 = vmul.f32 %v2935, %v1113
    %2938 = vset.pattern.permute.xlu0 60
    %2939 = vperm.xlu0 %2938, %v2876
    %v2940 = vpop.permute.xlu0 %2939
    %v2942 = vmul.f32 %v2940, %v1122
    %2943 = vset.pattern.permute.xlu0 61
    %2944 = vperm.xlu0 %2943, %v2876
    %v2945 = vpop.permute.xlu0 %2944
    %v2947 = vmul.f32 %v2945, %v1131
    %2948 = vset.pattern.permute.xlu0 62
    %2949 = vperm.xlu0 %2948, %v2876
    %v2950 = vpop.permute.xlu0 %2949
    %v2952 = vmul.f32 %v2950, %v1140
    %2953 = vset.pattern.permute.xlu0 63
    %2954 = vperm.xlu0 %2953, %v2876
    %v2955 = vpop.permute.xlu0 %2954
    %v2957 = vmul.f32 %v2955, %v1149
    %v2959 = vrot.slane %v2882, 6
    %v2961 = vadd.f32 %v977, %v2959
    %v2962 = vadd.f32 %v2887, %v2892
    %v2963 = vadd.f32 %v2897, %v2902
    %v2964 = vadd.f32 %v2907, %v2912
    %v2965 = vadd.f32 %v2917, %v2922
    %v2966 = vadd.f32 %v2927, %v2932
    %v2967 = vadd.f32 %v2937, %v2942
    %v2968 = vadd.f32 %v2947, %v2952
    %v2970 = vrot.slane %v2962, 6
    %v2972 = vadd.f32 %v2961, %v2970
    %v2973 = vadd.f32 %v2963, %v2964
    %v2974 = vadd.f32 %v2965, %v2966
    %v2975 = vadd.f32 %v2967, %v2968
    %v2977 = vrot.slane %v2973, 6
    %v2979 = vadd.f32 %v2972, %v2977
    %v2980 = vadd.f32 %v2974, %v2975
    %v2982 = vrot.slane %v2980, 6
    %v2984 = vadd.f32 %v2979, %v2982
    %v2986 = vrot.slane %v2957, 6
    %v2988 = vadd.f32 %v2984, %v2986
    %v2989 = vxor.u32 %v2988, 2147483648
    %v2990 = vmul.f32 %v2989, 1.442695
    %v2991 = vpow.pop %v2990
    %v2992 = vadd.f32 %v2991, 1.0
    %v2993 = vrcp.pop %v2992
    %v2994 = vmul.f32 1.0, %v2993
    %v2995 = vtanh.pop %v2988
    %v2997 = vrot.slane %v2870, 6
    %v2999 = vmul.f32 %v2994, %v2997
    %3001 = vrot.lane.b32.xlu0 %v2995, 96
    %v3002 = vpop.permute.xlu0 %3001
    %v3004 = vmul.f32 %v2994, %v3002
    %3006 = vrot.lane.b32.xlu0 %v3004, 16
    %v3007 = vpop.permute.xlu0 %3006
    %v3009 = vadd.f32 %v2999, %v3007
    %v3010 = vtanh.pop %v3009
    %3012 = vrot.lane.b32.xlu0 %v3010, 32
    %v3013 = vpop.permute.xlu0 %3012
    %v3015 = vmul.f32 %v2994, %v3013
    %3017 = vset.pattern.permute.xlu0 48
    %3018 = vperm.xlu0 %3017, %v3015
    %v3019 = vpop.permute.xlu0 %3018
    %v3021 = vmul.f32 %v3019, %v1014
    %3022 = vset.pattern.permute.xlu0 49
    %3023 = vperm.xlu0 %3022, %v3015
    %v3024 = vpop.permute.xlu0 %3023
    %v3026 = vmul.f32 %v3024, %v1023
    %3027 = vset.pattern.permute.xlu0 50
    %3028 = vperm.xlu0 %3027, %v3015
    %v3029 = vpop.permute.xlu0 %3028
    %v3031 = vmul.f32 %v3029, %v1032
    %3032 = vset.pattern.permute.xlu0 51
    %3033 = vperm.xlu0 %3032, %v3015
    %v3034 = vpop.permute.xlu0 %3033
    %v3036 = vmul.f32 %v3034, %v1041
    %3037 = vset.pattern.permute.xlu0 52
    %3038 = vperm.xlu0 %3037, %v3015
    %v3039 = vpop.permute.xlu0 %3038
    %v3041 = vmul.f32 %v3039, %v1050
    %3042 = vset.pattern.permute.xlu0 53
    %3043 = vperm.xlu0 %3042, %v3015
    %v3044 = vpop.permute.xlu0 %3043
    %v3046 = vmul.f32 %v3044, %v1059
    %3047 = vset.pattern.permute.xlu0 54
    %3048 = vperm.xlu0 %3047, %v3015
    %v3049 = vpop.permute.xlu0 %3048
    %v3051 = vmul.f32 %v3049, %v1068
    %3052 = vset.pattern.permute.xlu0 55
    %3053 = vperm.xlu0 %3052, %v3015
    %v3054 = vpop.permute.xlu0 %3053
    %v3056 = vmul.f32 %v3054, %v1077
    %3057 = vset.pattern.permute.xlu0 56
    %3058 = vperm.xlu0 %3057, %v3015
    %v3059 = vpop.permute.xlu0 %3058
    %v3061 = vmul.f32 %v3059, %v1086
    %3062 = vset.pattern.permute.xlu0 57
    %3063 = vperm.xlu0 %3062, %v3015
    %v3064 = vpop.permute.xlu0 %3063
    %v3066 = vmul.f32 %v3064, %v1095
    %3067 = vset.pattern.permute.xlu0 58
    %3068 = vperm.xlu0 %3067, %v3015
    %v3069 = vpop.permute.xlu0 %3068
    %v3071 = vmul.f32 %v3069, %v1104
    %3072 = vset.pattern.permute.xlu0 59
    %3073 = vperm.xlu0 %3072, %v3015
    %v3074 = vpop.permute.xlu0 %3073
    %v3076 = vmul.f32 %v3074, %v1113
    %3077 = vset.pattern.permute.xlu0 60
    %3078 = vperm.xlu0 %3077, %v3015
    %v3079 = vpop.permute.xlu0 %3078
    %v3081 = vmul.f32 %v3079, %v1122
    %3082 = vset.pattern.permute.xlu0 61
    %3083 = vperm.xlu0 %3082, %v3015
    %v3084 = vpop.permute.xlu0 %3083
    %v3086 = vmul.f32 %v3084, %v1131
    %3087 = vset.pattern.permute.xlu0 62
    %3088 = vperm.xlu0 %3087, %v3015
    %v3089 = vpop.permute.xlu0 %3088
    %v3091 = vmul.f32 %v3089, %v1140
    %3092 = vset.pattern.permute.xlu0 63
    %3093 = vperm.xlu0 %3092, %v3015
    %v3094 = vpop.permute.xlu0 %3093
    %v3096 = vmul.f32 %v3094, %v1149
    %v3098 = vrot.slane %v3021, 6
    %v3100 = vadd.f32 %v977, %v3098
    %v3101 = vadd.f32 %v3026, %v3031
    %v3102 = vadd.f32 %v3036, %v3041
    %v3103 = vadd.f32 %v3046, %v3051
    %v3104 = vadd.f32 %v3056, %v3061
    %v3105 = vadd.f32 %v3066, %v3071
    %v3106 = vadd.f32 %v3076, %v3081
    %v3107 = vadd.f32 %v3086, %v3091
    %v3109 = vrot.slane %v3101, 6
    %v3111 = vadd.f32 %v3100, %v3109
    %v3112 = vadd.f32 %v3102, %v3103
    %v3113 = vadd.f32 %v3104, %v3105
    %v3114 = vadd.f32 %v3106, %v3107
    %v3116 = vrot.slane %v3112, 6
    %v3118 = vadd.f32 %v3111, %v3116
    %v3119 = vadd.f32 %v3113, %v3114
    %v3121 = vrot.slane %v3119, 6
    %v3123 = vadd.f32 %v3118, %v3121
    %v3125 = vrot.slane %v3096, 6
    %v3127 = vadd.f32 %v3123, %v3125
    %v3128 = vxor.u32 %v3127, 2147483648
    %v3129 = vmul.f32 %v3128, 1.442695
    %v3130 = vpow.pop %v3129
    %v3131 = vadd.f32 %v3130, 1.0
    %v3132 = vrcp.pop %v3131
    %v3133 = vmul.f32 1.0, %v3132
    %v3134 = vtanh.pop %v3127
    %v3136 = vrot.slane %v3009, 6
    %v3138 = vmul.f32 %v3133, %v3136
    %3140 = vrot.lane.b32.xlu0 %v3134, 96
    %v3141 = vpop.permute.xlu0 %3140
    %v3143 = vmul.f32 %v3133, %v3141
    %3145 = vrot.lane.b32.xlu0 %v3143, 16
    %v3146 = vpop.permute.xlu0 %3145
    %v3148 = vadd.f32 %v3138, %v3146
    %v3149 = vtanh.pop %v3148
    %3151 = vrot.lane.b32.xlu0 %v3149, 32
    %v3152 = vpop.permute.xlu0 %3151
    %v3154 = vmul.f32 %v3133, %v3152
    %v3155 = vrot.slane %v1208, 2
    %v3156 = vrot.slane %v1347, 4
    %v3157 = vrot.slane %v1486, 6
    %v3158 = vrot.slane %v1764, 2
    %v3159 = vrot.slane %v1903, 4
    %v3160 = vrot.slane %v2042, 6
    %v3161 = vrot.slane %v2320, 2
    %v3162 = vrot.slane %v2459, 4
    %v3163 = vrot.slane %v2598, 6
    %v3164 = vrot.slane %v2876, 2
    %v3165 = vrot.slane %v3015, 4
    %v3167 = vrot.slane %v3154, 6
    %v3168 = vrot.slane %v3155, 7
    %vm3169 = vcmask 1041409
    %v3170 = vsel %vm3169, %v3168, %v1005
    %v3171 = vrot.slane %v3156, 6
    %vm3172 = vcmask 1042434
    %v3173 = vsel %vm3172, %v3171, %v3170
    %v3174 = vrot.slane %v3157, 5
    %vm3175 = vcmask 1043459
    %v3176 = vsel %vm3175, %v3174, %v3173
    %v3177 = vrot.slane %v1625, 4
    %vm3178 = vcmask 1044484
    %v3179 = vsel %vm3178, %v3177, %v3176
    %v3180 = vrot.slane %v3158, 3
    %vm3181 = vcmask 1045509
    %v3182 = vsel %vm3181, %v3180, %v3179
    %v3183 = vrot.slane %v3159, 2
    %vm3184 = vcmask 1046534
    %v3185 = vsel %vm3184, %v3183, %v3182
    %v3186 = vrot.slane %v3160, 1
    %vm3187 = vcmask 1047559
    %v3188 = vsel %vm3187, %v3186, %v3185
    %v3189 = vrot.slane %v3161, 7
    %v3190 = vsel %vm3169, %v3189, %v2181
    %v3191 = vrot.slane %v3162, 6
    %v3192 = vsel %vm3172, %v3191, %v3190
    %v3193 = vrot.slane %v3163, 5
    %v3194 = vsel %vm3175, %v3193, %v3192
    %v3195 = vrot.slane %v2737, 4
    %v3196 = vsel %vm3178, %v3195, %v3194
    %v3197 = vrot.slane %v3164, 3
    %v3198 = vsel %vm3181, %v3197, %v3196
    %v3199 = vrot.slane %v3165, 2
    %v3200 = vsel %vm3184, %v3199, %v3198
    %v3201 = vrot.slane %v3167, 1
    %v3202 = vsel %vm3187, %v3201, %v3200
    %3203 = vrot.lane.b32.xlu0 %v3188, 80
    %v3204 = vpop.permute.xlu0 %3203
    %3205 = vrot.lane.b32.xlu0 %v3202, 80
    %v3206 = vpop.permute.xlu0 %3205
    %3209 = vxpose.xlu0.b32.start [1/16] %v3204, 128
    %3210 = vxpose.xlu0.b32.cont [2/16] %v3206, 128
    %3211 = vxpose.xlu0.b32.cont [3/16] 0.0, 128
    %3212 = vxpose.xlu0.b32.cont [4/16] 0.0, 128
    %3213 = vxpose.xlu0.b32.cont [5/16] 0.0, 128
    %3214 = vxpose.xlu0.b32.cont [6/16] 0.0, 128
    %3215 = vxpose.xlu0.b32.cont [7/16] 0.0, 128
    %3216 = vxpose.xlu0.b32.cont [8/16] 0.0, 128
    %3217 = vxpose.xlu0.b32.cont [9/16] 0.0, 128
    %3218 = vxpose.xlu0.b32.cont [10/16] 0.0, 128
    %3219 = vxpose.xlu0.b32.cont [11/16] 0.0, 128
    %3220 = vxpose.xlu0.b32.cont [12/16] 0.0, 128
    %3221 = vxpose.xlu0.b32.cont [13/16] 0.0, 128
    %3222 = vxpose.xlu0.b32.cont [14/16] 0.0, 128
    %3223 = vxpose.xlu0.b32.cont [15/16] 0.0, 128
    %3224 = vxpose.xlu0.b32.end [16/16] 0.0, 128
    %v3225 = vpop.trf.xlu0
    %v3226 = vpop.trf.xlu0
    %v3227 = vpop.trf.xlu0
    %v3228 = vpop.trf.xlu0
    %v3229 = vpop.trf.xlu0
    %v3230 = vpop.trf.xlu0
    %v3231 = vpop.trf.xlu0
    %v3232 = vpop.trf.xlu0
    %v3233 = vpop.trf.xlu0
    %v3234 = vpop.trf.xlu0
    %v3235 = vpop.trf.xlu0
    %v3236 = vpop.trf.xlu0
    %v3237 = vpop.trf.xlu0
    %v3238 = vpop.trf.xlu0
    %v3239 = vpop.trf.xlu0
    %v3240 = vpop.trf.xlu0
    %v3243 = vrot.slane %v3225, 7
    %v3244 = vrot.slane %v3226, 7
    %v3245 = vsel %vm491, %v3243, %v3244
    %v3249 = vsel %vm491, 0.0, %v3243
    %v3250 = vsel %vm491, %v3244, 0.0
    %vm3253 = vcmask 1046528
    %v3254 = vrot.slane %v3249, 1
    %v3255 = vrot.slane %v3245, 1
    %v3256 = vsel %vm3253, %v3254, %v3255
    %v3257 = vrot.slane %v3250, 1
    %v3258 = vsel %vm3253, %v3255, %v3257
    %3259 = vrot.lane.b32.xlu0 %v3256, 16
    %v3260 = vpop.permute.xlu0 %3259
    %3261 = vrot.lane.b32.xlu0 %v3258, 16
    %v3262 = vpop.permute.xlu0 %3261
    %v3265 = vrot.slane %v3249, 2
    %v3266 = vrot.slane %v3245, 2
    %v3267 = vsel %vm194, %v3265, %v3266
    %v3268 = vrot.slane %v3250, 2
    %v3269 = vsel %vm194, %v3266, %v3268
    %3270 = vrot.lane.b32.xlu0 %v3267, 32
    %v3271 = vpop.permute.xlu0 %3270
    %3272 = vrot.lane.b32.xlu0 %v3269, 32
    %v3273 = vpop.permute.xlu0 %3272
    %v3276 = vsel %vm882, %v3249, %v3260
    %v3277 = vsel %vm882, %v3245, %v3262
    %v3278 = vsel %vm570, %v3276, %v3271
    %v3279 = vsel %vm570, %v3277, %v3273
    %v3280 = vrot.slane %v1005, 1
    %v3281 = vsel %vm3169, %v3155, %v3280
    %v3282 = vrot.slane %v3156, 7
    %v3283 = vsel %vm3172, %v3282, %v3281
    %v3284 = vrot.slane %v3157, 6
    %v3285 = vsel %vm3175, %v3284, %v3283
    %v3286 = vrot.slane %v1625, 5
    %v3287 = vsel %vm3178, %v3286, %v3285
    %v3288 = vrot.slane %v3158, 4
    %v3289 = vsel %vm3181, %v3288, %v3287
    %v3290 = vrot.slane %v3159, 3
    %v3291 = vsel %vm3184, %v3290, %v3289
    %v3292 = vrot.slane %v3160, 2
    %v3293 = vsel %vm3187, %v3292, %v3291
    %v3294 = vrot.slane %v2181, 1
    %v3295 = vsel %vm3169, %v3161, %v3294
    %v3296 = vrot.slane %v3162, 7
    %v3297 = vsel %vm3172, %v3296, %v3295
    %v3298 = vrot.slane %v3163, 6
    %v3299 = vsel %vm3175, %v3298, %v3297
    %v3300 = vrot.slane %v2737, 5
    %v3301 = vsel %vm3178, %v3300, %v3299
    %v3302 = vrot.slane %v3164, 4
    %v3303 = vsel %vm3181, %v3302, %v3301
    %v3304 = vrot.slane %v3165, 3
    %v3305 = vsel %vm3184, %v3304, %v3303
    %v3306 = vrot.slane %v3167, 2
    %v3307 = vsel %vm3187, %v3306, %v3305
    %3308 = vrot.lane.b32.xlu0 %v3293, 80
    %v3309 = vpop.permute.xlu0 %3308
    %3310 = vrot.lane.b32.xlu0 %v3307, 80
    %v3311 = vpop.permute.xlu0 %3310
    %3314 = vxpose.xlu0.b32.start [1/16] %v3309, 128
    %3315 = vxpose.xlu0.b32.cont [2/16] %v3311, 128
    %3316 = vxpose.xlu0.b32.cont [3/16] 0.0, 128
    %3317 = vxpose.xlu0.b32.cont [4/16] 0.0, 128
    %3318 = vxpose.xlu0.b32.cont [5/16] 0.0, 128
    %3319 = vxpose.xlu0.b32.cont [6/16] 0.0, 128
    %3320 = vxpose.xlu0.b32.cont [7/16] 0.0, 128
    %3321 = vxpose.xlu0.b32.cont [8/16] 0.0, 128
    %3322 = vxpose.xlu0.b32.cont [9/16] 0.0, 128
    %3323 = vxpose.xlu0.b32.cont [10/16] 0.0, 128
    %3324 = vxpose.xlu0.b32.cont [11/16] 0.0, 128
    %3325 = vxpose.xlu0.b32.cont [12/16] 0.0, 128
    %3326 = vxpose.xlu0.b32.cont [13/16] 0.0, 128
    %3327 = vxpose.xlu0.b32.cont [14/16] 0.0, 128
    %3328 = vxpose.xlu0.b32.cont [15/16] 0.0, 128
    %3329 = vxpose.xlu0.b32.end [16/16] 0.0, 128
    %v3330 = vpop.trf.xlu0
    %v3331 = vpop.trf.xlu0
    %v3332 = vpop.trf.xlu0
    %v3333 = vpop.trf.xlu0
    %v3334 = vpop.trf.xlu0
    %v3335 = vpop.trf.xlu0
    %v3336 = vpop.trf.xlu0
    %v3337 = vpop.trf.xlu0
    %v3338 = vpop.trf.xlu0
    %v3339 = vpop.trf.xlu0
    %v3340 = vpop.trf.xlu0
    %v3341 = vpop.trf.xlu0
    %v3342 = vpop.trf.xlu0
    %v3343 = vpop.trf.xlu0
    %v3344 = vpop.trf.xlu0
    %v3345 = vpop.trf.xlu0
    %v3348 = vrot.slane %v3330, 7
    %v3349 = vrot.slane %v3331, 7
    %v3350 = vsel %vm491, %v3348, %v3349
    %v3354 = vsel %vm491, 0.0, %v3348
    %v3355 = vsel %vm491, %v3349, 0.0
    %v3358 = vrot.slane %v3354, 1
    %v3359 = vrot.slane %v3350, 1
    %v3360 = vsel %vm3253, %v3358, %v3359
    %v3361 = vrot.slane %v3355, 1
    %v3362 = vsel %vm3253, %v3359, %v3361
    %3363 = vrot.lane.b32.xlu0 %v3360, 16
    %v3364 = vpop.permute.xlu0 %3363
    %3365 = vrot.lane.b32.xlu0 %v3362, 16
    %v3366 = vpop.permute.xlu0 %3365
    %v3369 = vrot.slane %v3354, 2
    %v3370 = vrot.slane %v3350, 2
    %v3371 = vsel %vm194, %v3369, %v3370
    %v3372 = vrot.slane %v3355, 2
    %v3373 = vsel %vm194, %v3370, %v3372
    %3374 = vrot.lane.b32.xlu0 %v3371, 32
    %v3375 = vpop.permute.xlu0 %3374
    %3376 = vrot.lane.b32.xlu0 %v3373, 32
    %v3377 = vpop.permute.xlu0 %3376
    %v3380 = vsel %vm882, %v3354, %v3364
    %v3381 = vsel %vm882, %v3350, %v3366
    %v3382 = vsel %vm570, %v3380, %v3375
    %v3383 = vsel %vm570, %v3381, %v3377
    %v3384 = vld [vmem:[%s5] sm:$0xff]
    %v3385 = vld [vmem:[%s5 + $0x8] sm:$0xff]
    %v3386 = vld [vmem:[%s5 + $0x10] sm:$0xff]
    %v3387 = vld [vmem:[%s5 + $0x18] sm:$0xff]
    %v3388 = vld [vmem:[%s5 + $0x20] sm:$0xff]
    %v3389 = vld [vmem:[%s5 + $0x28] sm:$0xff]
    %v3390 = vld [vmem:[%s7 + $0x4] sm:$0x1]
    %v3391 = vlaneseq
    %v3392 = vshrl.u32 %v3391, 7
    %v3393 = vsub.s32 0, %v3392
    %v3394 = vrot.slane %v3390, %v3393
    %vm3395 = vcmask 392192
    %v3397 = vsel %vm3395, %v3278, 0
    %v3400 = vsel %vm3395, %v3279, 0
    %v3403 = vsel %vm3395, %v3382, 0
    %v3406 = vsel %vm3395, %v3383, 0
    %3408 = vmatprep.subr.mxu0 0.0
    %3409 = vmatpush1.msra.mxu0 %v3384
    %3410 = vmatprep.subr.mxu0 0.0
    %3411 = vmatpush1.msra.mxu0 %v3385
    %3412 = vmatprep.subr.mxu0 0.0
    %3413 = vmatpush1.msra.mxu0 %v3386
    %3414 = vmatprep.subr.mxu0 0.0
    %3415 = vmatpush1.msra.mxu0 %v3387
    %3416 = vmatprep.subr.mxu0 0.0
    %3417 = vmatpush1.msra.mxu0 %v3388
    %3418 = vmatprep.subr.mxu0 0.0
    %3419 = vmatpush1.msra.mxu0 %v3389
    %3420 = vmatprep.subr.mxu0 0.0
    %3421 = vmatpush1.msra.mxu0 0.0
    %3422 = vmatprep.subr.mxu0 0.0
    %3423 = vmatpush1.msra.mxu0 0.0
    %3424 = vmatprep.subr.mxu0 0.0
    %3425 = vmatpush1.msra.mxu0 0.0
    %3426 = vmatprep.subr.mxu0 0.0
    %3427 = vmatpush1.msra.mxu0 0.0
    %3428 = vmatprep.subr.mxu0 0.0
    %3429 = vmatpush1.msra.mxu0 0.0
    %3430 = vmatprep.subr.mxu0 0.0
    %3431 = vmatpush1.msra.mxu0 0.0
    %3432 = vmatprep.subr.mxu0 0.0
    %3433 = vmatpush1.msra.mxu0 0.0
    %3434 = vmatprep.subr.mxu0 0.0
    %3435 = vmatpush1.msra.mxu0 0.0
    %3436 = vmatprep.subr.mxu0 0.0
    %3437 = vmatpush1.msra.mxu0 0.0
    %3438 = vmatprep.subr.mxu0 0.0
    %3439 = vmatpush1.msra.mxu0 0.0
    %3440 = vmatprep.subr.mxu0 0.0
    %3441 = vmatpush1.msra.mxu0 0.0
    %3442 = vmatprep.subr.mxu0 0.0
    %3443 = vmatpush1.msra.mxu0 0.0
    %3444 = vmatprep.subr.mxu0 0.0
    %3445 = vmatpush1.msra.mxu0 0.0
    %3446 = vmatprep.subr.mxu0 0.0
    %3447 = vmatpush1.msra.mxu0 0.0
    %3448 = vmatprep.subr.mxu0 0.0
    %3449 = vmatpush1.msra.mxu0 0.0
    %3450 = vmatprep.subr.mxu0 0.0
    %3451 = vmatpush1.msra.mxu0 0.0
    %3452 = vmatprep.subr.mxu0 0.0
    %3453 = vmatpush1.msra.mxu0 0.0
    %3454 = vmatprep.subr.mxu0 0.0
    %3455 = vmatpush1.msra.mxu0 0.0
    %3456 = vmatprep.subr.mxu0 0.0
    %3457 = vmatpush1.msra.mxu0 0.0
    %3458 = vmatprep.subr.mxu0 0.0
    %3459 = vmatpush1.msra.mxu0 0.0
    %3460 = vmatprep.subr.mxu0 0.0
    %3461 = vmatpush1.msra.mxu0 0.0
    %3462 = vmatprep.subr.mxu0 0.0
    %3463 = vmatpush1.msra.mxu0 0.0
    %3464 = vmatprep.subr.mxu0 0.0
    %3465 = vmatpush1.msra.mxu0 0.0
    %3466 = vmatprep.subr.mxu0 0.0
    %3467 = vmatpush1.msra.mxu0 0.0
    %3468 = vmatprep.subr.mxu0 0.0
    %3469 = vmatpush1.msra.mxu0 0.0
    %3470 = vmatprep.subr.mxu0 0.0
    %3471 = vmatpush1.msra.mxu0 0.0
    %3472 = vmatprep.mubr.f32.mxu0 0.0
    %3473 = vmatmul.mubr.f32.gmra.mrb[0].mxu0 %v3397
    %v3474 = vpop.f32.mrb[0].mxu0
    %v3475 = vadd.f32 %v3394, %v3474
    %v3476 = vpop.f32.mrb[0].mxu0
    %3477 = vmatprep.mubr.f32.mxu0 0.0
    %3478 = vmatmul.mubr.f32.gmra.mrb[0].mxu0 %v3400
    %v3479 = vpop.f32.mrb[0].mxu0
    %v3480 = vadd.f32 %v3394, %v3479
    %v3481 = vpop.f32.mrb[0].mxu0
    %3482 = vmatprep.mubr.f32.mxu0 0.0
    %3483 = vmatmul.mubr.f32.gmra.mrb[0].mxu0 %v3403
    %v3484 = vpop.f32.mrb[0].mxu0
    %v3485 = vadd.f32 %v3394, %v3484
    %v3486 = vpop.f32.mrb[0].mxu0
    %3487 = vmatprep.mubr.f32.mxu0 0.0
    %3488 = vmatmul.mubr.f32.gmra.mrb[0].mxu0 %v3406
    %v3489 = vpop.f32.mrb[0].mxu0
    %v3490 = vadd.f32 %v3394, %v3489
    %v3491 = vpop.f32.mrb[0].mxu0
    %3492 = vdwg.mxu0
    %v3493 = vsel %vm570, %v3475, 0.0
    %v3494 = vsel %vm570, %v3480, 0.0
    %v3495 = vadd.f32 %v3493, %v3494
    %v3496 = vsel %vm570, %v3485, 0.0
    %v3497 = vadd.f32 %v3495, %v3496
    %v3498 = vsel %vm570, %v3490, 0.0
    %v3499 = vadd.f32 %v3497, %v3498
    %v3500 = vrot.slane %v3499, 4
    %v3501 = vadd.f32 %v3499, %v3500
    %v3502 = vrot.slane %v3501, 2
    %v3503 = vadd.f32 %v3501, %v3502
    %v3504 = vrot.slane %v3503, 1
    %v3505 = vadd.f32 %v3503, %v3504
    %v3506 = vmul.f32 %v3475, %v3475
    %v3507 = vmul.f32 %v3480, %v3480
    %v3508 = vmul.f32 %v3485, %v3485
    %v3509 = vmul.f32 %v3490, %v3490
    %v3510 = vsel %vm570, %v3506, 0.0
    %v3511 = vsel %vm570, %v3507, 0.0
    %v3512 = vadd.f32 %v3510, %v3511
    %v3513 = vsel %vm570, %v3508, 0.0
    %v3514 = vadd.f32 %v3512, %v3513
    %v3515 = vsel %vm570, %v3509, 0.0
    %v3516 = vadd.f32 %v3514, %v3515
    %v3517 = vrot.slane %v3516, 4
    %v3518 = vadd.f32 %v3516, %v3517
    %v3519 = vrot.slane %v3518, 2
    %v3520 = vadd.f32 %v3518, %v3519
    %v3521 = vrot.slane %v3520, 1
    %v3522 = vadd.f32 %v3520, %v3521
    %v3523 = vsel %vm491, %v3505, %v3522
    %v3524 = vrcp.pop 32.0
    %v3525 = vmul.f32 %v3523, %v3524
    %v3526 = vmul.f32 %v3525, %v3525
    %v3528 = vrot.slane %v3526, 7
    %v3530 = vsub.f32 %v3525, %v3528
    %v3531 = vld [vmem:[%s7 + $0x5] sm:$0x1]
    %v3532 = vadd.f32 %v3530, 1e-05
    %v3533 = vrsqrt.pop %v3532
    %v3535 = vrot.slane %v3533, 1
    %v3537 = vmul.f32 %v3531, %v3535
    %v3538 = vld [vmem:[%s7 + $0x6] sm:$0x1]
    %v3539 = vmul.f32 %v3525, %v3537
    %v3540 = vsub.f32 %v3538, %v3539
    %v3541 = vlaneseq
    %v3542 = vshrl.u32 %v3541, 7
    %v3543 = vsub.s32 0, %v3542
    %v3544 = vrot.slane %v3537, %v3543
    %v3545 = vmul.f32 %v3475, %v3544
    %v3546 = vmul.f32 %v3480, %v3544
    %v3547 = vmul.f32 %v3485, %v3544
    %v3548 = vmul.f32 %v3490, %v3544
    %v3549 = vlaneseq
    %v3550 = vshrl.u32 %v3549, 7
    %v3551 = vsub.s32 0, %v3550
    %v3552 = vrot.slane %v3540, %v3551
    %v3553 = vadd.f32 %v3545, %v3552
    %v3554 = vadd.f32 %v3546, %v3552
    %v3555 = vadd.f32 %v3547, %v3552
    %v3556 = vadd.f32 %v3548, %v3552
    %v3557 = vmax.f32 %v3553, 0.0
    %v3558 = vmax.f32 %v3554, 0.0
    %v3559 = vmax.f32 %v3555, 0.0
    %v3560 = vmax.f32 %v3556, 0.0
    %v3561 = vsel %vm570, %v3557, 0.0
    %v3562 = vsel %vm570, %v3558, 0.0
    %v3563 = vadd.f32 %v3561, %v3562
    %v3564 = vrot.slane %v3563, 4
    %v3565 = vadd.f32 %v3563, %v3564
    %v3566 = vrot.slane %v3565, 2
    %v3567 = vadd.f32 %v3565, %v3566
    %v3568 = vrot.slane %v3567, 1
    %v3569 = vadd.f32 %v3567, %v3568
    %v3570 = vrcp.pop 16.0
    %v3571 = vmul.f32 %v3569, %v3570
    %v3572 = vsel %vm570, %v3559, 0.0
    %v3573 = vsel %vm570, %v3560, 0.0
    %v3574 = vadd.f32 %v3572, %v3573
    %v3575 = vrot.slane %v3574, 4
    %v3576 = vadd.f32 %v3574, %v3575
    %v3577 = vrot.slane %v3576, 2
    %v3578 = vadd.f32 %v3576, %v3577
    %v3579 = vrot.slane %v3578, 1
    %v3580 = vadd.f32 %v3578, %v3579
    %v3581 = vmul.f32 %v3580, %v3570
    %v3582 = vsel %vm491, %v3571, %v3581
    %v3583 = vld [vmem:[%s6] sm:$0xff]
    %v3584 = vld [vmem:[%s6 + $0x8] sm:$0xff]
    %v3585 = vld [vmem:[%s6 + $0x10] sm:$0xff]
    %v3586 = vld [vmem:[%s6 + $0x18] sm:$0xff]
    %v3587 = vld [vmem:[%s7 + $0x7] sm:$0x1]
    %v3588 = vlaneseq
    %v3589 = vshrl.u32 %v3588, 7
    %v3590 = vsub.s32 0, %v3589
    %v3591 = vrot.slane %v3587, %v3590
    %v3593 = vsel %vm570, %v3582, 0
    %3595 = vmatprep.subr.mxu0 0.0
    %3596 = vmatpush1.msra.mxu0 %v3583
    %3597 = vmatprep.subr.mxu0 0.0
    %3598 = vmatpush1.msra.mxu0 %v3584
    %3599 = vmatprep.subr.mxu0 0.0
    %3600 = vmatpush1.msra.mxu0 %v3585
    %3601 = vmatprep.subr.mxu0 0.0
    %3602 = vmatpush1.msra.mxu0 %v3586
    %3603 = vmatprep.subr.mxu0 0.0
    %3604 = vmatpush1.msra.mxu0 0.0
    %3605 = vmatprep.subr.mxu0 0.0
    %3606 = vmatpush1.msra.mxu0 0.0
    %3607 = vmatprep.subr.mxu0 0.0
    %3608 = vmatpush1.msra.mxu0 0.0
    %3609 = vmatprep.subr.mxu0 0.0
    %3610 = vmatpush1.msra.mxu0 0.0
    %3611 = vmatprep.subr.mxu0 0.0
    %3612 = vmatpush1.msra.mxu0 0.0
    %3613 = vmatprep.subr.mxu0 0.0
    %3614 = vmatpush1.msra.mxu0 0.0
    %3615 = vmatprep.subr.mxu0 0.0
    %3616 = vmatpush1.msra.mxu0 0.0
    %3617 = vmatprep.subr.mxu0 0.0
    %3618 = vmatpush1.msra.mxu0 0.0
    %3619 = vmatprep.subr.mxu0 0.0
    %3620 = vmatpush1.msra.mxu0 0.0
    %3621 = vmatprep.subr.mxu0 0.0
    %3622 = vmatpush1.msra.mxu0 0.0
    %3623 = vmatprep.subr.mxu0 0.0
    %3624 = vmatpush1.msra.mxu0 0.0
    %3625 = vmatprep.subr.mxu0 0.0
    %3626 = vmatpush1.msra.mxu0 0.0
    %3627 = vmatprep.subr.mxu0 0.0
    %3628 = vmatpush1.msra.mxu0 0.0
    %3629 = vmatprep.subr.mxu0 0.0
    %3630 = vmatpush1.msra.mxu0 0.0
    %3631 = vmatprep.subr.mxu0 0.0
    %3632 = vmatpush1.msra.mxu0 0.0
    %3633 = vmatprep.subr.mxu0 0.0
    %3634 = vmatpush1.msra.mxu0 0.0
    %3635 = vmatprep.subr.mxu0 0.0
    %3636 = vmatpush1.msra.mxu0 0.0
    %3637 = vmatprep.subr.mxu0 0.0
    %3638 = vmatpush1.msra.mxu0 0.0
    %3639 = vmatprep.subr.mxu0 0.0
    %3640 = vmatpush1.msra.mxu0 0.0
    %3641 = vmatprep.subr.mxu0 0.0
    %3642 = vmatpush1.msra.mxu0 0.0
    %3643 = vmatprep.subr.mxu0 0.0
    %3644 = vmatpush1.msra.mxu0 0.0
    %3645 = vmatprep.subr.mxu0 0.0
    %3646 = vmatpush1.msra.mxu0 0.0
    %3647 = vmatprep.subr.mxu0 0.0
    %3648 = vmatpush1.msra.mxu0 0.0
    %3649 = vmatprep.subr.mxu0 0.0
    %3650 = vmatpush1.msra.mxu0 0.0
    %3651 = vmatprep.subr.mxu0 0.0
    %3652 = vmatpush1.msra.mxu0 0.0
    %3653 = vmatprep.subr.mxu0 0.0
    %3654 = vmatpush1.msra.mxu0 0.0
    %3655 = vmatprep.subr.mxu0 0.0
    %3656 = vmatpush1.msra.mxu0 0.0
    %3657 = vmatprep.subr.mxu0 0.0
    %3658 = vmatpush1.msra.mxu0 0.0
    %3659 = vmatprep.mubr.f32.mxu0 0.0
    %3660 = vmatmul.mubr.f32.gmra.mrb[0].mxu0 %v3593
    %v3661 = vpop.f32.mrb[0].mxu0
    %v3662 = vadd.f32 %v3591, %v3661
    %v3663 = vpop.f32.mrb[0].mxu0
    %3664 = vdwg.mxu0
    %vm3665 = vcmask 58368
    %v3666 = vsel %vm3665, %v3662, -inf
    %3667 = vmax.xlane.f32.xlu0 %v3666
    %v3668 = vpop.xlane.xlu0 %3667
    %v3669 = vsub.f32 %v3662, %v3668
    %v3670 = vmul.f32 %v3669, 1.442695
    %v3671 = vpow.pop %v3670
    %v3672 = vsel %vm3665, %v3671, 0.0
    %3673 = vadd.xlane.f32.xlu0 %v3672
    %v3674 = vpop.xlane.xlu0 %3673
    %v3675 = vrcp.pop %v3674
    %v3676 = vmul.f32 %v3671, %v3675
    %3677 = vst.msk [vmem:[#allocation2] sm:$0x3] %vm3665, %v3676
    // Predicated region
    $region34: #{tsem_seq_forward.1} parent=1 // pred_check
      _
    $region35: #{tsem_seq_forward.1} parent=1 // pred_check_branch
      %3679 = sbr.rel (0) target = $region37
    $region36: #{tsem_seq_forward.1} parent=1 // pred_region
      %s3681 = ssub.s32 32, 32
      %3682 = vsyncadd [#allocation3], %s3681
      %s3684 = sshll.u32 [#allocation2], 4
      %s3685 = int_to_ptr.vmem [resolvable:$true] %s3684
      %3687 = dma.vmem_to_hbm [thread:$0]  %s3685, 32, %s8, [#allocation3]
    $region37: #{tsem_seq_forward.1} parent=1 // pred_fallthru
      _
    // Predicated region
    $region38: #{tsem_seq_forward.1} parent=1 // pred_check
      _
    $region39: #{tsem_seq_forward.1} parent=1 // pred_check_branch
      %3689 = sbr.rel (0) target = $region41
    $region40: #{tsem_seq_forward.1} parent=1 // pred_region
      %3690 = dma.done [#allocation3], 32
    $region41: #{tsem_seq_forward.1} parent=1 // pred_fallthru
      _
    %3691 = vsyncpa [#allocation3], 1

</llo_original>
